<compile_context>
chip_gen: v7x
topology: tpu7x:2x2x1
jax: 0.10.0
libtpu: 0.0.40
codegen_flags: <defaults>
</compile_context>

<pallas_src>
import jax
import jax.numpy as jnp
import numpy as np
from jax.experimental import pallas as pl
from jax.experimental.pallas import tpu as pltpu

B = 2
C_IN, L = 3, 88            # L = 88 is implied by fc1 = Linear(32*22, 128): 88 -> 44 -> 22
C1, C2 = 16, 32
K = 3
L1, L2 = L // 2, L // 4    # 44, 22
HID = 128
NUM_CLASSES = 5
OUT_PAD = 128              # lane-dense output width (>= NUM_CLASSES)


def lidar_cnn_kernel(x_ref, w1_ref, b1_ref, w2_ref, b2_ref,
                     wf1_ref, bf1_ref, wf2_ref, bf2_ref,
                     out_ref, s1_ref, s2_ref, p2_ref):
    cdt = w1_ref.dtype                     # compute dtype (f32 or bf16)
    bt = out_ref.shape[0]                  # samples handled by this grid step
    m1 = bt * L                            # rows of the conv1 matmul
    m2 = bt * L1                           # rows of the conv2 matmul

    # ---- conv1 (3 -> 16, k=3, pad=1) + ReLU: im2col built in-register -------
    # Shifts by +-1 row via XLU rolls; rows where the shift crosses a sample
    # boundary are zeroed (that is exactly the conv's zero padding).  Rolls are
    # circular, but the wrapped rows are masked by the boundary masks.
    xc = x_ref[...]                                                    # (m1, 3) f32
    t1 = jax.lax.broadcasted_iota(jnp.int32, (m1, C_IN), 0) % L
    x1l = jnp.where(t1 == 0, 0.0, pltpu.roll(xc, shift=1, axis=0))        # x[t-1]
    x1r = jnp.where(t1 == L - 1, 0.0, pltpu.roll(xc, shift=m1 - 1, axis=0))  # x[t+1]
    x1 = jnp.concatenate([x1l, xc, x1r], axis=1).astype(cdt)           # (m1, 9)
    y1 = jnp.dot(x1, w1_ref[...], preferred_element_type=jnp.float32)
    y1 = jnp.maximum(y1 + b1_ref[...], 0.0)                            # (m1, 16) f32

    # ---- maxpool(2): 88 -> 44.  Store the pairwise max once (roll lands on the
    # idle XLU slot), then ONE stride-2 read.  The circular wrap only pollutes
    # odd rows, which the even-row stride-2 read never touches.
    # TODO(synk): nn.Dropout(0.5) is stochastic; implemented as inference-mode identity.
    s1_ref[...] = jnp.maximum(y1, pltpu.roll(y1, shift=m1 - 1, axis=0))
    p1 = s1_ref[pl.ds(0, m2, 2), :]                                    # (m2, 16) f32

    # ---- conv2 (16 -> 32, k=3, pad=1) + ReLU as ONE matmul (in-register im2col)
    t2 = jax.lax.broadcasted_iota(jnp.int32, (m2, C1), 0) % L1
    x2l = jnp.where(t2 == 0, 0.0, pltpu.roll(p1, shift=1, axis=0))        # pool1[t-1]
    x2r = jnp.where(t2 == L1 - 1, 0.0, pltpu.roll(p1, shift=m2 - 1, axis=0))  # pool1[t+1]
    x2 = jnp.concatenate([x2l, p1, x2r], axis=1).astype(cdt)           # (m2, 48)
    y2 = jnp.dot(x2, w2_ref[...], preferred_element_type=jnp.float32)
    y2 = jnp.maximum(y2 + b2_ref[...], 0.0)                            # (m2, 32) f32

    # ---- maxpool(2) (44 -> 22) fused with the t-major flatten.  Pairwise max is
    # stored once; for each output position t one stride-44 read pulls that
    # position's (already max-pooled) row out of every sample and it is written
    # into the (bt, 704) feature scratch at lane offset 32*t (t-major flatten,
    # matching the permuted fc1 weight).  22 strided reads, no lane concat.
    s2_ref[...] = jnp.maximum(y2, pltpu.roll(y2, shift=m2 - 1, axis=0))
    for t in range(L2):
        p2_ref[:, t * C2:(t + 1) * C2] = s2_ref[pl.ds(2 * t, bt, L1), :].astype(cdt)

    # ---- fc1 (704 -> 128) + ReLU, fc2 (128 -> 128-lane-padded logits) --------
    h = jnp.dot(p2_ref[...], wf1_ref[...], preferred_element_type=jnp.float32)
    h = jnp.maximum(h + bf1_ref[...], 0.0).astype(cdt)
    out_ref[...] = (jnp.dot(h, wf2_ref[...], preferred_element_type=jnp.float32)
                    + bf2_ref[...])


def _round_up(n, m):
    return -(-n // m) * m


def lidar_cnn_forward(x, params, *, compute_dtype=jnp.float32, batch_tile=None):
    """x: (B, 3, 88) float32 in PyTorch NCL layout. Returns (B, num_classes) f32.

    compute_dtype: keep float32 on v5e; bfloat16 is the fast path on v6e/v7x
    (f32 accumulation is preserved).  batch_tile=None auto-picks 128.
    """
    w1, b1, w2, b2, wf1, bf1, wf2, bf2 = params
    bx = x.shape[0]

    # Per-generation guidance: >=128 (v5e) / >=256 (v6e, v7x); 128 keeps the
    # per-step working set well inside every generation's scoped-VMEM default.
    if batch_tile is None:
        batch_tile = 128
    bt = max(8, _round_up(min(batch_tile, bx), 8))   # multiple of 8 -> aligned blocks
    n_steps = -(-bx // bt)
    bpad = n_steps * bt

    # ---- glue (plain JAX): batch padding, channels-last layout, weight prep ----
    x_p = jnp.pad(x, ((0, bpad - bx), (0, 0), (0, 0)))
    # raw channels-last rows (bpad*L, 3); conv1 im2col happens in-kernel.
    x_cl = jnp.transpose(x_p, (0, 2, 1)).reshape(bpad * L, C_IN).astype(jnp.float32)

    # conv weights as im2col matrices (rows ordered tap-major, then in-channel).
    w1_col = jnp.transpose(w1, (2, 1, 0)).reshape(K * C_IN, C1).astype(compute_dtype)
    w2_col = jnp.transpose(w2, (2, 1, 0)).reshape(K * C1, C2).astype(compute_dtype)
    # torch flatten is channel-major (f = c*22 + t); permute the fc1 weight so the
    # kernel's t-major (t*32 + c) flatten matches.
    wf1_col = jnp.transpose(wf1.reshape(HID, C2, L2), (2, 1, 0))
    wf1_col = wf1_col.reshape(L2 * C2, HID).astype(compute_dtype)
    # fc2: zero-pad the output dim to 128 lanes for an unmasked, lane-dense store.
    wf2_pad = jnp.zeros((HID, OUT_PAD), compute_dtype).at[:, :NUM_CLASSES].set(
        wf2.T.astype(compute_dtype))
    bf2_pad = jnp.zeros((1, OUT_PAD), jnp.float32).at[:, :NUM_CLASSES].set(
        bf2.reshape(1, NUM_CLASSES).astype(jnp.float32))

    out = pl.pallas_call(
        lidar_cnn_kernel,
        out_shape=jax.ShapeDtypeStruct((bpad, OUT_PAD), jnp.float32),
        grid_spec=pltpu.PrefetchScalarGridSpec(
            num_scalar_prefetch=0,
            grid=(n_steps,),
            in_specs=[
                pl.BlockSpec((bt * L, C_IN), lambda i: (i, 0)),        # raw input rows
                pl.BlockSpec((K * C_IN, C1), lambda i: (0, 0)),        # conv1 weight
                pl.BlockSpec((1, C1), lambda i: (0, 0)),               # conv1 bias
                pl.BlockSpec((K * C1, C2), lambda i: (0, 0)),          # conv2 weight
                pl.BlockSpec((1, C2), lambda i: (0, 0)),               # conv2 bias
                pl.BlockSpec((L2 * C2, HID), lambda i: (0, 0)),        # fc1 weight
                pl.BlockSpec((1, HID), lambda i: (0, 0)),              # fc1 bias
                pl.BlockSpec((HID, OUT_PAD), lambda i: (0, 0)),        # fc2 weight (padded)
                pl.BlockSpec((1, OUT_PAD), lambda i: (0, 0)),          # fc2 bias (padded)
            ],
            out_specs=pl.BlockSpec((bt, OUT_PAD), lambda i: (i, 0)),
            scratch_shapes=[
                pltpu.VMEM((bt * L, C1), jnp.float32),     # pool1 pairwise-max source
                pltpu.VMEM((bt * L1, C2), jnp.float32),    # pool2 pairwise-max source
                pltpu.VMEM((bt, L2 * C2), compute_dtype),  # flattened fc1 operand
            ],
        ),
        compiler_params=pltpu.CompilerParams(
            dimension_semantics=("parallel",)),
    )(x_cl, w1_col, b1.reshape(1, C1).astype(jnp.float32),
      w2_col, b2.reshape(1, C2).astype(jnp.float32),
      wf1_col, bf1.reshape(1, HID).astype(jnp.float32),
      wf2_pad, bf2_pad)
    return out[:bx, :NUM_CLASSES]


def reference_forward(x, params):
    """Independent pure-JAX reference matching the PyTorch forward (eval mode)."""
    w1, b1, w2, b2, wf1, bf1, wf2, bf2 = params
    dn = ('NCH', 'OIH', 'NCH')
    y = jax.lax.conv_general_dilated(x, w1, (1,), ((1, 1),), dimension_numbers=dn)
    y = jax.nn.relu(y + b1[None, :, None])
    y = jax.lax.reduce_window(y, -jnp.inf, jax.lax.max, (1, 1, 2), (1, 1, 2), 'VALID')
    y = jax.lax.conv_general_dilated(y, w2, (1,), ((1, 1),), dimension_numbers=dn)
    y = jax.nn.relu(y + b2[None, :, None])
    y = jax.lax.reduce_window(y, -jnp.inf, jax.lax.max, (1, 1, 2), (1, 1, 2), 'VALID')
    y = y.reshape(y.shape[0], -1)                                # channel-major == torch view
    y = jax.nn.relu(y @ wf1.T + bf1)
    return y @ wf2.T + bf2


if __name__ == "__main__":
    key = jax.random.PRNGKey(0)
    ks = jax.random.split(key, 9)
    w1 = 0.2 * jax.random.normal(ks[0], (C1, C_IN, K), jnp.float32)      # Conv1d(3,16,3)
    b1 = 0.1 * jax.random.normal(ks[1], (C1,), jnp.float32)
    w2 = 0.1 * jax.random.normal(ks[2], (C2, C1, K), jnp.float32)        # Conv1d(16,32,3)
    b2 = 0.1 * jax.random.normal(ks[3], (C2,), jnp.float32)
    wf1 = 0.05 * jax.random.normal(ks[4], (HID, C2 * L2), jnp.float32)   # Linear(704,128)
    bf1 = 0.1 * jax.random.normal(ks[5], (HID,), jnp.float32)
    wf2 = 0.05 * jax.random.normal(ks[6], (NUM_CLASSES, HID), jnp.float32)  # Linear(128,nc)
    bf2 = 0.1 * jax.random.normal(ks[7], (NUM_CLASSES,), jnp.float32)
    params = (w1, b1, w2, b2, wf1, bf1, wf2, bf2)

    x = jax.random.normal(ks[8], (B, C_IN, L), jnp.float32)              # torch NCL input
    ref = reference_forward(x, params)

    # f32 path (matches PyTorch default numerics).
    out = jax.block_until_ready(lidar_cnn_forward(x, params))
    np.testing.assert_allclose(np.asarray(out), np.asarray(ref), rtol=2e-3, atol=2e-3)

    # bf16 compute path (v6e / v7x fast path: bf16 operands, f32 accumulation).
    out_bf16 = jax.block_until_ready(
        lidar_cnn_forward(x, params, compute_dtype=jnp.bfloat16))
    np.testing.assert_allclose(np.asarray(out_bf16), np.asarray(ref), rtol=5e-2, atol=5e-2)

    # Larger, non-multiple batch with an explicit small tile: exercises batch
    # padding + a 2-step "parallel" grid (both v7x TensorCores busy).
    x_big = jax.random.normal(jax.random.PRNGKey(1), (13, C_IN, L), jnp.float32)
    ref_big = reference_forward(x_big, params)
    out_big = jax.block_until_ready(lidar_cnn_forward(x_big, params, batch_tile=8))
    np.testing.assert_allclose(np.asarray(out_big), np.asarray(ref_big),
                               rtol=2e-3, atol=2e-3)

    print("KERNEL_OK")
</pallas_src>

<mosaic_0001>
module attributes {stable_mosaic.version = 11 : i64} {
  func.func @lidar_cnn_kernel(%arg0: i32, %arg1: memref<704x3xf32, #tpu.memory_space<vmem>>, %arg2: memref<9x16xf32, #tpu.memory_space<vmem>>, %arg3: memref<1x16xf32, #tpu.memory_space<vmem>>, %arg4: memref<48x32xf32, #tpu.memory_space<vmem>>, %arg5: memref<1x32xf32, #tpu.memory_space<vmem>>, %arg6: memref<704x128xf32, #tpu.memory_space<vmem>>, %arg7: memref<1x128xf32, #tpu.memory_space<vmem>>, %arg8: memref<128x128xf32, #tpu.memory_space<vmem>>, %arg9: memref<1x128xf32, #tpu.memory_space<vmem>>, %arg10: memref<8x128xf32, #tpu.memory_space<vmem>>, %arg11: memref<704x16xf32, #tpu.memory_space<vmem>>, %arg12: memref<352x32xf32, #tpu.memory_space<vmem>>, %arg13: memref<8x704xf32, #tpu.memory_space<vmem>>) attributes {dimension_semantics = [#tpu.dimension_semantics<parallel>], iteration_bounds = array<i64: 1>, scalar_prefetch = 0 : i64, scratch_operands = 3 : i64, tpu.core_type = #tpu.core_type<tc>, window_params = [{transform_indices = @transform_0, window_bounds = array<i64: 704, 3>}, {pipeline_mode = #tpu.pipeline_mode<synchronous>, transform_indices = @transform_1, window_bounds = array<i64: 9, 16>}, {pipeline_mode = #tpu.pipeline_mode<synchronous>, transform_indices = @transform_2, window_bounds = array<i64: 1, 16>}, {pipeline_mode = #tpu.pipeline_mode<synchronous>, transform_indices = @transform_3, window_bounds = array<i64: 48, 32>}, {pipeline_mode = #tpu.pipeline_mode<synchronous>, transform_indices = @transform_4, window_bounds = array<i64: 1, 32>}, {pipeline_mode = #tpu.pipeline_mode<synchronous>, transform_indices = @transform_5, window_bounds = array<i64: 704, 128>}, {pipeline_mode = #tpu.pipeline_mode<synchronous>, transform_indices = @transform_6, window_bounds = array<i64: 1, 128>}, {pipeline_mode = #tpu.pipeline_mode<synchronous>, transform_indices = @transform_7, window_bounds = array<i64: 128, 128>}, {pipeline_mode = #tpu.pipeline_mode<synchronous>, transform_indices = @transform_8, window_bounds = array<i64: 1, 128>}, {transform_indices = @transform_9, window_bounds = array<i64: 8, 128>}]} {
    %c0 = arith.constant 0 : index
    %c0_0 = arith.constant 0 : index
    %0 = vector.load %arg1[%c0, %c0_0] : memref<704x3xf32, #tpu.memory_space<vmem>>, vector<704x3xf32>
    %1 = tpu.iota {dimensions = array<i32: 0>} : vector<704x3xi32>
    %c88_i32 = arith.constant 88 : i32
    %c0_i32 = arith.constant 0 : i32
    %2 = arith.cmpi eq, %c88_i32, %c0_i32 : i32
    %c1_i32 = arith.constant 1 : i32
    %3 = arith.select %2, %c1_i32, %c88_i32 : i32
    %4 = vector.broadcast %3 : i32 to vector<704x3xi32>
    %5 = arith.remsi %1, %4 : vector<704x3xi32>
    %c0_i32_1 = arith.constant 0 : i32
    %6 = vector.broadcast %c0_i32_1 : i32 to vector<704x3xi32>
    %7 = arith.cmpi ne, %5, %6 : vector<704x3xi32>
    %c0_i32_2 = arith.constant 0 : i32
    %8 = vector.broadcast %c0_i32_2 : i32 to vector<704x3xi32>
    %9 = arith.cmpi slt, %5, %8 : vector<704x3xi32>
    %c0_i32_3 = arith.constant 0 : i32
    %10 = arith.cmpi slt, %3, %c0_i32_3 : i32
    %11 = vector.broadcast %10 : i1 to vector<704x3xi1>
    %12 = vector.broadcast %11 : vector<704x3xi1> to vector<704x3xi1>
    %13 = arith.xori %9, %12 : vector<704x3xi1>
    %14 = arith.andi %13, %7 : vector<704x3xi1>
    %15 = vector.broadcast %3 : i32 to vector<704x3xi32>
    %16 = arith.addi %5, %15 : vector<704x3xi32>
    %17 = arith.select %14, %16, %5 : vector<704x3xi1>, vector<704x3xi32>
    %c0_i32_4 = arith.constant 0 : i32
    %18 = vector.broadcast %c0_i32_4 : i32 to vector<704x3xi32>
    %19 = arith.cmpi eq, %17, %18 : vector<704x3xi32>
    %c1_i32_5 = arith.constant 1 : i32
    %20 = tpu.dynamic_rotate %0 by %c1_i32_5 dim 0 : vector<704x3xf32>, i32 -> vector<704x3xf32>
    %cst = arith.constant 0.000000e+00 : f32
    %21 = vector.broadcast %cst : f32 to vector<704x3xf32>
    %22 = arith.select %19, %21, %20 : vector<704x3xi1>, vector<704x3xf32>
    %c87_i32 = arith.constant 87 : i32
    %23 = vector.broadcast %c87_i32 : i32 to vector<704x3xi32>
    %24 = arith.cmpi eq, %17, %23 : vector<704x3xi32>
    %c703_i32 = arith.constant 703 : i32
    %25 = tpu.dynamic_rotate %0 by %c703_i32 dim 0 : vector<704x3xf32>, i32 -> vector<704x3xf32>
    %cst_6 = arith.constant 0.000000e+00 : f32
    %26 = vector.broadcast %cst_6 : f32 to vector<704x3xf32>
    %27 = arith.select %24, %26, %25 : vector<704x3xi1>, vector<704x3xf32>
    %28 = tpu.concatenate %22, %0, %27 in 1 : vector<704x3xf32>, vector<704x3xf32>, vector<704x3xf32> -> vector<704x9xf32>
    %c0_7 = arith.constant 0 : index
    %c0_8 = arith.constant 0 : index
    %29 = vector.load %arg2[%c0_7, %c0_8] : memref<9x16xf32, #tpu.memory_space<vmem>>, vector<9x16xf32>
    %cst_9 = arith.constant dense<0.000000e+00> : vector<704x16xf32>
    %30 = tpu.matmul %28, %29, %cst_9 {dimension_numbers = #tpu.dot_dimension_numbers<[1], [0], [0], [1], [0, 0, 1, 1], [], []>} : vector<704x9xf32>, vector<9x16xf32>, vector<704x16xf32> -> vector<704x16xf32>
    %c0_10 = arith.constant 0 : index
    %c0_11 = arith.constant 0 : index
    %31 = vector.load %arg3[%c0_10, %c0_11] : memref<1x16xf32, #tpu.memory_space<vmem>>, vector<1x16xf32>
    %32 = vector.broadcast %31 : vector<1x16xf32> to vector<704x16xf32>
    %33 = arith.addf %30, %32 : vector<704x16xf32>
    %cst_12 = arith.constant 0.000000e+00 : f32
    %34 = vector.broadcast %cst_12 : f32 to vector<704x16xf32>
    %35 = arith.maximumf %33, %34 : vector<704x16xf32>
    %c703_i32_13 = arith.constant 703 : i32
    %36 = tpu.dynamic_rotate %35 by %c703_i32_13 dim 0 : vector<704x16xf32>, i32 -> vector<704x16xf32>
    %37 = arith.maximumf %35, %36 : vector<704x16xf32>
    %c0_14 = arith.constant 0 : index
    %c0_15 = arith.constant 0 : index
    %38 = vector.load %arg11[%c0_14, %c0_15] : memref<704x16xf32, #tpu.memory_space<vmem>>, vector<704x16xf32>
    tpu.vector_store %arg11[%c0_14, %c0_15], %37 {strides = array<i32>} : memref<704x16xf32, #tpu.memory_space<vmem>>, vector<704x16xf32>,
    %c0_16 = arith.constant 0 : index
    %c0_17 = arith.constant 0 : index
    %39 = tpu.strided_load %arg11[%c0_16, %c0_17] {strides = array<i32: 2, 1>} : memref<704x16xf32, #tpu.memory_space<vmem>>, vector<352x16xf32>
    %40 = tpu.iota {dimensions = array<i32: 0>} : vector<352x16xi32>
    %c44_i32 = arith.constant 44 : i32
    %c0_i32_18 = arith.constant 0 : i32
    %41 = arith.cmpi eq, %c44_i32, %c0_i32_18 : i32
    %c1_i32_19 = arith.constant 1 : i32
    %42 = arith.select %41, %c1_i32_19, %c44_i32 : i32
    %43 = vector.broadcast %42 : i32 to vector<352x16xi32>
    %44 = arith.remsi %40, %43 : vector<352x16xi32>
    %c0_i32_20 = arith.constant 0 : i32
    %45 = vector.broadcast %c0_i32_20 : i32 to vector<352x16xi32>
    %46 = arith.cmpi ne, %44, %45 : vector<352x16xi32>
    %c0_i32_21 = arith.constant 0 : i32
    %47 = vector.broadcast %c0_i32_21 : i32 to vector<352x16xi32>
    %48 = arith.cmpi slt, %44, %47 : vector<352x16xi32>
    %c0_i32_22 = arith.constant 0 : i32
    %49 = arith.cmpi slt, %42, %c0_i32_22 : i32
    %50 = vector.broadcast %49 : i1 to vector<352x16xi1>
    %51 = vector.broadcast %50 : vector<352x16xi1> to vector<352x16xi1>
    %52 = arith.xori %48, %51 : vector<352x16xi1>
    %53 = arith.andi %52, %46 : vector<352x16xi1>
    %54 = vector.broadcast %42 : i32 to vector<352x16xi32>
    %55 = arith.addi %44, %54 : vector<352x16xi32>
    %56 = arith.select %53, %55, %44 : vector<352x16xi1>, vector<352x16xi32>
    %c0_i32_23 = arith.constant 0 : i32
    %57 = vector.broadcast %c0_i32_23 : i32 to vector<352x16xi32>
    %58 = arith.cmpi eq, %56, %57 : vector<352x16xi32>
    %c1_i32_24 = arith.constant 1 : i32
    %59 = tpu.dynamic_rotate %39 by %c1_i32_24 dim 0 : vector<352x16xf32>, i32 -> vector<352x16xf32>
    %cst_25 = arith.constant 0.000000e+00 : f32
    %60 = vector.broadcast %cst_25 : f32 to vector<352x16xf32>
    %61 = arith.select %58, %60, %59 : vector<352x16xi1>, vector<352x16xf32>
    %c43_i32 = arith.constant 43 : i32
    %62 = vector.broadcast %c43_i32 : i32 to vector<352x16xi32>
    %63 = arith.cmpi eq, %56, %62 : vector<352x16xi32>
    %c351_i32 = arith.constant 351 : i32
    %64 = tpu.dynamic_rotate %39 by %c351_i32 dim 0 : vector<352x16xf32>, i32 -> vector<352x16xf32>
    %cst_26 = arith.constant 0.000000e+00 : f32
    %65 = vector.broadcast %cst_26 : f32 to vector<352x16xf32>
    %66 = arith.select %63, %65, %64 : vector<352x16xi1>, vector<352x16xf32>
    %67 = tpu.concatenate %61, %39, %66 in 1 : vector<352x16xf32>, vector<352x16xf32>, vector<352x16xf32> -> vector<352x48xf32>
    %c0_27 = arith.constant 0 : index
    %c0_28 = arith.constant 0 : index
    %68 = vector.load %arg4[%c0_27, %c0_28] : memref<48x32xf32, #tpu.memory_space<vmem>>, vector<48x32xf32>
    %cst_29 = arith.constant dense<0.000000e+00> : vector<352x32xf32>
    %69 = tpu.matmul %67, %68, %cst_29 {dimension_numbers = #tpu.dot_dimension_numbers<[1], [0], [0], [1], [0, 0, 1, 1], [], []>} : vector<352x48xf32>, vector<48x32xf32>, vector<352x32xf32> -> vector<352x32xf32>
    %c0_30 = arith.constant 0 : index
    %c0_31 = arith.constant 0 : index
    %70 = vector.load %arg5[%c0_30, %c0_31] : memref<1x32xf32, #tpu.memory_space<vmem>>, vector<1x32xf32>
    %71 = vector.broadcast %70 : vector<1x32xf32> to vector<352x32xf32>
    %72 = arith.addf %69, %71 : vector<352x32xf32>
    %cst_32 = arith.constant 0.000000e+00 : f32
    %73 = vector.broadcast %cst_32 : f32 to vector<352x32xf32>
    %74 = arith.maximumf %72, %73 : vector<352x32xf32>
    %c351_i32_33 = arith.constant 351 : i32
    %75 = tpu.dynamic_rotate %74 by %c351_i32_33 dim 0 : vector<352x32xf32>, i32 -> vector<352x32xf32>
    %76 = arith.maximumf %74, %75 : vector<352x32xf32>
    %c0_34 = arith.constant 0 : index
    %c0_35 = arith.constant 0 : index
    %77 = vector.load %arg12[%c0_34, %c0_35] : memref<352x32xf32, #tpu.memory_space<vmem>>, vector<352x32xf32>
    tpu.vector_store %arg12[%c0_34, %c0_35], %76 {strides = array<i32>} : memref<352x32xf32, #tpu.memory_space<vmem>>, vector<352x32xf32>,
    %c0_36 = arith.constant 0 : index
    %c0_37 = arith.constant 0 : index
    %78 = tpu.strided_load %arg12[%c0_36, %c0_37] {strides = array<i32: 44, 1>} : memref<352x32xf32, #tpu.memory_space<vmem>>, vector<8x32xf32>
    %c0_38 = arith.constant 0 : index
    %c0_39 = arith.constant 0 : index
    %79 = vector.load %arg13[%c0_38, %c0_39] : memref<8x704xf32, #tpu.memory_space<vmem>>, vector<8x32xf32>
    tpu.vector_store %arg13[%c0_38, %c0_39], %78 {strides = array<i32>} : memref<8x704xf32, #tpu.memory_space<vmem>>, vector<8x32xf32>,
    %c2 = arith.constant 2 : index
    %c0_40 = arith.constant 0 : index
    %80 = tpu.strided_load %arg12[%c2, %c0_40] {strides = array<i32: 44, 1>} : memref<352x32xf32, #tpu.memory_space<vmem>>, vector<8x32xf32>
    %c0_41 = arith.constant 0 : index
    %c32 = arith.constant 32 : index
    %81 = vector.load %arg13[%c0_41, %c32] : memref<8x704xf32, #tpu.memory_space<vmem>>, vector<8x32xf32>
    tpu.vector_store %arg13[%c0_41, %c32], %80 {strides = array<i32>} : memref<8x704xf32, #tpu.memory_space<vmem>>, vector<8x32xf32>,
    %c4 = arith.constant 4 : index
    %c0_42 = arith.constant 0 : index
    %82 = tpu.strided_load %arg12[%c4, %c0_42] {strides = array<i32: 44, 1>} : memref<352x32xf32, #tpu.memory_space<vmem>>, vector<8x32xf32>
    %c0_43 = arith.constant 0 : index
    %c64 = arith.constant 64 : index
    %83 = vector.load %arg13[%c0_43, %c64] : memref<8x704xf32, #tpu.memory_space<vmem>>, vector<8x32xf32>
    tpu.vector_store %arg13[%c0_43, %c64], %82 {strides = array<i32>} : memref<8x704xf32, #tpu.memory_space<vmem>>, vector<8x32xf32>,
    %c6 = arith.constant 6 : index
    %c0_44 = arith.constant 0 : index
    %84 = tpu.strided_load %arg12[%c6, %c0_44] {strides = array<i32: 44, 1>} : memref<352x32xf32, #tpu.memory_space<vmem>>, vector<8x32xf32>
    %c0_45 = arith.constant 0 : index
    %c96 = arith.constant 96 : index
    %85 = vector.load %arg13[%c0_45, %c96] : memref<8x704xf32, #tpu.memory_space<vmem>>, vector<8x32xf32>
    tpu.vector_store %arg13[%c0_45, %c96], %84 {strides = array<i32>} : memref<8x704xf32, #tpu.memory_space<vmem>>, vector<8x32xf32>,
    %c8 = arith.constant 8 : index
    %c0_46 = arith.constant 0 : index
    %86 = tpu.strided_load %arg12[%c8, %c0_46] {strides = array<i32: 44, 1>} : memref<352x32xf32, #tpu.memory_space<vmem>>, vector<8x32xf32>
    %c0_47 = arith.constant 0 : index
    %c128 = arith.constant 128 : index
    %87 = vector.load %arg13[%c0_47, %c128] : memref<8x704xf32, #tpu.memory_space<vmem>>, vector<8x32xf32>
    tpu.vector_store %arg13[%c0_47, %c128], %86 {strides = array<i32>} : memref<8x704xf32, #tpu.memory_space<vmem>>, vector<8x32xf32>,
    %c10 = arith.constant 10 : index
    %c0_48 = arith.constant 0 : index
    %88 = tpu.strided_load %arg12[%c10, %c0_48] {strides = array<i32: 44, 1>} : memref<352x32xf32, #tpu.memory_space<vmem>>, vector<8x32xf32>
    %c0_49 = arith.constant 0 : index
    %c160 = arith.constant 160 : index
    %89 = vector.load %arg13[%c0_49, %c160] : memref<8x704xf32, #tpu.memory_space<vmem>>, vector<8x32xf32>
    tpu.vector_store %arg13[%c0_49, %c160], %88 {strides = array<i32>} : memref<8x704xf32, #tpu.memory_space<vmem>>, vector<8x32xf32>,
    %c12 = arith.constant 12 : index
    %c0_50 = arith.constant 0 : index
    %90 = tpu.strided_load %arg12[%c12, %c0_50] {strides = array<i32: 44, 1>} : memref<352x32xf32, #tpu.memory_space<vmem>>, vector<8x32xf32>
    %c0_51 = arith.constant 0 : index
    %c192 = arith.constant 192 : index
    %91 = vector.load %arg13[%c0_51, %c192] : memref<8x704xf32, #tpu.memory_space<vmem>>, vector<8x32xf32>
    tpu.vector_store %arg13[%c0_51, %c192], %90 {strides = array<i32>} : memref<8x704xf32, #tpu.memory_space<vmem>>, vector<8x32xf32>,
    %c14 = arith.constant 14 : index
    %c0_52 = arith.constant 0 : index
    %92 = tpu.strided_load %arg12[%c14, %c0_52] {strides = array<i32: 44, 1>} : memref<352x32xf32, #tpu.memory_space<vmem>>, vector<8x32xf32>
    %c0_53 = arith.constant 0 : index
    %c224 = arith.constant 224 : index
    %93 = vector.load %arg13[%c0_53, %c224] : memref<8x704xf32, #tpu.memory_space<vmem>>, vector<8x32xf32>
    tpu.vector_store %arg13[%c0_53, %c224], %92 {strides = array<i32>} : memref<8x704xf32, #tpu.memory_space<vmem>>, vector<8x32xf32>,
    %c16 = arith.constant 16 : index
    %c0_54 = arith.constant 0 : index
    %94 = tpu.strided_load %arg12[%c16, %c0_54] {strides = array<i32: 44, 1>} : memref<352x32xf32, #tpu.memory_space<vmem>>, vector<8x32xf32>
    %c0_55 = arith.constant 0 : index
    %c256 = arith.constant 256 : index
    %95 = vector.load %arg13[%c0_55, %c256] : memref<8x704xf32, #tpu.memory_space<vmem>>, vector<8x32xf32>
    tpu.vector_store %arg13[%c0_55, %c256], %94 {strides = array<i32>} : memref<8x704xf32, #tpu.memory_space<vmem>>, vector<8x32xf32>,
    %c18 = arith.constant 18 : index
    %c0_56 = arith.constant 0 : index
    %96 = tpu.strided_load %arg12[%c18, %c0_56] {strides = array<i32: 44, 1>} : memref<352x32xf32, #tpu.memory_space<vmem>>, vector<8x32xf32>
    %c0_57 = arith.constant 0 : index
    %c288 = arith.constant 288 : index
    %97 = vector.load %arg13[%c0_57, %c288] : memref<8x704xf32, #tpu.memory_space<vmem>>, vector<8x32xf32>
    tpu.vector_store %arg13[%c0_57, %c288], %96 {strides = array<i32>} : memref<8x704xf32, #tpu.memory_space<vmem>>, vector<8x32xf32>,
    %c20 = arith.constant 20 : index
    %c0_58 = arith.constant 0 : index
    %98 = tpu.strided_load %arg12[%c20, %c0_58] {strides = array<i32: 44, 1>} : memref<352x32xf32, #tpu.memory_space<vmem>>, vector<8x32xf32>
    %c0_59 = arith.constant 0 : index
    %c320 = arith.constant 320 : index
    %99 = vector.load %arg13[%c0_59, %c320] : memref<8x704xf32, #tpu.memory_space<vmem>>, vector<8x32xf32>
    tpu.vector_store %arg13[%c0_59, %c320], %98 {strides = array<i32>} : memref<8x704xf32, #tpu.memory_space<vmem>>, vector<8x32xf32>,
    %c22 = arith.constant 22 : index
    %c0_60 = arith.constant 0 : index
    %100 = tpu.strided_load %arg12[%c22, %c0_60] {strides = array<i32: 44, 1>} : memref<352x32xf32, #tpu.memory_space<vmem>>, vector<8x32xf32>
    %c0_61 = arith.constant 0 : index
    %c352 = arith.constant 352 : index
    %101 = vector.load %arg13[%c0_61, %c352] : memref<8x704xf32, #tpu.memory_space<vmem>>, vector<8x32xf32>
    tpu.vector_store %arg13[%c0_61, %c352], %100 {strides = array<i32>} : memref<8x704xf32, #tpu.memory_space<vmem>>, vector<8x32xf32>,
    %c24 = arith.constant 24 : index
    %c0_62 = arith.constant 0 : index
    %102 = tpu.strided_load %arg12[%c24, %c0_62] {strides = array<i32: 44, 1>} : memref<352x32xf32, #tpu.memory_space<vmem>>, vector<8x32xf32>
    %c0_63 = arith.constant 0 : index
    %c384 = arith.constant 384 : index
    %103 = vector.load %arg13[%c0_63, %c384] : memref<8x704xf32, #tpu.memory_space<vmem>>, vector<8x32xf32>
    tpu.vector_store %arg13[%c0_63, %c384], %102 {strides = array<i32>} : memref<8x704xf32, #tpu.memory_space<vmem>>, vector<8x32xf32>,
    %c26 = arith.constant 26 : index
    %c0_64 = arith.constant 0 : index
    %104 = tpu.strided_load %arg12[%c26, %c0_64] {strides = array<i32: 44, 1>} : memref<352x32xf32, #tpu.memory_space<vmem>>, vector<8x32xf32>
    %c0_65 = arith.constant 0 : index
    %c416 = arith.constant 416 : index
    %105 = vector.load %arg13[%c0_65, %c416] : memref<8x704xf32, #tpu.memory_space<vmem>>, vector<8x32xf32>
    tpu.vector_store %arg13[%c0_65, %c416], %104 {strides = array<i32>} : memref<8x704xf32, #tpu.memory_space<vmem>>, vector<8x32xf32>,
    %c28 = arith.constant 28 : index
    %c0_66 = arith.constant 0 : index
    %106 = tpu.strided_load %arg12[%c28, %c0_66] {strides = array<i32: 44, 1>} : memref<352x32xf32, #tpu.memory_space<vmem>>, vector<8x32xf32>
    %c0_67 = arith.constant 0 : index
    %c448 = arith.constant 448 : index
    %107 = vector.load %arg13[%c0_67, %c448] : memref<8x704xf32, #tpu.memory_space<vmem>>, vector<8x32xf32>
    tpu.vector_store %arg13[%c0_67, %c448], %106 {strides = array<i32>} : memref<8x704xf32, #tpu.memory_space<vmem>>, vector<8x32xf32>,
    %c30 = arith.constant 30 : index
    %c0_68 = arith.constant 0 : index
    %108 = tpu.strided_load %arg12[%c30, %c0_68] {strides = array<i32: 44, 1>} : memref<352x32xf32, #tpu.memory_space<vmem>>, vector<8x32xf32>
    %c0_69 = arith.constant 0 : index
    %c480 = arith.constant 480 : index
    %109 = vector.load %arg13[%c0_69, %c480] : memref<8x704xf32, #tpu.memory_space<vmem>>, vector<8x32xf32>
    tpu.vector_store %arg13[%c0_69, %c480], %108 {strides = array<i32>} : memref<8x704xf32, #tpu.memory_space<vmem>>, vector<8x32xf32>,
    %c32_70 = arith.constant 32 : index
    %c0_71 = arith.constant 0 : index
    %110 = tpu.strided_load %arg12[%c32_70, %c0_71] {strides = array<i32: 44, 1>} : memref<352x32xf32, #tpu.memory_space<vmem>>, vector<8x32xf32>
    %c0_72 = arith.constant 0 : index
    %c512 = arith.constant 512 : index
    %111 = vector.load %arg13[%c0_72, %c512] : memref<8x704xf32, #tpu.memory_space<vmem>>, vector<8x32xf32>
    tpu.vector_store %arg13[%c0_72, %c512], %110 {strides = array<i32>} : memref<8x704xf32, #tpu.memory_space<vmem>>, vector<8x32xf32>,
    %c34 = arith.constant 34 : index
    %c0_73 = arith.constant 0 : index
    %112 = tpu.strided_load %arg12[%c34, %c0_73] {strides = array<i32: 44, 1>} : memref<352x32xf32, #tpu.memory_space<vmem>>, vector<8x32xf32>
    %c0_74 = arith.constant 0 : index
    %c544 = arith.constant 544 : index
    %113 = vector.load %arg13[%c0_74, %c544] : memref<8x704xf32, #tpu.memory_space<vmem>>, vector<8x32xf32>
    tpu.vector_store %arg13[%c0_74, %c544], %112 {strides = array<i32>} : memref<8x704xf32, #tpu.memory_space<vmem>>, vector<8x32xf32>,
    %c36 = arith.constant 36 : index
    %c0_75 = arith.constant 0 : index
    %114 = tpu.strided_load %arg12[%c36, %c0_75] {strides = array<i32: 44, 1>} : memref<352x32xf32, #tpu.memory_space<vmem>>, vector<8x32xf32>
    %c0_76 = arith.constant 0 : index
    %c576 = arith.constant 576 : index
    %115 = vector.load %arg13[%c0_76, %c576] : memref<8x704xf32, #tpu.memory_space<vmem>>, vector<8x32xf32>
    tpu.vector_store %arg13[%c0_76, %c576], %114 {strides = array<i32>} : memref<8x704xf32, #tpu.memory_space<vmem>>, vector<8x32xf32>,
    %c38 = arith.constant 38 : index
    %c0_77 = arith.constant 0 : index
    %116 = tpu.strided_load %arg12[%c38, %c0_77] {strides = array<i32: 44, 1>} : memref<352x32xf32, #tpu.memory_space<vmem>>, vector<8x32xf32>
    %c0_78 = arith.constant 0 : index
    %c608 = arith.constant 608 : index
    %117 = vector.load %arg13[%c0_78, %c608] : memref<8x704xf32, #tpu.memory_space<vmem>>, vector<8x32xf32>
    tpu.vector_store %arg13[%c0_78, %c608], %116 {strides = array<i32>} : memref<8x704xf32, #tpu.memory_space<vmem>>, vector<8x32xf32>,
    %c40 = arith.constant 40 : index
    %c0_79 = arith.constant 0 : index
    %118 = tpu.strided_load %arg12[%c40, %c0_79] {strides = array<i32: 44, 1>} : memref<352x32xf32, #tpu.memory_space<vmem>>, vector<8x32xf32>
    %c0_80 = arith.constant 0 : index
    %c640 = arith.constant 640 : index
    %119 = vector.load %arg13[%c0_80, %c640] : memref<8x704xf32, #tpu.memory_space<vmem>>, vector<8x32xf32>
    tpu.vector_store %arg13[%c0_80, %c640], %118 {strides = array<i32>} : memref<8x704xf32, #tpu.memory_space<vmem>>, vector<8x32xf32>,
    %c42 = arith.constant 42 : index
    %c0_81 = arith.constant 0 : index
    %120 = tpu.strided_load %arg12[%c42, %c0_81] {strides = array<i32: 44, 1>} : memref<352x32xf32, #tpu.memory_space<vmem>>, vector<8x32xf32>
    %c0_82 = arith.constant 0 : index
    %c672 = arith.constant 672 : index
    %121 = vector.load %arg13[%c0_82, %c672] : memref<8x704xf32, #tpu.memory_space<vmem>>, vector<8x32xf32>
    tpu.vector_store %arg13[%c0_82, %c672], %120 {strides = array<i32>} : memref<8x704xf32, #tpu.memory_space<vmem>>, vector<8x32xf32>,
    %c0_83 = arith.constant 0 : index
    %c0_84 = arith.constant 0 : index
    %122 = vector.load %arg13[%c0_83, %c0_84] : memref<8x704xf32, #tpu.memory_space<vmem>>, vector<8x704xf32>
    %c0_85 = arith.constant 0 : index
    %c0_86 = arith.constant 0 : index
    %123 = vector.load %arg6[%c0_85, %c0_86] : memref<704x128xf32, #tpu.memory_space<vmem>>, vector<704x128xf32>
    %cst_87 = arith.constant dense<0.000000e+00> : vector<8x128xf32>
    %124 = tpu.matmul %122, %123, %cst_87 {dimension_numbers = #tpu.dot_dimension_numbers<[1], [0], [0], [1], [0, 0, 1, 1], [], []>} : vector<8x704xf32>, vector<704x128xf32>, vector<8x128xf32> -> vector<8x128xf32>
    %c0_88 = arith.constant 0 : index
    %c0_89 = arith.constant 0 : index
    %125 = vector.load %arg7[%c0_88, %c0_89] : memref<1x128xf32, #tpu.memory_space<vmem>>, vector<1x128xf32>
    %126 = vector.broadcast %125 : vector<1x128xf32> to vector<8x128xf32>
    %127 = arith.addf %124, %126 : vector<8x128xf32>
    %cst_90 = arith.constant 0.000000e+00 : f32
    %128 = vector.broadcast %cst_90 : f32 to vector<8x128xf32>
    %129 = arith.maximumf %127, %128 : vector<8x128xf32>
    %c0_91 = arith.constant 0 : index
    %c0_92 = arith.constant 0 : index
    %130 = vector.load %arg8[%c0_91, %c0_92] : memref<128x128xf32, #tpu.memory_space<vmem>>, vector<128x128xf32>
    %cst_93 = arith.constant dense<0.000000e+00> : vector<8x128xf32>
    %131 = tpu.matmul %129, %130, %cst_93 {dimension_numbers = #tpu.dot_dimension_numbers<[1], [0], [0], [1], [0, 0, 1, 1], [], []>} : vector<8x128xf32>, vector<128x128xf32>, vector<8x128xf32> -> vector<8x128xf32>
    %c0_94 = arith.constant 0 : index
    %c0_95 = arith.constant 0 : index
    %132 = vector.load %arg9[%c0_94, %c0_95] : memref<1x128xf32, #tpu.memory_space<vmem>>, vector<1x128xf32>
    %133 = vector.broadcast %132 : vector<1x128xf32> to vector<8x128xf32>
    %134 = arith.addf %131, %133 : vector<8x128xf32>
    %c0_96 = arith.constant 0 : index
    %c0_97 = arith.constant 0 : index
    %135 = vector.load %arg10[%c0_96, %c0_97] : memref<8x128xf32, #tpu.memory_space<vmem>>, vector<8x128xf32>
    tpu.vector_store %arg10[%c0_96, %c0_97], %134 {strides = array<i32>} : memref<8x128xf32, #tpu.memory_space<vmem>>, vector<8x128xf32>,
    return
  }
  func.func @transform_0(%arg0: i32) -> (i32, i32) {
    %c0_i32 = arith.constant 0 : i32
    %c0_i32_0 = arith.constant 0 : i32
    return %arg0, %c0_i32 : i32, i32
  }
  func.func @transform_1(%arg0: i32) -> (i32, i32) {
    %c0_i32 = arith.constant 0 : i32
    %c0_i32_0 = arith.constant 0 : i32
    %c0_i32_1 = arith.constant 0 : i32
    return %c0_i32, %c0_i32_0 : i32, i32
  }
  func.func @transform_2(%arg0: i32) -> (i32, i32) {
    %c0_i32 = arith.constant 0 : i32
    %c0_i32_0 = arith.constant 0 : i32
    %c0_i32_1 = arith.constant 0 : i32
    return %c0_i32, %c0_i32_0 : i32, i32
  }
  func.func @transform_3(%arg0: i32) -> (i32, i32) {
    %c0_i32 = arith.constant 0 : i32
    %c0_i32_0 = arith.constant 0 : i32
    %c0_i32_1 = arith.constant 0 : i32
    return %c0_i32, %c0_i32_0 : i32, i32
  }
  func.func @transform_4(%arg0: i32) -> (i32, i32) {
    %c0_i32 = arith.constant 0 : i32
    %c0_i32_0 = arith.constant 0 : i32
    %c0_i32_1 = arith.constant 0 : i32
    return %c0_i32, %c0_i32_0 : i32, i32
  }
  func.func @transform_5(%arg0: i32) -> (i32, i32) {
    %c0_i32 = arith.constant 0 : i32
    %c0_i32_0 = arith.constant 0 : i32
    %c0_i32_1 = arith.constant 0 : i32
    return %c0_i32, %c0_i32_0 : i32, i32
  }
  func.func @transform_6(%arg0: i32) -> (i32, i32) {
    %c0_i32 = arith.constant 0 : i32
    %c0_i32_0 = arith.constant 0 : i32
    %c0_i32_1 = arith.constant 0 : i32
    return %c0_i32, %c0_i32_0 : i32, i32
  }
  func.func @transform_7(%arg0: i32) -> (i32, i32) {
    %c0_i32 = arith.constant 0 : i32
    %c0_i32_0 = arith.constant 0 : i32
    %c0_i32_1 = arith.constant 0 : i32
    return %c0_i32, %c0_i32_0 : i32, i32
  }
  func.func @transform_8(%arg0: i32) -> (i32, i32) {
    %c0_i32 = arith.constant 0 : i32
    %c0_i32_0 = arith.constant 0 : i32
    %c0_i32_1 = arith.constant 0 : i32
    return %c0_i32, %c0_i32_0 : i32, i32
  }
  func.func @transform_9(%arg0: i32) -> (i32, i32) {
    %c0_i32 = arith.constant 0 : i32
    %c0_i32_0 = arith.constant 0 : i32
    return %arg0, %c0_i32 : i32, i32
  }
}

</mosaic_0001>

<llo_original>
// kernel: tpu_custom_call.1
$region0: #{tpu_custom_call.1}
  #allocation0 [shape = 'u32[]', space=smem, size = 0x4, offset = 0x4, fixed_abs, tag = 'smem constant byte address 0x4 - core index']
  #allocation1 [shape = 'u32[144,128]{1,0:T(1,128)}', space=vmem, size = 0x12000, scoped, tag = 'internal scratch']
  #allocation2 [shape = 'f32[704,16]{1,0:T(8,128)}', space=vmem, size = 0x58000, scoped, tag = 'scratch operand']
  #allocation3 [shape = 'f32[352,32]{1,0:T(8,128)}', space=vmem, size = 0x2c000, scoped, tag = 'scratch operand']
  #allocation4 [shape = 'f32[8,704]{1,0:T(8,128)}', space=vmem, size = 0x6000, scoped, tag = 'scratch operand']
  %s0 = inlined_call_operand.vmem [shape: f32[704,3], index: 0, kind: input, shape index: {}]
  %s1 = inlined_call_operand.vmem [shape: f32[9,16], index: 1, kind: input, shape index: {}]
  %s2 = inlined_call_operand.vmem [shape: f32[1,16], index: 2, kind: input, shape index: {}]
  %s3 = inlined_call_operand.vmem [shape: f32[48,32], index: 3, kind: input, shape index: {}]
  %s4 = inlined_call_operand.vmem [shape: f32[1,32], index: 4, kind: input, shape index: {}]
  %s5 = inlined_call_operand.vmem [shape: f32[704,128], index: 5, kind: input, shape index: {}]
  %s6 = inlined_call_operand.vmem [shape: f32[1,128], index: 6, kind: input, shape index: {}]
  %s7 = inlined_call_operand.hbm [shape: f32[128,128], index: 7, kind: input, shape index: {}]
  %s8 = inlined_call_operand.vmem [shape: f32[1,128], index: 8, kind: input, shape index: {}]
  %s9 = inlined_call_operand.hbm [shape: f32[8,128], index: 9, kind: output, shape index: {}]
  %s10 = sld [smem:[#allocation0]]
  $region50: #{tpu_custom_call.1} parent=0
    _
  %s12 = ssub.s32 1, %s10
  %s13 = scalar_select 0, %s12, %s10
  $region1: #{tpu_custom_call.1} parent=0
    #allocation5 [shape = 'u8[65536]{0}', space=vmem, size = 0x10000, scoped, tag = 'input window, operand 7, single buffered']
    #allocation6 [shape = 's32[1]{0}', space=sflag, size = 0x4, scoped, tag = 'scoped memory for tpu_custom_call.1']
    #allocation7 [shape = 's32[1]{0}', space=sflag, size = 0x4, scoped, tag = 'scoped memory for tpu_custom_call.1']
    #allocation8 [shape = 'u8[4096]{0}', space=vmem, size = 0x1000, scoped, tag = 'output window, operand 0, single buffered']
    %14 = vsyncpa [#allocation6], 0
    %15 = vsyncpa [#allocation7], 0
    // Predicated region
    $region2: #{tpu_custom_call.1} parent=1 // pred_check
      _
    $region3: #{tpu_custom_call.1} parent=1 // pred_check_branch
      %17 = sbr.rel (0) target = $region5
    $region4: #{tpu_custom_call.1} parent=1 // pred_region
      _
    $region5: #{tpu_custom_call.1} parent=1 // pred_fallthru
      _
    // Predicated region
    $region6: #{tpu_custom_call.1} parent=1 // pred_check
      _
    $region7: #{tpu_custom_call.1} parent=1 // pred_check_branch
      %19 = sbr.rel (0) target = $region9
    $region8: #{tpu_custom_call.1} parent=1 // pred_region
      _
    $region9: #{tpu_custom_call.1} parent=1 // pred_fallthru
      _
    // Predicated region
    $region10: #{tpu_custom_call.1} parent=1 // pred_check
      _
    $region11: #{tpu_custom_call.1} parent=1 // pred_check_branch
      %21 = sbr.rel (0) target = $region13
    $region12: #{tpu_custom_call.1} parent=1 // pred_region
      _
    $region13: #{tpu_custom_call.1} parent=1 // pred_fallthru
      _
    // Predicated region
    $region14: #{tpu_custom_call.1} parent=1 // pred_check
      _
    $region15: #{tpu_custom_call.1} parent=1 // pred_check_branch
      %23 = sbr.rel (0) target = $region17
    $region16: #{tpu_custom_call.1} parent=1 // pred_region
      _
    $region17: #{tpu_custom_call.1} parent=1 // pred_fallthru
      _
    // Predicated region
    $region18: #{tpu_custom_call.1} parent=1 // pred_check
      _
    $region19: #{tpu_custom_call.1} parent=1 // pred_check_branch
      %25 = sbr.rel (0) target = $region21
    $region20: #{tpu_custom_call.1} parent=1 // pred_region
      _
    $region21: #{tpu_custom_call.1} parent=1 // pred_fallthru
      _
    // Predicated region
    $region22: #{tpu_custom_call.1} parent=1 // pred_check
      _
    $region23: #{tpu_custom_call.1} parent=1 // pred_check_branch
      %27 = sbr.rel (0) target = $region25
    $region24: #{tpu_custom_call.1} parent=1 // pred_region
      _
    $region25: #{tpu_custom_call.1} parent=1 // pred_fallthru
      _
    // Predicated region
    $region26: #{tpu_custom_call.1} parent=1 // pred_check
      _
    $region27: #{tpu_custom_call.1} parent=1 // pred_check_branch
      %29 = sbr.rel (0) target = $region29
    $region28: #{tpu_custom_call.1} parent=1 // pred_region
      _
    $region29: #{tpu_custom_call.1} parent=1 // pred_fallthru
      _
    // Predicated region
    $region30: #{tpu_custom_call.1} parent=1 // pred_check
      _
    $region31: #{tpu_custom_call.1} parent=1 // pred_check_branch
      %31 = sbr.rel (0) target = $region33
    $region32: #{tpu_custom_call.1} parent=1 // pred_region
      %s33 = ssub.s32 2048, 2048
      %34 = vsyncadd [#allocation6], %s33
      %s35 = sshll.u32 [#allocation5], 4
      %s36 = int_to_ptr.vmem [resolvable:$true] %s35
      %41 = dma.hbm_to_vmem [thread:$0]  %s7, 2048, %s36, [#allocation6], 128, 128, 8
    $region33: #{tpu_custom_call.1} parent=1 // pred_fallthru
      _
    // Predicated region
    $region34: #{tpu_custom_call.1} parent=1 // pred_check
      _
    $region35: #{tpu_custom_call.1} parent=1 // pred_check_branch
      %43 = sbr.rel (0) target = $region37
    $region36: #{tpu_custom_call.1} parent=1 // pred_region
      _
    $region37: #{tpu_custom_call.1} parent=1 // pred_fallthru
      _
    // Predicated region
    $region38: #{tpu_custom_call.1} parent=1 // pred_check
      _
    $region39: #{tpu_custom_call.1} parent=1 // pred_check_branch
      %45 = sbr.rel (0) target = $region41
    $region40: #{tpu_custom_call.1} parent=1 // pred_region
      %46 = dma.done [#allocation6], 2048
    $region41: #{tpu_custom_call.1} parent=1 // pred_fallthru
      _
    %v47 = vld [vmem:[%s0] sm:$0xff]
    %v48 = vld [vmem:[%s0 + $0x8] sm:$0xff]
    %v49 = vld [vmem:[%s0 + $0x10] sm:$0xff]
    %v50 = vld [vmem:[%s0 + $0x18] sm:$0xff]
    %v51 = vld [vmem:[%s0 + $0x20] sm:$0xff]
    %v52 = vld [vmem:[%s0 + $0x28] sm:$0xff]
    %v53 = vld [vmem:[%s0 + $0x30] sm:$0xff]
    %v54 = vld [vmem:[%s0 + $0x38] sm:$0xff]
    %v55 = vld [vmem:[%s0 + $0x40] sm:$0xff]
    %v56 = vld [vmem:[%s0 + $0x48] sm:$0xff]
    %v57 = vld [vmem:[%s0 + $0x50] sm:$0xff]
    %v58 = vld [vmem:[%s0 + $0x58] sm:$0xff]
    %v59 = vld [vmem:[%s0 + $0x60] sm:$0xff]
    %v60 = vld [vmem:[%s0 + $0x68] sm:$0xff]
    %v61 = vld [vmem:[%s0 + $0x70] sm:$0xff]
    %v62 = vld [vmem:[%s0 + $0x78] sm:$0xff]
    %v63 = vld [vmem:[%s0 + $0x80] sm:$0xff]
    %v64 = vld [vmem:[%s0 + $0x88] sm:$0xff]
    %v65 = vld [vmem:[%s0 + $0x90] sm:$0xff]
    %v66 = vld [vmem:[%s0 + $0x98] sm:$0xff]
    %v67 = vld [vmem:[%s0 + $0xa0] sm:$0xff]
    %v68 = vld [vmem:[%s0 + $0xa8] sm:$0xff]
    %v69 = vld [vmem:[%s0 + $0xb0] sm:$0xff]
    %v70 = vld [vmem:[%s0 + $0xb8] sm:$0xff]
    %v71 = vld [vmem:[%s0 + $0xc0] sm:$0xff]
    %v72 = vld [vmem:[%s0 + $0xc8] sm:$0xff]
    %v73 = vld [vmem:[%s0 + $0xd0] sm:$0xff]
    %v74 = vld [vmem:[%s0 + $0xd8] sm:$0xff]
    %v75 = vld [vmem:[%s0 + $0xe0] sm:$0xff]
    %v76 = vld [vmem:[%s0 + $0xe8] sm:$0xff]
    %v77 = vld [vmem:[%s0 + $0xf0] sm:$0xff]
    %v78 = vld [vmem:[%s0 + $0xf8] sm:$0xff]
    %v79 = vld [vmem:[%s0 + $0x100] sm:$0xff]
    %v80 = vld [vmem:[%s0 + $0x108] sm:$0xff]
    %v81 = vld [vmem:[%s0 + $0x110] sm:$0xff]
    %v82 = vld [vmem:[%s0 + $0x118] sm:$0xff]
    %v83 = vld [vmem:[%s0 + $0x120] sm:$0xff]
    %v84 = vld [vmem:[%s0 + $0x128] sm:$0xff]
    %v85 = vld [vmem:[%s0 + $0x130] sm:$0xff]
    %v86 = vld [vmem:[%s0 + $0x138] sm:$0xff]
    %v87 = vld [vmem:[%s0 + $0x140] sm:$0xff]
    %v88 = vld [vmem:[%s0 + $0x148] sm:$0xff]
    %v89 = vld [vmem:[%s0 + $0x150] sm:$0xff]
    %v90 = vld [vmem:[%s0 + $0x158] sm:$0xff]
    %v91 = vld [vmem:[%s0 + $0x160] sm:$0xff]
    %v92 = vld [vmem:[%s0 + $0x168] sm:$0xff]
    %v93 = vld [vmem:[%s0 + $0x170] sm:$0xff]
    %v94 = vld [vmem:[%s0 + $0x178] sm:$0xff]
    %v95 = vld [vmem:[%s0 + $0x180] sm:$0xff]
    %v96 = vld [vmem:[%s0 + $0x188] sm:$0xff]
    %v97 = vld [vmem:[%s0 + $0x190] sm:$0xff]
    %v98 = vld [vmem:[%s0 + $0x198] sm:$0xff]
    %v99 = vld [vmem:[%s0 + $0x1a0] sm:$0xff]
    %v100 = vld [vmem:[%s0 + $0x1a8] sm:$0xff]
    %v101 = vld [vmem:[%s0 + $0x1b0] sm:$0xff]
    %v102 = vld [vmem:[%s0 + $0x1b8] sm:$0xff]
    %v103 = vld [vmem:[%s0 + $0x1c0] sm:$0xff]
    %v104 = vld [vmem:[%s0 + $0x1c8] sm:$0xff]
    %v105 = vld [vmem:[%s0 + $0x1d0] sm:$0xff]
    %v106 = vld [vmem:[%s0 + $0x1d8] sm:$0xff]
    %v107 = vld [vmem:[%s0 + $0x1e0] sm:$0xff]
    %v108 = vld [vmem:[%s0 + $0x1e8] sm:$0xff]
    %v109 = vld [vmem:[%s0 + $0x1f0] sm:$0xff]
    %v110 = vld [vmem:[%s0 + $0x1f8] sm:$0xff]
    %v111 = vld [vmem:[%s0 + $0x200] sm:$0xff]
    %v112 = vld [vmem:[%s0 + $0x208] sm:$0xff]
    %v113 = vld [vmem:[%s0 + $0x210] sm:$0xff]
    %v114 = vld [vmem:[%s0 + $0x218] sm:$0xff]
    %v115 = vld [vmem:[%s0 + $0x220] sm:$0xff]
    %v116 = vld [vmem:[%s0 + $0x228] sm:$0xff]
    %v117 = vld [vmem:[%s0 + $0x230] sm:$0xff]
    %v118 = vld [vmem:[%s0 + $0x238] sm:$0xff]
    %v119 = vld [vmem:[%s0 + $0x240] sm:$0xff]
    %v120 = vld [vmem:[%s0 + $0x248] sm:$0xff]
    %v121 = vld [vmem:[%s0 + $0x250] sm:$0xff]
    %v122 = vld [vmem:[%s0 + $0x258] sm:$0xff]
    %v123 = vld [vmem:[%s0 + $0x260] sm:$0xff]
    %v124 = vld [vmem:[%s0 + $0x268] sm:$0xff]
    %v125 = vld [vmem:[%s0 + $0x270] sm:$0xff]
    %v126 = vld [vmem:[%s0 + $0x278] sm:$0xff]
    %v127 = vld [vmem:[%s0 + $0x280] sm:$0xff]
    %v128 = vld [vmem:[%s0 + $0x288] sm:$0xff]
    %v129 = vld [vmem:[%s0 + $0x290] sm:$0xff]
    %v130 = vld [vmem:[%s0 + $0x298] sm:$0xff]
    %v131 = vld [vmem:[%s0 + $0x2a0] sm:$0xff]
    %v132 = vld [vmem:[%s0 + $0x2a8] sm:$0xff]
    %v133 = vld [vmem:[%s0 + $0x2b0] sm:$0xff]
    %v134 = vld [vmem:[%s0 + $0x2b8] sm:$0xff]
    %v135 = vlaneseq
    %v136 = vshrl.u32 %v135, 7
    %v137 = vadd.s32 %v136, 8
    %v138 = vadd.s32 %v136, 16
    %v139 = vadd.s32 %v136, 24
    %v140 = vadd.s32 %v136, 32
    %v141 = vadd.s32 %v136, 40
    %v142 = vadd.s32 %v136, 48
    %v143 = vadd.s32 %v136, 56
    %v144 = vadd.s32 %v136, 64
    %v145 = vadd.s32 %v136, 72
    %v146 = vadd.s32 %v136, 80
    %v147 = vadd.s32 %v136, 88
    %v148 = vadd.s32 %v136, 96
    %v149 = vadd.s32 %v136, 104
    %v150 = vadd.s32 %v136, 112
    %v151 = vadd.s32 %v136, 120
    %v152 = vadd.s32 %v136, 128
    %v153 = vadd.s32 %v136, 136
    %v154 = vadd.s32 %v136, 144
    %v155 = vadd.s32 %v136, 152
    %v156 = vadd.s32 %v136, 160
    %v157 = vadd.s32 %v136, 168
    %v158 = vadd.s32 %v136, 176
    %v159 = vadd.s32 %v136, 184
    %v160 = vadd.s32 %v136, 192
    %v161 = vadd.s32 %v136, 200
    %v162 = vadd.s32 %v136, 208
    %v163 = vadd.s32 %v136, 216
    %v164 = vadd.s32 %v136, 224
    %v165 = vadd.s32 %v136, 232
    %v166 = vadd.s32 %v136, 240
    %v167 = vadd.s32 %v136, 248
    %v168 = vadd.s32 %v136, 256
    %v169 = vadd.s32 %v136, 264
    %v170 = vadd.s32 %v136, 272
    %v171 = vadd.s32 %v136, 280
    %v172 = vadd.s32 %v136, 288
    %v173 = vadd.s32 %v136, 296
    %v174 = vadd.s32 %v136, 304
    %v175 = vadd.s32 %v136, 312
    %v176 = vadd.s32 %v136, 320
    %v177 = vadd.s32 %v136, 328
    %v178 = vadd.s32 %v136, 336
    %v179 = vadd.s32 %v136, 344
    %v180 = vadd.s32 %v136, 352
    %v181 = vadd.s32 %v136, 360
    %v182 = vadd.s32 %v136, 368
    %v183 = vadd.s32 %v136, 376
    %v184 = vadd.s32 %v136, 384
    %v185 = vadd.s32 %v136, 392
    %v186 = vadd.s32 %v136, 400
    %v187 = vadd.s32 %v136, 408
    %v188 = vadd.s32 %v136, 416
    %v189 = vadd.s32 %v136, 424
    %v190 = vadd.s32 %v136, 432
    %v191 = vadd.s32 %v136, 440
    %v192 = vadd.s32 %v136, 448
    %v193 = vadd.s32 %v136, 456
    %v194 = vadd.s32 %v136, 464
    %v195 = vadd.s32 %v136, 472
    %v196 = vadd.s32 %v136, 480
    %v197 = vadd.s32 %v136, 488
    %v198 = vadd.s32 %v136, 496
    %v199 = vadd.s32 %v136, 504
    %v200 = vadd.s32 %v136, 512
    %v201 = vadd.s32 %v136, 520
    %v202 = vadd.s32 %v136, 528
    %v203 = vadd.s32 %v136, 536
    %v204 = vadd.s32 %v136, 544
    %v205 = vadd.s32 %v136, 552
    %v206 = vadd.s32 %v136, 560
    %v207 = vadd.s32 %v136, 568
    %v208 = vadd.s32 %v136, 576
    %v209 = vadd.s32 %v136, 584
    %v210 = vadd.s32 %v136, 592
    %v211 = vadd.s32 %v136, 600
    %v212 = vadd.s32 %v136, 608
    %v213 = vadd.s32 %v136, 616
    %v214 = vadd.s32 %v136, 624
    %v215 = vadd.s32 %v136, 632
    %v216 = vadd.s32 %v136, 640
    %v217 = vadd.s32 %v136, 648
    %v218 = vadd.s32 %v136, 656
    %v219 = vadd.s32 %v136, 664
    %v220 = vadd.s32 %v136, 672
    %v221 = vadd.s32 %v136, 680
    %v222 = vadd.s32 %v136, 688
    %v223 = vadd.s32 %v136, 696
    %vm224 = vcmp.lt.s32.totalorder %v136, 0
    %v225 = vsub.s32 0, %v136
    %v226 = vsel %vm224, %v225, %v136
    %v227 = vmul.u32.u64.compose %v226, 3123612579
    %v228 = vextract.low.u32 %v227
    %v229 = vextract.high.u32 %v227
    %v230 = vshrl.u32 %v229, 6
    %v231 = vmul.u32 %v230, 88
    %v232 = vsub.s32 %v226, %v231
    %v233 = vsub.s32 0, %v232
    %v234 = vsel %vm224, %v233, %v232
    %vm235 = vcmp.lt.s32.totalorder %v137, 0
    %v236 = vsub.s32 0, %v137
    %v237 = vsel %vm235, %v236, %v137
    %v238 = vmul.u32.u64.compose %v237, 3123612579
    %v239 = vextract.low.u32 %v238
    %v240 = vextract.high.u32 %v238
    %v241 = vshrl.u32 %v240, 6
    %v242 = vmul.u32 %v241, 88
    %v243 = vsub.s32 %v237, %v242
    %v244 = vsub.s32 0, %v243
    %v245 = vsel %vm235, %v244, %v243
    %vm246 = vcmp.lt.s32.totalorder %v138, 0
    %v247 = vsub.s32 0, %v138
    %v248 = vsel %vm246, %v247, %v138
    %v249 = vmul.u32.u64.compose %v248, 3123612579
    %v250 = vextract.low.u32 %v249
    %v251 = vextract.high.u32 %v249
    %v252 = vshrl.u32 %v251, 6
    %v253 = vmul.u32 %v252, 88
    %v254 = vsub.s32 %v248, %v253
    %v255 = vsub.s32 0, %v254
    %v256 = vsel %vm246, %v255, %v254
    %vm257 = vcmp.lt.s32.totalorder %v139, 0
    %v258 = vsub.s32 0, %v139
    %v259 = vsel %vm257, %v258, %v139
    %v260 = vmul.u32.u64.compose %v259, 3123612579
    %v261 = vextract.low.u32 %v260
    %v262 = vextract.high.u32 %v260
    %v263 = vshrl.u32 %v262, 6
    %v264 = vmul.u32 %v263, 88
    %v265 = vsub.s32 %v259, %v264
    %v266 = vsub.s32 0, %v265
    %v267 = vsel %vm257, %v266, %v265
    %vm268 = vcmp.lt.s32.totalorder %v140, 0
    %v269 = vsub.s32 0, %v140
    %v270 = vsel %vm268, %v269, %v140
    %v271 = vmul.u32.u64.compose %v270, 3123612579
    %v272 = vextract.low.u32 %v271
    %v273 = vextract.high.u32 %v271
    %v274 = vshrl.u32 %v273, 6
    %v275 = vmul.u32 %v274, 88
    %v276 = vsub.s32 %v270, %v275
    %v277 = vsub.s32 0, %v276
    %v278 = vsel %vm268, %v277, %v276
    %vm279 = vcmp.lt.s32.totalorder %v141, 0
    %v280 = vsub.s32 0, %v141
    %v281 = vsel %vm279, %v280, %v141
    %v282 = vmul.u32.u64.compose %v281, 3123612579
    %v283 = vextract.low.u32 %v282
    %v284 = vextract.high.u32 %v282
    %v285 = vshrl.u32 %v284, 6
    %v286 = vmul.u32 %v285, 88
    %v287 = vsub.s32 %v281, %v286
    %v288 = vsub.s32 0, %v287
    %v289 = vsel %vm279, %v288, %v287
    %vm290 = vcmp.lt.s32.totalorder %v142, 0
    %v291 = vsub.s32 0, %v142
    %v292 = vsel %vm290, %v291, %v142
    %v293 = vmul.u32.u64.compose %v292, 3123612579
    %v294 = vextract.low.u32 %v293
    %v295 = vextract.high.u32 %v293
    %v296 = vshrl.u32 %v295, 6
    %v297 = vmul.u32 %v296, 88
    %v298 = vsub.s32 %v292, %v297
    %v299 = vsub.s32 0, %v298
    %v300 = vsel %vm290, %v299, %v298
    %vm301 = vcmp.lt.s32.totalorder %v143, 0
    %v302 = vsub.s32 0, %v143
    %v303 = vsel %vm301, %v302, %v143
    %v304 = vmul.u32.u64.compose %v303, 3123612579
    %v305 = vextract.low.u32 %v304
    %v306 = vextract.high.u32 %v304
    %v307 = vshrl.u32 %v306, 6
    %v308 = vmul.u32 %v307, 88
    %v309 = vsub.s32 %v303, %v308
    %v310 = vsub.s32 0, %v309
    %v311 = vsel %vm301, %v310, %v309
    %vm312 = vcmp.lt.s32.totalorder %v144, 0
    %v313 = vsub.s32 0, %v144
    %v314 = vsel %vm312, %v313, %v144
    %v315 = vmul.u32.u64.compose %v314, 3123612579
    %v316 = vextract.low.u32 %v315
    %v317 = vextract.high.u32 %v315
    %v318 = vshrl.u32 %v317, 6
    %v319 = vmul.u32 %v318, 88
    %v320 = vsub.s32 %v314, %v319
    %v321 = vsub.s32 0, %v320
    %v322 = vsel %vm312, %v321, %v320
    %vm323 = vcmp.lt.s32.totalorder %v145, 0
    %v324 = vsub.s32 0, %v145
    %v325 = vsel %vm323, %v324, %v145
    %v326 = vmul.u32.u64.compose %v325, 3123612579
    %v327 = vextract.low.u32 %v326
    %v328 = vextract.high.u32 %v326
    %v329 = vshrl.u32 %v328, 6
    %v330 = vmul.u32 %v329, 88
    %v331 = vsub.s32 %v325, %v330
    %v332 = vsub.s32 0, %v331
    %v333 = vsel %vm323, %v332, %v331
    %vm334 = vcmp.lt.s32.totalorder %v146, 0
    %v335 = vsub.s32 0, %v146
    %v336 = vsel %vm334, %v335, %v146
    %v337 = vmul.u32.u64.compose %v336, 3123612579
    %v338 = vextract.low.u32 %v337
    %v339 = vextract.high.u32 %v337
    %v340 = vshrl.u32 %v339, 6
    %v341 = vmul.u32 %v340, 88
    %v342 = vsub.s32 %v336, %v341
    %v343 = vsub.s32 0, %v342
    %v344 = vsel %vm334, %v343, %v342
    %vm345 = vcmp.lt.s32.totalorder %v147, 0
    %v346 = vsub.s32 0, %v147
    %v347 = vsel %vm345, %v346, %v147
    %v348 = vmul.u32.u64.compose %v347, 3123612579
    %v349 = vextract.low.u32 %v348
    %v350 = vextract.high.u32 %v348
    %v351 = vshrl.u32 %v350, 6
    %v352 = vmul.u32 %v351, 88
    %v353 = vsub.s32 %v347, %v352
    %v354 = vsub.s32 0, %v353
    %v355 = vsel %vm345, %v354, %v353
    %vm356 = vcmp.lt.s32.totalorder %v148, 0
    %v357 = vsub.s32 0, %v148
    %v358 = vsel %vm356, %v357, %v148
    %v359 = vmul.u32.u64.compose %v358, 3123612579
    %v360 = vextract.low.u32 %v359
    %v361 = vextract.high.u32 %v359
    %v362 = vshrl.u32 %v361, 6
    %v363 = vmul.u32 %v362, 88
    %v364 = vsub.s32 %v358, %v363
    %v365 = vsub.s32 0, %v364
    %v366 = vsel %vm356, %v365, %v364
    %vm367 = vcmp.lt.s32.totalorder %v149, 0
    %v368 = vsub.s32 0, %v149
    %v369 = vsel %vm367, %v368, %v149
    %v370 = vmul.u32.u64.compose %v369, 3123612579
    %v371 = vextract.low.u32 %v370
    %v372 = vextract.high.u32 %v370
    %v373 = vshrl.u32 %v372, 6
    %v374 = vmul.u32 %v373, 88
    %v375 = vsub.s32 %v369, %v374
    %v376 = vsub.s32 0, %v375
    %v377 = vsel %vm367, %v376, %v375
    %vm378 = vcmp.lt.s32.totalorder %v150, 0
    %v379 = vsub.s32 0, %v150
    %v380 = vsel %vm378, %v379, %v150
    %v381 = vmul.u32.u64.compose %v380, 3123612579
    %v382 = vextract.low.u32 %v381
    %v383 = vextract.high.u32 %v381
    %v384 = vshrl.u32 %v383, 6
    %v385 = vmul.u32 %v384, 88
    %v386 = vsub.s32 %v380, %v385
    %v387 = vsub.s32 0, %v386
    %v388 = vsel %vm378, %v387, %v386
    %vm389 = vcmp.lt.s32.totalorder %v151, 0
    %v390 = vsub.s32 0, %v151
    %v391 = vsel %vm389, %v390, %v151
    %v392 = vmul.u32.u64.compose %v391, 3123612579
    %v393 = vextract.low.u32 %v392
    %v394 = vextract.high.u32 %v392
    %v395 = vshrl.u32 %v394, 6
    %v396 = vmul.u32 %v395, 88
    %v397 = vsub.s32 %v391, %v396
    %v398 = vsub.s32 0, %v397
    %v399 = vsel %vm389, %v398, %v397
    %vm400 = vcmp.lt.s32.totalorder %v152, 0
    %v401 = vsub.s32 0, %v152
    %v402 = vsel %vm400, %v401, %v152
    %v403 = vmul.u32.u64.compose %v402, 3123612579
    %v404 = vextract.low.u32 %v403
    %v405 = vextract.high.u32 %v403
    %v406 = vshrl.u32 %v405, 6
    %v407 = vmul.u32 %v406, 88
    %v408 = vsub.s32 %v402, %v407
    %v409 = vsub.s32 0, %v408
    %v410 = vsel %vm400, %v409, %v408
    %vm411 = vcmp.lt.s32.totalorder %v153, 0
    %v412 = vsub.s32 0, %v153
    %v413 = vsel %vm411, %v412, %v153
    %v414 = vmul.u32.u64.compose %v413, 3123612579
    %v415 = vextract.low.u32 %v414
    %v416 = vextract.high.u32 %v414
    %v417 = vshrl.u32 %v416, 6
    %v418 = vmul.u32 %v417, 88
    %v419 = vsub.s32 %v413, %v418
    %v420 = vsub.s32 0, %v419
    %v421 = vsel %vm411, %v420, %v419
    %vm422 = vcmp.lt.s32.totalorder %v154, 0
    %v423 = vsub.s32 0, %v154
    %v424 = vsel %vm422, %v423, %v154
    %v425 = vmul.u32.u64.compose %v424, 3123612579
    %v426 = vextract.low.u32 %v425
    %v427 = vextract.high.u32 %v425
    %v428 = vshrl.u32 %v427, 6
    %v429 = vmul.u32 %v428, 88
    %v430 = vsub.s32 %v424, %v429
    %v431 = vsub.s32 0, %v430
    %v432 = vsel %vm422, %v431, %v430
    %vm433 = vcmp.lt.s32.totalorder %v155, 0
    %v434 = vsub.s32 0, %v155
    %v435 = vsel %vm433, %v434, %v155
    %v436 = vmul.u32.u64.compose %v435, 3123612579
    %v437 = vextract.low.u32 %v436
    %v438 = vextract.high.u32 %v436
    %v439 = vshrl.u32 %v438, 6
    %v440 = vmul.u32 %v439, 88
    %v441 = vsub.s32 %v435, %v440
    %v442 = vsub.s32 0, %v441
    %v443 = vsel %vm433, %v442, %v441
    %vm444 = vcmp.lt.s32.totalorder %v156, 0
    %v445 = vsub.s32 0, %v156
    %v446 = vsel %vm444, %v445, %v156
    %v447 = vmul.u32.u64.compose %v446, 3123612579
    %v448 = vextract.low.u32 %v447
    %v449 = vextract.high.u32 %v447
    %v450 = vshrl.u32 %v449, 6
    %v451 = vmul.u32 %v450, 88
    %v452 = vsub.s32 %v446, %v451
    %v453 = vsub.s32 0, %v452
    %v454 = vsel %vm444, %v453, %v452
    %vm455 = vcmp.lt.s32.totalorder %v157, 0
    %v456 = vsub.s32 0, %v157
    %v457 = vsel %vm455, %v456, %v157
    %v458 = vmul.u32.u64.compose %v457, 3123612579
    %v459 = vextract.low.u32 %v458
    %v460 = vextract.high.u32 %v458
    %v461 = vshrl.u32 %v460, 6
    %v462 = vmul.u32 %v461, 88
    %v463 = vsub.s32 %v457, %v462
    %v464 = vsub.s32 0, %v463
    %v465 = vsel %vm455, %v464, %v463
    %vm466 = vcmp.lt.s32.totalorder %v158, 0
    %v467 = vsub.s32 0, %v158
    %v468 = vsel %vm466, %v467, %v158
    %v469 = vmul.u32.u64.compose %v468, 3123612579
    %v470 = vextract.low.u32 %v469
    %v471 = vextract.high.u32 %v469
    %v472 = vshrl.u32 %v471, 6
    %v473 = vmul.u32 %v472, 88
    %v474 = vsub.s32 %v468, %v473
    %v475 = vsub.s32 0, %v474
    %v476 = vsel %vm466, %v475, %v474
    %vm477 = vcmp.lt.s32.totalorder %v159, 0
    %v478 = vsub.s32 0, %v159
    %v479 = vsel %vm477, %v478, %v159
    %v480 = vmul.u32.u64.compose %v479, 3123612579
    %v481 = vextract.low.u32 %v480
    %v482 = vextract.high.u32 %v480
    %v483 = vshrl.u32 %v482, 6
    %v484 = vmul.u32 %v483, 88
    %v485 = vsub.s32 %v479, %v484
    %v486 = vsub.s32 0, %v485
    %v487 = vsel %vm477, %v486, %v485
    %vm488 = vcmp.lt.s32.totalorder %v160, 0
    %v489 = vsub.s32 0, %v160
    %v490 = vsel %vm488, %v489, %v160
    %v491 = vmul.u32.u64.compose %v490, 3123612579
    %v492 = vextract.low.u32 %v491
    %v493 = vextract.high.u32 %v491
    %v494 = vshrl.u32 %v493, 6
    %v495 = vmul.u32 %v494, 88
    %v496 = vsub.s32 %v490, %v495
    %v497 = vsub.s32 0, %v496
    %v498 = vsel %vm488, %v497, %v496
    %vm499 = vcmp.lt.s32.totalorder %v161, 0
    %v500 = vsub.s32 0, %v161
    %v501 = vsel %vm499, %v500, %v161
    %v502 = vmul.u32.u64.compose %v501, 3123612579
    %v503 = vextract.low.u32 %v502
    %v504 = vextract.high.u32 %v502
    %v505 = vshrl.u32 %v504, 6
    %v506 = vmul.u32 %v505, 88
    %v507 = vsub.s32 %v501, %v506
    %v508 = vsub.s32 0, %v507
    %v509 = vsel %vm499, %v508, %v507
    %vm510 = vcmp.lt.s32.totalorder %v162, 0
    %v511 = vsub.s32 0, %v162
    %v512 = vsel %vm510, %v511, %v162
    %v513 = vmul.u32.u64.compose %v512, 3123612579
    %v514 = vextract.low.u32 %v513
    %v515 = vextract.high.u32 %v513
    %v516 = vshrl.u32 %v515, 6
    %v517 = vmul.u32 %v516, 88
    %v518 = vsub.s32 %v512, %v517
    %v519 = vsub.s32 0, %v518
    %v520 = vsel %vm510, %v519, %v518
    %vm521 = vcmp.lt.s32.totalorder %v163, 0
    %v522 = vsub.s32 0, %v163
    %v523 = vsel %vm521, %v522, %v163
    %v524 = vmul.u32.u64.compose %v523, 3123612579
    %v525 = vextract.low.u32 %v524
    %v526 = vextract.high.u32 %v524
    %v527 = vshrl.u32 %v526, 6
    %v528 = vmul.u32 %v527, 88
    %v529 = vsub.s32 %v523, %v528
    %v530 = vsub.s32 0, %v529
    %v531 = vsel %vm521, %v530, %v529
    %vm532 = vcmp.lt.s32.totalorder %v164, 0
    %v533 = vsub.s32 0, %v164
    %v534 = vsel %vm532, %v533, %v164
    %v535 = vmul.u32.u64.compose %v534, 3123612579
    %v536 = vextract.low.u32 %v535
    %v537 = vextract.high.u32 %v535
    %v538 = vshrl.u32 %v537, 6
    %v539 = vmul.u32 %v538, 88
    %v540 = vsub.s32 %v534, %v539
    %v541 = vsub.s32 0, %v540
    %v542 = vsel %vm532, %v541, %v540
    %vm543 = vcmp.lt.s32.totalorder %v165, 0
    %v544 = vsub.s32 0, %v165
    %v545 = vsel %vm543, %v544, %v165
    %v546 = vmul.u32.u64.compose %v545, 3123612579
    %v547 = vextract.low.u32 %v546
    %v548 = vextract.high.u32 %v546
    %v549 = vshrl.u32 %v548, 6
    %v550 = vmul.u32 %v549, 88
    %v551 = vsub.s32 %v545, %v550
    %v552 = vsub.s32 0, %v551
    %v553 = vsel %vm543, %v552, %v551
    %vm554 = vcmp.lt.s32.totalorder %v166, 0
    %v555 = vsub.s32 0, %v166
    %v556 = vsel %vm554, %v555, %v166
    %v557 = vmul.u32.u64.compose %v556, 3123612579
    %v558 = vextract.low.u32 %v557
    %v559 = vextract.high.u32 %v557
    %v560 = vshrl.u32 %v559, 6
    %v561 = vmul.u32 %v560, 88
    %v562 = vsub.s32 %v556, %v561
    %v563 = vsub.s32 0, %v562
    %v564 = vsel %vm554, %v563, %v562
    %vm565 = vcmp.lt.s32.totalorder %v167, 0
    %v566 = vsub.s32 0, %v167
    %v567 = vsel %vm565, %v566, %v167
    %v568 = vmul.u32.u64.compose %v567, 3123612579
    %v569 = vextract.low.u32 %v568
    %v570 = vextract.high.u32 %v568
    %v571 = vshrl.u32 %v570, 6
    %v572 = vmul.u32 %v571, 88
    %v573 = vsub.s32 %v567, %v572
    %v574 = vsub.s32 0, %v573
    %v575 = vsel %vm565, %v574, %v573
    %vm576 = vcmp.lt.s32.totalorder %v168, 0
    %v577 = vsub.s32 0, %v168
    %v578 = vsel %vm576, %v577, %v168
    %v579 = vmul.u32.u64.compose %v578, 3123612579
    %v580 = vextract.low.u32 %v579
    %v581 = vextract.high.u32 %v579
    %v582 = vshrl.u32 %v581, 6
    %v583 = vmul.u32 %v582, 88
    %v584 = vsub.s32 %v578, %v583
    %v585 = vsub.s32 0, %v584
    %v586 = vsel %vm576, %v585, %v584
    %vm587 = vcmp.lt.s32.totalorder %v169, 0
    %v588 = vsub.s32 0, %v169
    %v589 = vsel %vm587, %v588, %v169
    %v590 = vmul.u32.u64.compose %v589, 3123612579
    %v591 = vextract.low.u32 %v590
    %v592 = vextract.high.u32 %v590
    %v593 = vshrl.u32 %v592, 6
    %v594 = vmul.u32 %v593, 88
    %v595 = vsub.s32 %v589, %v594
    %v596 = vsub.s32 0, %v595
    %v597 = vsel %vm587, %v596, %v595
    %vm598 = vcmp.lt.s32.totalorder %v170, 0
    %v599 = vsub.s32 0, %v170
    %v600 = vsel %vm598, %v599, %v170
    %v601 = vmul.u32.u64.compose %v600, 3123612579
    %v602 = vextract.low.u32 %v601
    %v603 = vextract.high.u32 %v601
    %v604 = vshrl.u32 %v603, 6
    %v605 = vmul.u32 %v604, 88
    %v606 = vsub.s32 %v600, %v605
    %v607 = vsub.s32 0, %v606
    %v608 = vsel %vm598, %v607, %v606
    %vm609 = vcmp.lt.s32.totalorder %v171, 0
    %v610 = vsub.s32 0, %v171
    %v611 = vsel %vm609, %v610, %v171
    %v612 = vmul.u32.u64.compose %v611, 3123612579
    %v613 = vextract.low.u32 %v612
    %v614 = vextract.high.u32 %v612
    %v615 = vshrl.u32 %v614, 6
    %v616 = vmul.u32 %v615, 88
    %v617 = vsub.s32 %v611, %v616
    %v618 = vsub.s32 0, %v617
    %v619 = vsel %vm609, %v618, %v617
    %vm620 = vcmp.lt.s32.totalorder %v172, 0
    %v621 = vsub.s32 0, %v172
    %v622 = vsel %vm620, %v621, %v172
    %v623 = vmul.u32.u64.compose %v622, 3123612579
    %v624 = vextract.low.u32 %v623
    %v625 = vextract.high.u32 %v623
    %v626 = vshrl.u32 %v625, 6
    %v627 = vmul.u32 %v626, 88
    %v628 = vsub.s32 %v622, %v627
    %v629 = vsub.s32 0, %v628
    %v630 = vsel %vm620, %v629, %v628
    %vm631 = vcmp.lt.s32.totalorder %v173, 0
    %v632 = vsub.s32 0, %v173
    %v633 = vsel %vm631, %v632, %v173
    %v634 = vmul.u32.u64.compose %v633, 3123612579
    %v635 = vextract.low.u32 %v634
    %v636 = vextract.high.u32 %v634
    %v637 = vshrl.u32 %v636, 6
    %v638 = vmul.u32 %v637, 88
    %v639 = vsub.s32 %v633, %v638
    %v640 = vsub.s32 0, %v639
    %v641 = vsel %vm631, %v640, %v639
    %vm642 = vcmp.lt.s32.totalorder %v174, 0
    %v643 = vsub.s32 0, %v174
    %v644 = vsel %vm642, %v643, %v174
    %v645 = vmul.u32.u64.compose %v644, 3123612579
    %v646 = vextract.low.u32 %v645
    %v647 = vextract.high.u32 %v645
    %v648 = vshrl.u32 %v647, 6
    %v649 = vmul.u32 %v648, 88
    %v650 = vsub.s32 %v644, %v649
    %v651 = vsub.s32 0, %v650
    %v652 = vsel %vm642, %v651, %v650
    %vm653 = vcmp.lt.s32.totalorder %v175, 0
    %v654 = vsub.s32 0, %v175
    %v655 = vsel %vm653, %v654, %v175
    %v656 = vmul.u32.u64.compose %v655, 3123612579
    %v657 = vextract.low.u32 %v656
    %v658 = vextract.high.u32 %v656
    %v659 = vshrl.u32 %v658, 6
    %v660 = vmul.u32 %v659, 88
    %v661 = vsub.s32 %v655, %v660
    %v662 = vsub.s32 0, %v661
    %v663 = vsel %vm653, %v662, %v661
    %vm664 = vcmp.lt.s32.totalorder %v176, 0
    %v665 = vsub.s32 0, %v176
    %v666 = vsel %vm664, %v665, %v176
    %v667 = vmul.u32.u64.compose %v666, 3123612579
    %v668 = vextract.low.u32 %v667
    %v669 = vextract.high.u32 %v667
    %v670 = vshrl.u32 %v669, 6
    %v671 = vmul.u32 %v670, 88
    %v672 = vsub.s32 %v666, %v671
    %v673 = vsub.s32 0, %v672
    %v674 = vsel %vm664, %v673, %v672
    %vm675 = vcmp.lt.s32.totalorder %v177, 0
    %v676 = vsub.s32 0, %v177
    %v677 = vsel %vm675, %v676, %v177
    %v678 = vmul.u32.u64.compose %v677, 3123612579
    %v679 = vextract.low.u32 %v678
    %v680 = vextract.high.u32 %v678
    %v681 = vshrl.u32 %v680, 6
    %v682 = vmul.u32 %v681, 88
    %v683 = vsub.s32 %v677, %v682
    %v684 = vsub.s32 0, %v683
    %v685 = vsel %vm675, %v684, %v683
    %vm686 = vcmp.lt.s32.totalorder %v178, 0
    %v687 = vsub.s32 0, %v178
    %v688 = vsel %vm686, %v687, %v178
    %v689 = vmul.u32.u64.compose %v688, 3123612579
    %v690 = vextract.low.u32 %v689
    %v691 = vextract.high.u32 %v689
    %v692 = vshrl.u32 %v691, 6
    %v693 = vmul.u32 %v692, 88
    %v694 = vsub.s32 %v688, %v693
    %v695 = vsub.s32 0, %v694
    %v696 = vsel %vm686, %v695, %v694
    %vm697 = vcmp.lt.s32.totalorder %v179, 0
    %v698 = vsub.s32 0, %v179
    %v699 = vsel %vm697, %v698, %v179
    %v700 = vmul.u32.u64.compose %v699, 3123612579
    %v701 = vextract.low.u32 %v700
    %v702 = vextract.high.u32 %v700
    %v703 = vshrl.u32 %v702, 6
    %v704 = vmul.u32 %v703, 88
    %v705 = vsub.s32 %v699, %v704
    %v706 = vsub.s32 0, %v705
    %v707 = vsel %vm697, %v706, %v705
    %vm708 = vcmp.lt.s32.totalorder %v180, 0
    %v709 = vsub.s32 0, %v180
    %v710 = vsel %vm708, %v709, %v180
    %v711 = vmul.u32.u64.compose %v710, 3123612579
    %v712 = vextract.low.u32 %v711
    %v713 = vextract.high.u32 %v711
    %v714 = vshrl.u32 %v713, 6
    %v715 = vmul.u32 %v714, 88
    %v716 = vsub.s32 %v710, %v715
    %v717 = vsub.s32 0, %v716
    %v718 = vsel %vm708, %v717, %v716
    %vm719 = vcmp.lt.s32.totalorder %v181, 0
    %v720 = vsub.s32 0, %v181
    %v721 = vsel %vm719, %v720, %v181
    %v722 = vmul.u32.u64.compose %v721, 3123612579
    %v723 = vextract.low.u32 %v722
    %v724 = vextract.high.u32 %v722
    %v725 = vshrl.u32 %v724, 6
    %v726 = vmul.u32 %v725, 88
    %v727 = vsub.s32 %v721, %v726
    %v728 = vsub.s32 0, %v727
    %v729 = vsel %vm719, %v728, %v727
    %vm730 = vcmp.lt.s32.totalorder %v182, 0
    %v731 = vsub.s32 0, %v182
    %v732 = vsel %vm730, %v731, %v182
    %v733 = vmul.u32.u64.compose %v732, 3123612579
    %v734 = vextract.low.u32 %v733
    %v735 = vextract.high.u32 %v733
    %v736 = vshrl.u32 %v735, 6
    %v737 = vmul.u32 %v736, 88
    %v738 = vsub.s32 %v732, %v737
    %v739 = vsub.s32 0, %v738
    %v740 = vsel %vm730, %v739, %v738
    %vm741 = vcmp.lt.s32.totalorder %v183, 0
    %v742 = vsub.s32 0, %v183
    %v743 = vsel %vm741, %v742, %v183
    %v744 = vmul.u32.u64.compose %v743, 3123612579
    %v745 = vextract.low.u32 %v744
    %v746 = vextract.high.u32 %v744
    %v747 = vshrl.u32 %v746, 6
    %v748 = vmul.u32 %v747, 88
    %v749 = vsub.s32 %v743, %v748
    %v750 = vsub.s32 0, %v749
    %v751 = vsel %vm741, %v750, %v749
    %vm752 = vcmp.lt.s32.totalorder %v184, 0
    %v753 = vsub.s32 0, %v184
    %v754 = vsel %vm752, %v753, %v184
    %v755 = vmul.u32.u64.compose %v754, 3123612579
    %v756 = vextract.low.u32 %v755
    %v757 = vextract.high.u32 %v755
    %v758 = vshrl.u32 %v757, 6
    %v759 = vmul.u32 %v758, 88
    %v760 = vsub.s32 %v754, %v759
    %v761 = vsub.s32 0, %v760
    %v762 = vsel %vm752, %v761, %v760
    %vm763 = vcmp.lt.s32.totalorder %v185, 0
    %v764 = vsub.s32 0, %v185
    %v765 = vsel %vm763, %v764, %v185
    %v766 = vmul.u32.u64.compose %v765, 3123612579
    %v767 = vextract.low.u32 %v766
    %v768 = vextract.high.u32 %v766
    %v769 = vshrl.u32 %v768, 6
    %v770 = vmul.u32 %v769, 88
    %v771 = vsub.s32 %v765, %v770
    %v772 = vsub.s32 0, %v771
    %v773 = vsel %vm763, %v772, %v771
    %vm774 = vcmp.lt.s32.totalorder %v186, 0
    %v775 = vsub.s32 0, %v186
    %v776 = vsel %vm774, %v775, %v186
    %v777 = vmul.u32.u64.compose %v776, 3123612579
    %v778 = vextract.low.u32 %v777
    %v779 = vextract.high.u32 %v777
    %v780 = vshrl.u32 %v779, 6
    %v781 = vmul.u32 %v780, 88
    %v782 = vsub.s32 %v776, %v781
    %v783 = vsub.s32 0, %v782
    %v784 = vsel %vm774, %v783, %v782
    %vm785 = vcmp.lt.s32.totalorder %v187, 0
    %v786 = vsub.s32 0, %v187
    %v787 = vsel %vm785, %v786, %v187
    %v788 = vmul.u32.u64.compose %v787, 3123612579
    %v789 = vextract.low.u32 %v788
    %v790 = vextract.high.u32 %v788
    %v791 = vshrl.u32 %v790, 6
    %v792 = vmul.u32 %v791, 88
    %v793 = vsub.s32 %v787, %v792
    %v794 = vsub.s32 0, %v793
    %v795 = vsel %vm785, %v794, %v793
    %vm796 = vcmp.lt.s32.totalorder %v188, 0
    %v797 = vsub.s32 0, %v188
    %v798 = vsel %vm796, %v797, %v188
    %v799 = vmul.u32.u64.compose %v798, 3123612579
    %v800 = vextract.low.u32 %v799
    %v801 = vextract.high.u32 %v799
    %v802 = vshrl.u32 %v801, 6
    %v803 = vmul.u32 %v802, 88
    %v804 = vsub.s32 %v798, %v803
    %v805 = vsub.s32 0, %v804
    %v806 = vsel %vm796, %v805, %v804
    %vm807 = vcmp.lt.s32.totalorder %v189, 0
    %v808 = vsub.s32 0, %v189
    %v809 = vsel %vm807, %v808, %v189
    %v810 = vmul.u32.u64.compose %v809, 3123612579
    %v811 = vextract.low.u32 %v810
    %v812 = vextract.high.u32 %v810
    %v813 = vshrl.u32 %v812, 6
    %v814 = vmul.u32 %v813, 88
    %v815 = vsub.s32 %v809, %v814
    %v816 = vsub.s32 0, %v815
    %v817 = vsel %vm807, %v816, %v815
    %vm818 = vcmp.lt.s32.totalorder %v190, 0
    %v819 = vsub.s32 0, %v190
    %v820 = vsel %vm818, %v819, %v190
    %v821 = vmul.u32.u64.compose %v820, 3123612579
    %v822 = vextract.low.u32 %v821
    %v823 = vextract.high.u32 %v821
    %v824 = vshrl.u32 %v823, 6
    %v825 = vmul.u32 %v824, 88
    %v826 = vsub.s32 %v820, %v825
    %v827 = vsub.s32 0, %v826
    %v828 = vsel %vm818, %v827, %v826
    %vm829 = vcmp.lt.s32.totalorder %v191, 0
    %v830 = vsub.s32 0, %v191
    %v831 = vsel %vm829, %v830, %v191
    %v832 = vmul.u32.u64.compose %v831, 3123612579
    %v833 = vextract.low.u32 %v832
    %v834 = vextract.high.u32 %v832
    %v835 = vshrl.u32 %v834, 6
    %v836 = vmul.u32 %v835, 88
    %v837 = vsub.s32 %v831, %v836
    %v838 = vsub.s32 0, %v837
    %v839 = vsel %vm829, %v838, %v837
    %vm840 = vcmp.lt.s32.totalorder %v192, 0
    %v841 = vsub.s32 0, %v192
    %v842 = vsel %vm840, %v841, %v192
    %v843 = vmul.u32.u64.compose %v842, 3123612579
    %v844 = vextract.low.u32 %v843
    %v845 = vextract.high.u32 %v843
    %v846 = vshrl.u32 %v845, 6
    %v847 = vmul.u32 %v846, 88
    %v848 = vsub.s32 %v842, %v847
    %v849 = vsub.s32 0, %v848
    %v850 = vsel %vm840, %v849, %v848
    %vm851 = vcmp.lt.s32.totalorder %v193, 0
    %v852 = vsub.s32 0, %v193
    %v853 = vsel %vm851, %v852, %v193
    %v854 = vmul.u32.u64.compose %v853, 3123612579
    %v855 = vextract.low.u32 %v854
    %v856 = vextract.high.u32 %v854
    %v857 = vshrl.u32 %v856, 6
    %v858 = vmul.u32 %v857, 88
    %v859 = vsub.s32 %v853, %v858
    %v860 = vsub.s32 0, %v859
    %v861 = vsel %vm851, %v860, %v859
    %vm862 = vcmp.lt.s32.totalorder %v194, 0
    %v863 = vsub.s32 0, %v194
    %v864 = vsel %vm862, %v863, %v194
    %v865 = vmul.u32.u64.compose %v864, 3123612579
    %v866 = vextract.low.u32 %v865
    %v867 = vextract.high.u32 %v865
    %v868 = vshrl.u32 %v867, 6
    %v869 = vmul.u32 %v868, 88
    %v870 = vsub.s32 %v864, %v869
    %v871 = vsub.s32 0, %v870
    %v872 = vsel %vm862, %v871, %v870
    %vm873 = vcmp.lt.s32.totalorder %v195, 0
    %v874 = vsub.s32 0, %v195
    %v875 = vsel %vm873, %v874, %v195
    %v876 = vmul.u32.u64.compose %v875, 3123612579
    %v877 = vextract.low.u32 %v876
    %v878 = vextract.high.u32 %v876
    %v879 = vshrl.u32 %v878, 6
    %v880 = vmul.u32 %v879, 88
    %v881 = vsub.s32 %v875, %v880
    %v882 = vsub.s32 0, %v881
    %v883 = vsel %vm873, %v882, %v881
    %vm884 = vcmp.lt.s32.totalorder %v196, 0
    %v885 = vsub.s32 0, %v196
    %v886 = vsel %vm884, %v885, %v196
    %v887 = vmul.u32.u64.compose %v886, 3123612579
    %v888 = vextract.low.u32 %v887
    %v889 = vextract.high.u32 %v887
    %v890 = vshrl.u32 %v889, 6
    %v891 = vmul.u32 %v890, 88
    %v892 = vsub.s32 %v886, %v891
    %v893 = vsub.s32 0, %v892
    %v894 = vsel %vm884, %v893, %v892
    %vm895 = vcmp.lt.s32.totalorder %v197, 0
    %v896 = vsub.s32 0, %v197
    %v897 = vsel %vm895, %v896, %v197
    %v898 = vmul.u32.u64.compose %v897, 3123612579
    %v899 = vextract.low.u32 %v898
    %v900 = vextract.high.u32 %v898
    %v901 = vshrl.u32 %v900, 6
    %v902 = vmul.u32 %v901, 88
    %v903 = vsub.s32 %v897, %v902
    %v904 = vsub.s32 0, %v903
    %v905 = vsel %vm895, %v904, %v903
    %vm906 = vcmp.lt.s32.totalorder %v198, 0
    %v907 = vsub.s32 0, %v198
    %v908 = vsel %vm906, %v907, %v198
    %v909 = vmul.u32.u64.compose %v908, 3123612579
    %v910 = vextract.low.u32 %v909
    %v911 = vextract.high.u32 %v909
    %v912 = vshrl.u32 %v911, 6
    %v913 = vmul.u32 %v912, 88
    %v914 = vsub.s32 %v908, %v913
    %v915 = vsub.s32 0, %v914
    %v916 = vsel %vm906, %v915, %v914
    %vm917 = vcmp.lt.s32.totalorder %v199, 0
    %v918 = vsub.s32 0, %v199
    %v919 = vsel %vm917, %v918, %v199
    %v920 = vmul.u32.u64.compose %v919, 3123612579
    %v921 = vextract.low.u32 %v920
    %v922 = vextract.high.u32 %v920
    %v923 = vshrl.u32 %v922, 6
    %v924 = vmul.u32 %v923, 88
    %v925 = vsub.s32 %v919, %v924
    %v926 = vsub.s32 0, %v925
    %v927 = vsel %vm917, %v926, %v925
    %vm928 = vcmp.lt.s32.totalorder %v200, 0
    %v929 = vsub.s32 0, %v200
    %v930 = vsel %vm928, %v929, %v200
    %v931 = vmul.u32.u64.compose %v930, 3123612579
    %v932 = vextract.low.u32 %v931
    %v933 = vextract.high.u32 %v931
    %v934 = vshrl.u32 %v933, 6
    %v935 = vmul.u32 %v934, 88
    %v936 = vsub.s32 %v930, %v935
    %v937 = vsub.s32 0, %v936
    %v938 = vsel %vm928, %v937, %v936
    %vm939 = vcmp.lt.s32.totalorder %v201, 0
    %v940 = vsub.s32 0, %v201
    %v941 = vsel %vm939, %v940, %v201
    %v942 = vmul.u32.u64.compose %v941, 3123612579
    %v943 = vextract.low.u32 %v942
    %v944 = vextract.high.u32 %v942
    %v945 = vshrl.u32 %v944, 6
    %v946 = vmul.u32 %v945, 88
    %v947 = vsub.s32 %v941, %v946
    %v948 = vsub.s32 0, %v947
    %v949 = vsel %vm939, %v948, %v947
    %vm950 = vcmp.lt.s32.totalorder %v202, 0
    %v951 = vsub.s32 0, %v202
    %v952 = vsel %vm950, %v951, %v202
    %v953 = vmul.u32.u64.compose %v952, 3123612579
    %v954 = vextract.low.u32 %v953
    %v955 = vextract.high.u32 %v953
    %v956 = vshrl.u32 %v955, 6
    %v957 = vmul.u32 %v956, 88
    %v958 = vsub.s32 %v952, %v957
    %v959 = vsub.s32 0, %v958
    %v960 = vsel %vm950, %v959, %v958
    %vm961 = vcmp.lt.s32.totalorder %v203, 0
    %v962 = vsub.s32 0, %v203
    %v963 = vsel %vm961, %v962, %v203
    %v964 = vmul.u32.u64.compose %v963, 3123612579
    %v965 = vextract.low.u32 %v964
    %v966 = vextract.high.u32 %v964
    %v967 = vshrl.u32 %v966, 6
    %v968 = vmul.u32 %v967, 88
    %v969 = vsub.s32 %v963, %v968
    %v970 = vsub.s32 0, %v969
    %v971 = vsel %vm961, %v970, %v969
    %vm972 = vcmp.lt.s32.totalorder %v204, 0
    %v973 = vsub.s32 0, %v204
    %v974 = vsel %vm972, %v973, %v204
    %v975 = vmul.u32.u64.compose %v974, 3123612579
    %v976 = vextract.low.u32 %v975
    %v977 = vextract.high.u32 %v975
    %v978 = vshrl.u32 %v977, 6
    %v979 = vmul.u32 %v978, 88
    %v980 = vsub.s32 %v974, %v979
    %v981 = vsub.s32 0, %v980
    %v982 = vsel %vm972, %v981, %v980
    %vm983 = vcmp.lt.s32.totalorder %v205, 0
    %v984 = vsub.s32 0, %v205
    %v985 = vsel %vm983, %v984, %v205
    %v986 = vmul.u32.u64.compose %v985, 3123612579
    %v987 = vextract.low.u32 %v986
    %v988 = vextract.high.u32 %v986
    %v989 = vshrl.u32 %v988, 6
    %v990 = vmul.u32 %v989, 88
    %v991 = vsub.s32 %v985, %v990
    %v992 = vsub.s32 0, %v991
    %v993 = vsel %vm983, %v992, %v991
    %vm994 = vcmp.lt.s32.totalorder %v206, 0
    %v995 = vsub.s32 0, %v206
    %v996 = vsel %vm994, %v995, %v206
    %v997 = vmul.u32.u64.compose %v996, 3123612579
    %v998 = vextract.low.u32 %v997
    %v999 = vextract.high.u32 %v997
    %v1000 = vshrl.u32 %v999, 6
    %v1001 = vmul.u32 %v1000, 88
    %v1002 = vsub.s32 %v996, %v1001
    %v1003 = vsub.s32 0, %v1002
    %v1004 = vsel %vm994, %v1003, %v1002
    %vm1005 = vcmp.lt.s32.totalorder %v207, 0
    %v1006 = vsub.s32 0, %v207
    %v1007 = vsel %vm1005, %v1006, %v207
    %v1008 = vmul.u32.u64.compose %v1007, 3123612579
    %v1009 = vextract.low.u32 %v1008
    %v1010 = vextract.high.u32 %v1008
    %v1011 = vshrl.u32 %v1010, 6
    %v1012 = vmul.u32 %v1011, 88
    %v1013 = vsub.s32 %v1007, %v1012
    %v1014 = vsub.s32 0, %v1013
    %v1015 = vsel %vm1005, %v1014, %v1013
    %vm1016 = vcmp.lt.s32.totalorder %v208, 0
    %v1017 = vsub.s32 0, %v208
    %v1018 = vsel %vm1016, %v1017, %v208
    %v1019 = vmul.u32.u64.compose %v1018, 3123612579
    %v1020 = vextract.low.u32 %v1019
    %v1021 = vextract.high.u32 %v1019
    %v1022 = vshrl.u32 %v1021, 6
    %v1023 = vmul.u32 %v1022, 88
    %v1024 = vsub.s32 %v1018, %v1023
    %v1025 = vsub.s32 0, %v1024
    %v1026 = vsel %vm1016, %v1025, %v1024
    %vm1027 = vcmp.lt.s32.totalorder %v209, 0
    %v1028 = vsub.s32 0, %v209
    %v1029 = vsel %vm1027, %v1028, %v209
    %v1030 = vmul.u32.u64.compose %v1029, 3123612579
    %v1031 = vextract.low.u32 %v1030
    %v1032 = vextract.high.u32 %v1030
    %v1033 = vshrl.u32 %v1032, 6
    %v1034 = vmul.u32 %v1033, 88
    %v1035 = vsub.s32 %v1029, %v1034
    %v1036 = vsub.s32 0, %v1035
    %v1037 = vsel %vm1027, %v1036, %v1035
    %vm1038 = vcmp.lt.s32.totalorder %v210, 0
    %v1039 = vsub.s32 0, %v210
    %v1040 = vsel %vm1038, %v1039, %v210
    %v1041 = vmul.u32.u64.compose %v1040, 3123612579
    %v1042 = vextract.low.u32 %v1041
    %v1043 = vextract.high.u32 %v1041
    %v1044 = vshrl.u32 %v1043, 6
    %v1045 = vmul.u32 %v1044, 88
    %v1046 = vsub.s32 %v1040, %v1045
    %v1047 = vsub.s32 0, %v1046
    %v1048 = vsel %vm1038, %v1047, %v1046
    %vm1049 = vcmp.lt.s32.totalorder %v211, 0
    %v1050 = vsub.s32 0, %v211
    %v1051 = vsel %vm1049, %v1050, %v211
    %v1052 = vmul.u32.u64.compose %v1051, 3123612579
    %v1053 = vextract.low.u32 %v1052
    %v1054 = vextract.high.u32 %v1052
    %v1055 = vshrl.u32 %v1054, 6
    %v1056 = vmul.u32 %v1055, 88
    %v1057 = vsub.s32 %v1051, %v1056
    %v1058 = vsub.s32 0, %v1057
    %v1059 = vsel %vm1049, %v1058, %v1057
    %vm1060 = vcmp.lt.s32.totalorder %v212, 0
    %v1061 = vsub.s32 0, %v212
    %v1062 = vsel %vm1060, %v1061, %v212
    %v1063 = vmul.u32.u64.compose %v1062, 3123612579
    %v1064 = vextract.low.u32 %v1063
    %v1065 = vextract.high.u32 %v1063
    %v1066 = vshrl.u32 %v1065, 6
    %v1067 = vmul.u32 %v1066, 88
    %v1068 = vsub.s32 %v1062, %v1067
    %v1069 = vsub.s32 0, %v1068
    %v1070 = vsel %vm1060, %v1069, %v1068
    %vm1071 = vcmp.lt.s32.totalorder %v213, 0
    %v1072 = vsub.s32 0, %v213
    %v1073 = vsel %vm1071, %v1072, %v213
    %v1074 = vmul.u32.u64.compose %v1073, 3123612579
    %v1075 = vextract.low.u32 %v1074
    %v1076 = vextract.high.u32 %v1074
    %v1077 = vshrl.u32 %v1076, 6
    %v1078 = vmul.u32 %v1077, 88
    %v1079 = vsub.s32 %v1073, %v1078
    %v1080 = vsub.s32 0, %v1079
    %v1081 = vsel %vm1071, %v1080, %v1079
    %vm1082 = vcmp.lt.s32.totalorder %v214, 0
    %v1083 = vsub.s32 0, %v214
    %v1084 = vsel %vm1082, %v1083, %v214
    %v1085 = vmul.u32.u64.compose %v1084, 3123612579
    %v1086 = vextract.low.u32 %v1085
    %v1087 = vextract.high.u32 %v1085
    %v1088 = vshrl.u32 %v1087, 6
    %v1089 = vmul.u32 %v1088, 88
    %v1090 = vsub.s32 %v1084, %v1089
    %v1091 = vsub.s32 0, %v1090
    %v1092 = vsel %vm1082, %v1091, %v1090
    %vm1093 = vcmp.lt.s32.totalorder %v215, 0
    %v1094 = vsub.s32 0, %v215
    %v1095 = vsel %vm1093, %v1094, %v215
    %v1096 = vmul.u32.u64.compose %v1095, 3123612579
    %v1097 = vextract.low.u32 %v1096
    %v1098 = vextract.high.u32 %v1096
    %v1099 = vshrl.u32 %v1098, 6
    %v1100 = vmul.u32 %v1099, 88
    %v1101 = vsub.s32 %v1095, %v1100
    %v1102 = vsub.s32 0, %v1101
    %v1103 = vsel %vm1093, %v1102, %v1101
    %vm1104 = vcmp.lt.s32.totalorder %v216, 0
    %v1105 = vsub.s32 0, %v216
    %v1106 = vsel %vm1104, %v1105, %v216
    %v1107 = vmul.u32.u64.compose %v1106, 3123612579
    %v1108 = vextract.low.u32 %v1107
    %v1109 = vextract.high.u32 %v1107
    %v1110 = vshrl.u32 %v1109, 6
    %v1111 = vmul.u32 %v1110, 88
    %v1112 = vsub.s32 %v1106, %v1111
    %v1113 = vsub.s32 0, %v1112
    %v1114 = vsel %vm1104, %v1113, %v1112
    %vm1115 = vcmp.lt.s32.totalorder %v217, 0
    %v1116 = vsub.s32 0, %v217
    %v1117 = vsel %vm1115, %v1116, %v217
    %v1118 = vmul.u32.u64.compose %v1117, 3123612579
    %v1119 = vextract.low.u32 %v1118
    %v1120 = vextract.high.u32 %v1118
    %v1121 = vshrl.u32 %v1120, 6
    %v1122 = vmul.u32 %v1121, 88
    %v1123 = vsub.s32 %v1117, %v1122
    %v1124 = vsub.s32 0, %v1123
    %v1125 = vsel %vm1115, %v1124, %v1123
    %vm1126 = vcmp.lt.s32.totalorder %v218, 0
    %v1127 = vsub.s32 0, %v218
    %v1128 = vsel %vm1126, %v1127, %v218
    %v1129 = vmul.u32.u64.compose %v1128, 3123612579
    %v1130 = vextract.low.u32 %v1129
    %v1131 = vextract.high.u32 %v1129
    %v1132 = vshrl.u32 %v1131, 6
    %v1133 = vmul.u32 %v1132, 88
    %v1134 = vsub.s32 %v1128, %v1133
    %v1135 = vsub.s32 0, %v1134
    %v1136 = vsel %vm1126, %v1135, %v1134
    %vm1137 = vcmp.lt.s32.totalorder %v219, 0
    %v1138 = vsub.s32 0, %v219
    %v1139 = vsel %vm1137, %v1138, %v219
    %v1140 = vmul.u32.u64.compose %v1139, 3123612579
    %v1141 = vextract.low.u32 %v1140
    %v1142 = vextract.high.u32 %v1140
    %v1143 = vshrl.u32 %v1142, 6
    %v1144 = vmul.u32 %v1143, 88
    %v1145 = vsub.s32 %v1139, %v1144
    %v1146 = vsub.s32 0, %v1145
    %v1147 = vsel %vm1137, %v1146, %v1145
    %vm1148 = vcmp.lt.s32.totalorder %v220, 0
    %v1149 = vsub.s32 0, %v220
    %v1150 = vsel %vm1148, %v1149, %v220
    %v1151 = vmul.u32.u64.compose %v1150, 3123612579
    %v1152 = vextract.low.u32 %v1151
    %v1153 = vextract.high.u32 %v1151
    %v1154 = vshrl.u32 %v1153, 6
    %v1155 = vmul.u32 %v1154, 88
    %v1156 = vsub.s32 %v1150, %v1155
    %v1157 = vsub.s32 0, %v1156
    %v1158 = vsel %vm1148, %v1157, %v1156
    %vm1159 = vcmp.lt.s32.totalorder %v221, 0
    %v1160 = vsub.s32 0, %v221
    %v1161 = vsel %vm1159, %v1160, %v221
    %v1162 = vmul.u32.u64.compose %v1161, 3123612579
    %v1163 = vextract.low.u32 %v1162
    %v1164 = vextract.high.u32 %v1162
    %v1165 = vshrl.u32 %v1164, 6
    %v1166 = vmul.u32 %v1165, 88
    %v1167 = vsub.s32 %v1161, %v1166
    %v1168 = vsub.s32 0, %v1167
    %v1169 = vsel %vm1159, %v1168, %v1167
    %vm1170 = vcmp.lt.s32.totalorder %v222, 0
    %v1171 = vsub.s32 0, %v222
    %v1172 = vsel %vm1170, %v1171, %v222
    %v1173 = vmul.u32.u64.compose %v1172, 3123612579
    %v1174 = vextract.low.u32 %v1173
    %v1175 = vextract.high.u32 %v1173
    %v1176 = vshrl.u32 %v1175, 6
    %v1177 = vmul.u32 %v1176, 88
    %v1178 = vsub.s32 %v1172, %v1177
    %v1179 = vsub.s32 0, %v1178
    %v1180 = vsel %vm1170, %v1179, %v1178
    %vm1181 = vcmp.lt.s32.totalorder %v223, 0
    %v1182 = vsub.s32 0, %v223
    %v1183 = vsel %vm1181, %v1182, %v223
    %v1184 = vmul.u32.u64.compose %v1183, 3123612579
    %v1185 = vextract.low.u32 %v1184
    %v1186 = vextract.high.u32 %v1184
    %v1187 = vshrl.u32 %v1186, 6
    %v1188 = vmul.u32 %v1187, 88
    %v1189 = vsub.s32 %v1183, %v1188
    %v1190 = vsub.s32 0, %v1189
    %v1191 = vsel %vm1181, %v1190, %v1189
    %vm1192 = vcmp.ne.s32.totalorder %v234, 0
    %vm1193 = vcmp.ne.s32.totalorder %v245, 0
    %vm1194 = vcmp.ne.s32.totalorder %v256, 0
    %vm1195 = vcmp.ne.s32.totalorder %v267, 0
    %vm1196 = vcmp.ne.s32.totalorder %v278, 0
    %vm1197 = vcmp.ne.s32.totalorder %v289, 0
    %vm1198 = vcmp.ne.s32.totalorder %v300, 0
    %vm1199 = vcmp.ne.s32.totalorder %v311, 0
    %vm1200 = vcmp.ne.s32.totalorder %v322, 0
    %vm1201 = vcmp.ne.s32.totalorder %v333, 0
    %vm1202 = vcmp.ne.s32.totalorder %v344, 0
    %vm1203 = vcmp.ne.s32.totalorder %v355, 0
    %vm1204 = vcmp.ne.s32.totalorder %v366, 0
    %vm1205 = vcmp.ne.s32.totalorder %v377, 0
    %vm1206 = vcmp.ne.s32.totalorder %v388, 0
    %vm1207 = vcmp.ne.s32.totalorder %v399, 0
    %vm1208 = vcmp.ne.s32.totalorder %v410, 0
    %vm1209 = vcmp.ne.s32.totalorder %v421, 0
    %vm1210 = vcmp.ne.s32.totalorder %v432, 0
    %vm1211 = vcmp.ne.s32.totalorder %v443, 0
    %vm1212 = vcmp.ne.s32.totalorder %v454, 0
    %vm1213 = vcmp.ne.s32.totalorder %v465, 0
    %vm1214 = vcmp.ne.s32.totalorder %v476, 0
    %vm1215 = vcmp.ne.s32.totalorder %v487, 0
    %vm1216 = vcmp.ne.s32.totalorder %v498, 0
    %vm1217 = vcmp.ne.s32.totalorder %v509, 0
    %vm1218 = vcmp.ne.s32.totalorder %v520, 0
    %vm1219 = vcmp.ne.s32.totalorder %v531, 0
    %vm1220 = vcmp.ne.s32.totalorder %v542, 0
    %vm1221 = vcmp.ne.s32.totalorder %v553, 0
    %vm1222 = vcmp.ne.s32.totalorder %v564, 0
    %vm1223 = vcmp.ne.s32.totalorder %v575, 0
    %vm1224 = vcmp.ne.s32.totalorder %v586, 0
    %vm1225 = vcmp.ne.s32.totalorder %v597, 0
    %vm1226 = vcmp.ne.s32.totalorder %v608, 0
    %vm1227 = vcmp.ne.s32.totalorder %v619, 0
    %vm1228 = vcmp.ne.s32.totalorder %v630, 0
    %vm1229 = vcmp.ne.s32.totalorder %v641, 0
    %vm1230 = vcmp.ne.s32.totalorder %v652, 0
    %vm1231 = vcmp.ne.s32.totalorder %v663, 0
    %vm1232 = vcmp.ne.s32.totalorder %v674, 0
    %vm1233 = vcmp.ne.s32.totalorder %v685, 0
    %vm1234 = vcmp.ne.s32.totalorder %v696, 0
    %vm1235 = vcmp.ne.s32.totalorder %v707, 0
    %vm1236 = vcmp.ne.s32.totalorder %v718, 0
    %vm1237 = vcmp.ne.s32.totalorder %v729, 0
    %vm1238 = vcmp.ne.s32.totalorder %v740, 0
    %vm1239 = vcmp.ne.s32.totalorder %v751, 0
    %vm1240 = vcmp.ne.s32.totalorder %v762, 0
    %vm1241 = vcmp.ne.s32.totalorder %v773, 0
    %vm1242 = vcmp.ne.s32.totalorder %v784, 0
    %vm1243 = vcmp.ne.s32.totalorder %v795, 0
    %vm1244 = vcmp.ne.s32.totalorder %v806, 0
    %vm1245 = vcmp.ne.s32.totalorder %v817, 0
    %vm1246 = vcmp.ne.s32.totalorder %v828, 0
    %vm1247 = vcmp.ne.s32.totalorder %v839, 0
    %vm1248 = vcmp.ne.s32.totalorder %v850, 0
    %vm1249 = vcmp.ne.s32.totalorder %v861, 0
    %vm1250 = vcmp.ne.s32.totalorder %v872, 0
    %vm1251 = vcmp.ne.s32.totalorder %v883, 0
    %vm1252 = vcmp.ne.s32.totalorder %v894, 0
    %vm1253 = vcmp.ne.s32.totalorder %v905, 0
    %vm1254 = vcmp.ne.s32.totalorder %v916, 0
    %vm1255 = vcmp.ne.s32.totalorder %v927, 0
    %vm1256 = vcmp.ne.s32.totalorder %v938, 0
    %vm1257 = vcmp.ne.s32.totalorder %v949, 0
    %vm1258 = vcmp.ne.s32.totalorder %v960, 0
    %vm1259 = vcmp.ne.s32.totalorder %v971, 0
    %vm1260 = vcmp.ne.s32.totalorder %v982, 0
    %vm1261 = vcmp.ne.s32.totalorder %v993, 0
    %vm1262 = vcmp.ne.s32.totalorder %v1004, 0
    %vm1263 = vcmp.ne.s32.totalorder %v1015, 0
    %vm1264 = vcmp.ne.s32.totalorder %v1026, 0
    %vm1265 = vcmp.ne.s32.totalorder %v1037, 0
    %vm1266 = vcmp.ne.s32.totalorder %v1048, 0
    %vm1267 = vcmp.ne.s32.totalorder %v1059, 0
    %vm1268 = vcmp.ne.s32.totalorder %v1070, 0
    %vm1269 = vcmp.ne.s32.totalorder %v1081, 0
    %vm1270 = vcmp.ne.s32.totalorder %v1092, 0
    %vm1271 = vcmp.ne.s32.totalorder %v1103, 0
    %vm1272 = vcmp.ne.s32.totalorder %v1114, 0
    %vm1273 = vcmp.ne.s32.totalorder %v1125, 0
    %vm1274 = vcmp.ne.s32.totalorder %v1136, 0
    %vm1275 = vcmp.ne.s32.totalorder %v1147, 0
    %vm1276 = vcmp.ne.s32.totalorder %v1158, 0
    %vm1277 = vcmp.ne.s32.totalorder %v1169, 0
    %vm1278 = vcmp.ne.s32.totalorder %v1180, 0
    %vm1279 = vcmp.ne.s32.totalorder %v1191, 0
    %vm1280 = vcmp.lt.s32.totalorder %v234, 0
    %vm1281 = vcmp.lt.s32.totalorder %v245, 0
    %vm1282 = vcmp.lt.s32.totalorder %v256, 0
    %vm1283 = vcmp.lt.s32.totalorder %v267, 0
    %vm1284 = vcmp.lt.s32.totalorder %v278, 0
    %vm1285 = vcmp.lt.s32.totalorder %v289, 0
    %vm1286 = vcmp.lt.s32.totalorder %v300, 0
    %vm1287 = vcmp.lt.s32.totalorder %v311, 0
    %vm1288 = vcmp.lt.s32.totalorder %v322, 0
    %vm1289 = vcmp.lt.s32.totalorder %v333, 0
    %vm1290 = vcmp.lt.s32.totalorder %v344, 0
    %vm1291 = vcmp.lt.s32.totalorder %v355, 0
    %vm1292 = vcmp.lt.s32.totalorder %v366, 0
    %vm1293 = vcmp.lt.s32.totalorder %v377, 0
    %vm1294 = vcmp.lt.s32.totalorder %v388, 0
    %vm1295 = vcmp.lt.s32.totalorder %v399, 0
    %vm1296 = vcmp.lt.s32.totalorder %v410, 0
    %vm1297 = vcmp.lt.s32.totalorder %v421, 0
    %vm1298 = vcmp.lt.s32.totalorder %v432, 0
    %vm1299 = vcmp.lt.s32.totalorder %v443, 0
    %vm1300 = vcmp.lt.s32.totalorder %v454, 0
    %vm1301 = vcmp.lt.s32.totalorder %v465, 0
    %vm1302 = vcmp.lt.s32.totalorder %v476, 0
    %vm1303 = vcmp.lt.s32.totalorder %v487, 0
    %vm1304 = vcmp.lt.s32.totalorder %v498, 0
    %vm1305 = vcmp.lt.s32.totalorder %v509, 0
    %vm1306 = vcmp.lt.s32.totalorder %v520, 0
    %vm1307 = vcmp.lt.s32.totalorder %v531, 0
    %vm1308 = vcmp.lt.s32.totalorder %v542, 0
    %vm1309 = vcmp.lt.s32.totalorder %v553, 0
    %vm1310 = vcmp.lt.s32.totalorder %v564, 0
    %vm1311 = vcmp.lt.s32.totalorder %v575, 0
    %vm1312 = vcmp.lt.s32.totalorder %v586, 0
    %vm1313 = vcmp.lt.s32.totalorder %v597, 0
    %vm1314 = vcmp.lt.s32.totalorder %v608, 0
    %vm1315 = vcmp.lt.s32.totalorder %v619, 0
    %vm1316 = vcmp.lt.s32.totalorder %v630, 0
    %vm1317 = vcmp.lt.s32.totalorder %v641, 0
    %vm1318 = vcmp.lt.s32.totalorder %v652, 0
    %vm1319 = vcmp.lt.s32.totalorder %v663, 0
    %vm1320 = vcmp.lt.s32.totalorder %v674, 0
    %vm1321 = vcmp.lt.s32.totalorder %v685, 0
    %vm1322 = vcmp.lt.s32.totalorder %v696, 0
    %vm1323 = vcmp.lt.s32.totalorder %v707, 0
    %vm1324 = vcmp.lt.s32.totalorder %v718, 0
    %vm1325 = vcmp.lt.s32.totalorder %v729, 0
    %vm1326 = vcmp.lt.s32.totalorder %v740, 0
    %vm1327 = vcmp.lt.s32.totalorder %v751, 0
    %vm1328 = vcmp.lt.s32.totalorder %v762, 0
    %vm1329 = vcmp.lt.s32.totalorder %v773, 0
    %vm1330 = vcmp.lt.s32.totalorder %v784, 0
    %vm1331 = vcmp.lt.s32.totalorder %v795, 0
    %vm1332 = vcmp.lt.s32.totalorder %v806, 0
    %vm1333 = vcmp.lt.s32.totalorder %v817, 0
    %vm1334 = vcmp.lt.s32.totalorder %v828, 0
    %vm1335 = vcmp.lt.s32.totalorder %v839, 0
    %vm1336 = vcmp.lt.s32.totalorder %v850, 0
    %vm1337 = vcmp.lt.s32.totalorder %v861, 0
    %vm1338 = vcmp.lt.s32.totalorder %v872, 0
    %vm1339 = vcmp.lt.s32.totalorder %v883, 0
    %vm1340 = vcmp.lt.s32.totalorder %v894, 0
    %vm1341 = vcmp.lt.s32.totalorder %v905, 0
    %vm1342 = vcmp.lt.s32.totalorder %v916, 0
    %vm1343 = vcmp.lt.s32.totalorder %v927, 0
    %vm1344 = vcmp.lt.s32.totalorder %v938, 0
    %vm1345 = vcmp.lt.s32.totalorder %v949, 0
    %vm1346 = vcmp.lt.s32.totalorder %v960, 0
    %vm1347 = vcmp.lt.s32.totalorder %v971, 0
    %vm1348 = vcmp.lt.s32.totalorder %v982, 0
    %vm1349 = vcmp.lt.s32.totalorder %v993, 0
    %vm1350 = vcmp.lt.s32.totalorder %v1004, 0
    %vm1351 = vcmp.lt.s32.totalorder %v1015, 0
    %vm1352 = vcmp.lt.s32.totalorder %v1026, 0
    %vm1353 = vcmp.lt.s32.totalorder %v1037, 0
    %vm1354 = vcmp.lt.s32.totalorder %v1048, 0
    %vm1355 = vcmp.lt.s32.totalorder %v1059, 0
    %vm1356 = vcmp.lt.s32.totalorder %v1070, 0
    %vm1357 = vcmp.lt.s32.totalorder %v1081, 0
    %vm1358 = vcmp.lt.s32.totalorder %v1092, 0
    %vm1359 = vcmp.lt.s32.totalorder %v1103, 0
    %vm1360 = vcmp.lt.s32.totalorder %v1114, 0
    %vm1361 = vcmp.lt.s32.totalorder %v1125, 0
    %vm1362 = vcmp.lt.s32.totalorder %v1136, 0
    %vm1363 = vcmp.lt.s32.totalorder %v1147, 0
    %vm1364 = vcmp.lt.s32.totalorder %v1158, 0
    %vm1365 = vcmp.lt.s32.totalorder %v1169, 0
    %vm1366 = vcmp.lt.s32.totalorder %v1180, 0
    %vm1367 = vcmp.lt.s32.totalorder %v1191, 0
    %vm1368 = vmand %vm1280, %vm1192
    %vm1369 = vmand %vm1281, %vm1193
    %vm1370 = vmand %vm1282, %vm1194
    %vm1371 = vmand %vm1283, %vm1195
    %vm1372 = vmand %vm1284, %vm1196
    %vm1373 = vmand %vm1285, %vm1197
    %vm1374 = vmand %vm1286, %vm1198
    %vm1375 = vmand %vm1287, %vm1199
    %vm1376 = vmand %vm1288, %vm1200
    %vm1377 = vmand %vm1289, %vm1201
    %vm1378 = vmand %vm1290, %vm1202
    %vm1379 = vmand %vm1291, %vm1203
    %vm1380 = vmand %vm1292, %vm1204
    %vm1381 = vmand %vm1293, %vm1205
    %vm1382 = vmand %vm1294, %vm1206
    %vm1383 = vmand %vm1295, %vm1207
    %vm1384 = vmand %vm1296, %vm1208
    %vm1385 = vmand %vm1297, %vm1209
    %vm1386 = vmand %vm1298, %vm1210
    %vm1387 = vmand %vm1299, %vm1211
    %vm1388 = vmand %vm1300, %vm1212
    %vm1389 = vmand %vm1301, %vm1213
    %vm1390 = vmand %vm1302, %vm1214
    %vm1391 = vmand %vm1303, %vm1215
    %vm1392 = vmand %vm1304, %vm1216
    %vm1393 = vmand %vm1305, %vm1217
    %vm1394 = vmand %vm1306, %vm1218
    %vm1395 = vmand %vm1307, %vm1219
    %vm1396 = vmand %vm1308, %vm1220
    %vm1397 = vmand %vm1309, %vm1221
    %vm1398 = vmand %vm1310, %vm1222
    %vm1399 = vmand %vm1311, %vm1223
    %vm1400 = vmand %vm1312, %vm1224
    %vm1401 = vmand %vm1313, %vm1225
    %vm1402 = vmand %vm1314, %vm1226
    %vm1403 = vmand %vm1315, %vm1227
    %vm1404 = vmand %vm1316, %vm1228
    %vm1405 = vmand %vm1317, %vm1229
    %vm1406 = vmand %vm1318, %vm1230
    %vm1407 = vmand %vm1319, %vm1231
    %vm1408 = vmand %vm1320, %vm1232
    %vm1409 = vmand %vm1321, %vm1233
    %vm1410 = vmand %vm1322, %vm1234
    %vm1411 = vmand %vm1323, %vm1235
    %vm1412 = vmand %vm1324, %vm1236
    %vm1413 = vmand %vm1325, %vm1237
    %vm1414 = vmand %vm1326, %vm1238
    %vm1415 = vmand %vm1327, %vm1239
    %vm1416 = vmand %vm1328, %vm1240
    %vm1417 = vmand %vm1329, %vm1241
    %vm1418 = vmand %vm1330, %vm1242
    %vm1419 = vmand %vm1331, %vm1243
    %vm1420 = vmand %vm1332, %vm1244
    %vm1421 = vmand %vm1333, %vm1245
    %vm1422 = vmand %vm1334, %vm1246
    %vm1423 = vmand %vm1335, %vm1247
    %vm1424 = vmand %vm1336, %vm1248
    %vm1425 = vmand %vm1337, %vm1249
    %vm1426 = vmand %vm1338, %vm1250
    %vm1427 = vmand %vm1339, %vm1251
    %vm1428 = vmand %vm1340, %vm1252
    %vm1429 = vmand %vm1341, %vm1253
    %vm1430 = vmand %vm1342, %vm1254
    %vm1431 = vmand %vm1343, %vm1255
    %vm1432 = vmand %vm1344, %vm1256
    %vm1433 = vmand %vm1345, %vm1257
    %vm1434 = vmand %vm1346, %vm1258
    %vm1435 = vmand %vm1347, %vm1259
    %vm1436 = vmand %vm1348, %vm1260
    %vm1437 = vmand %vm1349, %vm1261
    %vm1438 = vmand %vm1350, %vm1262
    %vm1439 = vmand %vm1351, %vm1263
    %vm1440 = vmand %vm1352, %vm1264
    %vm1441 = vmand %vm1353, %vm1265
    %vm1442 = vmand %vm1354, %vm1266
    %vm1443 = vmand %vm1355, %vm1267
    %vm1444 = vmand %vm1356, %vm1268
    %vm1445 = vmand %vm1357, %vm1269
    %vm1446 = vmand %vm1358, %vm1270
    %vm1447 = vmand %vm1359, %vm1271
    %vm1448 = vmand %vm1360, %vm1272
    %vm1449 = vmand %vm1361, %vm1273
    %vm1450 = vmand %vm1362, %vm1274
    %vm1451 = vmand %vm1363, %vm1275
    %vm1452 = vmand %vm1364, %vm1276
    %vm1453 = vmand %vm1365, %vm1277
    %vm1454 = vmand %vm1366, %vm1278
    %vm1455 = vmand %vm1367, %vm1279
    %v1456 = vadd.s32 %v234, 88
    %v1457 = vadd.s32 %v245, 88
    %v1458 = vadd.s32 %v256, 88
    %v1459 = vadd.s32 %v267, 88
    %v1460 = vadd.s32 %v278, 88
    %v1461 = vadd.s32 %v289, 88
    %v1462 = vadd.s32 %v300, 88
    %v1463 = vadd.s32 %v311, 88
    %v1464 = vadd.s32 %v322, 88
    %v1465 = vadd.s32 %v333, 88
    %v1466 = vadd.s32 %v344, 88
    %v1467 = vadd.s32 %v355, 88
    %v1468 = vadd.s32 %v366, 88
    %v1469 = vadd.s32 %v377, 88
    %v1470 = vadd.s32 %v388, 88
    %v1471 = vadd.s32 %v399, 88
    %v1472 = vadd.s32 %v410, 88
    %v1473 = vadd.s32 %v421, 88
    %v1474 = vadd.s32 %v432, 88
    %v1475 = vadd.s32 %v443, 88
    %v1476 = vadd.s32 %v454, 88
    %v1477 = vadd.s32 %v465, 88
    %v1478 = vadd.s32 %v476, 88
    %v1479 = vadd.s32 %v487, 88
    %v1480 = vadd.s32 %v498, 88
    %v1481 = vadd.s32 %v509, 88
    %v1482 = vadd.s32 %v520, 88
    %v1483 = vadd.s32 %v531, 88
    %v1484 = vadd.s32 %v542, 88
    %v1485 = vadd.s32 %v553, 88
    %v1486 = vadd.s32 %v564, 88
    %v1487 = vadd.s32 %v575, 88
    %v1488 = vadd.s32 %v586, 88
    %v1489 = vadd.s32 %v597, 88
    %v1490 = vadd.s32 %v608, 88
    %v1491 = vadd.s32 %v619, 88
    %v1492 = vadd.s32 %v630, 88
    %v1493 = vadd.s32 %v641, 88
    %v1494 = vadd.s32 %v652, 88
    %v1495 = vadd.s32 %v663, 88
    %v1496 = vadd.s32 %v674, 88
    %v1497 = vadd.s32 %v685, 88
    %v1498 = vadd.s32 %v696, 88
    %v1499 = vadd.s32 %v707, 88
    %v1500 = vadd.s32 %v718, 88
    %v1501 = vadd.s32 %v729, 88
    %v1502 = vadd.s32 %v740, 88
    %v1503 = vadd.s32 %v751, 88
    %v1504 = vadd.s32 %v762, 88
    %v1505 = vadd.s32 %v773, 88
    %v1506 = vadd.s32 %v784, 88
    %v1507 = vadd.s32 %v795, 88
    %v1508 = vadd.s32 %v806, 88
    %v1509 = vadd.s32 %v817, 88
    %v1510 = vadd.s32 %v828, 88
    %v1511 = vadd.s32 %v839, 88
    %v1512 = vadd.s32 %v850, 88
    %v1513 = vadd.s32 %v861, 88
    %v1514 = vadd.s32 %v872, 88
    %v1515 = vadd.s32 %v883, 88
    %v1516 = vadd.s32 %v894, 88
    %v1517 = vadd.s32 %v905, 88
    %v1518 = vadd.s32 %v916, 88
    %v1519 = vadd.s32 %v927, 88
    %v1520 = vadd.s32 %v938, 88
    %v1521 = vadd.s32 %v949, 88
    %v1522 = vadd.s32 %v960, 88
    %v1523 = vadd.s32 %v971, 88
    %v1524 = vadd.s32 %v982, 88
    %v1525 = vadd.s32 %v993, 88
    %v1526 = vadd.s32 %v1004, 88
    %v1527 = vadd.s32 %v1015, 88
    %v1528 = vadd.s32 %v1026, 88
    %v1529 = vadd.s32 %v1037, 88
    %v1530 = vadd.s32 %v1048, 88
    %v1531 = vadd.s32 %v1059, 88
    %v1532 = vadd.s32 %v1070, 88
    %v1533 = vadd.s32 %v1081, 88
    %v1534 = vadd.s32 %v1092, 88
    %v1535 = vadd.s32 %v1103, 88
    %v1536 = vadd.s32 %v1114, 88
    %v1537 = vadd.s32 %v1125, 88
    %v1538 = vadd.s32 %v1136, 88
    %v1539 = vadd.s32 %v1147, 88
    %v1540 = vadd.s32 %v1158, 88
    %v1541 = vadd.s32 %v1169, 88
    %v1542 = vadd.s32 %v1180, 88
    %v1543 = vadd.s32 %v1191, 88
    %v1544 = vsel %vm1368, %v1456, %v234
    %v1545 = vsel %vm1369, %v1457, %v245
    %v1546 = vsel %vm1370, %v1458, %v256
    %v1547 = vsel %vm1371, %v1459, %v267
    %v1548 = vsel %vm1372, %v1460, %v278
    %v1549 = vsel %vm1373, %v1461, %v289
    %v1550 = vsel %vm1374, %v1462, %v300
    %v1551 = vsel %vm1375, %v1463, %v311
    %v1552 = vsel %vm1376, %v1464, %v322
    %v1553 = vsel %vm1377, %v1465, %v333
    %v1554 = vsel %vm1378, %v1466, %v344
    %v1555 = vsel %vm1379, %v1467, %v355
    %v1556 = vsel %vm1380, %v1468, %v366
    %v1557 = vsel %vm1381, %v1469, %v377
    %v1558 = vsel %vm1382, %v1470, %v388
    %v1559 = vsel %vm1383, %v1471, %v399
    %v1560 = vsel %vm1384, %v1472, %v410
    %v1561 = vsel %vm1385, %v1473, %v421
    %v1562 = vsel %vm1386, %v1474, %v432
    %v1563 = vsel %vm1387, %v1475, %v443
    %v1564 = vsel %vm1388, %v1476, %v454
    %v1565 = vsel %vm1389, %v1477, %v465
    %v1566 = vsel %vm1390, %v1478, %v476
    %v1567 = vsel %vm1391, %v1479, %v487
    %v1568 = vsel %vm1392, %v1480, %v498
    %v1569 = vsel %vm1393, %v1481, %v509
    %v1570 = vsel %vm1394, %v1482, %v520
    %v1571 = vsel %vm1395, %v1483, %v531
    %v1572 = vsel %vm1396, %v1484, %v542
    %v1573 = vsel %vm1397, %v1485, %v553
    %v1574 = vsel %vm1398, %v1486, %v564
    %v1575 = vsel %vm1399, %v1487, %v575
    %v1576 = vsel %vm1400, %v1488, %v586
    %v1577 = vsel %vm1401, %v1489, %v597
    %v1578 = vsel %vm1402, %v1490, %v608
    %v1579 = vsel %vm1403, %v1491, %v619
    %v1580 = vsel %vm1404, %v1492, %v630
    %v1581 = vsel %vm1405, %v1493, %v641
    %v1582 = vsel %vm1406, %v1494, %v652
    %v1583 = vsel %vm1407, %v1495, %v663
    %v1584 = vsel %vm1408, %v1496, %v674
    %v1585 = vsel %vm1409, %v1497, %v685
    %v1586 = vsel %vm1410, %v1498, %v696
    %v1587 = vsel %vm1411, %v1499, %v707
    %v1588 = vsel %vm1412, %v1500, %v718
    %v1589 = vsel %vm1413, %v1501, %v729
    %v1590 = vsel %vm1414, %v1502, %v740
    %v1591 = vsel %vm1415, %v1503, %v751
    %v1592 = vsel %vm1416, %v1504, %v762
    %v1593 = vsel %vm1417, %v1505, %v773
    %v1594 = vsel %vm1418, %v1506, %v784
    %v1595 = vsel %vm1419, %v1507, %v795
    %v1596 = vsel %vm1420, %v1508, %v806
    %v1597 = vsel %vm1421, %v1509, %v817
    %v1598 = vsel %vm1422, %v1510, %v828
    %v1599 = vsel %vm1423, %v1511, %v839
    %v1600 = vsel %vm1424, %v1512, %v850
    %v1601 = vsel %vm1425, %v1513, %v861
    %v1602 = vsel %vm1426, %v1514, %v872
    %v1603 = vsel %vm1427, %v1515, %v883
    %v1604 = vsel %vm1428, %v1516, %v894
    %v1605 = vsel %vm1429, %v1517, %v905
    %v1606 = vsel %vm1430, %v1518, %v916
    %v1607 = vsel %vm1431, %v1519, %v927
    %v1608 = vsel %vm1432, %v1520, %v938
    %v1609 = vsel %vm1433, %v1521, %v949
    %v1610 = vsel %vm1434, %v1522, %v960
    %v1611 = vsel %vm1435, %v1523, %v971
    %v1612 = vsel %vm1436, %v1524, %v982
    %v1613 = vsel %vm1437, %v1525, %v993
    %v1614 = vsel %vm1438, %v1526, %v1004
    %v1615 = vsel %vm1439, %v1527, %v1015
    %v1616 = vsel %vm1440, %v1528, %v1026
    %v1617 = vsel %vm1441, %v1529, %v1037
    %v1618 = vsel %vm1442, %v1530, %v1048
    %v1619 = vsel %vm1443, %v1531, %v1059
    %v1620 = vsel %vm1444, %v1532, %v1070
    %v1621 = vsel %vm1445, %v1533, %v1081
    %v1622 = vsel %vm1446, %v1534, %v1092
    %v1623 = vsel %vm1447, %v1535, %v1103
    %v1624 = vsel %vm1448, %v1536, %v1114
    %v1625 = vsel %vm1449, %v1537, %v1125
    %v1626 = vsel %vm1450, %v1538, %v1136
    %v1627 = vsel %vm1451, %v1539, %v1147
    %v1628 = vsel %vm1452, %v1540, %v1158
    %v1629 = vsel %vm1453, %v1541, %v1169
    %v1630 = vsel %vm1454, %v1542, %v1180
    %v1631 = vsel %vm1455, %v1543, %v1191
    %vm1632 = vcmp.eq.s32.totalorder %v1544, 0
    %vm1633 = vcmp.eq.s32.totalorder %v1545, 0
    %vm1634 = vcmp.eq.s32.totalorder %v1546, 0
    %vm1635 = vcmp.eq.s32.totalorder %v1547, 0
    %vm1636 = vcmp.eq.s32.totalorder %v1548, 0
    %vm1637 = vcmp.eq.s32.totalorder %v1549, 0
    %vm1638 = vcmp.eq.s32.totalorder %v1550, 0
    %vm1639 = vcmp.eq.s32.totalorder %v1551, 0
    %vm1640 = vcmp.eq.s32.totalorder %v1552, 0
    %vm1641 = vcmp.eq.s32.totalorder %v1553, 0
    %vm1642 = vcmp.eq.s32.totalorder %v1554, 0
    %vm1643 = vcmp.eq.s32.totalorder %v1555, 0
    %vm1644 = vcmp.eq.s32.totalorder %v1556, 0
    %vm1645 = vcmp.eq.s32.totalorder %v1557, 0
    %vm1646 = vcmp.eq.s32.totalorder %v1558, 0
    %vm1647 = vcmp.eq.s32.totalorder %v1559, 0
    %vm1648 = vcmp.eq.s32.totalorder %v1560, 0
    %vm1649 = vcmp.eq.s32.totalorder %v1561, 0
    %vm1650 = vcmp.eq.s32.totalorder %v1562, 0
    %vm1651 = vcmp.eq.s32.totalorder %v1563, 0
    %vm1652 = vcmp.eq.s32.totalorder %v1564, 0
    %vm1653 = vcmp.eq.s32.totalorder %v1565, 0
    %vm1654 = vcmp.eq.s32.totalorder %v1566, 0
    %vm1655 = vcmp.eq.s32.totalorder %v1567, 0
    %vm1656 = vcmp.eq.s32.totalorder %v1568, 0
    %vm1657 = vcmp.eq.s32.totalorder %v1569, 0
    %vm1658 = vcmp.eq.s32.totalorder %v1570, 0
    %vm1659 = vcmp.eq.s32.totalorder %v1571, 0
    %vm1660 = vcmp.eq.s32.totalorder %v1572, 0
    %vm1661 = vcmp.eq.s32.totalorder %v1573, 0
    %vm1662 = vcmp.eq.s32.totalorder %v1574, 0
    %vm1663 = vcmp.eq.s32.totalorder %v1575, 0
    %vm1664 = vcmp.eq.s32.totalorder %v1576, 0
    %vm1665 = vcmp.eq.s32.totalorder %v1577, 0
    %vm1666 = vcmp.eq.s32.totalorder %v1578, 0
    %vm1667 = vcmp.eq.s32.totalorder %v1579, 0
    %vm1668 = vcmp.eq.s32.totalorder %v1580, 0
    %vm1669 = vcmp.eq.s32.totalorder %v1581, 0
    %vm1670 = vcmp.eq.s32.totalorder %v1582, 0
    %vm1671 = vcmp.eq.s32.totalorder %v1583, 0
    %vm1672 = vcmp.eq.s32.totalorder %v1584, 0
    %vm1673 = vcmp.eq.s32.totalorder %v1585, 0
    %vm1674 = vcmp.eq.s32.totalorder %v1586, 0
    %vm1675 = vcmp.eq.s32.totalorder %v1587, 0
    %vm1676 = vcmp.eq.s32.totalorder %v1588, 0
    %vm1677 = vcmp.eq.s32.totalorder %v1589, 0
    %vm1678 = vcmp.eq.s32.totalorder %v1590, 0
    %vm1679 = vcmp.eq.s32.totalorder %v1591, 0
    %vm1680 = vcmp.eq.s32.totalorder %v1592, 0
    %vm1681 = vcmp.eq.s32.totalorder %v1593, 0
    %vm1682 = vcmp.eq.s32.totalorder %v1594, 0
    %vm1683 = vcmp.eq.s32.totalorder %v1595, 0
    %vm1684 = vcmp.eq.s32.totalorder %v1596, 0
    %vm1685 = vcmp.eq.s32.totalorder %v1597, 0
    %vm1686 = vcmp.eq.s32.totalorder %v1598, 0
    %vm1687 = vcmp.eq.s32.totalorder %v1599, 0
    %vm1688 = vcmp.eq.s32.totalorder %v1600, 0
    %vm1689 = vcmp.eq.s32.totalorder %v1601, 0
    %vm1690 = vcmp.eq.s32.totalorder %v1602, 0
    %vm1691 = vcmp.eq.s32.totalorder %v1603, 0
    %vm1692 = vcmp.eq.s32.totalorder %v1604, 0
    %vm1693 = vcmp.eq.s32.totalorder %v1605, 0
    %vm1694 = vcmp.eq.s32.totalorder %v1606, 0
    %vm1695 = vcmp.eq.s32.totalorder %v1607, 0
    %vm1696 = vcmp.eq.s32.totalorder %v1608, 0
    %vm1697 = vcmp.eq.s32.totalorder %v1609, 0
    %vm1698 = vcmp.eq.s32.totalorder %v1610, 0
    %vm1699 = vcmp.eq.s32.totalorder %v1611, 0
    %vm1700 = vcmp.eq.s32.totalorder %v1612, 0
    %vm1701 = vcmp.eq.s32.totalorder %v1613, 0
    %vm1702 = vcmp.eq.s32.totalorder %v1614, 0
    %vm1703 = vcmp.eq.s32.totalorder %v1615, 0
    %vm1704 = vcmp.eq.s32.totalorder %v1616, 0
    %vm1705 = vcmp.eq.s32.totalorder %v1617, 0
    %vm1706 = vcmp.eq.s32.totalorder %v1618, 0
    %vm1707 = vcmp.eq.s32.totalorder %v1619, 0
    %vm1708 = vcmp.eq.s32.totalorder %v1620, 0
    %vm1709 = vcmp.eq.s32.totalorder %v1621, 0
    %vm1710 = vcmp.eq.s32.totalorder %v1622, 0
    %vm1711 = vcmp.eq.s32.totalorder %v1623, 0
    %vm1712 = vcmp.eq.s32.totalorder %v1624, 0
    %vm1713 = vcmp.eq.s32.totalorder %v1625, 0
    %vm1714 = vcmp.eq.s32.totalorder %v1626, 0
    %vm1715 = vcmp.eq.s32.totalorder %v1627, 0
    %vm1716 = vcmp.eq.s32.totalorder %v1628, 0
    %vm1717 = vcmp.eq.s32.totalorder %v1629, 0
    %vm1718 = vcmp.eq.s32.totalorder %v1630, 0
    %vm1719 = vcmp.eq.s32.totalorder %v1631, 0
    %v1720 = vrot.slane %v47, 7
    %v1721 = vrot.slane %v48, 7
    %v1722 = vrot.slane %v49, 7
    %v1723 = vrot.slane %v50, 7
    %v1724 = vrot.slane %v51, 7
    %v1725 = vrot.slane %v52, 7
    %v1726 = vrot.slane %v53, 7
    %v1727 = vrot.slane %v54, 7
    %v1728 = vrot.slane %v55, 7
    %v1729 = vrot.slane %v56, 7
    %v1730 = vrot.slane %v57, 7
    %v1731 = vrot.slane %v58, 7
    %v1732 = vrot.slane %v59, 7
    %v1733 = vrot.slane %v60, 7
    %v1734 = vrot.slane %v61, 7
    %v1735 = vrot.slane %v62, 7
    %v1736 = vrot.slane %v63, 7
    %v1737 = vrot.slane %v64, 7
    %v1738 = vrot.slane %v65, 7
    %v1739 = vrot.slane %v66, 7
    %v1740 = vrot.slane %v67, 7
    %v1741 = vrot.slane %v68, 7
    %v1742 = vrot.slane %v69, 7
    %v1743 = vrot.slane %v70, 7
    %v1744 = vrot.slane %v71, 7
    %v1745 = vrot.slane %v72, 7
    %v1746 = vrot.slane %v73, 7
    %v1747 = vrot.slane %v74, 7
    %v1748 = vrot.slane %v75, 7
    %v1749 = vrot.slane %v76, 7
    %v1750 = vrot.slane %v77, 7
    %v1751 = vrot.slane %v78, 7
    %v1752 = vrot.slane %v79, 7
    %v1753 = vrot.slane %v80, 7
    %v1754 = vrot.slane %v81, 7
    %v1755 = vrot.slane %v82, 7
    %v1756 = vrot.slane %v83, 7
    %v1757 = vrot.slane %v84, 7
    %v1758 = vrot.slane %v85, 7
    %v1759 = vrot.slane %v86, 7
    %v1760 = vrot.slane %v87, 7
    %v1761 = vrot.slane %v88, 7
    %v1762 = vrot.slane %v89, 7
    %v1763 = vrot.slane %v90, 7
    %v1764 = vrot.slane %v91, 7
    %v1765 = vrot.slane %v92, 7
    %v1766 = vrot.slane %v93, 7
    %v1767 = vrot.slane %v94, 7
    %v1768 = vrot.slane %v95, 7
    %v1769 = vrot.slane %v96, 7
    %v1770 = vrot.slane %v97, 7
    %v1771 = vrot.slane %v98, 7
    %v1772 = vrot.slane %v99, 7
    %v1773 = vrot.slane %v100, 7
    %v1774 = vrot.slane %v101, 7
    %v1775 = vrot.slane %v102, 7
    %v1776 = vrot.slane %v103, 7
    %v1777 = vrot.slane %v104, 7
    %v1778 = vrot.slane %v105, 7
    %v1779 = vrot.slane %v106, 7
    %v1780 = vrot.slane %v107, 7
    %v1781 = vrot.slane %v108, 7
    %v1782 = vrot.slane %v109, 7
    %v1783 = vrot.slane %v110, 7
    %v1784 = vrot.slane %v111, 7
    %v1785 = vrot.slane %v112, 7
    %v1786 = vrot.slane %v113, 7
    %v1787 = vrot.slane %v114, 7
    %v1788 = vrot.slane %v115, 7
    %v1789 = vrot.slane %v116, 7
    %v1790 = vrot.slane %v117, 7
    %v1791 = vrot.slane %v118, 7
    %v1792 = vrot.slane %v119, 7
    %v1793 = vrot.slane %v120, 7
    %v1794 = vrot.slane %v121, 7
    %v1795 = vrot.slane %v122, 7
    %v1796 = vrot.slane %v123, 7
    %v1797 = vrot.slane %v124, 7
    %v1798 = vrot.slane %v125, 7
    %v1799 = vrot.slane %v126, 7
    %v1800 = vrot.slane %v127, 7
    %v1801 = vrot.slane %v128, 7
    %v1802 = vrot.slane %v129, 7
    %v1803 = vrot.slane %v130, 7
    %v1804 = vrot.slane %v131, 7
    %v1805 = vrot.slane %v132, 7
    %v1806 = vrot.slane %v133, 7
    %v1807 = vrot.slane %v134, 7
    %vm1808 = vcmp.lt.s32.totalorder %v136, 1
    %v1809 = vsel %vm1808, %v1806, %v1807
    %v1810 = vsel %vm1808, %v1805, %v1806
    %v1811 = vsel %vm1808, %v1804, %v1805
    %v1812 = vsel %vm1808, %v1803, %v1804
    %v1813 = vsel %vm1808, %v1802, %v1803
    %v1814 = vsel %vm1808, %v1801, %v1802
    %v1815 = vsel %vm1808, %v1800, %v1801
    %v1816 = vsel %vm1808, %v1799, %v1800
    %v1817 = vsel %vm1808, %v1798, %v1799
    %v1818 = vsel %vm1808, %v1797, %v1798
    %v1819 = vsel %vm1808, %v1796, %v1797
    %v1820 = vsel %vm1808, %v1795, %v1796
    %v1821 = vsel %vm1808, %v1794, %v1795
    %v1822 = vsel %vm1808, %v1793, %v1794
    %v1823 = vsel %vm1808, %v1792, %v1793
    %v1824 = vsel %vm1808, %v1791, %v1792
    %v1825 = vsel %vm1808, %v1790, %v1791
    %v1826 = vsel %vm1808, %v1789, %v1790
    %v1827 = vsel %vm1808, %v1788, %v1789
    %v1828 = vsel %vm1808, %v1787, %v1788
    %v1829 = vsel %vm1808, %v1786, %v1787
    %v1830 = vsel %vm1808, %v1785, %v1786
    %v1831 = vsel %vm1808, %v1784, %v1785
    %v1832 = vsel %vm1808, %v1783, %v1784
    %v1833 = vsel %vm1808, %v1782, %v1783
    %v1834 = vsel %vm1808, %v1781, %v1782
    %v1835 = vsel %vm1808, %v1780, %v1781
    %v1836 = vsel %vm1808, %v1779, %v1780
    %v1837 = vsel %vm1808, %v1778, %v1779
    %v1838 = vsel %vm1808, %v1777, %v1778
    %v1839 = vsel %vm1808, %v1776, %v1777
    %v1840 = vsel %vm1808, %v1775, %v1776
    %v1841 = vsel %vm1808, %v1774, %v1775
    %v1842 = vsel %vm1808, %v1773, %v1774
    %v1843 = vsel %vm1808, %v1772, %v1773
    %v1844 = vsel %vm1808, %v1771, %v1772
    %v1845 = vsel %vm1808, %v1770, %v1771
    %v1846 = vsel %vm1808, %v1769, %v1770
    %v1847 = vsel %vm1808, %v1768, %v1769
    %v1848 = vsel %vm1808, %v1767, %v1768
    %v1849 = vsel %vm1808, %v1766, %v1767
    %v1850 = vsel %vm1808, %v1765, %v1766
    %v1851 = vsel %vm1808, %v1764, %v1765
    %v1852 = vsel %vm1808, %v1763, %v1764
    %v1853 = vsel %vm1808, %v1762, %v1763
    %v1854 = vsel %vm1808, %v1761, %v1762
    %v1855 = vsel %vm1808, %v1760, %v1761
    %v1856 = vsel %vm1808, %v1759, %v1760
    %v1857 = vsel %vm1808, %v1758, %v1759
    %v1858 = vsel %vm1808, %v1757, %v1758
    %v1859 = vsel %vm1808, %v1756, %v1757
    %v1860 = vsel %vm1808, %v1755, %v1756
    %v1861 = vsel %vm1808, %v1754, %v1755
    %v1862 = vsel %vm1808, %v1753, %v1754
    %v1863 = vsel %vm1808, %v1752, %v1753
    %v1864 = vsel %vm1808, %v1751, %v1752
    %v1865 = vsel %vm1808, %v1750, %v1751
    %v1866 = vsel %vm1808, %v1749, %v1750
    %v1867 = vsel %vm1808, %v1748, %v1749
    %v1868 = vsel %vm1808, %v1747, %v1748
    %v1869 = vsel %vm1808, %v1746, %v1747
    %v1870 = vsel %vm1808, %v1745, %v1746
    %v1871 = vsel %vm1808, %v1744, %v1745
    %v1872 = vsel %vm1808, %v1743, %v1744
    %v1873 = vsel %vm1808, %v1742, %v1743
    %v1874 = vsel %vm1808, %v1741, %v1742
    %v1875 = vsel %vm1808, %v1740, %v1741
    %v1876 = vsel %vm1808, %v1739, %v1740
    %v1877 = vsel %vm1808, %v1738, %v1739
    %v1878 = vsel %vm1808, %v1737, %v1738
    %v1879 = vsel %vm1808, %v1736, %v1737
    %v1880 = vsel %vm1808, %v1735, %v1736
    %v1881 = vsel %vm1808, %v1734, %v1735
    %v1882 = vsel %vm1808, %v1733, %v1734
    %v1883 = vsel %vm1808, %v1732, %v1733
    %v1884 = vsel %vm1808, %v1731, %v1732
    %v1885 = vsel %vm1808, %v1730, %v1731
    %v1886 = vsel %vm1808, %v1729, %v1730
    %v1887 = vsel %vm1808, %v1728, %v1729
    %v1888 = vsel %vm1808, %v1727, %v1728
    %v1889 = vsel %vm1808, %v1726, %v1727
    %v1890 = vsel %vm1808, %v1725, %v1726
    %v1891 = vsel %vm1808, %v1724, %v1725
    %v1892 = vsel %vm1808, %v1723, %v1724
    %v1893 = vsel %vm1808, %v1722, %v1723
    %v1894 = vsel %vm1808, %v1721, %v1722
    %v1895 = vsel %vm1808, %v1720, %v1721
    %v1896 = vsel %vm1808, %v1807, %v1720
    %v1897 = vsel %vm1632, 0.0, %v1896
    %v1898 = vsel %vm1633, 0.0, %v1895
    %v1899 = vsel %vm1634, 0.0, %v1894
    %v1900 = vsel %vm1635, 0.0, %v1893
    %v1901 = vsel %vm1636, 0.0, %v1892
    %v1902 = vsel %vm1637, 0.0, %v1891
    %v1903 = vsel %vm1638, 0.0, %v1890
    %v1904 = vsel %vm1639, 0.0, %v1889
    %v1905 = vsel %vm1640, 0.0, %v1888
    %v1906 = vsel %vm1641, 0.0, %v1887
    %v1907 = vsel %vm1642, 0.0, %v1886
    %v1908 = vsel %vm1643, 0.0, %v1885
    %v1909 = vsel %vm1644, 0.0, %v1884
    %v1910 = vsel %vm1645, 0.0, %v1883
    %v1911 = vsel %vm1646, 0.0, %v1882
    %v1912 = vsel %vm1647, 0.0, %v1881
    %v1913 = vsel %vm1648, 0.0, %v1880
    %v1914 = vsel %vm1649, 0.0, %v1879
    %v1915 = vsel %vm1650, 0.0, %v1878
    %v1916 = vsel %vm1651, 0.0, %v1877
    %v1917 = vsel %vm1652, 0.0, %v1876
    %v1918 = vsel %vm1653, 0.0, %v1875
    %v1919 = vsel %vm1654, 0.0, %v1874
    %v1920 = vsel %vm1655, 0.0, %v1873
    %v1921 = vsel %vm1656, 0.0, %v1872
    %v1922 = vsel %vm1657, 0.0, %v1871
    %v1923 = vsel %vm1658, 0.0, %v1870
    %v1924 = vsel %vm1659, 0.0, %v1869
    %v1925 = vsel %vm1660, 0.0, %v1868
    %v1926 = vsel %vm1661, 0.0, %v1867
    %v1927 = vsel %vm1662, 0.0, %v1866
    %v1928 = vsel %vm1663, 0.0, %v1865
    %v1929 = vsel %vm1664, 0.0, %v1864
    %v1930 = vsel %vm1665, 0.0, %v1863
    %v1931 = vsel %vm1666, 0.0, %v1862
    %v1932 = vsel %vm1667, 0.0, %v1861
    %v1933 = vsel %vm1668, 0.0, %v1860
    %v1934 = vsel %vm1669, 0.0, %v1859
    %v1935 = vsel %vm1670, 0.0, %v1858
    %v1936 = vsel %vm1671, 0.0, %v1857
    %v1937 = vsel %vm1672, 0.0, %v1856
    %v1938 = vsel %vm1673, 0.0, %v1855
    %v1939 = vsel %vm1674, 0.0, %v1854
    %v1940 = vsel %vm1675, 0.0, %v1853
    %v1941 = vsel %vm1676, 0.0, %v1852
    %v1942 = vsel %vm1677, 0.0, %v1851
    %v1943 = vsel %vm1678, 0.0, %v1850
    %v1944 = vsel %vm1679, 0.0, %v1849
    %v1945 = vsel %vm1680, 0.0, %v1848
    %v1946 = vsel %vm1681, 0.0, %v1847
    %v1947 = vsel %vm1682, 0.0, %v1846
    %v1948 = vsel %vm1683, 0.0, %v1845
    %v1949 = vsel %vm1684, 0.0, %v1844
    %v1950 = vsel %vm1685, 0.0, %v1843
    %v1951 = vsel %vm1686, 0.0, %v1842
    %v1952 = vsel %vm1687, 0.0, %v1841
    %v1953 = vsel %vm1688, 0.0, %v1840
    %v1954 = vsel %vm1689, 0.0, %v1839
    %v1955 = vsel %vm1690, 0.0, %v1838
    %v1956 = vsel %vm1691, 0.0, %v1837
    %v1957 = vsel %vm1692, 0.0, %v1836
    %v1958 = vsel %vm1693, 0.0, %v1835
    %v1959 = vsel %vm1694, 0.0, %v1834
    %v1960 = vsel %vm1695, 0.0, %v1833
    %v1961 = vsel %vm1696, 0.0, %v1832
    %v1962 = vsel %vm1697, 0.0, %v1831
    %v1963 = vsel %vm1698, 0.0, %v1830
    %v1964 = vsel %vm1699, 0.0, %v1829
    %v1965 = vsel %vm1700, 0.0, %v1828
    %v1966 = vsel %vm1701, 0.0, %v1827
    %v1967 = vsel %vm1702, 0.0, %v1826
    %v1968 = vsel %vm1703, 0.0, %v1825
    %v1969 = vsel %vm1704, 0.0, %v1824
    %v1970 = vsel %vm1705, 0.0, %v1823
    %v1971 = vsel %vm1706, 0.0, %v1822
    %v1972 = vsel %vm1707, 0.0, %v1821
    %v1973 = vsel %vm1708, 0.0, %v1820
    %v1974 = vsel %vm1709, 0.0, %v1819
    %v1975 = vsel %vm1710, 0.0, %v1818
    %v1976 = vsel %vm1711, 0.0, %v1817
    %v1977 = vsel %vm1712, 0.0, %v1816
    %v1978 = vsel %vm1713, 0.0, %v1815
    %v1979 = vsel %vm1714, 0.0, %v1814
    %v1980 = vsel %vm1715, 0.0, %v1813
    %v1981 = vsel %vm1716, 0.0, %v1812
    %v1982 = vsel %vm1717, 0.0, %v1811
    %v1983 = vsel %vm1718, 0.0, %v1810
    %v1984 = vsel %vm1719, 0.0, %v1809
    %vm1985 = vcmp.eq.s32.totalorder %v1544, 87
    %vm1986 = vcmp.eq.s32.totalorder %v1545, 87
    %vm1987 = vcmp.eq.s32.totalorder %v1546, 87
    %vm1988 = vcmp.eq.s32.totalorder %v1547, 87
    %vm1989 = vcmp.eq.s32.totalorder %v1548, 87
    %vm1990 = vcmp.eq.s32.totalorder %v1549, 87
    %vm1991 = vcmp.eq.s32.totalorder %v1550, 87
    %vm1992 = vcmp.eq.s32.totalorder %v1551, 87
    %vm1993 = vcmp.eq.s32.totalorder %v1552, 87
    %vm1994 = vcmp.eq.s32.totalorder %v1553, 87
    %vm1995 = vcmp.eq.s32.totalorder %v1554, 87
    %vm1996 = vcmp.eq.s32.totalorder %v1555, 87
    %vm1997 = vcmp.eq.s32.totalorder %v1556, 87
    %vm1998 = vcmp.eq.s32.totalorder %v1557, 87
    %vm1999 = vcmp.eq.s32.totalorder %v1558, 87
    %vm2000 = vcmp.eq.s32.totalorder %v1559, 87
    %vm2001 = vcmp.eq.s32.totalorder %v1560, 87
    %vm2002 = vcmp.eq.s32.totalorder %v1561, 87
    %vm2003 = vcmp.eq.s32.totalorder %v1562, 87
    %vm2004 = vcmp.eq.s32.totalorder %v1563, 87
    %vm2005 = vcmp.eq.s32.totalorder %v1564, 87
    %vm2006 = vcmp.eq.s32.totalorder %v1565, 87
    %vm2007 = vcmp.eq.s32.totalorder %v1566, 87
    %vm2008 = vcmp.eq.s32.totalorder %v1567, 87
    %vm2009 = vcmp.eq.s32.totalorder %v1568, 87
    %vm2010 = vcmp.eq.s32.totalorder %v1569, 87
    %vm2011 = vcmp.eq.s32.totalorder %v1570, 87
    %vm2012 = vcmp.eq.s32.totalorder %v1571, 87
    %vm2013 = vcmp.eq.s32.totalorder %v1572, 87
    %vm2014 = vcmp.eq.s32.totalorder %v1573, 87
    %vm2015 = vcmp.eq.s32.totalorder %v1574, 87
    %vm2016 = vcmp.eq.s32.totalorder %v1575, 87
    %vm2017 = vcmp.eq.s32.totalorder %v1576, 87
    %vm2018 = vcmp.eq.s32.totalorder %v1577, 87
    %vm2019 = vcmp.eq.s32.totalorder %v1578, 87
    %vm2020 = vcmp.eq.s32.totalorder %v1579, 87
    %vm2021 = vcmp.eq.s32.totalorder %v1580, 87
    %vm2022 = vcmp.eq.s32.totalorder %v1581, 87
    %vm2023 = vcmp.eq.s32.totalorder %v1582, 87
    %vm2024 = vcmp.eq.s32.totalorder %v1583, 87
    %vm2025 = vcmp.eq.s32.totalorder %v1584, 87
    %vm2026 = vcmp.eq.s32.totalorder %v1585, 87
    %vm2027 = vcmp.eq.s32.totalorder %v1586, 87
    %vm2028 = vcmp.eq.s32.totalorder %v1587, 87
    %vm2029 = vcmp.eq.s32.totalorder %v1588, 87
    %vm2030 = vcmp.eq.s32.totalorder %v1589, 87
    %vm2031 = vcmp.eq.s32.totalorder %v1590, 87
    %vm2032 = vcmp.eq.s32.totalorder %v1591, 87
    %vm2033 = vcmp.eq.s32.totalorder %v1592, 87
    %vm2034 = vcmp.eq.s32.totalorder %v1593, 87
    %vm2035 = vcmp.eq.s32.totalorder %v1594, 87
    %vm2036 = vcmp.eq.s32.totalorder %v1595, 87
    %vm2037 = vcmp.eq.s32.totalorder %v1596, 87
    %vm2038 = vcmp.eq.s32.totalorder %v1597, 87
    %vm2039 = vcmp.eq.s32.totalorder %v1598, 87
    %vm2040 = vcmp.eq.s32.totalorder %v1599, 87
    %vm2041 = vcmp.eq.s32.totalorder %v1600, 87
    %vm2042 = vcmp.eq.s32.totalorder %v1601, 87
    %vm2043 = vcmp.eq.s32.totalorder %v1602, 87
    %vm2044 = vcmp.eq.s32.totalorder %v1603, 87
    %vm2045 = vcmp.eq.s32.totalorder %v1604, 87
    %vm2046 = vcmp.eq.s32.totalorder %v1605, 87
    %vm2047 = vcmp.eq.s32.totalorder %v1606, 87
    %vm2048 = vcmp.eq.s32.totalorder %v1607, 87
    %vm2049 = vcmp.eq.s32.totalorder %v1608, 87
    %vm2050 = vcmp.eq.s32.totalorder %v1609, 87
    %vm2051 = vcmp.eq.s32.totalorder %v1610, 87
    %vm2052 = vcmp.eq.s32.totalorder %v1611, 87
    %vm2053 = vcmp.eq.s32.totalorder %v1612, 87
    %vm2054 = vcmp.eq.s32.totalorder %v1613, 87
    %vm2055 = vcmp.eq.s32.totalorder %v1614, 87
    %vm2056 = vcmp.eq.s32.totalorder %v1615, 87
    %vm2057 = vcmp.eq.s32.totalorder %v1616, 87
    %vm2058 = vcmp.eq.s32.totalorder %v1617, 87
    %vm2059 = vcmp.eq.s32.totalorder %v1618, 87
    %vm2060 = vcmp.eq.s32.totalorder %v1619, 87
    %vm2061 = vcmp.eq.s32.totalorder %v1620, 87
    %vm2062 = vcmp.eq.s32.totalorder %v1621, 87
    %vm2063 = vcmp.eq.s32.totalorder %v1622, 87
    %vm2064 = vcmp.eq.s32.totalorder %v1623, 87
    %vm2065 = vcmp.eq.s32.totalorder %v1624, 87
    %vm2066 = vcmp.eq.s32.totalorder %v1625, 87
    %vm2067 = vcmp.eq.s32.totalorder %v1626, 87
    %vm2068 = vcmp.eq.s32.totalorder %v1627, 87
    %vm2069 = vcmp.eq.s32.totalorder %v1628, 87
    %vm2070 = vcmp.eq.s32.totalorder %v1629, 87
    %vm2071 = vcmp.eq.s32.totalorder %v1630, 87
    %vm2072 = vcmp.eq.s32.totalorder %v1631, 87
    %v2073 = vrot.slane %v47, 1
    %v2074 = vrot.slane %v48, 1
    %v2075 = vrot.slane %v49, 1
    %v2076 = vrot.slane %v50, 1
    %v2077 = vrot.slane %v51, 1
    %v2078 = vrot.slane %v52, 1
    %v2079 = vrot.slane %v53, 1
    %v2080 = vrot.slane %v54, 1
    %v2081 = vrot.slane %v55, 1
    %v2082 = vrot.slane %v56, 1
    %v2083 = vrot.slane %v57, 1
    %v2084 = vrot.slane %v58, 1
    %v2085 = vrot.slane %v59, 1
    %v2086 = vrot.slane %v60, 1
    %v2087 = vrot.slane %v61, 1
    %v2088 = vrot.slane %v62, 1
    %v2089 = vrot.slane %v63, 1
    %v2090 = vrot.slane %v64, 1
    %v2091 = vrot.slane %v65, 1
    %v2092 = vrot.slane %v66, 1
    %v2093 = vrot.slane %v67, 1
    %v2094 = vrot.slane %v68, 1
    %v2095 = vrot.slane %v69, 1
    %v2096 = vrot.slane %v70, 1
    %v2097 = vrot.slane %v71, 1
    %v2098 = vrot.slane %v72, 1
    %v2099 = vrot.slane %v73, 1
    %v2100 = vrot.slane %v74, 1
    %v2101 = vrot.slane %v75, 1
    %v2102 = vrot.slane %v76, 1
    %v2103 = vrot.slane %v77, 1
    %v2104 = vrot.slane %v78, 1
    %v2105 = vrot.slane %v79, 1
    %v2106 = vrot.slane %v80, 1
    %v2107 = vrot.slane %v81, 1
    %v2108 = vrot.slane %v82, 1
    %v2109 = vrot.slane %v83, 1
    %v2110 = vrot.slane %v84, 1
    %v2111 = vrot.slane %v85, 1
    %v2112 = vrot.slane %v86, 1
    %v2113 = vrot.slane %v87, 1
    %v2114 = vrot.slane %v88, 1
    %v2115 = vrot.slane %v89, 1
    %v2116 = vrot.slane %v90, 1
    %v2117 = vrot.slane %v91, 1
    %v2118 = vrot.slane %v92, 1
    %v2119 = vrot.slane %v93, 1
    %v2120 = vrot.slane %v94, 1
    %v2121 = vrot.slane %v95, 1
    %v2122 = vrot.slane %v96, 1
    %v2123 = vrot.slane %v97, 1
    %v2124 = vrot.slane %v98, 1
    %v2125 = vrot.slane %v99, 1
    %v2126 = vrot.slane %v100, 1
    %v2127 = vrot.slane %v101, 1
    %v2128 = vrot.slane %v102, 1
    %v2129 = vrot.slane %v103, 1
    %v2130 = vrot.slane %v104, 1
    %v2131 = vrot.slane %v105, 1
    %v2132 = vrot.slane %v106, 1
    %v2133 = vrot.slane %v107, 1
    %v2134 = vrot.slane %v108, 1
    %v2135 = vrot.slane %v109, 1
    %v2136 = vrot.slane %v110, 1
    %v2137 = vrot.slane %v111, 1
    %v2138 = vrot.slane %v112, 1
    %v2139 = vrot.slane %v113, 1
    %v2140 = vrot.slane %v114, 1
    %v2141 = vrot.slane %v115, 1
    %v2142 = vrot.slane %v116, 1
    %v2143 = vrot.slane %v117, 1
    %v2144 = vrot.slane %v118, 1
    %v2145 = vrot.slane %v119, 1
    %v2146 = vrot.slane %v120, 1
    %v2147 = vrot.slane %v121, 1
    %v2148 = vrot.slane %v122, 1
    %v2149 = vrot.slane %v123, 1
    %v2150 = vrot.slane %v124, 1
    %v2151 = vrot.slane %v125, 1
    %v2152 = vrot.slane %v126, 1
    %v2153 = vrot.slane %v127, 1
    %v2154 = vrot.slane %v128, 1
    %v2155 = vrot.slane %v129, 1
    %v2156 = vrot.slane %v130, 1
    %v2157 = vrot.slane %v131, 1
    %v2158 = vrot.slane %v132, 1
    %v2159 = vrot.slane %v133, 1
    %v2160 = vrot.slane %v134, 1
    %vm2161 = vcmp.lt.s32.totalorder %v136, 7
    %v2162 = vsel %vm2161, %v2159, %v2160
    %v2163 = vsel %vm2161, %v2158, %v2159
    %v2164 = vsel %vm2161, %v2157, %v2158
    %v2165 = vsel %vm2161, %v2156, %v2157
    %v2166 = vsel %vm2161, %v2155, %v2156
    %v2167 = vsel %vm2161, %v2154, %v2155
    %v2168 = vsel %vm2161, %v2153, %v2154
    %v2169 = vsel %vm2161, %v2152, %v2153
    %v2170 = vsel %vm2161, %v2151, %v2152
    %v2171 = vsel %vm2161, %v2150, %v2151
    %v2172 = vsel %vm2161, %v2149, %v2150
    %v2173 = vsel %vm2161, %v2148, %v2149
    %v2174 = vsel %vm2161, %v2147, %v2148
    %v2175 = vsel %vm2161, %v2146, %v2147
    %v2176 = vsel %vm2161, %v2145, %v2146
    %v2177 = vsel %vm2161, %v2144, %v2145
    %v2178 = vsel %vm2161, %v2143, %v2144
    %v2179 = vsel %vm2161, %v2142, %v2143
    %v2180 = vsel %vm2161, %v2141, %v2142
    %v2181 = vsel %vm2161, %v2140, %v2141
    %v2182 = vsel %vm2161, %v2139, %v2140
    %v2183 = vsel %vm2161, %v2138, %v2139
    %v2184 = vsel %vm2161, %v2137, %v2138
    %v2185 = vsel %vm2161, %v2136, %v2137
    %v2186 = vsel %vm2161, %v2135, %v2136
    %v2187 = vsel %vm2161, %v2134, %v2135
    %v2188 = vsel %vm2161, %v2133, %v2134
    %v2189 = vsel %vm2161, %v2132, %v2133
    %v2190 = vsel %vm2161, %v2131, %v2132
    %v2191 = vsel %vm2161, %v2130, %v2131
    %v2192 = vsel %vm2161, %v2129, %v2130
    %v2193 = vsel %vm2161, %v2128, %v2129
    %v2194 = vsel %vm2161, %v2127, %v2128
    %v2195 = vsel %vm2161, %v2126, %v2127
    %v2196 = vsel %vm2161, %v2125, %v2126
    %v2197 = vsel %vm2161, %v2124, %v2125
    %v2198 = vsel %vm2161, %v2123, %v2124
    %v2199 = vsel %vm2161, %v2122, %v2123
    %v2200 = vsel %vm2161, %v2121, %v2122
    %v2201 = vsel %vm2161, %v2120, %v2121
    %v2202 = vsel %vm2161, %v2119, %v2120
    %v2203 = vsel %vm2161, %v2118, %v2119
    %v2204 = vsel %vm2161, %v2117, %v2118
    %v2205 = vsel %vm2161, %v2116, %v2117
    %v2206 = vsel %vm2161, %v2115, %v2116
    %v2207 = vsel %vm2161, %v2114, %v2115
    %v2208 = vsel %vm2161, %v2113, %v2114
    %v2209 = vsel %vm2161, %v2112, %v2113
    %v2210 = vsel %vm2161, %v2111, %v2112
    %v2211 = vsel %vm2161, %v2110, %v2111
    %v2212 = vsel %vm2161, %v2109, %v2110
    %v2213 = vsel %vm2161, %v2108, %v2109
    %v2214 = vsel %vm2161, %v2107, %v2108
    %v2215 = vsel %vm2161, %v2106, %v2107
    %v2216 = vsel %vm2161, %v2105, %v2106
    %v2217 = vsel %vm2161, %v2104, %v2105
    %v2218 = vsel %vm2161, %v2103, %v2104
    %v2219 = vsel %vm2161, %v2102, %v2103
    %v2220 = vsel %vm2161, %v2101, %v2102
    %v2221 = vsel %vm2161, %v2100, %v2101
    %v2222 = vsel %vm2161, %v2099, %v2100
    %v2223 = vsel %vm2161, %v2098, %v2099
    %v2224 = vsel %vm2161, %v2097, %v2098
    %v2225 = vsel %vm2161, %v2096, %v2097
    %v2226 = vsel %vm2161, %v2095, %v2096
    %v2227 = vsel %vm2161, %v2094, %v2095
    %v2228 = vsel %vm2161, %v2093, %v2094
    %v2229 = vsel %vm2161, %v2092, %v2093
    %v2230 = vsel %vm2161, %v2091, %v2092
    %v2231 = vsel %vm2161, %v2090, %v2091
    %v2232 = vsel %vm2161, %v2089, %v2090
    %v2233 = vsel %vm2161, %v2088, %v2089
    %v2234 = vsel %vm2161, %v2087, %v2088
    %v2235 = vsel %vm2161, %v2086, %v2087
    %v2236 = vsel %vm2161, %v2085, %v2086
    %v2237 = vsel %vm2161, %v2084, %v2085
    %v2238 = vsel %vm2161, %v2083, %v2084
    %v2239 = vsel %vm2161, %v2082, %v2083
    %v2240 = vsel %vm2161, %v2081, %v2082
    %v2241 = vsel %vm2161, %v2080, %v2081
    %v2242 = vsel %vm2161, %v2079, %v2080
    %v2243 = vsel %vm2161, %v2078, %v2079
    %v2244 = vsel %vm2161, %v2077, %v2078
    %v2245 = vsel %vm2161, %v2076, %v2077
    %v2246 = vsel %vm2161, %v2075, %v2076
    %v2247 = vsel %vm2161, %v2074, %v2075
    %v2248 = vsel %vm2161, %v2073, %v2074
    %v2249 = vsel %vm2161, %v2160, %v2073
    %v2250 = vsel %vm1985, 0.0, %v2248
    %v2251 = vsel %vm1986, 0.0, %v2247
    %v2252 = vsel %vm1987, 0.0, %v2246
    %v2253 = vsel %vm1988, 0.0, %v2245
    %v2254 = vsel %vm1989, 0.0, %v2244
    %v2255 = vsel %vm1990, 0.0, %v2243
    %v2256 = vsel %vm1991, 0.0, %v2242
    %v2257 = vsel %vm1992, 0.0, %v2241
    %v2258 = vsel %vm1993, 0.0, %v2240
    %v2259 = vsel %vm1994, 0.0, %v2239
    %v2260 = vsel %vm1995, 0.0, %v2238
    %v2261 = vsel %vm1996, 0.0, %v2237
    %v2262 = vsel %vm1997, 0.0, %v2236
    %v2263 = vsel %vm1998, 0.0, %v2235
    %v2264 = vsel %vm1999, 0.0, %v2234
    %v2265 = vsel %vm2000, 0.0, %v2233
    %v2266 = vsel %vm2001, 0.0, %v2232
    %v2267 = vsel %vm2002, 0.0, %v2231
    %v2268 = vsel %vm2003, 0.0, %v2230
    %v2269 = vsel %vm2004, 0.0, %v2229
    %v2270 = vsel %vm2005, 0.0, %v2228
    %v2271 = vsel %vm2006, 0.0, %v2227
    %v2272 = vsel %vm2007, 0.0, %v2226
    %v2273 = vsel %vm2008, 0.0, %v2225
    %v2274 = vsel %vm2009, 0.0, %v2224
    %v2275 = vsel %vm2010, 0.0, %v2223
    %v2276 = vsel %vm2011, 0.0, %v2222
    %v2277 = vsel %vm2012, 0.0, %v2221
    %v2278 = vsel %vm2013, 0.0, %v2220
    %v2279 = vsel %vm2014, 0.0, %v2219
    %v2280 = vsel %vm2015, 0.0, %v2218
    %v2281 = vsel %vm2016, 0.0, %v2217
    %v2282 = vsel %vm2017, 0.0, %v2216
    %v2283 = vsel %vm2018, 0.0, %v2215
    %v2284 = vsel %vm2019, 0.0, %v2214
    %v2285 = vsel %vm2020, 0.0, %v2213
    %v2286 = vsel %vm2021, 0.0, %v2212
    %v2287 = vsel %vm2022, 0.0, %v2211
    %v2288 = vsel %vm2023, 0.0, %v2210
    %v2289 = vsel %vm2024, 0.0, %v2209
    %v2290 = vsel %vm2025, 0.0, %v2208
    %v2291 = vsel %vm2026, 0.0, %v2207
    %v2292 = vsel %vm2027, 0.0, %v2206
    %v2293 = vsel %vm2028, 0.0, %v2205
    %v2294 = vsel %vm2029, 0.0, %v2204
    %v2295 = vsel %vm2030, 0.0, %v2203
    %v2296 = vsel %vm2031, 0.0, %v2202
    %v2297 = vsel %vm2032, 0.0, %v2201
    %v2298 = vsel %vm2033, 0.0, %v2200
    %v2299 = vsel %vm2034, 0.0, %v2199
    %v2300 = vsel %vm2035, 0.0, %v2198
    %v2301 = vsel %vm2036, 0.0, %v2197
    %v2302 = vsel %vm2037, 0.0, %v2196
    %v2303 = vsel %vm2038, 0.0, %v2195
    %v2304 = vsel %vm2039, 0.0, %v2194
    %v2305 = vsel %vm2040, 0.0, %v2193
    %v2306 = vsel %vm2041, 0.0, %v2192
    %v2307 = vsel %vm2042, 0.0, %v2191
    %v2308 = vsel %vm2043, 0.0, %v2190
    %v2309 = vsel %vm2044, 0.0, %v2189
    %v2310 = vsel %vm2045, 0.0, %v2188
    %v2311 = vsel %vm2046, 0.0, %v2187
    %v2312 = vsel %vm2047, 0.0, %v2186
    %v2313 = vsel %vm2048, 0.0, %v2185
    %v2314 = vsel %vm2049, 0.0, %v2184
    %v2315 = vsel %vm2050, 0.0, %v2183
    %v2316 = vsel %vm2051, 0.0, %v2182
    %v2317 = vsel %vm2052, 0.0, %v2181
    %v2318 = vsel %vm2053, 0.0, %v2180
    %v2319 = vsel %vm2054, 0.0, %v2179
    %v2320 = vsel %vm2055, 0.0, %v2178
    %v2321 = vsel %vm2056, 0.0, %v2177
    %v2322 = vsel %vm2057, 0.0, %v2176
    %v2323 = vsel %vm2058, 0.0, %v2175
    %v2324 = vsel %vm2059, 0.0, %v2174
    %v2325 = vsel %vm2060, 0.0, %v2173
    %v2326 = vsel %vm2061, 0.0, %v2172
    %v2327 = vsel %vm2062, 0.0, %v2171
    %v2328 = vsel %vm2063, 0.0, %v2170
    %v2329 = vsel %vm2064, 0.0, %v2169
    %v2330 = vsel %vm2065, 0.0, %v2168
    %v2331 = vsel %vm2066, 0.0, %v2167
    %v2332 = vsel %vm2067, 0.0, %v2166
    %v2333 = vsel %vm2068, 0.0, %v2165
    %v2334 = vsel %vm2069, 0.0, %v2164
    %v2335 = vsel %vm2070, 0.0, %v2163
    %v2336 = vsel %vm2071, 0.0, %v2162
    %v2337 = vsel %vm2072, 0.0, %v2249
    %2426 = vrot.lane.b32.xlu0 %v47, 3
    %v2427 = vpop.permute.xlu0 %2426
    %2428 = vrot.lane.b32.xlu0 %v48, 3
    %v2429 = vpop.permute.xlu0 %2428
    %2430 = vrot.lane.b32.xlu0 %v49, 3
    %v2431 = vpop.permute.xlu0 %2430
    %2432 = vrot.lane.b32.xlu0 %v50, 3
    %v2433 = vpop.permute.xlu0 %2432
    %2434 = vrot.lane.b32.xlu0 %v51, 3
    %v2435 = vpop.permute.xlu0 %2434
    %2436 = vrot.lane.b32.xlu0 %v52, 3
    %v2437 = vpop.permute.xlu0 %2436
    %2438 = vrot.lane.b32.xlu0 %v53, 3
    %v2439 = vpop.permute.xlu0 %2438
    %2440 = vrot.lane.b32.xlu0 %v54, 3
    %v2441 = vpop.permute.xlu0 %2440
    %2442 = vrot.lane.b32.xlu0 %v55, 3
    %v2443 = vpop.permute.xlu0 %2442
    %2444 = vrot.lane.b32.xlu0 %v56, 3
    %v2445 = vpop.permute.xlu0 %2444
    %2446 = vrot.lane.b32.xlu0 %v57, 3
    %v2447 = vpop.permute.xlu0 %2446
    %2448 = vrot.lane.b32.xlu0 %v58, 3
    %v2449 = vpop.permute.xlu0 %2448
    %2450 = vrot.lane.b32.xlu0 %v59, 3
    %v2451 = vpop.permute.xlu0 %2450
    %2452 = vrot.lane.b32.xlu0 %v60, 3
    %v2453 = vpop.permute.xlu0 %2452
    %2454 = vrot.lane.b32.xlu0 %v61, 3
    %v2455 = vpop.permute.xlu0 %2454
    %2456 = vrot.lane.b32.xlu0 %v62, 3
    %v2457 = vpop.permute.xlu0 %2456
    %2458 = vrot.lane.b32.xlu0 %v63, 3
    %v2459 = vpop.permute.xlu0 %2458
    %2460 = vrot.lane.b32.xlu0 %v64, 3
    %v2461 = vpop.permute.xlu0 %2460
    %2462 = vrot.lane.b32.xlu0 %v65, 3
    %v2463 = vpop.permute.xlu0 %2462
    %2464 = vrot.lane.b32.xlu0 %v66, 3
    %v2465 = vpop.permute.xlu0 %2464
    %2466 = vrot.lane.b32.xlu0 %v67, 3
    %v2467 = vpop.permute.xlu0 %2466
    %2468 = vrot.lane.b32.xlu0 %v68, 3
    %v2469 = vpop.permute.xlu0 %2468
    %2470 = vrot.lane.b32.xlu0 %v69, 3
    %v2471 = vpop.permute.xlu0 %2470
    %2472 = vrot.lane.b32.xlu0 %v70, 3
    %v2473 = vpop.permute.xlu0 %2472
    %2474 = vrot.lane.b32.xlu0 %v71, 3
    %v2475 = vpop.permute.xlu0 %2474
    %2476 = vrot.lane.b32.xlu0 %v72, 3
    %v2477 = vpop.permute.xlu0 %2476
    %2478 = vrot.lane.b32.xlu0 %v73, 3
    %v2479 = vpop.permute.xlu0 %2478
    %2480 = vrot.lane.b32.xlu0 %v74, 3
    %v2481 = vpop.permute.xlu0 %2480
    %2482 = vrot.lane.b32.xlu0 %v75, 3
    %v2483 = vpop.permute.xlu0 %2482
    %2484 = vrot.lane.b32.xlu0 %v76, 3
    %v2485 = vpop.permute.xlu0 %2484
    %2486 = vrot.lane.b32.xlu0 %v77, 3
    %v2487 = vpop.permute.xlu0 %2486
    %2488 = vrot.lane.b32.xlu0 %v78, 3
    %v2489 = vpop.permute.xlu0 %2488
    %2490 = vrot.lane.b32.xlu0 %v79, 3
    %v2491 = vpop.permute.xlu0 %2490
    %2492 = vrot.lane.b32.xlu0 %v80, 3
    %v2493 = vpop.permute.xlu0 %2492
    %2494 = vrot.lane.b32.xlu0 %v81, 3
    %v2495 = vpop.permute.xlu0 %2494
    %2496 = vrot.lane.b32.xlu0 %v82, 3
    %v2497 = vpop.permute.xlu0 %2496
    %2498 = vrot.lane.b32.xlu0 %v83, 3
    %v2499 = vpop.permute.xlu0 %2498
    %2500 = vrot.lane.b32.xlu0 %v84, 3
    %v2501 = vpop.permute.xlu0 %2500
    %2502 = vrot.lane.b32.xlu0 %v85, 3
    %v2503 = vpop.permute.xlu0 %2502
    %2504 = vrot.lane.b32.xlu0 %v86, 3
    %v2505 = vpop.permute.xlu0 %2504
    %2506 = vrot.lane.b32.xlu0 %v87, 3
    %v2507 = vpop.permute.xlu0 %2506
    %2508 = vrot.lane.b32.xlu0 %v88, 3
    %v2509 = vpop.permute.xlu0 %2508
    %2510 = vrot.lane.b32.xlu0 %v89, 3
    %v2511 = vpop.permute.xlu0 %2510
    %2512 = vrot.lane.b32.xlu0 %v90, 3
    %v2513 = vpop.permute.xlu0 %2512
    %2514 = vrot.lane.b32.xlu0 %v91, 3
    %v2515 = vpop.permute.xlu0 %2514
    %2516 = vrot.lane.b32.xlu0 %v92, 3
    %v2517 = vpop.permute.xlu0 %2516
    %2518 = vrot.lane.b32.xlu0 %v93, 3
    %v2519 = vpop.permute.xlu0 %2518
    %2520 = vrot.lane.b32.xlu0 %v94, 3
    %v2521 = vpop.permute.xlu0 %2520
    %2522 = vrot.lane.b32.xlu0 %v95, 3
    %v2523 = vpop.permute.xlu0 %2522
    %2524 = vrot.lane.b32.xlu0 %v96, 3
    %v2525 = vpop.permute.xlu0 %2524
    %2526 = vrot.lane.b32.xlu0 %v97, 3
    %v2527 = vpop.permute.xlu0 %2526
    %2528 = vrot.lane.b32.xlu0 %v98, 3
    %v2529 = vpop.permute.xlu0 %2528
    %2530 = vrot.lane.b32.xlu0 %v99, 3
    %v2531 = vpop.permute.xlu0 %2530
    %2532 = vrot.lane.b32.xlu0 %v100, 3
    %v2533 = vpop.permute.xlu0 %2532
    %2534 = vrot.lane.b32.xlu0 %v101, 3
    %v2535 = vpop.permute.xlu0 %2534
    %2536 = vrot.lane.b32.xlu0 %v102, 3
    %v2537 = vpop.permute.xlu0 %2536
    %2538 = vrot.lane.b32.xlu0 %v103, 3
    %v2539 = vpop.permute.xlu0 %2538
    %2540 = vrot.lane.b32.xlu0 %v104, 3
    %v2541 = vpop.permute.xlu0 %2540
    %2542 = vrot.lane.b32.xlu0 %v105, 3
    %v2543 = vpop.permute.xlu0 %2542
    %2544 = vrot.lane.b32.xlu0 %v106, 3
    %v2545 = vpop.permute.xlu0 %2544
    %2546 = vrot.lane.b32.xlu0 %v107, 3
    %v2547 = vpop.permute.xlu0 %2546
    %2548 = vrot.lane.b32.xlu0 %v108, 3
    %v2549 = vpop.permute.xlu0 %2548
    %2550 = vrot.lane.b32.xlu0 %v109, 3
    %v2551 = vpop.permute.xlu0 %2550
    %2552 = vrot.lane.b32.xlu0 %v110, 3
    %v2553 = vpop.permute.xlu0 %2552
    %2554 = vrot.lane.b32.xlu0 %v111, 3
    %v2555 = vpop.permute.xlu0 %2554
    %2556 = vrot.lane.b32.xlu0 %v112, 3
    %v2557 = vpop.permute.xlu0 %2556
    %2558 = vrot.lane.b32.xlu0 %v113, 3
    %v2559 = vpop.permute.xlu0 %2558
    %2560 = vrot.lane.b32.xlu0 %v114, 3
    %v2561 = vpop.permute.xlu0 %2560
    %2562 = vrot.lane.b32.xlu0 %v115, 3
    %v2563 = vpop.permute.xlu0 %2562
    %2564 = vrot.lane.b32.xlu0 %v116, 3
    %v2565 = vpop.permute.xlu0 %2564
    %2566 = vrot.lane.b32.xlu0 %v117, 3
    %v2567 = vpop.permute.xlu0 %2566
    %2568 = vrot.lane.b32.xlu0 %v118, 3
    %v2569 = vpop.permute.xlu0 %2568
    %2570 = vrot.lane.b32.xlu0 %v119, 3
    %v2571 = vpop.permute.xlu0 %2570
    %2572 = vrot.lane.b32.xlu0 %v120, 3
    %v2573 = vpop.permute.xlu0 %2572
    %2574 = vrot.lane.b32.xlu0 %v121, 3
    %v2575 = vpop.permute.xlu0 %2574
    %2576 = vrot.lane.b32.xlu0 %v122, 3
    %v2577 = vpop.permute.xlu0 %2576
    %2578 = vrot.lane.b32.xlu0 %v123, 3
    %v2579 = vpop.permute.xlu0 %2578
    %2580 = vrot.lane.b32.xlu0 %v124, 3
    %v2581 = vpop.permute.xlu0 %2580
    %2582 = vrot.lane.b32.xlu0 %v125, 3
    %v2583 = vpop.permute.xlu0 %2582
    %2584 = vrot.lane.b32.xlu0 %v126, 3
    %v2585 = vpop.permute.xlu0 %2584
    %2586 = vrot.lane.b32.xlu0 %v127, 3
    %v2587 = vpop.permute.xlu0 %2586
    %2588 = vrot.lane.b32.xlu0 %v128, 3
    %v2589 = vpop.permute.xlu0 %2588
    %2590 = vrot.lane.b32.xlu0 %v129, 3
    %v2591 = vpop.permute.xlu0 %2590
    %2592 = vrot.lane.b32.xlu0 %v130, 3
    %v2593 = vpop.permute.xlu0 %2592
    %2594 = vrot.lane.b32.xlu0 %v131, 3
    %v2595 = vpop.permute.xlu0 %2594
    %2596 = vrot.lane.b32.xlu0 %v132, 3
    %v2597 = vpop.permute.xlu0 %2596
    %2598 = vrot.lane.b32.xlu0 %v133, 3
    %v2599 = vpop.permute.xlu0 %2598
    %2600 = vrot.lane.b32.xlu0 %v134, 3
    %v2601 = vpop.permute.xlu0 %2600
    %2778 = vrot.lane.b32.xlu0 %v2250, 6
    %v2779 = vpop.permute.xlu0 %2778
    %2780 = vrot.lane.b32.xlu0 %v2251, 6
    %v2781 = vpop.permute.xlu0 %2780
    %2782 = vrot.lane.b32.xlu0 %v2252, 6
    %v2783 = vpop.permute.xlu0 %2782
    %2784 = vrot.lane.b32.xlu0 %v2253, 6
    %v2785 = vpop.permute.xlu0 %2784
    %2786 = vrot.lane.b32.xlu0 %v2254, 6
    %v2787 = vpop.permute.xlu0 %2786
    %2788 = vrot.lane.b32.xlu0 %v2255, 6
    %v2789 = vpop.permute.xlu0 %2788
    %2790 = vrot.lane.b32.xlu0 %v2256, 6
    %v2791 = vpop.permute.xlu0 %2790
    %2792 = vrot.lane.b32.xlu0 %v2257, 6
    %v2793 = vpop.permute.xlu0 %2792
    %2794 = vrot.lane.b32.xlu0 %v2258, 6
    %v2795 = vpop.permute.xlu0 %2794
    %2796 = vrot.lane.b32.xlu0 %v2259, 6
    %v2797 = vpop.permute.xlu0 %2796
    %2798 = vrot.lane.b32.xlu0 %v2260, 6
    %v2799 = vpop.permute.xlu0 %2798
    %2800 = vrot.lane.b32.xlu0 %v2261, 6
    %v2801 = vpop.permute.xlu0 %2800
    %2802 = vrot.lane.b32.xlu0 %v2262, 6
    %v2803 = vpop.permute.xlu0 %2802
    %2804 = vrot.lane.b32.xlu0 %v2263, 6
    %v2805 = vpop.permute.xlu0 %2804
    %2806 = vrot.lane.b32.xlu0 %v2264, 6
    %v2807 = vpop.permute.xlu0 %2806
    %2808 = vrot.lane.b32.xlu0 %v2265, 6
    %v2809 = vpop.permute.xlu0 %2808
    %2810 = vrot.lane.b32.xlu0 %v2266, 6
    %v2811 = vpop.permute.xlu0 %2810
    %2812 = vrot.lane.b32.xlu0 %v2267, 6
    %v2813 = vpop.permute.xlu0 %2812
    %2814 = vrot.lane.b32.xlu0 %v2268, 6
    %v2815 = vpop.permute.xlu0 %2814
    %2816 = vrot.lane.b32.xlu0 %v2269, 6
    %v2817 = vpop.permute.xlu0 %2816
    %2818 = vrot.lane.b32.xlu0 %v2270, 6
    %v2819 = vpop.permute.xlu0 %2818
    %2820 = vrot.lane.b32.xlu0 %v2271, 6
    %v2821 = vpop.permute.xlu0 %2820
    %2822 = vrot.lane.b32.xlu0 %v2272, 6
    %v2823 = vpop.permute.xlu0 %2822
    %2824 = vrot.lane.b32.xlu0 %v2273, 6
    %v2825 = vpop.permute.xlu0 %2824
    %2826 = vrot.lane.b32.xlu0 %v2274, 6
    %v2827 = vpop.permute.xlu0 %2826
    %2828 = vrot.lane.b32.xlu0 %v2275, 6
    %v2829 = vpop.permute.xlu0 %2828
    %2830 = vrot.lane.b32.xlu0 %v2276, 6
    %v2831 = vpop.permute.xlu0 %2830
    %2832 = vrot.lane.b32.xlu0 %v2277, 6
    %v2833 = vpop.permute.xlu0 %2832
    %2834 = vrot.lane.b32.xlu0 %v2278, 6
    %v2835 = vpop.permute.xlu0 %2834
    %2836 = vrot.lane.b32.xlu0 %v2279, 6
    %v2837 = vpop.permute.xlu0 %2836
    %2838 = vrot.lane.b32.xlu0 %v2280, 6
    %v2839 = vpop.permute.xlu0 %2838
    %2840 = vrot.lane.b32.xlu0 %v2281, 6
    %v2841 = vpop.permute.xlu0 %2840
    %2842 = vrot.lane.b32.xlu0 %v2282, 6
    %v2843 = vpop.permute.xlu0 %2842
    %2844 = vrot.lane.b32.xlu0 %v2283, 6
    %v2845 = vpop.permute.xlu0 %2844
    %2846 = vrot.lane.b32.xlu0 %v2284, 6
    %v2847 = vpop.permute.xlu0 %2846
    %2848 = vrot.lane.b32.xlu0 %v2285, 6
    %v2849 = vpop.permute.xlu0 %2848
    %2850 = vrot.lane.b32.xlu0 %v2286, 6
    %v2851 = vpop.permute.xlu0 %2850
    %2852 = vrot.lane.b32.xlu0 %v2287, 6
    %v2853 = vpop.permute.xlu0 %2852
    %2854 = vrot.lane.b32.xlu0 %v2288, 6
    %v2855 = vpop.permute.xlu0 %2854
    %2856 = vrot.lane.b32.xlu0 %v2289, 6
    %v2857 = vpop.permute.xlu0 %2856
    %2858 = vrot.lane.b32.xlu0 %v2290, 6
    %v2859 = vpop.permute.xlu0 %2858
    %2860 = vrot.lane.b32.xlu0 %v2291, 6
    %v2861 = vpop.permute.xlu0 %2860
    %2862 = vrot.lane.b32.xlu0 %v2292, 6
    %v2863 = vpop.permute.xlu0 %2862
    %2864 = vrot.lane.b32.xlu0 %v2293, 6
    %v2865 = vpop.permute.xlu0 %2864
    %2866 = vrot.lane.b32.xlu0 %v2294, 6
    %v2867 = vpop.permute.xlu0 %2866
    %2868 = vrot.lane.b32.xlu0 %v2295, 6
    %v2869 = vpop.permute.xlu0 %2868
    %2870 = vrot.lane.b32.xlu0 %v2296, 6
    %v2871 = vpop.permute.xlu0 %2870
    %2872 = vrot.lane.b32.xlu0 %v2297, 6
    %v2873 = vpop.permute.xlu0 %2872
    %2874 = vrot.lane.b32.xlu0 %v2298, 6
    %v2875 = vpop.permute.xlu0 %2874
    %2876 = vrot.lane.b32.xlu0 %v2299, 6
    %v2877 = vpop.permute.xlu0 %2876
    %2878 = vrot.lane.b32.xlu0 %v2300, 6
    %v2879 = vpop.permute.xlu0 %2878
    %2880 = vrot.lane.b32.xlu0 %v2301, 6
    %v2881 = vpop.permute.xlu0 %2880
    %2882 = vrot.lane.b32.xlu0 %v2302, 6
    %v2883 = vpop.permute.xlu0 %2882
    %2884 = vrot.lane.b32.xlu0 %v2303, 6
    %v2885 = vpop.permute.xlu0 %2884
    %2886 = vrot.lane.b32.xlu0 %v2304, 6
    %v2887 = vpop.permute.xlu0 %2886
    %2888 = vrot.lane.b32.xlu0 %v2305, 6
    %v2889 = vpop.permute.xlu0 %2888
    %2890 = vrot.lane.b32.xlu0 %v2306, 6
    %v2891 = vpop.permute.xlu0 %2890
    %2892 = vrot.lane.b32.xlu0 %v2307, 6
    %v2893 = vpop.permute.xlu0 %2892
    %2894 = vrot.lane.b32.xlu0 %v2308, 6
    %v2895 = vpop.permute.xlu0 %2894
    %2896 = vrot.lane.b32.xlu0 %v2309, 6
    %v2897 = vpop.permute.xlu0 %2896
    %2898 = vrot.lane.b32.xlu0 %v2310, 6
    %v2899 = vpop.permute.xlu0 %2898
    %2900 = vrot.lane.b32.xlu0 %v2311, 6
    %v2901 = vpop.permute.xlu0 %2900
    %2902 = vrot.lane.b32.xlu0 %v2312, 6
    %v2903 = vpop.permute.xlu0 %2902
    %2904 = vrot.lane.b32.xlu0 %v2313, 6
    %v2905 = vpop.permute.xlu0 %2904
    %2906 = vrot.lane.b32.xlu0 %v2314, 6
    %v2907 = vpop.permute.xlu0 %2906
    %2908 = vrot.lane.b32.xlu0 %v2315, 6
    %v2909 = vpop.permute.xlu0 %2908
    %2910 = vrot.lane.b32.xlu0 %v2316, 6
    %v2911 = vpop.permute.xlu0 %2910
    %2912 = vrot.lane.b32.xlu0 %v2317, 6
    %v2913 = vpop.permute.xlu0 %2912
    %2914 = vrot.lane.b32.xlu0 %v2318, 6
    %v2915 = vpop.permute.xlu0 %2914
    %2916 = vrot.lane.b32.xlu0 %v2319, 6
    %v2917 = vpop.permute.xlu0 %2916
    %2918 = vrot.lane.b32.xlu0 %v2320, 6
    %v2919 = vpop.permute.xlu0 %2918
    %2920 = vrot.lane.b32.xlu0 %v2321, 6
    %v2921 = vpop.permute.xlu0 %2920
    %2922 = vrot.lane.b32.xlu0 %v2322, 6
    %v2923 = vpop.permute.xlu0 %2922
    %2924 = vrot.lane.b32.xlu0 %v2323, 6
    %v2925 = vpop.permute.xlu0 %2924
    %2926 = vrot.lane.b32.xlu0 %v2324, 6
    %v2927 = vpop.permute.xlu0 %2926
    %2928 = vrot.lane.b32.xlu0 %v2325, 6
    %v2929 = vpop.permute.xlu0 %2928
    %2930 = vrot.lane.b32.xlu0 %v2326, 6
    %v2931 = vpop.permute.xlu0 %2930
    %2932 = vrot.lane.b32.xlu0 %v2327, 6
    %v2933 = vpop.permute.xlu0 %2932
    %2934 = vrot.lane.b32.xlu0 %v2328, 6
    %v2935 = vpop.permute.xlu0 %2934
    %2936 = vrot.lane.b32.xlu0 %v2329, 6
    %v2937 = vpop.permute.xlu0 %2936
    %2938 = vrot.lane.b32.xlu0 %v2330, 6
    %v2939 = vpop.permute.xlu0 %2938
    %2940 = vrot.lane.b32.xlu0 %v2331, 6
    %v2941 = vpop.permute.xlu0 %2940
    %2942 = vrot.lane.b32.xlu0 %v2332, 6
    %v2943 = vpop.permute.xlu0 %2942
    %2944 = vrot.lane.b32.xlu0 %v2333, 6
    %v2945 = vpop.permute.xlu0 %2944
    %2946 = vrot.lane.b32.xlu0 %v2334, 6
    %v2947 = vpop.permute.xlu0 %2946
    %2948 = vrot.lane.b32.xlu0 %v2335, 6
    %v2949 = vpop.permute.xlu0 %2948
    %2950 = vrot.lane.b32.xlu0 %v2336, 6
    %v2951 = vpop.permute.xlu0 %2950
    %2952 = vrot.lane.b32.xlu0 %v2337, 6
    %v2953 = vpop.permute.xlu0 %2952
    %vm3042 = vcmask 23552
    %v3043 = vsel %vm3042, %v1897, %v2427
    %v3044 = vsel %vm3042, %v1898, %v2429
    %v3045 = vsel %vm3042, %v1899, %v2431
    %v3046 = vsel %vm3042, %v1900, %v2433
    %v3047 = vsel %vm3042, %v1901, %v2435
    %v3048 = vsel %vm3042, %v1902, %v2437
    %v3049 = vsel %vm3042, %v1903, %v2439
    %v3050 = vsel %vm3042, %v1904, %v2441
    %v3051 = vsel %vm3042, %v1905, %v2443
    %v3052 = vsel %vm3042, %v1906, %v2445
    %v3053 = vsel %vm3042, %v1907, %v2447
    %v3054 = vsel %vm3042, %v1908, %v2449
    %v3055 = vsel %vm3042, %v1909, %v2451
    %v3056 = vsel %vm3042, %v1910, %v2453
    %v3057 = vsel %vm3042, %v1911, %v2455
    %v3058 = vsel %vm3042, %v1912, %v2457
    %v3059 = vsel %vm3042, %v1913, %v2459
    %v3060 = vsel %vm3042, %v1914, %v2461
    %v3061 = vsel %vm3042, %v1915, %v2463
    %v3062 = vsel %vm3042, %v1916, %v2465
    %v3063 = vsel %vm3042, %v1917, %v2467
    %v3064 = vsel %vm3042, %v1918, %v2469
    %v3065 = vsel %vm3042, %v1919, %v2471
    %v3066 = vsel %vm3042, %v1920, %v2473
    %v3067 = vsel %vm3042, %v1921, %v2475
    %v3068 = vsel %vm3042, %v1922, %v2477
    %v3069 = vsel %vm3042, %v1923, %v2479
    %v3070 = vsel %vm3042, %v1924, %v2481
    %v3071 = vsel %vm3042, %v1925, %v2483
    %v3072 = vsel %vm3042, %v1926, %v2485
    %v3073 = vsel %vm3042, %v1927, %v2487
    %v3074 = vsel %vm3042, %v1928, %v2489
    %v3075 = vsel %vm3042, %v1929, %v2491
    %v3076 = vsel %vm3042, %v1930, %v2493
    %v3077 = vsel %vm3042, %v1931, %v2495
    %v3078 = vsel %vm3042, %v1932, %v2497
    %v3079 = vsel %vm3042, %v1933, %v2499
    %v3080 = vsel %vm3042, %v1934, %v2501
    %v3081 = vsel %vm3042, %v1935, %v2503
    %v3082 = vsel %vm3042, %v1936, %v2505
    %v3083 = vsel %vm3042, %v1937, %v2507
    %v3084 = vsel %vm3042, %v1938, %v2509
    %v3085 = vsel %vm3042, %v1939, %v2511
    %v3086 = vsel %vm3042, %v1940, %v2513
    %v3087 = vsel %vm3042, %v1941, %v2515
    %v3088 = vsel %vm3042, %v1942, %v2517
    %v3089 = vsel %vm3042, %v1943, %v2519
    %v3090 = vsel %vm3042, %v1944, %v2521
    %v3091 = vsel %vm3042, %v1945, %v2523
    %v3092 = vsel %vm3042, %v1946, %v2525
    %v3093 = vsel %vm3042, %v1947, %v2527
    %v3094 = vsel %vm3042, %v1948, %v2529
    %v3095 = vsel %vm3042, %v1949, %v2531
    %v3096 = vsel %vm3042, %v1950, %v2533
    %v3097 = vsel %vm3042, %v1951, %v2535
    %v3098 = vsel %vm3042, %v1952, %v2537
    %v3099 = vsel %vm3042, %v1953, %v2539
    %v3100 = vsel %vm3042, %v1954, %v2541
    %v3101 = vsel %vm3042, %v1955, %v2543
    %v3102 = vsel %vm3042, %v1956, %v2545
    %v3103 = vsel %vm3042, %v1957, %v2547
    %v3104 = vsel %vm3042, %v1958, %v2549
    %v3105 = vsel %vm3042, %v1959, %v2551
    %v3106 = vsel %vm3042, %v1960, %v2553
    %v3107 = vsel %vm3042, %v1961, %v2555
    %v3108 = vsel %vm3042, %v1962, %v2557
    %v3109 = vsel %vm3042, %v1963, %v2559
    %v3110 = vsel %vm3042, %v1964, %v2561
    %v3111 = vsel %vm3042, %v1965, %v2563
    %v3112 = vsel %vm3042, %v1966, %v2565
    %v3113 = vsel %vm3042, %v1967, %v2567
    %v3114 = vsel %vm3042, %v1968, %v2569
    %v3115 = vsel %vm3042, %v1969, %v2571
    %v3116 = vsel %vm3042, %v1970, %v2573
    %v3117 = vsel %vm3042, %v1971, %v2575
    %v3118 = vsel %vm3042, %v1972, %v2577
    %v3119 = vsel %vm3042, %v1973, %v2579
    %v3120 = vsel %vm3042, %v1974, %v2581
    %v3121 = vsel %vm3042, %v1975, %v2583
    %v3122 = vsel %vm3042, %v1976, %v2585
    %v3123 = vsel %vm3042, %v1977, %v2587
    %v3124 = vsel %vm3042, %v1978, %v2589
    %v3125 = vsel %vm3042, %v1979, %v2591
    %v3126 = vsel %vm3042, %v1980, %v2593
    %v3127 = vsel %vm3042, %v1981, %v2595
    %v3128 = vsel %vm3042, %v1982, %v2597
    %v3129 = vsel %vm3042, %v1983, %v2599
    %v3130 = vsel %vm3042, %v1984, %v2601
    %vm3131 = vcmask 48128
    %v3132 = vsel %vm3131, %v3043, %v2779
    %v3133 = vsel %vm3131, %v3044, %v2781
    %v3134 = vsel %vm3131, %v3045, %v2783
    %v3135 = vsel %vm3131, %v3046, %v2785
    %v3136 = vsel %vm3131, %v3047, %v2787
    %v3137 = vsel %vm3131, %v3048, %v2789
    %v3138 = vsel %vm3131, %v3049, %v2791
    %v3139 = vsel %vm3131, %v3050, %v2793
    %v3140 = vsel %vm3131, %v3051, %v2795
    %v3141 = vsel %vm3131, %v3052, %v2797
    %v3142 = vsel %vm3131, %v3053, %v2799
    %v3143 = vsel %vm3131, %v3054, %v2801
    %v3144 = vsel %vm3131, %v3055, %v2803
    %v3145 = vsel %vm3131, %v3056, %v2805
    %v3146 = vsel %vm3131, %v3057, %v2807
    %v3147 = vsel %vm3131, %v3058, %v2809
    %v3148 = vsel %vm3131, %v3059, %v2811
    %v3149 = vsel %vm3131, %v3060, %v2813
    %v3150 = vsel %vm3131, %v3061, %v2815
    %v3151 = vsel %vm3131, %v3062, %v2817
    %v3152 = vsel %vm3131, %v3063, %v2819
    %v3153 = vsel %vm3131, %v3064, %v2821
    %v3154 = vsel %vm3131, %v3065, %v2823
    %v3155 = vsel %vm3131, %v3066, %v2825
    %v3156 = vsel %vm3131, %v3067, %v2827
    %v3157 = vsel %vm3131, %v3068, %v2829
    %v3158 = vsel %vm3131, %v3069, %v2831
    %v3159 = vsel %vm3131, %v3070, %v2833
    %v3160 = vsel %vm3131, %v3071, %v2835
    %v3161 = vsel %vm3131, %v3072, %v2837
    %v3162 = vsel %vm3131, %v3073, %v2839
    %v3163 = vsel %vm3131, %v3074, %v2841
    %v3164 = vsel %vm3131, %v3075, %v2843
    %v3165 = vsel %vm3131, %v3076, %v2845
    %v3166 = vsel %vm3131, %v3077, %v2847
    %v3167 = vsel %vm3131, %v3078, %v2849
    %v3168 = vsel %vm3131, %v3079, %v2851
    %v3169 = vsel %vm3131, %v3080, %v2853
    %v3170 = vsel %vm3131, %v3081, %v2855
    %v3171 = vsel %vm3131, %v3082, %v2857
    %v3172 = vsel %vm3131, %v3083, %v2859
    %v3173 = vsel %vm3131, %v3084, %v2861
    %v3174 = vsel %vm3131, %v3085, %v2863
    %v3175 = vsel %vm3131, %v3086, %v2865
    %v3176 = vsel %vm3131, %v3087, %v2867
    %v3177 = vsel %vm3131, %v3088, %v2869
    %v3178 = vsel %vm3131, %v3089, %v2871
    %v3179 = vsel %vm3131, %v3090, %v2873
    %v3180 = vsel %vm3131, %v3091, %v2875
    %v3181 = vsel %vm3131, %v3092, %v2877
    %v3182 = vsel %vm3131, %v3093, %v2879
    %v3183 = vsel %vm3131, %v3094, %v2881
    %v3184 = vsel %vm3131, %v3095, %v2883
    %v3185 = vsel %vm3131, %v3096, %v2885
    %v3186 = vsel %vm3131, %v3097, %v2887
    %v3187 = vsel %vm3131, %v3098, %v2889
    %v3188 = vsel %vm3131, %v3099, %v2891
    %v3189 = vsel %vm3131, %v3100, %v2893
    %v3190 = vsel %vm3131, %v3101, %v2895
    %v3191 = vsel %vm3131, %v3102, %v2897
    %v3192 = vsel %vm3131, %v3103, %v2899
    %v3193 = vsel %vm3131, %v3104, %v2901
    %v3194 = vsel %vm3131, %v3105, %v2903
    %v3195 = vsel %vm3131, %v3106, %v2905
    %v3196 = vsel %vm3131, %v3107, %v2907
    %v3197 = vsel %vm3131, %v3108, %v2909
    %v3198 = vsel %vm3131, %v3109, %v2911
    %v3199 = vsel %vm3131, %v3110, %v2913
    %v3200 = vsel %vm3131, %v3111, %v2915
    %v3201 = vsel %vm3131, %v3112, %v2917
    %v3202 = vsel %vm3131, %v3113, %v2919
    %v3203 = vsel %vm3131, %v3114, %v2921
    %v3204 = vsel %vm3131, %v3115, %v2923
    %v3205 = vsel %vm3131, %v3116, %v2925
    %v3206 = vsel %vm3131, %v3117, %v2927
    %v3207 = vsel %vm3131, %v3118, %v2929
    %v3208 = vsel %vm3131, %v3119, %v2931
    %v3209 = vsel %vm3131, %v3120, %v2933
    %v3210 = vsel %vm3131, %v3121, %v2935
    %v3211 = vsel %vm3131, %v3122, %v2937
    %v3212 = vsel %vm3131, %v3123, %v2939
    %v3213 = vsel %vm3131, %v3124, %v2941
    %v3214 = vsel %vm3131, %v3125, %v2943
    %v3215 = vsel %vm3131, %v3126, %v2945
    %v3216 = vsel %vm3131, %v3127, %v2947
    %v3217 = vsel %vm3131, %v3128, %v2949
    %v3218 = vsel %vm3131, %v3129, %v2951
    %v3219 = vsel %vm3131, %v3130, %v2953
    %v3220 = vld [vmem:[%s1] sm:$0xff]
    %v3221 = vld [vmem:[%s1 + $0x8] sm:$0x1]
    %v3222 = vld [vmem:[%s2] sm:$0x1]
    %v3224 = vlaneseq
    %v3225 = vshrl.u32 %v3224, 7
    %v3226 = vsub.s32 0, %v3225
    %v3227 = vrot.slane %v3222, %v3226
    %vm3229 = vcmask 72704
    %v3231 = vsel %vm3229, %v3132, 0
    %v3234 = vsel %vm3229, %v3133, 0
    %v3237 = vsel %vm3229, %v3134, 0
    %v3240 = vsel %vm3229, %v3135, 0
    %v3243 = vsel %vm3229, %v3136, 0
    %v3246 = vsel %vm3229, %v3137, 0
    %v3249 = vsel %vm3229, %v3138, 0
    %v3252 = vsel %vm3229, %v3139, 0
    %v3255 = vsel %vm3229, %v3140, 0
    %v3258 = vsel %vm3229, %v3141, 0
    %v3261 = vsel %vm3229, %v3142, 0
    %v3264 = vsel %vm3229, %v3143, 0
    %v3267 = vsel %vm3229, %v3144, 0
    %v3270 = vsel %vm3229, %v3145, 0
    %v3273 = vsel %vm3229, %v3146, 0
    %v3276 = vsel %vm3229, %v3147, 0
    %v3279 = vsel %vm3229, %v3148, 0
    %v3282 = vsel %vm3229, %v3149, 0
    %v3285 = vsel %vm3229, %v3150, 0
    %v3288 = vsel %vm3229, %v3151, 0
    %v3291 = vsel %vm3229, %v3152, 0
    %v3294 = vsel %vm3229, %v3153, 0
    %v3297 = vsel %vm3229, %v3154, 0
    %v3300 = vsel %vm3229, %v3155, 0
    %v3303 = vsel %vm3229, %v3156, 0
    %v3306 = vsel %vm3229, %v3157, 0
    %v3309 = vsel %vm3229, %v3158, 0
    %v3312 = vsel %vm3229, %v3159, 0
    %v3315 = vsel %vm3229, %v3160, 0
    %v3318 = vsel %vm3229, %v3161, 0
    %v3321 = vsel %vm3229, %v3162, 0
    %v3324 = vsel %vm3229, %v3163, 0
    %v3327 = vsel %vm3229, %v3164, 0
    %v3330 = vsel %vm3229, %v3165, 0
    %v3333 = vsel %vm3229, %v3166, 0
    %v3336 = vsel %vm3229, %v3167, 0
    %v3339 = vsel %vm3229, %v3168, 0
    %v3342 = vsel %vm3229, %v3169, 0
    %v3345 = vsel %vm3229, %v3170, 0
    %v3348 = vsel %vm3229, %v3171, 0
    %v3351 = vsel %vm3229, %v3172, 0
    %v3354 = vsel %vm3229, %v3173, 0
    %v3357 = vsel %vm3229, %v3174, 0
    %v3360 = vsel %vm3229, %v3175, 0
    %v3363 = vsel %vm3229, %v3176, 0
    %v3366 = vsel %vm3229, %v3177, 0
    %v3369 = vsel %vm3229, %v3178, 0
    %v3372 = vsel %vm3229, %v3179, 0
    %v3375 = vsel %vm3229, %v3180, 0
    %v3378 = vsel %vm3229, %v3181, 0
    %v3381 = vsel %vm3229, %v3182, 0
    %v3384 = vsel %vm3229, %v3183, 0
    %v3387 = vsel %vm3229, %v3184, 0
    %v3390 = vsel %vm3229, %v3185, 0
    %v3393 = vsel %vm3229, %v3186, 0
    %v3396 = vsel %vm3229, %v3187, 0
    %v3399 = vsel %vm3229, %v3188, 0
    %v3402 = vsel %vm3229, %v3189, 0
    %v3405 = vsel %vm3229, %v3190, 0
    %v3408 = vsel %vm3229, %v3191, 0
    %v3411 = vsel %vm3229, %v3192, 0
    %v3414 = vsel %vm3229, %v3193, 0
    %v3417 = vsel %vm3229, %v3194, 0
    %v3420 = vsel %vm3229, %v3195, 0
    %v3423 = vsel %vm3229, %v3196, 0
    %v3426 = vsel %vm3229, %v3197, 0
    %v3429 = vsel %vm3229, %v3198, 0
    %v3432 = vsel %vm3229, %v3199, 0
    %v3435 = vsel %vm3229, %v3200, 0
    %v3438 = vsel %vm3229, %v3201, 0
    %v3441 = vsel %vm3229, %v3202, 0
    %v3444 = vsel %vm3229, %v3203, 0
    %v3447 = vsel %vm3229, %v3204, 0
    %v3450 = vsel %vm3229, %v3205, 0
    %v3453 = vsel %vm3229, %v3206, 0
    %v3456 = vsel %vm3229, %v3207, 0
    %v3459 = vsel %vm3229, %v3208, 0
    %v3462 = vsel %vm3229, %v3209, 0
    %v3465 = vsel %vm3229, %v3210, 0
    %v3468 = vsel %vm3229, %v3211, 0
    %v3471 = vsel %vm3229, %v3212, 0
    %v3474 = vsel %vm3229, %v3213, 0
    %v3477 = vsel %vm3229, %v3214, 0
    %v3480 = vsel %vm3229, %v3215, 0
    %v3483 = vsel %vm3229, %v3216, 0
    %v3486 = vsel %vm3229, %v3217, 0
    %v3489 = vsel %vm3229, %v3218, 0
    %v3492 = vsel %vm3229, %v3219, 0
    %vm3494 = vcmask 1040384
    %v3496 = vsel %vm3494, %v3221, 0
    %3498 = vmatprep.subr.mxu0 0.0
    %3499 = vmatpush1.msra.mxu0 %v3220
    %3500 = vmatprep.subr.mxu0 0.0
    %3501 = vmatpush1.msra.mxu0 %v3496
    %3502 = vmatprep.subr.mxu0 0.0
    %3503 = vmatpush1.msra.mxu0 0.0
    %3504 = vmatprep.subr.mxu0 0.0
    %3505 = vmatpush1.msra.mxu0 0.0
    %3506 = vmatprep.subr.mxu0 0.0
    %3507 = vmatpush1.msra.mxu0 0.0
    %3508 = vmatprep.subr.mxu0 0.0
    %3509 = vmatpush1.msra.mxu0 0.0
    %3510 = vmatprep.subr.mxu0 0.0
    %3511 = vmatpush1.msra.mxu0 0.0
    %3512 = vmatprep.subr.mxu0 0.0
    %3513 = vmatpush1.msra.mxu0 0.0
    %3514 = vmatprep.subr.mxu0 0.0
    %3515 = vmatpush1.msra.mxu0 0.0
    %3516 = vmatprep.subr.mxu0 0.0
    %3517 = vmatpush1.msra.mxu0 0.0
    %3518 = vmatprep.subr.mxu0 0.0
    %3519 = vmatpush1.msra.mxu0 0.0
    %3520 = vmatprep.subr.mxu0 0.0
    %3521 = vmatpush1.msra.mxu0 0.0
    %3522 = vmatprep.subr.mxu0 0.0
    %3523 = vmatpush1.msra.mxu0 0.0
    %3524 = vmatprep.subr.mxu0 0.0
    %3525 = vmatpush1.msra.mxu0 0.0
    %3526 = vmatprep.subr.mxu0 0.0
    %3527 = vmatpush1.msra.mxu0 0.0
    %3528 = vmatprep.subr.mxu0 0.0
    %3529 = vmatpush1.msra.mxu0 0.0
    %3530 = vmatprep.subr.mxu0 0.0
    %3531 = vmatpush1.msra.mxu0 0.0
    %3532 = vmatprep.subr.mxu0 0.0
    %3533 = vmatpush1.msra.mxu0 0.0
    %3534 = vmatprep.subr.mxu0 0.0
    %3535 = vmatpush1.msra.mxu0 0.0
    %3536 = vmatprep.subr.mxu0 0.0
    %3537 = vmatpush1.msra.mxu0 0.0
    %3538 = vmatprep.subr.mxu0 0.0
    %3539 = vmatpush1.msra.mxu0 0.0
    %3540 = vmatprep.subr.mxu0 0.0
    %3541 = vmatpush1.msra.mxu0 0.0
    %3542 = vmatprep.subr.mxu0 0.0
    %3543 = vmatpush1.msra.mxu0 0.0
    %3544 = vmatprep.subr.mxu0 0.0
    %3545 = vmatpush1.msra.mxu0 0.0
    %3546 = vmatprep.subr.mxu0 0.0
    %3547 = vmatpush1.msra.mxu0 0.0
    %3548 = vmatprep.subr.mxu0 0.0
    %3549 = vmatpush1.msra.mxu0 0.0
    %3550 = vmatprep.subr.mxu0 0.0
    %3551 = vmatpush1.msra.mxu0 0.0
    %3552 = vmatprep.subr.mxu0 0.0
    %3553 = vmatpush1.msra.mxu0 0.0
    %3554 = vmatprep.subr.mxu0 0.0
    %3555 = vmatpush1.msra.mxu0 0.0
    %3556 = vmatprep.subr.mxu0 0.0
    %3557 = vmatpush1.msra.mxu0 0.0
    %3558 = vmatprep.subr.mxu0 0.0
    %3559 = vmatpush1.msra.mxu0 0.0
    %3560 = vmatprep.subr.mxu0 0.0
    %3561 = vmatpush1.msra.mxu0 0.0
    %3562 = vmatprep.mubr.f32.mxu0 0.0
    %3563 = vmatmul.mubr.f32.gmra.mrb[0].mxu0 %v3231
    %v3564 = vpop.f32.mrb[0].mxu0
    %v3565 = vadd.f32 %v3227, %v3564
    %v3566 = vpop.f32.mrb[0].mxu0
    %3567 = vmatprep.mubr.f32.mxu0 0.0
    %3568 = vmatmul.mubr.f32.gmra.mrb[0].mxu0 %v3234
    %v3569 = vpop.f32.mrb[0].mxu0
    %v3570 = vadd.f32 %v3227, %v3569
    %v3571 = vpop.f32.mrb[0].mxu0
    %3572 = vmatprep.mubr.f32.mxu0 0.0
    %3573 = vmatmul.mubr.f32.gmra.mrb[0].mxu0 %v3237
    %v3574 = vpop.f32.mrb[0].mxu0
    %v3575 = vadd.f32 %v3227, %v3574
    %v3576 = vpop.f32.mrb[0].mxu0
    %3577 = vmatprep.mubr.f32.mxu0 0.0
    %3578 = vmatmul.mubr.f32.gmra.mrb[0].mxu0 %v3240
    %v3579 = vpop.f32.mrb[0].mxu0
    %v3580 = vadd.f32 %v3227, %v3579
    %v3581 = vpop.f32.mrb[0].mxu0
    %3582 = vmatprep.mubr.f32.mxu0 0.0
    %3583 = vmatmul.mubr.f32.gmra.mrb[0].mxu0 %v3243
    %v3584 = vpop.f32.mrb[0].mxu0
    %v3585 = vadd.f32 %v3227, %v3584
    %v3586 = vpop.f32.mrb[0].mxu0
    %3587 = vmatprep.mubr.f32.mxu0 0.0
    %3588 = vmatmul.mubr.f32.gmra.mrb[0].mxu0 %v3246
    %v3589 = vpop.f32.mrb[0].mxu0
    %v3590 = vadd.f32 %v3227, %v3589
    %v3591 = vpop.f32.mrb[0].mxu0
    %3592 = vmatprep.mubr.f32.mxu0 0.0
    %3593 = vmatmul.mubr.f32.gmra.mrb[0].mxu0 %v3249
    %v3594 = vpop.f32.mrb[0].mxu0
    %v3595 = vadd.f32 %v3227, %v3594
    %v3596 = vpop.f32.mrb[0].mxu0
    %3597 = vmatprep.mubr.f32.mxu0 0.0
    %3598 = vmatmul.mubr.f32.gmra.mrb[0].mxu0 %v3252
    %v3599 = vpop.f32.mrb[0].mxu0
    %v3600 = vadd.f32 %v3227, %v3599
    %v3601 = vpop.f32.mrb[0].mxu0
    %3602 = vmatprep.mubr.f32.mxu0 0.0
    %3603 = vmatmul.mubr.f32.gmra.mrb[0].mxu0 %v3255
    %v3604 = vpop.f32.mrb[0].mxu0
    %v3605 = vadd.f32 %v3227, %v3604
    %v3606 = vpop.f32.mrb[0].mxu0
    %3607 = vmatprep.mubr.f32.mxu0 0.0
    %3608 = vmatmul.mubr.f32.gmra.mrb[0].mxu0 %v3258
    %v3609 = vpop.f32.mrb[0].mxu0
    %v3610 = vadd.f32 %v3227, %v3609
    %v3611 = vpop.f32.mrb[0].mxu0
    %3612 = vmatprep.mubr.f32.mxu0 0.0
    %3613 = vmatmul.mubr.f32.gmra.mrb[0].mxu0 %v3261
    %v3614 = vpop.f32.mrb[0].mxu0
    %v3615 = vadd.f32 %v3227, %v3614
    %v3616 = vpop.f32.mrb[0].mxu0
    %3617 = vmatprep.mubr.f32.mxu0 0.0
    %3618 = vmatmul.mubr.f32.gmra.mrb[0].mxu0 %v3264
    %v3619 = vpop.f32.mrb[0].mxu0
    %v3620 = vadd.f32 %v3227, %v3619
    %v3621 = vpop.f32.mrb[0].mxu0
    %3622 = vmatprep.mubr.f32.mxu0 0.0
    %3623 = vmatmul.mubr.f32.gmra.mrb[0].mxu0 %v3267
    %v3624 = vpop.f32.mrb[0].mxu0
    %v3625 = vadd.f32 %v3227, %v3624
    %v3626 = vpop.f32.mrb[0].mxu0
    %3627 = vmatprep.mubr.f32.mxu0 0.0
    %3628 = vmatmul.mubr.f32.gmra.mrb[0].mxu0 %v3270
    %v3629 = vpop.f32.mrb[0].mxu0
    %v3630 = vadd.f32 %v3227, %v3629
    %v3631 = vpop.f32.mrb[0].mxu0
    %3632 = vmatprep.mubr.f32.mxu0 0.0
    %3633 = vmatmul.mubr.f32.gmra.mrb[0].mxu0 %v3273
    %v3634 = vpop.f32.mrb[0].mxu0
    %v3635 = vadd.f32 %v3227, %v3634
    %v3636 = vpop.f32.mrb[0].mxu0
    %3637 = vmatprep.mubr.f32.mxu0 0.0
    %3638 = vmatmul.mubr.f32.gmra.mrb[0].mxu0 %v3276
    %v3639 = vpop.f32.mrb[0].mxu0
    %v3640 = vadd.f32 %v3227, %v3639
    %v3641 = vpop.f32.mrb[0].mxu0
    %3642 = vmatprep.mubr.f32.mxu0 0.0
    %3643 = vmatmul.mubr.f32.gmra.mrb[0].mxu0 %v3279
    %v3644 = vpop.f32.mrb[0].mxu0
    %v3645 = vadd.f32 %v3227, %v3644
    %v3646 = vpop.f32.mrb[0].mxu0
    %3647 = vmatprep.mubr.f32.mxu0 0.0
    %3648 = vmatmul.mubr.f32.gmra.mrb[0].mxu0 %v3282
    %v3649 = vpop.f32.mrb[0].mxu0
    %v3650 = vadd.f32 %v3227, %v3649
    %v3651 = vpop.f32.mrb[0].mxu0
    %3652 = vmatprep.mubr.f32.mxu0 0.0
    %3653 = vmatmul.mubr.f32.gmra.mrb[0].mxu0 %v3285
    %v3654 = vpop.f32.mrb[0].mxu0
    %v3655 = vadd.f32 %v3227, %v3654
    %v3656 = vpop.f32.mrb[0].mxu0
    %3657 = vmatprep.mubr.f32.mxu0 0.0
    %3658 = vmatmul.mubr.f32.gmra.mrb[0].mxu0 %v3288
    %v3659 = vpop.f32.mrb[0].mxu0
    %v3660 = vadd.f32 %v3227, %v3659
    %v3661 = vpop.f32.mrb[0].mxu0
    %3662 = vmatprep.mubr.f32.mxu0 0.0
    %3663 = vmatmul.mubr.f32.gmra.mrb[0].mxu0 %v3291
    %v3664 = vpop.f32.mrb[0].mxu0
    %v3665 = vadd.f32 %v3227, %v3664
    %v3666 = vpop.f32.mrb[0].mxu0
    %3667 = vmatprep.mubr.f32.mxu0 0.0
    %3668 = vmatmul.mubr.f32.gmra.mrb[0].mxu0 %v3294
    %v3669 = vpop.f32.mrb[0].mxu0
    %v3670 = vadd.f32 %v3227, %v3669
    %v3671 = vpop.f32.mrb[0].mxu0
    %3672 = vmatprep.mubr.f32.mxu0 0.0
    %3673 = vmatmul.mubr.f32.gmra.mrb[0].mxu0 %v3297
    %v3674 = vpop.f32.mrb[0].mxu0
    %v3675 = vadd.f32 %v3227, %v3674
    %v3676 = vpop.f32.mrb[0].mxu0
    %3677 = vmatprep.mubr.f32.mxu0 0.0
    %3678 = vmatmul.mubr.f32.gmra.mrb[0].mxu0 %v3300
    %v3679 = vpop.f32.mrb[0].mxu0
    %v3680 = vadd.f32 %v3227, %v3679
    %v3681 = vpop.f32.mrb[0].mxu0
    %3682 = vmatprep.mubr.f32.mxu0 0.0
    %3683 = vmatmul.mubr.f32.gmra.mrb[0].mxu0 %v3303
    %v3684 = vpop.f32.mrb[0].mxu0
    %v3685 = vadd.f32 %v3227, %v3684
    %v3686 = vpop.f32.mrb[0].mxu0
    %3687 = vmatprep.mubr.f32.mxu0 0.0
    %3688 = vmatmul.mubr.f32.gmra.mrb[0].mxu0 %v3306
    %v3689 = vpop.f32.mrb[0].mxu0
    %v3690 = vadd.f32 %v3227, %v3689
    %v3691 = vpop.f32.mrb[0].mxu0
    %3692 = vmatprep.mubr.f32.mxu0 0.0
    %3693 = vmatmul.mubr.f32.gmra.mrb[0].mxu0 %v3309
    %v3694 = vpop.f32.mrb[0].mxu0
    %v3695 = vadd.f32 %v3227, %v3694
    %v3696 = vpop.f32.mrb[0].mxu0
    %3697 = vmatprep.mubr.f32.mxu0 0.0
    %3698 = vmatmul.mubr.f32.gmra.mrb[0].mxu0 %v3312
    %v3699 = vpop.f32.mrb[0].mxu0
    %v3700 = vadd.f32 %v3227, %v3699
    %v3701 = vpop.f32.mrb[0].mxu0
    %3702 = vmatprep.mubr.f32.mxu0 0.0
    %3703 = vmatmul.mubr.f32.gmra.mrb[0].mxu0 %v3315
    %v3704 = vpop.f32.mrb[0].mxu0
    %v3705 = vadd.f32 %v3227, %v3704
    %v3706 = vpop.f32.mrb[0].mxu0
    %3707 = vmatprep.mubr.f32.mxu0 0.0
    %3708 = vmatmul.mubr.f32.gmra.mrb[0].mxu0 %v3318
    %v3709 = vpop.f32.mrb[0].mxu0
    %v3710 = vadd.f32 %v3227, %v3709
    %v3711 = vpop.f32.mrb[0].mxu0
    %3712 = vmatprep.mubr.f32.mxu0 0.0
    %3713 = vmatmul.mubr.f32.gmra.mrb[0].mxu0 %v3321
    %v3714 = vpop.f32.mrb[0].mxu0
    %v3715 = vadd.f32 %v3227, %v3714
    %v3716 = vpop.f32.mrb[0].mxu0
    %3717 = vmatprep.mubr.f32.mxu0 0.0
    %3718 = vmatmul.mubr.f32.gmra.mrb[0].mxu0 %v3324
    %v3719 = vpop.f32.mrb[0].mxu0
    %v3720 = vadd.f32 %v3227, %v3719
    %v3721 = vpop.f32.mrb[0].mxu0
    %3722 = vmatprep.mubr.f32.mxu0 0.0
    %3723 = vmatmul.mubr.f32.gmra.mrb[0].mxu0 %v3327
    %v3724 = vpop.f32.mrb[0].mxu0
    %v3725 = vadd.f32 %v3227, %v3724
    %v3726 = vpop.f32.mrb[0].mxu0
    %3727 = vmatprep.mubr.f32.mxu0 0.0
    %3728 = vmatmul.mubr.f32.gmra.mrb[0].mxu0 %v3330
    %v3729 = vpop.f32.mrb[0].mxu0
    %v3730 = vadd.f32 %v3227, %v3729
    %v3731 = vpop.f32.mrb[0].mxu0
    %3732 = vmatprep.mubr.f32.mxu0 0.0
    %3733 = vmatmul.mubr.f32.gmra.mrb[0].mxu0 %v3333
    %v3734 = vpop.f32.mrb[0].mxu0
    %v3735 = vadd.f32 %v3227, %v3734
    %v3736 = vpop.f32.mrb[0].mxu0
    %3737 = vmatprep.mubr.f32.mxu0 0.0
    %3738 = vmatmul.mubr.f32.gmra.mrb[0].mxu0 %v3336
    %v3739 = vpop.f32.mrb[0].mxu0
    %v3740 = vadd.f32 %v3227, %v3739
    %v3741 = vpop.f32.mrb[0].mxu0
    %3742 = vmatprep.mubr.f32.mxu0 0.0
    %3743 = vmatmul.mubr.f32.gmra.mrb[0].mxu0 %v3339
    %v3744 = vpop.f32.mrb[0].mxu0
    %v3745 = vadd.f32 %v3227, %v3744
    %v3746 = vpop.f32.mrb[0].mxu0
    %3747 = vmatprep.mubr.f32.mxu0 0.0
    %3748 = vmatmul.mubr.f32.gmra.mrb[0].mxu0 %v3342
    %v3749 = vpop.f32.mrb[0].mxu0
    %v3750 = vadd.f32 %v3227, %v3749
    %v3751 = vpop.f32.mrb[0].mxu0
    %3752 = vmatprep.mubr.f32.mxu0 0.0
    %3753 = vmatmul.mubr.f32.gmra.mrb[0].mxu0 %v3345
    %v3754 = vpop.f32.mrb[0].mxu0
    %v3755 = vadd.f32 %v3227, %v3754
    %v3756 = vpop.f32.mrb[0].mxu0
    %3757 = vmatprep.mubr.f32.mxu0 0.0
    %3758 = vmatmul.mubr.f32.gmra.mrb[0].mxu0 %v3348
    %v3759 = vpop.f32.mrb[0].mxu0
    %v3760 = vadd.f32 %v3227, %v3759
    %v3761 = vpop.f32.mrb[0].mxu0
    %3762 = vmatprep.mubr.f32.mxu0 0.0
    %3763 = vmatmul.mubr.f32.gmra.mrb[0].mxu0 %v3351
    %v3764 = vpop.f32.mrb[0].mxu0
    %v3765 = vadd.f32 %v3227, %v3764
    %v3766 = vpop.f32.mrb[0].mxu0
    %3767 = vmatprep.mubr.f32.mxu0 0.0
    %3768 = vmatmul.mubr.f32.gmra.mrb[0].mxu0 %v3354
    %v3769 = vpop.f32.mrb[0].mxu0
    %v3770 = vadd.f32 %v3227, %v3769
    %v3771 = vpop.f32.mrb[0].mxu0
    %3772 = vmatprep.mubr.f32.mxu0 0.0
    %3773 = vmatmul.mubr.f32.gmra.mrb[0].mxu0 %v3357
    %v3774 = vpop.f32.mrb[0].mxu0
    %v3775 = vadd.f32 %v3227, %v3774
    %v3776 = vpop.f32.mrb[0].mxu0
    %3777 = vmatprep.mubr.f32.mxu0 0.0
    %3778 = vmatmul.mubr.f32.gmra.mrb[0].mxu0 %v3360
    %v3779 = vpop.f32.mrb[0].mxu0
    %v3780 = vadd.f32 %v3227, %v3779
    %v3781 = vpop.f32.mrb[0].mxu0
    %3782 = vmatprep.mubr.f32.mxu0 0.0
    %3783 = vmatmul.mubr.f32.gmra.mrb[0].mxu0 %v3363
    %v3784 = vpop.f32.mrb[0].mxu0
    %v3785 = vadd.f32 %v3227, %v3784
    %v3786 = vpop.f32.mrb[0].mxu0
    %3787 = vmatprep.mubr.f32.mxu0 0.0
    %3788 = vmatmul.mubr.f32.gmra.mrb[0].mxu0 %v3366
    %v3789 = vpop.f32.mrb[0].mxu0
    %v3790 = vadd.f32 %v3227, %v3789
    %v3791 = vpop.f32.mrb[0].mxu0
    %3792 = vmatprep.mubr.f32.mxu0 0.0
    %3793 = vmatmul.mubr.f32.gmra.mrb[0].mxu0 %v3369
    %v3794 = vpop.f32.mrb[0].mxu0
    %v3795 = vadd.f32 %v3227, %v3794
    %v3796 = vpop.f32.mrb[0].mxu0
    %3797 = vmatprep.mubr.f32.mxu0 0.0
    %3798 = vmatmul.mubr.f32.gmra.mrb[0].mxu0 %v3372
    %v3799 = vpop.f32.mrb[0].mxu0
    %v3800 = vadd.f32 %v3227, %v3799
    %v3801 = vpop.f32.mrb[0].mxu0
    %3802 = vmatprep.mubr.f32.mxu0 0.0
    %3803 = vmatmul.mubr.f32.gmra.mrb[0].mxu0 %v3375
    %v3804 = vpop.f32.mrb[0].mxu0
    %v3805 = vadd.f32 %v3227, %v3804
    %v3806 = vpop.f32.mrb[0].mxu0
    %3807 = vmatprep.mubr.f32.mxu0 0.0
    %3808 = vmatmul.mubr.f32.gmra.mrb[0].mxu0 %v3378
    %v3809 = vpop.f32.mrb[0].mxu0
    %v3810 = vadd.f32 %v3227, %v3809
    %v3811 = vpop.f32.mrb[0].mxu0
    %3812 = vmatprep.mubr.f32.mxu0 0.0
    %3813 = vmatmul.mubr.f32.gmra.mrb[0].mxu0 %v3381
    %v3814 = vpop.f32.mrb[0].mxu0
    %v3815 = vadd.f32 %v3227, %v3814
    %v3816 = vpop.f32.mrb[0].mxu0
    %3817 = vmatprep.mubr.f32.mxu0 0.0
    %3818 = vmatmul.mubr.f32.gmra.mrb[0].mxu0 %v3384
    %v3819 = vpop.f32.mrb[0].mxu0
    %v3820 = vadd.f32 %v3227, %v3819
    %v3821 = vpop.f32.mrb[0].mxu0
    %3822 = vmatprep.mubr.f32.mxu0 0.0
    %3823 = vmatmul.mubr.f32.gmra.mrb[0].mxu0 %v3387
    %v3824 = vpop.f32.mrb[0].mxu0
    %v3825 = vadd.f32 %v3227, %v3824
    %v3826 = vpop.f32.mrb[0].mxu0
    %3827 = vmatprep.mubr.f32.mxu0 0.0
    %3828 = vmatmul.mubr.f32.gmra.mrb[0].mxu0 %v3390
    %v3829 = vpop.f32.mrb[0].mxu0
    %v3830 = vadd.f32 %v3227, %v3829
    %v3831 = vpop.f32.mrb[0].mxu0
    %3832 = vmatprep.mubr.f32.mxu0 0.0
    %3833 = vmatmul.mubr.f32.gmra.mrb[0].mxu0 %v3393
    %v3834 = vpop.f32.mrb[0].mxu0
    %v3835 = vadd.f32 %v3227, %v3834
    %v3836 = vpop.f32.mrb[0].mxu0
    %3837 = vmatprep.mubr.f32.mxu0 0.0
    %3838 = vmatmul.mubr.f32.gmra.mrb[0].mxu0 %v3396
    %v3839 = vpop.f32.mrb[0].mxu0
    %v3840 = vadd.f32 %v3227, %v3839
    %v3841 = vpop.f32.mrb[0].mxu0
    %3842 = vmatprep.mubr.f32.mxu0 0.0
    %3843 = vmatmul.mubr.f32.gmra.mrb[0].mxu0 %v3399
    %v3844 = vpop.f32.mrb[0].mxu0
    %v3845 = vadd.f32 %v3227, %v3844
    %v3846 = vpop.f32.mrb[0].mxu0
    %3847 = vmatprep.mubr.f32.mxu0 0.0
    %3848 = vmatmul.mubr.f32.gmra.mrb[0].mxu0 %v3402
    %v3849 = vpop.f32.mrb[0].mxu0
    %v3850 = vadd.f32 %v3227, %v3849
    %v3851 = vpop.f32.mrb[0].mxu0
    %3852 = vmatprep.mubr.f32.mxu0 0.0
    %3853 = vmatmul.mubr.f32.gmra.mrb[0].mxu0 %v3405
    %v3854 = vpop.f32.mrb[0].mxu0
    %v3855 = vadd.f32 %v3227, %v3854
    %v3856 = vpop.f32.mrb[0].mxu0
    %3857 = vmatprep.mubr.f32.mxu0 0.0
    %3858 = vmatmul.mubr.f32.gmra.mrb[0].mxu0 %v3408
    %v3859 = vpop.f32.mrb[0].mxu0
    %v3860 = vadd.f32 %v3227, %v3859
    %v3861 = vpop.f32.mrb[0].mxu0
    %3862 = vmatprep.mubr.f32.mxu0 0.0
    %3863 = vmatmul.mubr.f32.gmra.mrb[0].mxu0 %v3411
    %v3864 = vpop.f32.mrb[0].mxu0
    %v3865 = vadd.f32 %v3227, %v3864
    %v3866 = vpop.f32.mrb[0].mxu0
    %3867 = vmatprep.mubr.f32.mxu0 0.0
    %3868 = vmatmul.mubr.f32.gmra.mrb[0].mxu0 %v3414
    %v3869 = vpop.f32.mrb[0].mxu0
    %v3870 = vadd.f32 %v3227, %v3869
    %v3871 = vpop.f32.mrb[0].mxu0
    %3872 = vmatprep.mubr.f32.mxu0 0.0
    %3873 = vmatmul.mubr.f32.gmra.mrb[0].mxu0 %v3417
    %v3874 = vpop.f32.mrb[0].mxu0
    %v3875 = vadd.f32 %v3227, %v3874
    %v3876 = vpop.f32.mrb[0].mxu0
    %3877 = vmatprep.mubr.f32.mxu0 0.0
    %3878 = vmatmul.mubr.f32.gmra.mrb[0].mxu0 %v3420
    %v3879 = vpop.f32.mrb[0].mxu0
    %v3880 = vadd.f32 %v3227, %v3879
    %v3881 = vpop.f32.mrb[0].mxu0
    %3882 = vmatprep.mubr.f32.mxu0 0.0
    %3883 = vmatmul.mubr.f32.gmra.mrb[0].mxu0 %v3423
    %v3884 = vpop.f32.mrb[0].mxu0
    %v3885 = vadd.f32 %v3227, %v3884
    %v3886 = vpop.f32.mrb[0].mxu0
    %3887 = vmatprep.mubr.f32.mxu0 0.0
    %3888 = vmatmul.mubr.f32.gmra.mrb[0].mxu0 %v3426
    %v3889 = vpop.f32.mrb[0].mxu0
    %v3890 = vadd.f32 %v3227, %v3889
    %v3891 = vpop.f32.mrb[0].mxu0
    %3892 = vmatprep.mubr.f32.mxu0 0.0
    %3893 = vmatmul.mubr.f32.gmra.mrb[0].mxu0 %v3429
    %v3894 = vpop.f32.mrb[0].mxu0
    %v3895 = vadd.f32 %v3227, %v3894
    %v3896 = vpop.f32.mrb[0].mxu0
    %3897 = vmatprep.mubr.f32.mxu0 0.0
    %3898 = vmatmul.mubr.f32.gmra.mrb[0].mxu0 %v3432
    %v3899 = vpop.f32.mrb[0].mxu0
    %v3900 = vadd.f32 %v3227, %v3899
    %v3901 = vpop.f32.mrb[0].mxu0
    %3902 = vmatprep.mubr.f32.mxu0 0.0
    %3903 = vmatmul.mubr.f32.gmra.mrb[0].mxu0 %v3435
    %v3904 = vpop.f32.mrb[0].mxu0
    %v3905 = vadd.f32 %v3227, %v3904
    %v3906 = vpop.f32.mrb[0].mxu0
    %3907 = vmatprep.mubr.f32.mxu0 0.0
    %3908 = vmatmul.mubr.f32.gmra.mrb[0].mxu0 %v3438
    %v3909 = vpop.f32.mrb[0].mxu0
    %v3910 = vadd.f32 %v3227, %v3909
    %v3911 = vpop.f32.mrb[0].mxu0
    %3912 = vmatprep.mubr.f32.mxu0 0.0
    %3913 = vmatmul.mubr.f32.gmra.mrb[0].mxu0 %v3441
    %v3914 = vpop.f32.mrb[0].mxu0
    %v3915 = vadd.f32 %v3227, %v3914
    %v3916 = vpop.f32.mrb[0].mxu0
    %3917 = vmatprep.mubr.f32.mxu0 0.0
    %3918 = vmatmul.mubr.f32.gmra.mrb[0].mxu0 %v3444
    %v3919 = vpop.f32.mrb[0].mxu0
    %v3920 = vadd.f32 %v3227, %v3919
    %v3921 = vpop.f32.mrb[0].mxu0
    %3922 = vmatprep.mubr.f32.mxu0 0.0
    %3923 = vmatmul.mubr.f32.gmra.mrb[0].mxu0 %v3447
    %v3924 = vpop.f32.mrb[0].mxu0
    %v3925 = vadd.f32 %v3227, %v3924
    %v3926 = vpop.f32.mrb[0].mxu0
    %3927 = vmatprep.mubr.f32.mxu0 0.0
    %3928 = vmatmul.mubr.f32.gmra.mrb[0].mxu0 %v3450
    %v3929 = vpop.f32.mrb[0].mxu0
    %v3930 = vadd.f32 %v3227, %v3929
    %v3931 = vpop.f32.mrb[0].mxu0
    %3932 = vmatprep.mubr.f32.mxu0 0.0
    %3933 = vmatmul.mubr.f32.gmra.mrb[0].mxu0 %v3453
    %v3934 = vpop.f32.mrb[0].mxu0
    %v3935 = vadd.f32 %v3227, %v3934
    %v3936 = vpop.f32.mrb[0].mxu0
    %3937 = vmatprep.mubr.f32.mxu0 0.0
    %3938 = vmatmul.mubr.f32.gmra.mrb[0].mxu0 %v3456
    %v3939 = vpop.f32.mrb[0].mxu0
    %v3940 = vadd.f32 %v3227, %v3939
    %v3941 = vpop.f32.mrb[0].mxu0
    %3942 = vmatprep.mubr.f32.mxu0 0.0
    %3943 = vmatmul.mubr.f32.gmra.mrb[0].mxu0 %v3459
    %v3944 = vpop.f32.mrb[0].mxu0
    %v3945 = vadd.f32 %v3227, %v3944
    %v3946 = vpop.f32.mrb[0].mxu0
    %3947 = vmatprep.mubr.f32.mxu0 0.0
    %3948 = vmatmul.mubr.f32.gmra.mrb[0].mxu0 %v3462
    %v3949 = vpop.f32.mrb[0].mxu0
    %v3950 = vadd.f32 %v3227, %v3949
    %v3951 = vpop.f32.mrb[0].mxu0
    %3952 = vmatprep.mubr.f32.mxu0 0.0
    %3953 = vmatmul.mubr.f32.gmra.mrb[0].mxu0 %v3465
    %v3954 = vpop.f32.mrb[0].mxu0
    %v3955 = vadd.f32 %v3227, %v3954
    %v3956 = vpop.f32.mrb[0].mxu0
    %3957 = vmatprep.mubr.f32.mxu0 0.0
    %3958 = vmatmul.mubr.f32.gmra.mrb[0].mxu0 %v3468
    %v3959 = vpop.f32.mrb[0].mxu0
    %v3960 = vadd.f32 %v3227, %v3959
    %v3961 = vpop.f32.mrb[0].mxu0
    %3962 = vmatprep.mubr.f32.mxu0 0.0
    %3963 = vmatmul.mubr.f32.gmra.mrb[0].mxu0 %v3471
    %v3964 = vpop.f32.mrb[0].mxu0
    %v3965 = vadd.f32 %v3227, %v3964
    %v3966 = vpop.f32.mrb[0].mxu0
    %3967 = vmatprep.mubr.f32.mxu0 0.0
    %3968 = vmatmul.mubr.f32.gmra.mrb[0].mxu0 %v3474
    %v3969 = vpop.f32.mrb[0].mxu0
    %v3970 = vadd.f32 %v3227, %v3969
    %v3971 = vpop.f32.mrb[0].mxu0
    %3972 = vmatprep.mubr.f32.mxu0 0.0
    %3973 = vmatmul.mubr.f32.gmra.mrb[0].mxu0 %v3477
    %v3974 = vpop.f32.mrb[0].mxu0
    %v3975 = vadd.f32 %v3227, %v3974
    %v3976 = vpop.f32.mrb[0].mxu0
    %3977 = vmatprep.mubr.f32.mxu0 0.0
    %3978 = vmatmul.mubr.f32.gmra.mrb[0].mxu0 %v3480
    %v3979 = vpop.f32.mrb[0].mxu0
    %v3980 = vadd.f32 %v3227, %v3979
    %v3981 = vpop.f32.mrb[0].mxu0
    %3982 = vmatprep.mubr.f32.mxu0 0.0
    %3983 = vmatmul.mubr.f32.gmra.mrb[0].mxu0 %v3483
    %v3984 = vpop.f32.mrb[0].mxu0
    %v3985 = vadd.f32 %v3227, %v3984
    %v3986 = vpop.f32.mrb[0].mxu0
    %3987 = vmatprep.mubr.f32.mxu0 0.0
    %3988 = vmatmul.mubr.f32.gmra.mrb[0].mxu0 %v3486
    %v3989 = vpop.f32.mrb[0].mxu0
    %v3990 = vadd.f32 %v3227, %v3989
    %v3991 = vpop.f32.mrb[0].mxu0
    %3992 = vmatprep.mubr.f32.mxu0 0.0
    %3993 = vmatmul.mubr.f32.gmra.mrb[0].mxu0 %v3489
    %v3994 = vpop.f32.mrb[0].mxu0
    %v3995 = vadd.f32 %v3227, %v3994
    %v3996 = vpop.f32.mrb[0].mxu0
    %3997 = vmatprep.mubr.f32.mxu0 0.0
    %3998 = vmatmul.mubr.f32.gmra.mrb[0].mxu0 %v3492
    %v3999 = vpop.f32.mrb[0].mxu0
    %v4000 = vadd.f32 %v3227, %v3999
    %v4001 = vpop.f32.mrb[0].mxu0
    %4002 = vdwg.mxu0
    %v4003 = vmax.f32 %v3565, 0.0
    %v4004 = vmax.f32 %v3570, 0.0
    %v4005 = vmax.f32 %v3575, 0.0
    %v4006 = vmax.f32 %v3580, 0.0
    %v4007 = vmax.f32 %v3585, 0.0
    %v4008 = vmax.f32 %v3590, 0.0
    %v4009 = vmax.f32 %v3595, 0.0
    %v4010 = vmax.f32 %v3600, 0.0
    %v4011 = vmax.f32 %v3605, 0.0
    %v4012 = vmax.f32 %v3610, 0.0
    %v4013 = vmax.f32 %v3615, 0.0
    %v4014 = vmax.f32 %v3620, 0.0
    %v4015 = vmax.f32 %v3625, 0.0
    %v4016 = vmax.f32 %v3630, 0.0
    %v4017 = vmax.f32 %v3635, 0.0
    %v4018 = vmax.f32 %v3640, 0.0
    %v4019 = vmax.f32 %v3645, 0.0
    %v4020 = vmax.f32 %v3650, 0.0
    %v4021 = vmax.f32 %v3655, 0.0
    %v4022 = vmax.f32 %v3660, 0.0
    %v4023 = vmax.f32 %v3665, 0.0
    %v4024 = vmax.f32 %v3670, 0.0
    %v4025 = vmax.f32 %v3675, 0.0
    %v4026 = vmax.f32 %v3680, 0.0
    %v4027 = vmax.f32 %v3685, 0.0
    %v4028 = vmax.f32 %v3690, 0.0
    %v4029 = vmax.f32 %v3695, 0.0
    %v4030 = vmax.f32 %v3700, 0.0
    %v4031 = vmax.f32 %v3705, 0.0
    %v4032 = vmax.f32 %v3710, 0.0
    %v4033 = vmax.f32 %v3715, 0.0
    %v4034 = vmax.f32 %v3720, 0.0
    %v4035 = vmax.f32 %v3725, 0.0
    %v4036 = vmax.f32 %v3730, 0.0
    %v4037 = vmax.f32 %v3735, 0.0
    %v4038 = vmax.f32 %v3740, 0.0
    %v4039 = vmax.f32 %v3745, 0.0
    %v4040 = vmax.f32 %v3750, 0.0
    %v4041 = vmax.f32 %v3755, 0.0
    %v4042 = vmax.f32 %v3760, 0.0
    %v4043 = vmax.f32 %v3765, 0.0
    %v4044 = vmax.f32 %v3770, 0.0
    %v4045 = vmax.f32 %v3775, 0.0
    %v4046 = vmax.f32 %v3780, 0.0
    %v4047 = vmax.f32 %v3785, 0.0
    %v4048 = vmax.f32 %v3790, 0.0
    %v4049 = vmax.f32 %v3795, 0.0
    %v4050 = vmax.f32 %v3800, 0.0
    %v4051 = vmax.f32 %v3805, 0.0
    %v4052 = vmax.f32 %v3810, 0.0
    %v4053 = vmax.f32 %v3815, 0.0
    %v4054 = vmax.f32 %v3820, 0.0
    %v4055 = vmax.f32 %v3825, 0.0
    %v4056 = vmax.f32 %v3830, 0.0
    %v4057 = vmax.f32 %v3835, 0.0
    %v4058 = vmax.f32 %v3840, 0.0
    %v4059 = vmax.f32 %v3845, 0.0
    %v4060 = vmax.f32 %v3850, 0.0
    %v4061 = vmax.f32 %v3855, 0.0
    %v4062 = vmax.f32 %v3860, 0.0
    %v4063 = vmax.f32 %v3865, 0.0
    %v4064 = vmax.f32 %v3870, 0.0
    %v4065 = vmax.f32 %v3875, 0.0
    %v4066 = vmax.f32 %v3880, 0.0
    %v4067 = vmax.f32 %v3885, 0.0
    %v4068 = vmax.f32 %v3890, 0.0
    %v4069 = vmax.f32 %v3895, 0.0
    %v4070 = vmax.f32 %v3900, 0.0
    %v4071 = vmax.f32 %v3905, 0.0
    %v4072 = vmax.f32 %v3910, 0.0
    %v4073 = vmax.f32 %v3915, 0.0
    %v4074 = vmax.f32 %v3920, 0.0
    %v4075 = vmax.f32 %v3925, 0.0
    %v4076 = vmax.f32 %v3930, 0.0
    %v4077 = vmax.f32 %v3935, 0.0
    %v4078 = vmax.f32 %v3940, 0.0
    %v4079 = vmax.f32 %v3945, 0.0
    %v4080 = vmax.f32 %v3950, 0.0
    %v4081 = vmax.f32 %v3955, 0.0
    %v4082 = vmax.f32 %v3960, 0.0
    %v4083 = vmax.f32 %v3965, 0.0
    %v4084 = vmax.f32 %v3970, 0.0
    %v4085 = vmax.f32 %v3975, 0.0
    %v4086 = vmax.f32 %v3980, 0.0
    %v4087 = vmax.f32 %v3985, 0.0
    %v4088 = vmax.f32 %v3990, 0.0
    %v4089 = vmax.f32 %v3995, 0.0
    %v4090 = vmax.f32 %v4000, 0.0
    %v4091 = vrot.slane %v4003, 1
    %v4092 = vrot.slane %v4004, 1
    %v4093 = vrot.slane %v4005, 1
    %v4094 = vrot.slane %v4006, 1
    %v4095 = vrot.slane %v4007, 1
    %v4096 = vrot.slane %v4008, 1
    %v4097 = vrot.slane %v4009, 1
    %v4098 = vrot.slane %v4010, 1
    %v4099 = vrot.slane %v4011, 1
    %v4100 = vrot.slane %v4012, 1
    %v4101 = vrot.slane %v4013, 1
    %v4102 = vrot.slane %v4014, 1
    %v4103 = vrot.slane %v4015, 1
    %v4104 = vrot.slane %v4016, 1
    %v4105 = vrot.slane %v4017, 1
    %v4106 = vrot.slane %v4018, 1
    %v4107 = vrot.slane %v4019, 1
    %v4108 = vrot.slane %v4020, 1
    %v4109 = vrot.slane %v4021, 1
    %v4110 = vrot.slane %v4022, 1
    %v4111 = vrot.slane %v4023, 1
    %v4112 = vrot.slane %v4024, 1
    %v4113 = vrot.slane %v4025, 1
    %v4114 = vrot.slane %v4026, 1
    %v4115 = vrot.slane %v4027, 1
    %v4116 = vrot.slane %v4028, 1
    %v4117 = vrot.slane %v4029, 1
    %v4118 = vrot.slane %v4030, 1
    %v4119 = vrot.slane %v4031, 1
    %v4120 = vrot.slane %v4032, 1
    %v4121 = vrot.slane %v4033, 1
    %v4122 = vrot.slane %v4034, 1
    %v4123 = vrot.slane %v4035, 1
    %v4124 = vrot.slane %v4036, 1
    %v4125 = vrot.slane %v4037, 1
    %v4126 = vrot.slane %v4038, 1
    %v4127 = vrot.slane %v4039, 1
    %v4128 = vrot.slane %v4040, 1
    %v4129 = vrot.slane %v4041, 1
    %v4130 = vrot.slane %v4042, 1
    %v4131 = vrot.slane %v4043, 1
    %v4132 = vrot.slane %v4044, 1
    %v4133 = vrot.slane %v4045, 1
    %v4134 = vrot.slane %v4046, 1
    %v4135 = vrot.slane %v4047, 1
    %v4136 = vrot.slane %v4048, 1
    %v4137 = vrot.slane %v4049, 1
    %v4138 = vrot.slane %v4050, 1
    %v4139 = vrot.slane %v4051, 1
    %v4140 = vrot.slane %v4052, 1
    %v4141 = vrot.slane %v4053, 1
    %v4142 = vrot.slane %v4054, 1
    %v4143 = vrot.slane %v4055, 1
    %v4144 = vrot.slane %v4056, 1
    %v4145 = vrot.slane %v4057, 1
    %v4146 = vrot.slane %v4058, 1
    %v4147 = vrot.slane %v4059, 1
    %v4148 = vrot.slane %v4060, 1
    %v4149 = vrot.slane %v4061, 1
    %v4150 = vrot.slane %v4062, 1
    %v4151 = vrot.slane %v4063, 1
    %v4152 = vrot.slane %v4064, 1
    %v4153 = vrot.slane %v4065, 1
    %v4154 = vrot.slane %v4066, 1
    %v4155 = vrot.slane %v4067, 1
    %v4156 = vrot.slane %v4068, 1
    %v4157 = vrot.slane %v4069, 1
    %v4158 = vrot.slane %v4070, 1
    %v4159 = vrot.slane %v4071, 1
    %v4160 = vrot.slane %v4072, 1
    %v4161 = vrot.slane %v4073, 1
    %v4162 = vrot.slane %v4074, 1
    %v4163 = vrot.slane %v4075, 1
    %v4164 = vrot.slane %v4076, 1
    %v4165 = vrot.slane %v4077, 1
    %v4166 = vrot.slane %v4078, 1
    %v4167 = vrot.slane %v4079, 1
    %v4168 = vrot.slane %v4080, 1
    %v4169 = vrot.slane %v4081, 1
    %v4170 = vrot.slane %v4082, 1
    %v4171 = vrot.slane %v4083, 1
    %v4172 = vrot.slane %v4084, 1
    %v4173 = vrot.slane %v4085, 1
    %v4174 = vrot.slane %v4086, 1
    %v4175 = vrot.slane %v4087, 1
    %v4176 = vrot.slane %v4088, 1
    %v4177 = vrot.slane %v4089, 1
    %v4178 = vrot.slane %v4090, 1
    %v4179 = vsel %vm2161, %v4177, %v4178
    %v4180 = vsel %vm2161, %v4176, %v4177
    %v4181 = vsel %vm2161, %v4175, %v4176
    %v4182 = vsel %vm2161, %v4174, %v4175
    %v4183 = vsel %vm2161, %v4173, %v4174
    %v4184 = vsel %vm2161, %v4172, %v4173
    %v4185 = vsel %vm2161, %v4171, %v4172
    %v4186 = vsel %vm2161, %v4170, %v4171
    %v4187 = vsel %vm2161, %v4169, %v4170
    %v4188 = vsel %vm2161, %v4168, %v4169
    %v4189 = vsel %vm2161, %v4167, %v4168
    %v4190 = vsel %vm2161, %v4166, %v4167
    %v4191 = vsel %vm2161, %v4165, %v4166
    %v4192 = vsel %vm2161, %v4164, %v4165
    %v4193 = vsel %vm2161, %v4163, %v4164
    %v4194 = vsel %vm2161, %v4162, %v4163
    %v4195 = vsel %vm2161, %v4161, %v4162
    %v4196 = vsel %vm2161, %v4160, %v4161
    %v4197 = vsel %vm2161, %v4159, %v4160
    %v4198 = vsel %vm2161, %v4158, %v4159
    %v4199 = vsel %vm2161, %v4157, %v4158
    %v4200 = vsel %vm2161, %v4156, %v4157
    %v4201 = vsel %vm2161, %v4155, %v4156
    %v4202 = vsel %vm2161, %v4154, %v4155
    %v4203 = vsel %vm2161, %v4153, %v4154
    %v4204 = vsel %vm2161, %v4152, %v4153
    %v4205 = vsel %vm2161, %v4151, %v4152
    %v4206 = vsel %vm2161, %v4150, %v4151
    %v4207 = vsel %vm2161, %v4149, %v4150
    %v4208 = vsel %vm2161, %v4148, %v4149
    %v4209 = vsel %vm2161, %v4147, %v4148
    %v4210 = vsel %vm2161, %v4146, %v4147
    %v4211 = vsel %vm2161, %v4145, %v4146
    %v4212 = vsel %vm2161, %v4144, %v4145
    %v4213 = vsel %vm2161, %v4143, %v4144
    %v4214 = vsel %vm2161, %v4142, %v4143
    %v4215 = vsel %vm2161, %v4141, %v4142
    %v4216 = vsel %vm2161, %v4140, %v4141
    %v4217 = vsel %vm2161, %v4139, %v4140
    %v4218 = vsel %vm2161, %v4138, %v4139
    %v4219 = vsel %vm2161, %v4137, %v4138
    %v4220 = vsel %vm2161, %v4136, %v4137
    %v4221 = vsel %vm2161, %v4135, %v4136
    %v4222 = vsel %vm2161, %v4134, %v4135
    %v4223 = vsel %vm2161, %v4133, %v4134
    %v4224 = vsel %vm2161, %v4132, %v4133
    %v4225 = vsel %vm2161, %v4131, %v4132
    %v4226 = vsel %vm2161, %v4130, %v4131
    %v4227 = vsel %vm2161, %v4129, %v4130
    %v4228 = vsel %vm2161, %v4128, %v4129
    %v4229 = vsel %vm2161, %v4127, %v4128
    %v4230 = vsel %vm2161, %v4126, %v4127
    %v4231 = vsel %vm2161, %v4125, %v4126
    %v4232 = vsel %vm2161, %v4124, %v4125
    %v4233 = vsel %vm2161, %v4123, %v4124
    %v4234 = vsel %vm2161, %v4122, %v4123
    %v4235 = vsel %vm2161, %v4121, %v4122
    %v4236 = vsel %vm2161, %v4120, %v4121
    %v4237 = vsel %vm2161, %v4119, %v4120
    %v4238 = vsel %vm2161, %v4118, %v4119
    %v4239 = vsel %vm2161, %v4117, %v4118
    %v4240 = vsel %vm2161, %v4116, %v4117
    %v4241 = vsel %vm2161, %v4115, %v4116
    %v4242 = vsel %vm2161, %v4114, %v4115
    %v4243 = vsel %vm2161, %v4113, %v4114
    %v4244 = vsel %vm2161, %v4112, %v4113
    %v4245 = vsel %vm2161, %v4111, %v4112
    %v4246 = vsel %vm2161, %v4110, %v4111
    %v4247 = vsel %vm2161, %v4109, %v4110
    %v4248 = vsel %vm2161, %v4108, %v4109
    %v4249 = vsel %vm2161, %v4107, %v4108
    %v4250 = vsel %vm2161, %v4106, %v4107
    %v4251 = vsel %vm2161, %v4105, %v4106
    %v4252 = vsel %vm2161, %v4104, %v4105
    %v4253 = vsel %vm2161, %v4103, %v4104
    %v4254 = vsel %vm2161, %v4102, %v4103
    %v4255 = vsel %vm2161, %v4101, %v4102
    %v4256 = vsel %vm2161, %v4100, %v4101
    %v4257 = vsel %vm2161, %v4099, %v4100
    %v4258 = vsel %vm2161, %v4098, %v4099
    %v4259 = vsel %vm2161, %v4097, %v4098
    %v4260 = vsel %vm2161, %v4096, %v4097
    %v4261 = vsel %vm2161, %v4095, %v4096
    %v4262 = vsel %vm2161, %v4094, %v4095
    %v4263 = vsel %vm2161, %v4093, %v4094
    %v4264 = vsel %vm2161, %v4092, %v4093
    %v4265 = vsel %vm2161, %v4091, %v4092
    %v4266 = vsel %vm2161, %v4178, %v4091
    %v4267 = vmax.f32 %v4003, %v4265
    %v4268 = vmax.f32 %v4004, %v4264
    %v4269 = vmax.f32 %v4005, %v4263
    %v4270 = vmax.f32 %v4006, %v4262
    %v4271 = vmax.f32 %v4007, %v4261
    %v4272 = vmax.f32 %v4008, %v4260
    %v4273 = vmax.f32 %v4009, %v4259
    %v4274 = vmax.f32 %v4010, %v4258
    %v4275 = vmax.f32 %v4011, %v4257
    %v4276 = vmax.f32 %v4012, %v4256
    %v4277 = vmax.f32 %v4013, %v4255
    %v4278 = vmax.f32 %v4014, %v4254
    %v4279 = vmax.f32 %v4015, %v4253
    %v4280 = vmax.f32 %v4016, %v4252
    %v4281 = vmax.f32 %v4017, %v4251
    %v4282 = vmax.f32 %v4018, %v4250
    %v4283 = vmax.f32 %v4019, %v4249
    %v4284 = vmax.f32 %v4020, %v4248
    %v4285 = vmax.f32 %v4021, %v4247
    %v4286 = vmax.f32 %v4022, %v4246
    %v4287 = vmax.f32 %v4023, %v4245
    %v4288 = vmax.f32 %v4024, %v4244
    %v4289 = vmax.f32 %v4025, %v4243
    %v4290 = vmax.f32 %v4026, %v4242
    %v4291 = vmax.f32 %v4027, %v4241
    %v4292 = vmax.f32 %v4028, %v4240
    %v4293 = vmax.f32 %v4029, %v4239
    %v4294 = vmax.f32 %v4030, %v4238
    %v4295 = vmax.f32 %v4031, %v4237
    %v4296 = vmax.f32 %v4032, %v4236
    %v4297 = vmax.f32 %v4033, %v4235
    %v4298 = vmax.f32 %v4034, %v4234
    %v4299 = vmax.f32 %v4035, %v4233
    %v4300 = vmax.f32 %v4036, %v4232
    %v4301 = vmax.f32 %v4037, %v4231
    %v4302 = vmax.f32 %v4038, %v4230
    %v4303 = vmax.f32 %v4039, %v4229
    %v4304 = vmax.f32 %v4040, %v4228
    %v4305 = vmax.f32 %v4041, %v4227
    %v4306 = vmax.f32 %v4042, %v4226
    %v4307 = vmax.f32 %v4043, %v4225
    %v4308 = vmax.f32 %v4044, %v4224
    %v4309 = vmax.f32 %v4045, %v4223
    %v4310 = vmax.f32 %v4046, %v4222
    %v4311 = vmax.f32 %v4047, %v4221
    %v4312 = vmax.f32 %v4048, %v4220
    %v4313 = vmax.f32 %v4049, %v4219
    %v4314 = vmax.f32 %v4050, %v4218
    %v4315 = vmax.f32 %v4051, %v4217
    %v4316 = vmax.f32 %v4052, %v4216
    %v4317 = vmax.f32 %v4053, %v4215
    %v4318 = vmax.f32 %v4054, %v4214
    %v4319 = vmax.f32 %v4055, %v4213
    %v4320 = vmax.f32 %v4056, %v4212
    %v4321 = vmax.f32 %v4057, %v4211
    %v4322 = vmax.f32 %v4058, %v4210
    %v4323 = vmax.f32 %v4059, %v4209
    %v4324 = vmax.f32 %v4060, %v4208
    %v4325 = vmax.f32 %v4061, %v4207
    %v4326 = vmax.f32 %v4062, %v4206
    %v4327 = vmax.f32 %v4063, %v4205
    %v4328 = vmax.f32 %v4064, %v4204
    %v4329 = vmax.f32 %v4065, %v4203
    %v4330 = vmax.f32 %v4066, %v4202
    %v4331 = vmax.f32 %v4067, %v4201
    %v4332 = vmax.f32 %v4068, %v4200
    %v4333 = vmax.f32 %v4069, %v4199
    %v4334 = vmax.f32 %v4070, %v4198
    %v4335 = vmax.f32 %v4071, %v4197
    %v4336 = vmax.f32 %v4072, %v4196
    %v4337 = vmax.f32 %v4073, %v4195
    %v4338 = vmax.f32 %v4074, %v4194
    %v4339 = vmax.f32 %v4075, %v4193
    %v4340 = vmax.f32 %v4076, %v4192
    %v4341 = vmax.f32 %v4077, %v4191
    %v4342 = vmax.f32 %v4078, %v4190
    %v4343 = vmax.f32 %v4079, %v4189
    %v4344 = vmax.f32 %v4080, %v4188
    %v4345 = vmax.f32 %v4081, %v4187
    %v4346 = vmax.f32 %v4082, %v4186
    %v4347 = vmax.f32 %v4083, %v4185
    %v4348 = vmax.f32 %v4084, %v4184
    %v4349 = vmax.f32 %v4085, %v4183
    %v4350 = vmax.f32 %v4086, %v4182
    %v4351 = vmax.f32 %v4087, %v4181
    %v4352 = vmax.f32 %v4088, %v4180
    %v4353 = vmax.f32 %v4089, %v4179
    %v4354 = vmax.f32 %v4090, %v4266
    %vm4355 = vcmask 130048
    %4356 = vst.msk [vmem:[#allocation2] sm:$0xff] %vm4355, %v4267
    %4357 = vst.msk [vmem:[#allocation2 + $0x8] sm:$0xff] %vm4355, %v4268
    %4358 = vst.msk [vmem:[#allocation2 + $0x10] sm:$0xff] %vm4355, %v4269
    %4359 = vst.msk [vmem:[#allocation2 + $0x18] sm:$0xff] %vm4355, %v4270
    %4360 = vst.msk [vmem:[#allocation2 + $0x20] sm:$0xff] %vm4355, %v4271
    %4361 = vst.msk [vmem:[#allocation2 + $0x28] sm:$0xff] %vm4355, %v4272
    %4362 = vst.msk [vmem:[#allocation2 + $0x30] sm:$0xff] %vm4355, %v4273
    %4363 = vst.msk [vmem:[#allocation2 + $0x38] sm:$0xff] %vm4355, %v4274
    %4364 = vst.msk [vmem:[#allocation2 + $0x40] sm:$0xff] %vm4355, %v4275
    %4365 = vst.msk [vmem:[#allocation2 + $0x48] sm:$0xff] %vm4355, %v4276
    %4366 = vst.msk [vmem:[#allocation2 + $0x50] sm:$0xff] %vm4355, %v4277
    %4367 = vst.msk [vmem:[#allocation2 + $0x58] sm:$0xff] %vm4355, %v4278
    %4368 = vst.msk [vmem:[#allocation2 + $0x60] sm:$0xff] %vm4355, %v4279
    %4369 = vst.msk [vmem:[#allocation2 + $0x68] sm:$0xff] %vm4355, %v4280
    %4370 = vst.msk [vmem:[#allocation2 + $0x70] sm:$0xff] %vm4355, %v4281
    %4371 = vst.msk [vmem:[#allocation2 + $0x78] sm:$0xff] %vm4355, %v4282
    %4372 = vst.msk [vmem:[#allocation2 + $0x80] sm:$0xff] %vm4355, %v4283
    %4373 = vst.msk [vmem:[#allocation2 + $0x88] sm:$0xff] %vm4355, %v4284
    %4374 = vst.msk [vmem:[#allocation2 + $0x90] sm:$0xff] %vm4355, %v4285
    %4375 = vst.msk [vmem:[#allocation2 + $0x98] sm:$0xff] %vm4355, %v4286
    %4376 = vst.msk [vmem:[#allocation2 + $0xa0] sm:$0xff] %vm4355, %v4287
    %4377 = vst.msk [vmem:[#allocation2 + $0xa8] sm:$0xff] %vm4355, %v4288
    %4378 = vst.msk [vmem:[#allocation2 + $0xb0] sm:$0xff] %vm4355, %v4289
    %4379 = vst.msk [vmem:[#allocation2 + $0xb8] sm:$0xff] %vm4355, %v4290
    %4380 = vst.msk [vmem:[#allocation2 + $0xc0] sm:$0xff] %vm4355, %v4291
    %4381 = vst.msk [vmem:[#allocation2 + $0xc8] sm:$0xff] %vm4355, %v4292
    %4382 = vst.msk [vmem:[#allocation2 + $0xd0] sm:$0xff] %vm4355, %v4293
    %4383 = vst.msk [vmem:[#allocation2 + $0xd8] sm:$0xff] %vm4355, %v4294
    %4384 = vst.msk [vmem:[#allocation2 + $0xe0] sm:$0xff] %vm4355, %v4295
    %4385 = vst.msk [vmem:[#allocation2 + $0xe8] sm:$0xff] %vm4355, %v4296
    %4386 = vst.msk [vmem:[#allocation2 + $0xf0] sm:$0xff] %vm4355, %v4297
    %4387 = vst.msk [vmem:[#allocation2 + $0xf8] sm:$0xff] %vm4355, %v4298
    %4388 = vst.msk [vmem:[#allocation2 + $0x100] sm:$0xff] %vm4355, %v4299
    %4389 = vst.msk [vmem:[#allocation2 + $0x108] sm:$0xff] %vm4355, %v4300
    %4390 = vst.msk [vmem:[#allocation2 + $0x110] sm:$0xff] %vm4355, %v4301
    %4391 = vst.msk [vmem:[#allocation2 + $0x118] sm:$0xff] %vm4355, %v4302
    %4392 = vst.msk [vmem:[#allocation2 + $0x120] sm:$0xff] %vm4355, %v4303
    %4393 = vst.msk [vmem:[#allocation2 + $0x128] sm:$0xff] %vm4355, %v4304
    %4394 = vst.msk [vmem:[#allocation2 + $0x130] sm:$0xff] %vm4355, %v4305
    %4395 = vst.msk [vmem:[#allocation2 + $0x138] sm:$0xff] %vm4355, %v4306
    %4396 = vst.msk [vmem:[#allocation2 + $0x140] sm:$0xff] %vm4355, %v4307
    %4397 = vst.msk [vmem:[#allocation2 + $0x148] sm:$0xff] %vm4355, %v4308
    %4398 = vst.msk [vmem:[#allocation2 + $0x150] sm:$0xff] %vm4355, %v4309
    %4399 = vst.msk [vmem:[#allocation2 + $0x158] sm:$0xff] %vm4355, %v4310
    %4400 = vst.msk [vmem:[#allocation2 + $0x160] sm:$0xff] %vm4355, %v4311
    %4401 = vst.msk [vmem:[#allocation2 + $0x168] sm:$0xff] %vm4355, %v4312
    %4402 = vst.msk [vmem:[#allocation2 + $0x170] sm:$0xff] %vm4355, %v4313
    %4403 = vst.msk [vmem:[#allocation2 + $0x178] sm:$0xff] %vm4355, %v4314
    %4404 = vst.msk [vmem:[#allocation2 + $0x180] sm:$0xff] %vm4355, %v4315
    %4405 = vst.msk [vmem:[#allocation2 + $0x188] sm:$0xff] %vm4355, %v4316
    %4406 = vst.msk [vmem:[#allocation2 + $0x190] sm:$0xff] %vm4355, %v4317
    %4407 = vst.msk [vmem:[#allocation2 + $0x198] sm:$0xff] %vm4355, %v4318
    %4408 = vst.msk [vmem:[#allocation2 + $0x1a0] sm:$0xff] %vm4355, %v4319
    %4409 = vst.msk [vmem:[#allocation2 + $0x1a8] sm:$0xff] %vm4355, %v4320
    %4410 = vst.msk [vmem:[#allocation2 + $0x1b0] sm:$0xff] %vm4355, %v4321
    %4411 = vst.msk [vmem:[#allocation2 + $0x1b8] sm:$0xff] %vm4355, %v4322
    %4412 = vst.msk [vmem:[#allocation2 + $0x1c0] sm:$0xff] %vm4355, %v4323
    %4413 = vst.msk [vmem:[#allocation2 + $0x1c8] sm:$0xff] %vm4355, %v4324
    %4414 = vst.msk [vmem:[#allocation2 + $0x1d0] sm:$0xff] %vm4355, %v4325
    %4415 = vst.msk [vmem:[#allocation2 + $0x1d8] sm:$0xff] %vm4355, %v4326
    %4416 = vst.msk [vmem:[#allocation2 + $0x1e0] sm:$0xff] %vm4355, %v4327
    %4417 = vst.msk [vmem:[#allocation2 + $0x1e8] sm:$0xff] %vm4355, %v4328
    %4418 = vst.msk [vmem:[#allocation2 + $0x1f0] sm:$0xff] %vm4355, %v4329
    %4419 = vst.msk [vmem:[#allocation2 + $0x1f8] sm:$0xff] %vm4355, %v4330
    %4420 = vst.msk [vmem:[#allocation2 + $0x200] sm:$0xff] %vm4355, %v4331
    %4421 = vst.msk [vmem:[#allocation2 + $0x208] sm:$0xff] %vm4355, %v4332
    %4422 = vst.msk [vmem:[#allocation2 + $0x210] sm:$0xff] %vm4355, %v4333
    %4423 = vst.msk [vmem:[#allocation2 + $0x218] sm:$0xff] %vm4355, %v4334
    %4424 = vst.msk [vmem:[#allocation2 + $0x220] sm:$0xff] %vm4355, %v4335
    %4425 = vst.msk [vmem:[#allocation2 + $0x228] sm:$0xff] %vm4355, %v4336
    %4426 = vst.msk [vmem:[#allocation2 + $0x230] sm:$0xff] %vm4355, %v4337
    %4427 = vst.msk [vmem:[#allocation2 + $0x238] sm:$0xff] %vm4355, %v4338
    %4428 = vst.msk [vmem:[#allocation2 + $0x240] sm:$0xff] %vm4355, %v4339
    %4429 = vst.msk [vmem:[#allocation2 + $0x248] sm:$0xff] %vm4355, %v4340
    %4430 = vst.msk [vmem:[#allocation2 + $0x250] sm:$0xff] %vm4355, %v4341
    %4431 = vst.msk [vmem:[#allocation2 + $0x258] sm:$0xff] %vm4355, %v4342
    %4432 = vst.msk [vmem:[#allocation2 + $0x260] sm:$0xff] %vm4355, %v4343
    %4433 = vst.msk [vmem:[#allocation2 + $0x268] sm:$0xff] %vm4355, %v4344
    %4434 = vst.msk [vmem:[#allocation2 + $0x270] sm:$0xff] %vm4355, %v4345
    %4435 = vst.msk [vmem:[#allocation2 + $0x278] sm:$0xff] %vm4355, %v4346
    %4436 = vst.msk [vmem:[#allocation2 + $0x280] sm:$0xff] %vm4355, %v4347
    %4437 = vst.msk [vmem:[#allocation2 + $0x288] sm:$0xff] %vm4355, %v4348
    %4438 = vst.msk [vmem:[#allocation2 + $0x290] sm:$0xff] %vm4355, %v4349
    %4439 = vst.msk [vmem:[#allocation2 + $0x298] sm:$0xff] %vm4355, %v4350
    %4440 = vst.msk [vmem:[#allocation2 + $0x2a0] sm:$0xff] %vm4355, %v4351
    %4441 = vst.msk [vmem:[#allocation2 + $0x2a8] sm:$0xff] %vm4355, %v4352
    %4442 = vst.msk [vmem:[#allocation2 + $0x2b0] sm:$0xff] %vm4355, %v4353
    %4443 = vst.msk [vmem:[#allocation2 + $0x2b8] sm:$0xff] %vm4355, %v4354
    %v4444 = vld [vmem:[#allocation2] ss:$2 sm:$0xff]
    %s4445 = scalar_lea.vmem [#allocation2], 16
    %v4446 = vld [vmem:[%s4445] ss:$2 sm:$0xff]
    %s4447 = scalar_lea.vmem [#allocation2], 32
    %v4448 = vld [vmem:[%s4447] ss:$2 sm:$0xff]
    %s4449 = scalar_lea.vmem [#allocation2], 48
    %v4450 = vld [vmem:[%s4449] ss:$2 sm:$0xff]
    %s4451 = scalar_lea.vmem [#allocation2], 64
    %v4452 = vld [vmem:[%s4451] ss:$2 sm:$0xff]
    %s4453 = scalar_lea.vmem [#allocation2], 80
    %v4454 = vld [vmem:[%s4453] ss:$2 sm:$0xff]
    %s4455 = scalar_lea.vmem [#allocation2], 96
    %v4456 = vld [vmem:[%s4455] ss:$2 sm:$0xff]
    %s4457 = scalar_lea.vmem [#allocation2], 112
    %v4458 = vld [vmem:[%s4457] ss:$2 sm:$0xff]
    %s4459 = scalar_lea.vmem [#allocation2], 128
    %v4460 = vld [vmem:[%s4459] ss:$2 sm:$0xff]
    %s4461 = scalar_lea.vmem [#allocation2], 144
    %v4462 = vld [vmem:[%s4461] ss:$2 sm:$0xff]
    %s4463 = scalar_lea.vmem [#allocation2], 160
    %v4464 = vld [vmem:[%s4463] ss:$2 sm:$0xff]
    %s4465 = scalar_lea.vmem [#allocation2], 176
    %v4466 = vld [vmem:[%s4465] ss:$2 sm:$0xff]
    %s4467 = scalar_lea.vmem [#allocation2], 192
    %v4468 = vld [vmem:[%s4467] ss:$2 sm:$0xff]
    %s4469 = scalar_lea.vmem [#allocation2], 208
    %v4470 = vld [vmem:[%s4469] ss:$2 sm:$0xff]
    %s4471 = scalar_lea.vmem [#allocation2], 224
    %v4472 = vld [vmem:[%s4471] ss:$2 sm:$0xff]
    %s4473 = scalar_lea.vmem [#allocation2], 240
    %v4474 = vld [vmem:[%s4473] ss:$2 sm:$0xff]
    %s4475 = scalar_lea.vmem [#allocation2], 256
    %v4476 = vld [vmem:[%s4475] ss:$2 sm:$0xff]
    %s4477 = scalar_lea.vmem [#allocation2], 272
    %v4478 = vld [vmem:[%s4477] ss:$2 sm:$0xff]
    %s4479 = scalar_lea.vmem [#allocation2], 288
    %v4480 = vld [vmem:[%s4479] ss:$2 sm:$0xff]
    %s4481 = scalar_lea.vmem [#allocation2], 304
    %v4482 = vld [vmem:[%s4481] ss:$2 sm:$0xff]
    %s4483 = scalar_lea.vmem [#allocation2], 320
    %v4484 = vld [vmem:[%s4483] ss:$2 sm:$0xff]
    %s4485 = scalar_lea.vmem [#allocation2], 336
    %v4486 = vld [vmem:[%s4485] ss:$2 sm:$0xff]
    %s4487 = scalar_lea.vmem [#allocation2], 352
    %v4488 = vld [vmem:[%s4487] ss:$2 sm:$0xff]
    %s4489 = scalar_lea.vmem [#allocation2], 368
    %v4490 = vld [vmem:[%s4489] ss:$2 sm:$0xff]
    %s4491 = scalar_lea.vmem [#allocation2], 384
    %v4492 = vld [vmem:[%s4491] ss:$2 sm:$0xff]
    %s4493 = scalar_lea.vmem [#allocation2], 400
    %v4494 = vld [vmem:[%s4493] ss:$2 sm:$0xff]
    %s4495 = scalar_lea.vmem [#allocation2], 416
    %v4496 = vld [vmem:[%s4495] ss:$2 sm:$0xff]
    %s4497 = scalar_lea.vmem [#allocation2], 432
    %v4498 = vld [vmem:[%s4497] ss:$2 sm:$0xff]
    %s4499 = scalar_lea.vmem [#allocation2], 448
    %v4500 = vld [vmem:[%s4499] ss:$2 sm:$0xff]
    %s4501 = scalar_lea.vmem [#allocation2], 464
    %v4502 = vld [vmem:[%s4501] ss:$2 sm:$0xff]
    %s4503 = scalar_lea.vmem [#allocation2], 480
    %v4504 = vld [vmem:[%s4503] ss:$2 sm:$0xff]
    %s4505 = scalar_lea.vmem [#allocation2], 496
    %v4506 = vld [vmem:[%s4505] ss:$2 sm:$0xff]
    %s4507 = scalar_lea.vmem [#allocation2], 512
    %v4508 = vld [vmem:[%s4507] ss:$2 sm:$0xff]
    %s4509 = scalar_lea.vmem [#allocation2], 528
    %v4510 = vld [vmem:[%s4509] ss:$2 sm:$0xff]
    %s4511 = scalar_lea.vmem [#allocation2], 544
    %v4512 = vld [vmem:[%s4511] ss:$2 sm:$0xff]
    %s4513 = scalar_lea.vmem [#allocation2], 560
    %v4514 = vld [vmem:[%s4513] ss:$2 sm:$0xff]
    %s4515 = scalar_lea.vmem [#allocation2], 576
    %v4516 = vld [vmem:[%s4515] ss:$2 sm:$0xff]
    %s4517 = scalar_lea.vmem [#allocation2], 592
    %v4518 = vld [vmem:[%s4517] ss:$2 sm:$0xff]
    %s4519 = scalar_lea.vmem [#allocation2], 608
    %v4520 = vld [vmem:[%s4519] ss:$2 sm:$0xff]
    %s4521 = scalar_lea.vmem [#allocation2], 624
    %v4522 = vld [vmem:[%s4521] ss:$2 sm:$0xff]
    %s4523 = scalar_lea.vmem [#allocation2], 640
    %v4524 = vld [vmem:[%s4523] ss:$2 sm:$0xff]
    %s4525 = scalar_lea.vmem [#allocation2], 656
    %v4526 = vld [vmem:[%s4525] ss:$2 sm:$0xff]
    %s4527 = scalar_lea.vmem [#allocation2], 672
    %v4528 = vld [vmem:[%s4527] ss:$2 sm:$0xff]
    %s4529 = scalar_lea.vmem [#allocation2], 688
    %v4530 = vld [vmem:[%s4529] ss:$2 sm:$0xff]
    %vm4531 = vcmp.lt.s32.totalorder %v136, 0
    %v4532 = vsub.s32 0, %v136
    %v4533 = vsel %vm4531, %v4532, %v136
    %v4534 = vmul.u32.u64.compose %v4533, 3123612579
    %v4535 = vextract.low.u32 %v4534
    %v4536 = vextract.high.u32 %v4534
    %v4537 = vshrl.u32 %v4536, 5
    %v4538 = vmul.u32 %v4537, 44
    %v4539 = vsub.s32 %v4533, %v4538
    %v4540 = vsub.s32 0, %v4539
    %v4541 = vsel %vm4531, %v4540, %v4539
    %vm4542 = vcmp.lt.s32.totalorder %v137, 0
    %v4543 = vsub.s32 0, %v137
    %v4544 = vsel %vm4542, %v4543, %v137
    %v4545 = vmul.u32.u64.compose %v4544, 3123612579
    %v4546 = vextract.low.u32 %v4545
    %v4547 = vextract.high.u32 %v4545
    %v4548 = vshrl.u32 %v4547, 5
    %v4549 = vmul.u32 %v4548, 44
    %v4550 = vsub.s32 %v4544, %v4549
    %v4551 = vsub.s32 0, %v4550
    %v4552 = vsel %vm4542, %v4551, %v4550
    %vm4553 = vcmp.lt.s32.totalorder %v138, 0
    %v4554 = vsub.s32 0, %v138
    %v4555 = vsel %vm4553, %v4554, %v138
    %v4556 = vmul.u32.u64.compose %v4555, 3123612579
    %v4557 = vextract.low.u32 %v4556
    %v4558 = vextract.high.u32 %v4556
    %v4559 = vshrl.u32 %v4558, 5
    %v4560 = vmul.u32 %v4559, 44
    %v4561 = vsub.s32 %v4555, %v4560
    %v4562 = vsub.s32 0, %v4561
    %v4563 = vsel %vm4553, %v4562, %v4561
    %vm4564 = vcmp.lt.s32.totalorder %v139, 0
    %v4565 = vsub.s32 0, %v139
    %v4566 = vsel %vm4564, %v4565, %v139
    %v4567 = vmul.u32.u64.compose %v4566, 3123612579
    %v4568 = vextract.low.u32 %v4567
    %v4569 = vextract.high.u32 %v4567
    %v4570 = vshrl.u32 %v4569, 5
    %v4571 = vmul.u32 %v4570, 44
    %v4572 = vsub.s32 %v4566, %v4571
    %v4573 = vsub.s32 0, %v4572
    %v4574 = vsel %vm4564, %v4573, %v4572
    %vm4575 = vcmp.lt.s32.totalorder %v140, 0
    %v4576 = vsub.s32 0, %v140
    %v4577 = vsel %vm4575, %v4576, %v140
    %v4578 = vmul.u32.u64.compose %v4577, 3123612579
    %v4579 = vextract.low.u32 %v4578
    %v4580 = vextract.high.u32 %v4578
    %v4581 = vshrl.u32 %v4580, 5
    %v4582 = vmul.u32 %v4581, 44
    %v4583 = vsub.s32 %v4577, %v4582
    %v4584 = vsub.s32 0, %v4583
    %v4585 = vsel %vm4575, %v4584, %v4583
    %vm4586 = vcmp.lt.s32.totalorder %v141, 0
    %v4587 = vsub.s32 0, %v141
    %v4588 = vsel %vm4586, %v4587, %v141
    %v4589 = vmul.u32.u64.compose %v4588, 3123612579
    %v4590 = vextract.low.u32 %v4589
    %v4591 = vextract.high.u32 %v4589
    %v4592 = vshrl.u32 %v4591, 5
    %v4593 = vmul.u32 %v4592, 44
    %v4594 = vsub.s32 %v4588, %v4593
    %v4595 = vsub.s32 0, %v4594
    %v4596 = vsel %vm4586, %v4595, %v4594
    %vm4597 = vcmp.lt.s32.totalorder %v142, 0
    %v4598 = vsub.s32 0, %v142
    %v4599 = vsel %vm4597, %v4598, %v142
    %v4600 = vmul.u32.u64.compose %v4599, 3123612579
    %v4601 = vextract.low.u32 %v4600
    %v4602 = vextract.high.u32 %v4600
    %v4603 = vshrl.u32 %v4602, 5
    %v4604 = vmul.u32 %v4603, 44
    %v4605 = vsub.s32 %v4599, %v4604
    %v4606 = vsub.s32 0, %v4605
    %v4607 = vsel %vm4597, %v4606, %v4605
    %vm4608 = vcmp.lt.s32.totalorder %v143, 0
    %v4609 = vsub.s32 0, %v143
    %v4610 = vsel %vm4608, %v4609, %v143
    %v4611 = vmul.u32.u64.compose %v4610, 3123612579
    %v4612 = vextract.low.u32 %v4611
    %v4613 = vextract.high.u32 %v4611
    %v4614 = vshrl.u32 %v4613, 5
    %v4615 = vmul.u32 %v4614, 44
    %v4616 = vsub.s32 %v4610, %v4615
    %v4617 = vsub.s32 0, %v4616
    %v4618 = vsel %vm4608, %v4617, %v4616
    %vm4619 = vcmp.lt.s32.totalorder %v144, 0
    %v4620 = vsub.s32 0, %v144
    %v4621 = vsel %vm4619, %v4620, %v144
    %v4622 = vmul.u32.u64.compose %v4621, 3123612579
    %v4623 = vextract.low.u32 %v4622
    %v4624 = vextract.high.u32 %v4622
    %v4625 = vshrl.u32 %v4624, 5
    %v4626 = vmul.u32 %v4625, 44
    %v4627 = vsub.s32 %v4621, %v4626
    %v4628 = vsub.s32 0, %v4627
    %v4629 = vsel %vm4619, %v4628, %v4627
    %vm4630 = vcmp.lt.s32.totalorder %v145, 0
    %v4631 = vsub.s32 0, %v145
    %v4632 = vsel %vm4630, %v4631, %v145
    %v4633 = vmul.u32.u64.compose %v4632, 3123612579
    %v4634 = vextract.low.u32 %v4633
    %v4635 = vextract.high.u32 %v4633
    %v4636 = vshrl.u32 %v4635, 5
    %v4637 = vmul.u32 %v4636, 44
    %v4638 = vsub.s32 %v4632, %v4637
    %v4639 = vsub.s32 0, %v4638
    %v4640 = vsel %vm4630, %v4639, %v4638
    %vm4641 = vcmp.lt.s32.totalorder %v146, 0
    %v4642 = vsub.s32 0, %v146
    %v4643 = vsel %vm4641, %v4642, %v146
    %v4644 = vmul.u32.u64.compose %v4643, 3123612579
    %v4645 = vextract.low.u32 %v4644
    %v4646 = vextract.high.u32 %v4644
    %v4647 = vshrl.u32 %v4646, 5
    %v4648 = vmul.u32 %v4647, 44
    %v4649 = vsub.s32 %v4643, %v4648
    %v4650 = vsub.s32 0, %v4649
    %v4651 = vsel %vm4641, %v4650, %v4649
    %vm4652 = vcmp.lt.s32.totalorder %v147, 0
    %v4653 = vsub.s32 0, %v147
    %v4654 = vsel %vm4652, %v4653, %v147
    %v4655 = vmul.u32.u64.compose %v4654, 3123612579
    %v4656 = vextract.low.u32 %v4655
    %v4657 = vextract.high.u32 %v4655
    %v4658 = vshrl.u32 %v4657, 5
    %v4659 = vmul.u32 %v4658, 44
    %v4660 = vsub.s32 %v4654, %v4659
    %v4661 = vsub.s32 0, %v4660
    %v4662 = vsel %vm4652, %v4661, %v4660
    %vm4663 = vcmp.lt.s32.totalorder %v148, 0
    %v4664 = vsub.s32 0, %v148
    %v4665 = vsel %vm4663, %v4664, %v148
    %v4666 = vmul.u32.u64.compose %v4665, 3123612579
    %v4667 = vextract.low.u32 %v4666
    %v4668 = vextract.high.u32 %v4666
    %v4669 = vshrl.u32 %v4668, 5
    %v4670 = vmul.u32 %v4669, 44
    %v4671 = vsub.s32 %v4665, %v4670
    %v4672 = vsub.s32 0, %v4671
    %v4673 = vsel %vm4663, %v4672, %v4671
    %vm4674 = vcmp.lt.s32.totalorder %v149, 0
    %v4675 = vsub.s32 0, %v149
    %v4676 = vsel %vm4674, %v4675, %v149
    %v4677 = vmul.u32.u64.compose %v4676, 3123612579
    %v4678 = vextract.low.u32 %v4677
    %v4679 = vextract.high.u32 %v4677
    %v4680 = vshrl.u32 %v4679, 5
    %v4681 = vmul.u32 %v4680, 44
    %v4682 = vsub.s32 %v4676, %v4681
    %v4683 = vsub.s32 0, %v4682
    %v4684 = vsel %vm4674, %v4683, %v4682
    %vm4685 = vcmp.lt.s32.totalorder %v150, 0
    %v4686 = vsub.s32 0, %v150
    %v4687 = vsel %vm4685, %v4686, %v150
    %v4688 = vmul.u32.u64.compose %v4687, 3123612579
    %v4689 = vextract.low.u32 %v4688
    %v4690 = vextract.high.u32 %v4688
    %v4691 = vshrl.u32 %v4690, 5
    %v4692 = vmul.u32 %v4691, 44
    %v4693 = vsub.s32 %v4687, %v4692
    %v4694 = vsub.s32 0, %v4693
    %v4695 = vsel %vm4685, %v4694, %v4693
    %vm4696 = vcmp.lt.s32.totalorder %v151, 0
    %v4697 = vsub.s32 0, %v151
    %v4698 = vsel %vm4696, %v4697, %v151
    %v4699 = vmul.u32.u64.compose %v4698, 3123612579
    %v4700 = vextract.low.u32 %v4699
    %v4701 = vextract.high.u32 %v4699
    %v4702 = vshrl.u32 %v4701, 5
    %v4703 = vmul.u32 %v4702, 44
    %v4704 = vsub.s32 %v4698, %v4703
    %v4705 = vsub.s32 0, %v4704
    %v4706 = vsel %vm4696, %v4705, %v4704
    %vm4707 = vcmp.lt.s32.totalorder %v152, 0
    %v4708 = vsub.s32 0, %v152
    %v4709 = vsel %vm4707, %v4708, %v152
    %v4710 = vmul.u32.u64.compose %v4709, 3123612579
    %v4711 = vextract.low.u32 %v4710
    %v4712 = vextract.high.u32 %v4710
    %v4713 = vshrl.u32 %v4712, 5
    %v4714 = vmul.u32 %v4713, 44
    %v4715 = vsub.s32 %v4709, %v4714
    %v4716 = vsub.s32 0, %v4715
    %v4717 = vsel %vm4707, %v4716, %v4715
    %vm4718 = vcmp.lt.s32.totalorder %v153, 0
    %v4719 = vsub.s32 0, %v153
    %v4720 = vsel %vm4718, %v4719, %v153
    %v4721 = vmul.u32.u64.compose %v4720, 3123612579
    %v4722 = vextract.low.u32 %v4721
    %v4723 = vextract.high.u32 %v4721
    %v4724 = vshrl.u32 %v4723, 5
    %v4725 = vmul.u32 %v4724, 44
    %v4726 = vsub.s32 %v4720, %v4725
    %v4727 = vsub.s32 0, %v4726
    %v4728 = vsel %vm4718, %v4727, %v4726
    %vm4729 = vcmp.lt.s32.totalorder %v154, 0
    %v4730 = vsub.s32 0, %v154
    %v4731 = vsel %vm4729, %v4730, %v154
    %v4732 = vmul.u32.u64.compose %v4731, 3123612579
    %v4733 = vextract.low.u32 %v4732
    %v4734 = vextract.high.u32 %v4732
    %v4735 = vshrl.u32 %v4734, 5
    %v4736 = vmul.u32 %v4735, 44
    %v4737 = vsub.s32 %v4731, %v4736
    %v4738 = vsub.s32 0, %v4737
    %v4739 = vsel %vm4729, %v4738, %v4737
    %vm4740 = vcmp.lt.s32.totalorder %v155, 0
    %v4741 = vsub.s32 0, %v155
    %v4742 = vsel %vm4740, %v4741, %v155
    %v4743 = vmul.u32.u64.compose %v4742, 3123612579
    %v4744 = vextract.low.u32 %v4743
    %v4745 = vextract.high.u32 %v4743
    %v4746 = vshrl.u32 %v4745, 5
    %v4747 = vmul.u32 %v4746, 44
    %v4748 = vsub.s32 %v4742, %v4747
    %v4749 = vsub.s32 0, %v4748
    %v4750 = vsel %vm4740, %v4749, %v4748
    %vm4751 = vcmp.lt.s32.totalorder %v156, 0
    %v4752 = vsub.s32 0, %v156
    %v4753 = vsel %vm4751, %v4752, %v156
    %v4754 = vmul.u32.u64.compose %v4753, 3123612579
    %v4755 = vextract.low.u32 %v4754
    %v4756 = vextract.high.u32 %v4754
    %v4757 = vshrl.u32 %v4756, 5
    %v4758 = vmul.u32 %v4757, 44
    %v4759 = vsub.s32 %v4753, %v4758
    %v4760 = vsub.s32 0, %v4759
    %v4761 = vsel %vm4751, %v4760, %v4759
    %vm4762 = vcmp.lt.s32.totalorder %v157, 0
    %v4763 = vsub.s32 0, %v157
    %v4764 = vsel %vm4762, %v4763, %v157
    %v4765 = vmul.u32.u64.compose %v4764, 3123612579
    %v4766 = vextract.low.u32 %v4765
    %v4767 = vextract.high.u32 %v4765
    %v4768 = vshrl.u32 %v4767, 5
    %v4769 = vmul.u32 %v4768, 44
    %v4770 = vsub.s32 %v4764, %v4769
    %v4771 = vsub.s32 0, %v4770
    %v4772 = vsel %vm4762, %v4771, %v4770
    %vm4773 = vcmp.lt.s32.totalorder %v158, 0
    %v4774 = vsub.s32 0, %v158
    %v4775 = vsel %vm4773, %v4774, %v158
    %v4776 = vmul.u32.u64.compose %v4775, 3123612579
    %v4777 = vextract.low.u32 %v4776
    %v4778 = vextract.high.u32 %v4776
    %v4779 = vshrl.u32 %v4778, 5
    %v4780 = vmul.u32 %v4779, 44
    %v4781 = vsub.s32 %v4775, %v4780
    %v4782 = vsub.s32 0, %v4781
    %v4783 = vsel %vm4773, %v4782, %v4781
    %vm4784 = vcmp.lt.s32.totalorder %v159, 0
    %v4785 = vsub.s32 0, %v159
    %v4786 = vsel %vm4784, %v4785, %v159
    %v4787 = vmul.u32.u64.compose %v4786, 3123612579
    %v4788 = vextract.low.u32 %v4787
    %v4789 = vextract.high.u32 %v4787
    %v4790 = vshrl.u32 %v4789, 5
    %v4791 = vmul.u32 %v4790, 44
    %v4792 = vsub.s32 %v4786, %v4791
    %v4793 = vsub.s32 0, %v4792
    %v4794 = vsel %vm4784, %v4793, %v4792
    %vm4795 = vcmp.lt.s32.totalorder %v160, 0
    %v4796 = vsub.s32 0, %v160
    %v4797 = vsel %vm4795, %v4796, %v160
    %v4798 = vmul.u32.u64.compose %v4797, 3123612579
    %v4799 = vextract.low.u32 %v4798
    %v4800 = vextract.high.u32 %v4798
    %v4801 = vshrl.u32 %v4800, 5
    %v4802 = vmul.u32 %v4801, 44
    %v4803 = vsub.s32 %v4797, %v4802
    %v4804 = vsub.s32 0, %v4803
    %v4805 = vsel %vm4795, %v4804, %v4803
    %vm4806 = vcmp.lt.s32.totalorder %v161, 0
    %v4807 = vsub.s32 0, %v161
    %v4808 = vsel %vm4806, %v4807, %v161
    %v4809 = vmul.u32.u64.compose %v4808, 3123612579
    %v4810 = vextract.low.u32 %v4809
    %v4811 = vextract.high.u32 %v4809
    %v4812 = vshrl.u32 %v4811, 5
    %v4813 = vmul.u32 %v4812, 44
    %v4814 = vsub.s32 %v4808, %v4813
    %v4815 = vsub.s32 0, %v4814
    %v4816 = vsel %vm4806, %v4815, %v4814
    %vm4817 = vcmp.lt.s32.totalorder %v162, 0
    %v4818 = vsub.s32 0, %v162
    %v4819 = vsel %vm4817, %v4818, %v162
    %v4820 = vmul.u32.u64.compose %v4819, 3123612579
    %v4821 = vextract.low.u32 %v4820
    %v4822 = vextract.high.u32 %v4820
    %v4823 = vshrl.u32 %v4822, 5
    %v4824 = vmul.u32 %v4823, 44
    %v4825 = vsub.s32 %v4819, %v4824
    %v4826 = vsub.s32 0, %v4825
    %v4827 = vsel %vm4817, %v4826, %v4825
    %vm4828 = vcmp.lt.s32.totalorder %v163, 0
    %v4829 = vsub.s32 0, %v163
    %v4830 = vsel %vm4828, %v4829, %v163
    %v4831 = vmul.u32.u64.compose %v4830, 3123612579
    %v4832 = vextract.low.u32 %v4831
    %v4833 = vextract.high.u32 %v4831
    %v4834 = vshrl.u32 %v4833, 5
    %v4835 = vmul.u32 %v4834, 44
    %v4836 = vsub.s32 %v4830, %v4835
    %v4837 = vsub.s32 0, %v4836
    %v4838 = vsel %vm4828, %v4837, %v4836
    %vm4839 = vcmp.lt.s32.totalorder %v164, 0
    %v4840 = vsub.s32 0, %v164
    %v4841 = vsel %vm4839, %v4840, %v164
    %v4842 = vmul.u32.u64.compose %v4841, 3123612579
    %v4843 = vextract.low.u32 %v4842
    %v4844 = vextract.high.u32 %v4842
    %v4845 = vshrl.u32 %v4844, 5
    %v4846 = vmul.u32 %v4845, 44
    %v4847 = vsub.s32 %v4841, %v4846
    %v4848 = vsub.s32 0, %v4847
    %v4849 = vsel %vm4839, %v4848, %v4847
    %vm4850 = vcmp.lt.s32.totalorder %v165, 0
    %v4851 = vsub.s32 0, %v165
    %v4852 = vsel %vm4850, %v4851, %v165
    %v4853 = vmul.u32.u64.compose %v4852, 3123612579
    %v4854 = vextract.low.u32 %v4853
    %v4855 = vextract.high.u32 %v4853
    %v4856 = vshrl.u32 %v4855, 5
    %v4857 = vmul.u32 %v4856, 44
    %v4858 = vsub.s32 %v4852, %v4857
    %v4859 = vsub.s32 0, %v4858
    %v4860 = vsel %vm4850, %v4859, %v4858
    %vm4861 = vcmp.lt.s32.totalorder %v166, 0
    %v4862 = vsub.s32 0, %v166
    %v4863 = vsel %vm4861, %v4862, %v166
    %v4864 = vmul.u32.u64.compose %v4863, 3123612579
    %v4865 = vextract.low.u32 %v4864
    %v4866 = vextract.high.u32 %v4864
    %v4867 = vshrl.u32 %v4866, 5
    %v4868 = vmul.u32 %v4867, 44
    %v4869 = vsub.s32 %v4863, %v4868
    %v4870 = vsub.s32 0, %v4869
    %v4871 = vsel %vm4861, %v4870, %v4869
    %vm4872 = vcmp.lt.s32.totalorder %v167, 0
    %v4873 = vsub.s32 0, %v167
    %v4874 = vsel %vm4872, %v4873, %v167
    %v4875 = vmul.u32.u64.compose %v4874, 3123612579
    %v4876 = vextract.low.u32 %v4875
    %v4877 = vextract.high.u32 %v4875
    %v4878 = vshrl.u32 %v4877, 5
    %v4879 = vmul.u32 %v4878, 44
    %v4880 = vsub.s32 %v4874, %v4879
    %v4881 = vsub.s32 0, %v4880
    %v4882 = vsel %vm4872, %v4881, %v4880
    %vm4883 = vcmp.lt.s32.totalorder %v168, 0
    %v4884 = vsub.s32 0, %v168
    %v4885 = vsel %vm4883, %v4884, %v168
    %v4886 = vmul.u32.u64.compose %v4885, 3123612579
    %v4887 = vextract.low.u32 %v4886
    %v4888 = vextract.high.u32 %v4886
    %v4889 = vshrl.u32 %v4888, 5
    %v4890 = vmul.u32 %v4889, 44
    %v4891 = vsub.s32 %v4885, %v4890
    %v4892 = vsub.s32 0, %v4891
    %v4893 = vsel %vm4883, %v4892, %v4891
    %vm4894 = vcmp.lt.s32.totalorder %v169, 0
    %v4895 = vsub.s32 0, %v169
    %v4896 = vsel %vm4894, %v4895, %v169
    %v4897 = vmul.u32.u64.compose %v4896, 3123612579
    %v4898 = vextract.low.u32 %v4897
    %v4899 = vextract.high.u32 %v4897
    %v4900 = vshrl.u32 %v4899, 5
    %v4901 = vmul.u32 %v4900, 44
    %v4902 = vsub.s32 %v4896, %v4901
    %v4903 = vsub.s32 0, %v4902
    %v4904 = vsel %vm4894, %v4903, %v4902
    %vm4905 = vcmp.lt.s32.totalorder %v170, 0
    %v4906 = vsub.s32 0, %v170
    %v4907 = vsel %vm4905, %v4906, %v170
    %v4908 = vmul.u32.u64.compose %v4907, 3123612579
    %v4909 = vextract.low.u32 %v4908
    %v4910 = vextract.high.u32 %v4908
    %v4911 = vshrl.u32 %v4910, 5
    %v4912 = vmul.u32 %v4911, 44
    %v4913 = vsub.s32 %v4907, %v4912
    %v4914 = vsub.s32 0, %v4913
    %v4915 = vsel %vm4905, %v4914, %v4913
    %vm4916 = vcmp.lt.s32.totalorder %v171, 0
    %v4917 = vsub.s32 0, %v171
    %v4918 = vsel %vm4916, %v4917, %v171
    %v4919 = vmul.u32.u64.compose %v4918, 3123612579
    %v4920 = vextract.low.u32 %v4919
    %v4921 = vextract.high.u32 %v4919
    %v4922 = vshrl.u32 %v4921, 5
    %v4923 = vmul.u32 %v4922, 44
    %v4924 = vsub.s32 %v4918, %v4923
    %v4925 = vsub.s32 0, %v4924
    %v4926 = vsel %vm4916, %v4925, %v4924
    %vm4927 = vcmp.lt.s32.totalorder %v172, 0
    %v4928 = vsub.s32 0, %v172
    %v4929 = vsel %vm4927, %v4928, %v172
    %v4930 = vmul.u32.u64.compose %v4929, 3123612579
    %v4931 = vextract.low.u32 %v4930
    %v4932 = vextract.high.u32 %v4930
    %v4933 = vshrl.u32 %v4932, 5
    %v4934 = vmul.u32 %v4933, 44
    %v4935 = vsub.s32 %v4929, %v4934
    %v4936 = vsub.s32 0, %v4935
    %v4937 = vsel %vm4927, %v4936, %v4935
    %vm4938 = vcmp.lt.s32.totalorder %v173, 0
    %v4939 = vsub.s32 0, %v173
    %v4940 = vsel %vm4938, %v4939, %v173
    %v4941 = vmul.u32.u64.compose %v4940, 3123612579
    %v4942 = vextract.low.u32 %v4941
    %v4943 = vextract.high.u32 %v4941
    %v4944 = vshrl.u32 %v4943, 5
    %v4945 = vmul.u32 %v4944, 44
    %v4946 = vsub.s32 %v4940, %v4945
    %v4947 = vsub.s32 0, %v4946
    %v4948 = vsel %vm4938, %v4947, %v4946
    %vm4949 = vcmp.lt.s32.totalorder %v174, 0
    %v4950 = vsub.s32 0, %v174
    %v4951 = vsel %vm4949, %v4950, %v174
    %v4952 = vmul.u32.u64.compose %v4951, 3123612579
    %v4953 = vextract.low.u32 %v4952
    %v4954 = vextract.high.u32 %v4952
    %v4955 = vshrl.u32 %v4954, 5
    %v4956 = vmul.u32 %v4955, 44
    %v4957 = vsub.s32 %v4951, %v4956
    %v4958 = vsub.s32 0, %v4957
    %v4959 = vsel %vm4949, %v4958, %v4957
    %vm4960 = vcmp.lt.s32.totalorder %v175, 0
    %v4961 = vsub.s32 0, %v175
    %v4962 = vsel %vm4960, %v4961, %v175
    %v4963 = vmul.u32.u64.compose %v4962, 3123612579
    %v4964 = vextract.low.u32 %v4963
    %v4965 = vextract.high.u32 %v4963
    %v4966 = vshrl.u32 %v4965, 5
    %v4967 = vmul.u32 %v4966, 44
    %v4968 = vsub.s32 %v4962, %v4967
    %v4969 = vsub.s32 0, %v4968
    %v4970 = vsel %vm4960, %v4969, %v4968
    %vm4971 = vcmp.lt.s32.totalorder %v176, 0
    %v4972 = vsub.s32 0, %v176
    %v4973 = vsel %vm4971, %v4972, %v176
    %v4974 = vmul.u32.u64.compose %v4973, 3123612579
    %v4975 = vextract.low.u32 %v4974
    %v4976 = vextract.high.u32 %v4974
    %v4977 = vshrl.u32 %v4976, 5
    %v4978 = vmul.u32 %v4977, 44
    %v4979 = vsub.s32 %v4973, %v4978
    %v4980 = vsub.s32 0, %v4979
    %v4981 = vsel %vm4971, %v4980, %v4979
    %vm4982 = vcmp.lt.s32.totalorder %v177, 0
    %v4983 = vsub.s32 0, %v177
    %v4984 = vsel %vm4982, %v4983, %v177
    %v4985 = vmul.u32.u64.compose %v4984, 3123612579
    %v4986 = vextract.low.u32 %v4985
    %v4987 = vextract.high.u32 %v4985
    %v4988 = vshrl.u32 %v4987, 5
    %v4989 = vmul.u32 %v4988, 44
    %v4990 = vsub.s32 %v4984, %v4989
    %v4991 = vsub.s32 0, %v4990
    %v4992 = vsel %vm4982, %v4991, %v4990
    %vm4993 = vcmp.lt.s32.totalorder %v178, 0
    %v4994 = vsub.s32 0, %v178
    %v4995 = vsel %vm4993, %v4994, %v178
    %v4996 = vmul.u32.u64.compose %v4995, 3123612579
    %v4997 = vextract.low.u32 %v4996
    %v4998 = vextract.high.u32 %v4996
    %v4999 = vshrl.u32 %v4998, 5
    %v5000 = vmul.u32 %v4999, 44
    %v5001 = vsub.s32 %v4995, %v5000
    %v5002 = vsub.s32 0, %v5001
    %v5003 = vsel %vm4993, %v5002, %v5001
    %vm5004 = vcmp.lt.s32.totalorder %v179, 0
    %v5005 = vsub.s32 0, %v179
    %v5006 = vsel %vm5004, %v5005, %v179
    %v5007 = vmul.u32.u64.compose %v5006, 3123612579
    %v5008 = vextract.low.u32 %v5007
    %v5009 = vextract.high.u32 %v5007
    %v5010 = vshrl.u32 %v5009, 5
    %v5011 = vmul.u32 %v5010, 44
    %v5012 = vsub.s32 %v5006, %v5011
    %v5013 = vsub.s32 0, %v5012
    %v5014 = vsel %vm5004, %v5013, %v5012
    %vm5015 = vcmp.ne.s32.totalorder %v4541, 0
    %vm5016 = vcmp.ne.s32.totalorder %v4552, 0
    %vm5017 = vcmp.ne.s32.totalorder %v4563, 0
    %vm5018 = vcmp.ne.s32.totalorder %v4574, 0
    %vm5019 = vcmp.ne.s32.totalorder %v4585, 0
    %vm5020 = vcmp.ne.s32.totalorder %v4596, 0
    %vm5021 = vcmp.ne.s32.totalorder %v4607, 0
    %vm5022 = vcmp.ne.s32.totalorder %v4618, 0
    %vm5023 = vcmp.ne.s32.totalorder %v4629, 0
    %vm5024 = vcmp.ne.s32.totalorder %v4640, 0
    %vm5025 = vcmp.ne.s32.totalorder %v4651, 0
    %vm5026 = vcmp.ne.s32.totalorder %v4662, 0
    %vm5027 = vcmp.ne.s32.totalorder %v4673, 0
    %vm5028 = vcmp.ne.s32.totalorder %v4684, 0
    %vm5029 = vcmp.ne.s32.totalorder %v4695, 0
    %vm5030 = vcmp.ne.s32.totalorder %v4706, 0
    %vm5031 = vcmp.ne.s32.totalorder %v4717, 0
    %vm5032 = vcmp.ne.s32.totalorder %v4728, 0
    %vm5033 = vcmp.ne.s32.totalorder %v4739, 0
    %vm5034 = vcmp.ne.s32.totalorder %v4750, 0
    %vm5035 = vcmp.ne.s32.totalorder %v4761, 0
    %vm5036 = vcmp.ne.s32.totalorder %v4772, 0
    %vm5037 = vcmp.ne.s32.totalorder %v4783, 0
    %vm5038 = vcmp.ne.s32.totalorder %v4794, 0
    %vm5039 = vcmp.ne.s32.totalorder %v4805, 0
    %vm5040 = vcmp.ne.s32.totalorder %v4816, 0
    %vm5041 = vcmp.ne.s32.totalorder %v4827, 0
    %vm5042 = vcmp.ne.s32.totalorder %v4838, 0
    %vm5043 = vcmp.ne.s32.totalorder %v4849, 0
    %vm5044 = vcmp.ne.s32.totalorder %v4860, 0
    %vm5045 = vcmp.ne.s32.totalorder %v4871, 0
    %vm5046 = vcmp.ne.s32.totalorder %v4882, 0
    %vm5047 = vcmp.ne.s32.totalorder %v4893, 0
    %vm5048 = vcmp.ne.s32.totalorder %v4904, 0
    %vm5049 = vcmp.ne.s32.totalorder %v4915, 0
    %vm5050 = vcmp.ne.s32.totalorder %v4926, 0
    %vm5051 = vcmp.ne.s32.totalorder %v4937, 0
    %vm5052 = vcmp.ne.s32.totalorder %v4948, 0
    %vm5053 = vcmp.ne.s32.totalorder %v4959, 0
    %vm5054 = vcmp.ne.s32.totalorder %v4970, 0
    %vm5055 = vcmp.ne.s32.totalorder %v4981, 0
    %vm5056 = vcmp.ne.s32.totalorder %v4992, 0
    %vm5057 = vcmp.ne.s32.totalorder %v5003, 0
    %vm5058 = vcmp.ne.s32.totalorder %v5014, 0
    %vm5059 = vcmp.lt.s32.totalorder %v4541, 0
    %vm5060 = vcmp.lt.s32.totalorder %v4552, 0
    %vm5061 = vcmp.lt.s32.totalorder %v4563, 0
    %vm5062 = vcmp.lt.s32.totalorder %v4574, 0
    %vm5063 = vcmp.lt.s32.totalorder %v4585, 0
    %vm5064 = vcmp.lt.s32.totalorder %v4596, 0
    %vm5065 = vcmp.lt.s32.totalorder %v4607, 0
    %vm5066 = vcmp.lt.s32.totalorder %v4618, 0
    %vm5067 = vcmp.lt.s32.totalorder %v4629, 0
    %vm5068 = vcmp.lt.s32.totalorder %v4640, 0
    %vm5069 = vcmp.lt.s32.totalorder %v4651, 0
    %vm5070 = vcmp.lt.s32.totalorder %v4662, 0
    %vm5071 = vcmp.lt.s32.totalorder %v4673, 0
    %vm5072 = vcmp.lt.s32.totalorder %v4684, 0
    %vm5073 = vcmp.lt.s32.totalorder %v4695, 0
    %vm5074 = vcmp.lt.s32.totalorder %v4706, 0
    %vm5075 = vcmp.lt.s32.totalorder %v4717, 0
    %vm5076 = vcmp.lt.s32.totalorder %v4728, 0
    %vm5077 = vcmp.lt.s32.totalorder %v4739, 0
    %vm5078 = vcmp.lt.s32.totalorder %v4750, 0
    %vm5079 = vcmp.lt.s32.totalorder %v4761, 0
    %vm5080 = vcmp.lt.s32.totalorder %v4772, 0
    %vm5081 = vcmp.lt.s32.totalorder %v4783, 0
    %vm5082 = vcmp.lt.s32.totalorder %v4794, 0
    %vm5083 = vcmp.lt.s32.totalorder %v4805, 0
    %vm5084 = vcmp.lt.s32.totalorder %v4816, 0
    %vm5085 = vcmp.lt.s32.totalorder %v4827, 0
    %vm5086 = vcmp.lt.s32.totalorder %v4838, 0
    %vm5087 = vcmp.lt.s32.totalorder %v4849, 0
    %vm5088 = vcmp.lt.s32.totalorder %v4860, 0
    %vm5089 = vcmp.lt.s32.totalorder %v4871, 0
    %vm5090 = vcmp.lt.s32.totalorder %v4882, 0
    %vm5091 = vcmp.lt.s32.totalorder %v4893, 0
    %vm5092 = vcmp.lt.s32.totalorder %v4904, 0
    %vm5093 = vcmp.lt.s32.totalorder %v4915, 0
    %vm5094 = vcmp.lt.s32.totalorder %v4926, 0
    %vm5095 = vcmp.lt.s32.totalorder %v4937, 0
    %vm5096 = vcmp.lt.s32.totalorder %v4948, 0
    %vm5097 = vcmp.lt.s32.totalorder %v4959, 0
    %vm5098 = vcmp.lt.s32.totalorder %v4970, 0
    %vm5099 = vcmp.lt.s32.totalorder %v4981, 0
    %vm5100 = vcmp.lt.s32.totalorder %v4992, 0
    %vm5101 = vcmp.lt.s32.totalorder %v5003, 0
    %vm5102 = vcmp.lt.s32.totalorder %v5014, 0
    %vm5103 = vmand %vm5059, %vm5015
    %vm5104 = vmand %vm5060, %vm5016
    %vm5105 = vmand %vm5061, %vm5017
    %vm5106 = vmand %vm5062, %vm5018
    %vm5107 = vmand %vm5063, %vm5019
    %vm5108 = vmand %vm5064, %vm5020
    %vm5109 = vmand %vm5065, %vm5021
    %vm5110 = vmand %vm5066, %vm5022
    %vm5111 = vmand %vm5067, %vm5023
    %vm5112 = vmand %vm5068, %vm5024
    %vm5113 = vmand %vm5069, %vm5025
    %vm5114 = vmand %vm5070, %vm5026
    %vm5115 = vmand %vm5071, %vm5027
    %vm5116 = vmand %vm5072, %vm5028
    %vm5117 = vmand %vm5073, %vm5029
    %vm5118 = vmand %vm5074, %vm5030
    %vm5119 = vmand %vm5075, %vm5031
    %vm5120 = vmand %vm5076, %vm5032
    %vm5121 = vmand %vm5077, %vm5033
    %vm5122 = vmand %vm5078, %vm5034
    %vm5123 = vmand %vm5079, %vm5035
    %vm5124 = vmand %vm5080, %vm5036
    %vm5125 = vmand %vm5081, %vm5037
    %vm5126 = vmand %vm5082, %vm5038
    %vm5127 = vmand %vm5083, %vm5039
    %vm5128 = vmand %vm5084, %vm5040
    %vm5129 = vmand %vm5085, %vm5041
    %vm5130 = vmand %vm5086, %vm5042
    %vm5131 = vmand %vm5087, %vm5043
    %vm5132 = vmand %vm5088, %vm5044
    %vm5133 = vmand %vm5089, %vm5045
    %vm5134 = vmand %vm5090, %vm5046
    %vm5135 = vmand %vm5091, %vm5047
    %vm5136 = vmand %vm5092, %vm5048
    %vm5137 = vmand %vm5093, %vm5049
    %vm5138 = vmand %vm5094, %vm5050
    %vm5139 = vmand %vm5095, %vm5051
    %vm5140 = vmand %vm5096, %vm5052
    %vm5141 = vmand %vm5097, %vm5053
    %vm5142 = vmand %vm5098, %vm5054
    %vm5143 = vmand %vm5099, %vm5055
    %vm5144 = vmand %vm5100, %vm5056
    %vm5145 = vmand %vm5101, %vm5057
    %vm5146 = vmand %vm5102, %vm5058
    %v5147 = vadd.s32 %v4541, 44
    %v5148 = vadd.s32 %v4552, 44
    %v5149 = vadd.s32 %v4563, 44
    %v5150 = vadd.s32 %v4574, 44
    %v5151 = vadd.s32 %v4585, 44
    %v5152 = vadd.s32 %v4596, 44
    %v5153 = vadd.s32 %v4607, 44
    %v5154 = vadd.s32 %v4618, 44
    %v5155 = vadd.s32 %v4629, 44
    %v5156 = vadd.s32 %v4640, 44
    %v5157 = vadd.s32 %v4651, 44
    %v5158 = vadd.s32 %v4662, 44
    %v5159 = vadd.s32 %v4673, 44
    %v5160 = vadd.s32 %v4684, 44
    %v5161 = vadd.s32 %v4695, 44
    %v5162 = vadd.s32 %v4706, 44
    %v5163 = vadd.s32 %v4717, 44
    %v5164 = vadd.s32 %v4728, 44
    %v5165 = vadd.s32 %v4739, 44
    %v5166 = vadd.s32 %v4750, 44
    %v5167 = vadd.s32 %v4761, 44
    %v5168 = vadd.s32 %v4772, 44
    %v5169 = vadd.s32 %v4783, 44
    %v5170 = vadd.s32 %v4794, 44
    %v5171 = vadd.s32 %v4805, 44
    %v5172 = vadd.s32 %v4816, 44
    %v5173 = vadd.s32 %v4827, 44
    %v5174 = vadd.s32 %v4838, 44
    %v5175 = vadd.s32 %v4849, 44
    %v5176 = vadd.s32 %v4860, 44
    %v5177 = vadd.s32 %v4871, 44
    %v5178 = vadd.s32 %v4882, 44
    %v5179 = vadd.s32 %v4893, 44
    %v5180 = vadd.s32 %v4904, 44
    %v5181 = vadd.s32 %v4915, 44
    %v5182 = vadd.s32 %v4926, 44
    %v5183 = vadd.s32 %v4937, 44
    %v5184 = vadd.s32 %v4948, 44
    %v5185 = vadd.s32 %v4959, 44
    %v5186 = vadd.s32 %v4970, 44
    %v5187 = vadd.s32 %v4981, 44
    %v5188 = vadd.s32 %v4992, 44
    %v5189 = vadd.s32 %v5003, 44
    %v5190 = vadd.s32 %v5014, 44
    %v5191 = vsel %vm5103, %v5147, %v4541
    %v5192 = vsel %vm5104, %v5148, %v4552
    %v5193 = vsel %vm5105, %v5149, %v4563
    %v5194 = vsel %vm5106, %v5150, %v4574
    %v5195 = vsel %vm5107, %v5151, %v4585
    %v5196 = vsel %vm5108, %v5152, %v4596
    %v5197 = vsel %vm5109, %v5153, %v4607
    %v5198 = vsel %vm5110, %v5154, %v4618
    %v5199 = vsel %vm5111, %v5155, %v4629
    %v5200 = vsel %vm5112, %v5156, %v4640
    %v5201 = vsel %vm5113, %v5157, %v4651
    %v5202 = vsel %vm5114, %v5158, %v4662
    %v5203 = vsel %vm5115, %v5159, %v4673
    %v5204 = vsel %vm5116, %v5160, %v4684
    %v5205 = vsel %vm5117, %v5161, %v4695
    %v5206 = vsel %vm5118, %v5162, %v4706
    %v5207 = vsel %vm5119, %v5163, %v4717
    %v5208 = vsel %vm5120, %v5164, %v4728
    %v5209 = vsel %vm5121, %v5165, %v4739
    %v5210 = vsel %vm5122, %v5166, %v4750
    %v5211 = vsel %vm5123, %v5167, %v4761
    %v5212 = vsel %vm5124, %v5168, %v4772
    %v5213 = vsel %vm5125, %v5169, %v4783
    %v5214 = vsel %vm5126, %v5170, %v4794
    %v5215 = vsel %vm5127, %v5171, %v4805
    %v5216 = vsel %vm5128, %v5172, %v4816
    %v5217 = vsel %vm5129, %v5173, %v4827
    %v5218 = vsel %vm5130, %v5174, %v4838
    %v5219 = vsel %vm5131, %v5175, %v4849
    %v5220 = vsel %vm5132, %v5176, %v4860
    %v5221 = vsel %vm5133, %v5177, %v4871
    %v5222 = vsel %vm5134, %v5178, %v4882
    %v5223 = vsel %vm5135, %v5179, %v4893
    %v5224 = vsel %vm5136, %v5180, %v4904
    %v5225 = vsel %vm5137, %v5181, %v4915
    %v5226 = vsel %vm5138, %v5182, %v4926
    %v5227 = vsel %vm5139, %v5183, %v4937
    %v5228 = vsel %vm5140, %v5184, %v4948
    %v5229 = vsel %vm5141, %v5185, %v4959
    %v5230 = vsel %vm5142, %v5186, %v4970
    %v5231 = vsel %vm5143, %v5187, %v4981
    %v5232 = vsel %vm5144, %v5188, %v4992
    %v5233 = vsel %vm5145, %v5189, %v5003
    %v5234 = vsel %vm5146, %v5190, %v5014
    %vm5235 = vcmp.eq.s32.totalorder %v5191, 0
    %vm5236 = vcmp.eq.s32.totalorder %v5192, 0
    %vm5237 = vcmp.eq.s32.totalorder %v5193, 0
    %vm5238 = vcmp.eq.s32.totalorder %v5194, 0
    %vm5239 = vcmp.eq.s32.totalorder %v5195, 0
    %vm5240 = vcmp.eq.s32.totalorder %v5196, 0
    %vm5241 = vcmp.eq.s32.totalorder %v5197, 0
    %vm5242 = vcmp.eq.s32.totalorder %v5198, 0
    %vm5243 = vcmp.eq.s32.totalorder %v5199, 0
    %vm5244 = vcmp.eq.s32.totalorder %v5200, 0
    %vm5245 = vcmp.eq.s32.totalorder %v5201, 0
    %vm5246 = vcmp.eq.s32.totalorder %v5202, 0
    %vm5247 = vcmp.eq.s32.totalorder %v5203, 0
    %vm5248 = vcmp.eq.s32.totalorder %v5204, 0
    %vm5249 = vcmp.eq.s32.totalorder %v5205, 0
    %vm5250 = vcmp.eq.s32.totalorder %v5206, 0
    %vm5251 = vcmp.eq.s32.totalorder %v5207, 0
    %vm5252 = vcmp.eq.s32.totalorder %v5208, 0
    %vm5253 = vcmp.eq.s32.totalorder %v5209, 0
    %vm5254 = vcmp.eq.s32.totalorder %v5210, 0
    %vm5255 = vcmp.eq.s32.totalorder %v5211, 0
    %vm5256 = vcmp.eq.s32.totalorder %v5212, 0
    %vm5257 = vcmp.eq.s32.totalorder %v5213, 0
    %vm5258 = vcmp.eq.s32.totalorder %v5214, 0
    %vm5259 = vcmp.eq.s32.totalorder %v5215, 0
    %vm5260 = vcmp.eq.s32.totalorder %v5216, 0
    %vm5261 = vcmp.eq.s32.totalorder %v5217, 0
    %vm5262 = vcmp.eq.s32.totalorder %v5218, 0
    %vm5263 = vcmp.eq.s32.totalorder %v5219, 0
    %vm5264 = vcmp.eq.s32.totalorder %v5220, 0
    %vm5265 = vcmp.eq.s32.totalorder %v5221, 0
    %vm5266 = vcmp.eq.s32.totalorder %v5222, 0
    %vm5267 = vcmp.eq.s32.totalorder %v5223, 0
    %vm5268 = vcmp.eq.s32.totalorder %v5224, 0
    %vm5269 = vcmp.eq.s32.totalorder %v5225, 0
    %vm5270 = vcmp.eq.s32.totalorder %v5226, 0
    %vm5271 = vcmp.eq.s32.totalorder %v5227, 0
    %vm5272 = vcmp.eq.s32.totalorder %v5228, 0
    %vm5273 = vcmp.eq.s32.totalorder %v5229, 0
    %vm5274 = vcmp.eq.s32.totalorder %v5230, 0
    %vm5275 = vcmp.eq.s32.totalorder %v5231, 0
    %vm5276 = vcmp.eq.s32.totalorder %v5232, 0
    %vm5277 = vcmp.eq.s32.totalorder %v5233, 0
    %vm5278 = vcmp.eq.s32.totalorder %v5234, 0
    %v5279 = vrot.slane %v4444, 7
    %v5280 = vrot.slane %v4446, 7
    %v5281 = vrot.slane %v4448, 7
    %v5282 = vrot.slane %v4450, 7
    %v5283 = vrot.slane %v4452, 7
    %v5284 = vrot.slane %v4454, 7
    %v5285 = vrot.slane %v4456, 7
    %v5286 = vrot.slane %v4458, 7
    %v5287 = vrot.slane %v4460, 7
    %v5288 = vrot.slane %v4462, 7
    %v5289 = vrot.slane %v4464, 7
    %v5290 = vrot.slane %v4466, 7
    %v5291 = vrot.slane %v4468, 7
    %v5292 = vrot.slane %v4470, 7
    %v5293 = vrot.slane %v4472, 7
    %v5294 = vrot.slane %v4474, 7
    %v5295 = vrot.slane %v4476, 7
    %v5296 = vrot.slane %v4478, 7
    %v5297 = vrot.slane %v4480, 7
    %v5298 = vrot.slane %v4482, 7
    %v5299 = vrot.slane %v4484, 7
    %v5300 = vrot.slane %v4486, 7
    %v5301 = vrot.slane %v4488, 7
    %v5302 = vrot.slane %v4490, 7
    %v5303 = vrot.slane %v4492, 7
    %v5304 = vrot.slane %v4494, 7
    %v5305 = vrot.slane %v4496, 7
    %v5306 = vrot.slane %v4498, 7
    %v5307 = vrot.slane %v4500, 7
    %v5308 = vrot.slane %v4502, 7
    %v5309 = vrot.slane %v4504, 7
    %v5310 = vrot.slane %v4506, 7
    %v5311 = vrot.slane %v4508, 7
    %v5312 = vrot.slane %v4510, 7
    %v5313 = vrot.slane %v4512, 7
    %v5314 = vrot.slane %v4514, 7
    %v5315 = vrot.slane %v4516, 7
    %v5316 = vrot.slane %v4518, 7
    %v5317 = vrot.slane %v4520, 7
    %v5318 = vrot.slane %v4522, 7
    %v5319 = vrot.slane %v4524, 7
    %v5320 = vrot.slane %v4526, 7
    %v5321 = vrot.slane %v4528, 7
    %v5322 = vrot.slane %v4530, 7
    %v5323 = vsel %vm1808, %v5321, %v5322
    %v5324 = vsel %vm1808, %v5320, %v5321
    %v5325 = vsel %vm1808, %v5319, %v5320
    %v5326 = vsel %vm1808, %v5318, %v5319
    %v5327 = vsel %vm1808, %v5317, %v5318
    %v5328 = vsel %vm1808, %v5316, %v5317
    %v5329 = vsel %vm1808, %v5315, %v5316
    %v5330 = vsel %vm1808, %v5314, %v5315
    %v5331 = vsel %vm1808, %v5313, %v5314
    %v5332 = vsel %vm1808, %v5312, %v5313
    %v5333 = vsel %vm1808, %v5311, %v5312
    %v5334 = vsel %vm1808, %v5310, %v5311
    %v5335 = vsel %vm1808, %v5309, %v5310
    %v5336 = vsel %vm1808, %v5308, %v5309
    %v5337 = vsel %vm1808, %v5307, %v5308
    %v5338 = vsel %vm1808, %v5306, %v5307
    %v5339 = vsel %vm1808, %v5305, %v5306
    %v5340 = vsel %vm1808, %v5304, %v5305
    %v5341 = vsel %vm1808, %v5303, %v5304
    %v5342 = vsel %vm1808, %v5302, %v5303
    %v5343 = vsel %vm1808, %v5301, %v5302
    %v5344 = vsel %vm1808, %v5300, %v5301
    %v5345 = vsel %vm1808, %v5299, %v5300
    %v5346 = vsel %vm1808, %v5298, %v5299
    %v5347 = vsel %vm1808, %v5297, %v5298
    %v5348 = vsel %vm1808, %v5296, %v5297
    %v5349 = vsel %vm1808, %v5295, %v5296
    %v5350 = vsel %vm1808, %v5294, %v5295
    %v5351 = vsel %vm1808, %v5293, %v5294
    %v5352 = vsel %vm1808, %v5292, %v5293
    %v5353 = vsel %vm1808, %v5291, %v5292
    %v5354 = vsel %vm1808, %v5290, %v5291
    %v5355 = vsel %vm1808, %v5289, %v5290
    %v5356 = vsel %vm1808, %v5288, %v5289
    %v5357 = vsel %vm1808, %v5287, %v5288
    %v5358 = vsel %vm1808, %v5286, %v5287
    %v5359 = vsel %vm1808, %v5285, %v5286
    %v5360 = vsel %vm1808, %v5284, %v5285
    %v5361 = vsel %vm1808, %v5283, %v5284
    %v5362 = vsel %vm1808, %v5282, %v5283
    %v5363 = vsel %vm1808, %v5281, %v5282
    %v5364 = vsel %vm1808, %v5280, %v5281
    %v5365 = vsel %vm1808, %v5279, %v5280
    %v5366 = vsel %vm1808, %v5322, %v5279
    %v5367 = vsel %vm5235, 0.0, %v5366
    %v5368 = vsel %vm5236, 0.0, %v5365
    %v5369 = vsel %vm5237, 0.0, %v5364
    %v5370 = vsel %vm5238, 0.0, %v5363
    %v5371 = vsel %vm5239, 0.0, %v5362
    %v5372 = vsel %vm5240, 0.0, %v5361
    %v5373 = vsel %vm5241, 0.0, %v5360
    %v5374 = vsel %vm5242, 0.0, %v5359
    %v5375 = vsel %vm5243, 0.0, %v5358
    %v5376 = vsel %vm5244, 0.0, %v5357
    %v5377 = vsel %vm5245, 0.0, %v5356
    %v5378 = vsel %vm5246, 0.0, %v5355
    %v5379 = vsel %vm5247, 0.0, %v5354
    %v5380 = vsel %vm5248, 0.0, %v5353
    %v5381 = vsel %vm5249, 0.0, %v5352
    %v5382 = vsel %vm5250, 0.0, %v5351
    %v5383 = vsel %vm5251, 0.0, %v5350
    %v5384 = vsel %vm5252, 0.0, %v5349
    %v5385 = vsel %vm5253, 0.0, %v5348
    %v5386 = vsel %vm5254, 0.0, %v5347
    %v5387 = vsel %vm5255, 0.0, %v5346
    %v5388 = vsel %vm5256, 0.0, %v5345
    %v5389 = vsel %vm5257, 0.0, %v5344
    %v5390 = vsel %vm5258, 0.0, %v5343
    %v5391 = vsel %vm5259, 0.0, %v5342
    %v5392 = vsel %vm5260, 0.0, %v5341
    %v5393 = vsel %vm5261, 0.0, %v5340
    %v5394 = vsel %vm5262, 0.0, %v5339
    %v5395 = vsel %vm5263, 0.0, %v5338
    %v5396 = vsel %vm5264, 0.0, %v5337
    %v5397 = vsel %vm5265, 0.0, %v5336
    %v5398 = vsel %vm5266, 0.0, %v5335
    %v5399 = vsel %vm5267, 0.0, %v5334
    %v5400 = vsel %vm5268, 0.0, %v5333
    %v5401 = vsel %vm5269, 0.0, %v5332
    %v5402 = vsel %vm5270, 0.0, %v5331
    %v5403 = vsel %vm5271, 0.0, %v5330
    %v5404 = vsel %vm5272, 0.0, %v5329
    %v5405 = vsel %vm5273, 0.0, %v5328
    %v5406 = vsel %vm5274, 0.0, %v5327
    %v5407 = vsel %vm5275, 0.0, %v5326
    %v5408 = vsel %vm5276, 0.0, %v5325
    %v5409 = vsel %vm5277, 0.0, %v5324
    %v5410 = vsel %vm5278, 0.0, %v5323
    %vm5411 = vcmp.eq.s32.totalorder %v5191, 43
    %vm5412 = vcmp.eq.s32.totalorder %v5192, 43
    %vm5413 = vcmp.eq.s32.totalorder %v5193, 43
    %vm5414 = vcmp.eq.s32.totalorder %v5194, 43
    %vm5415 = vcmp.eq.s32.totalorder %v5195, 43
    %vm5416 = vcmp.eq.s32.totalorder %v5196, 43
    %vm5417 = vcmp.eq.s32.totalorder %v5197, 43
    %vm5418 = vcmp.eq.s32.totalorder %v5198, 43
    %vm5419 = vcmp.eq.s32.totalorder %v5199, 43
    %vm5420 = vcmp.eq.s32.totalorder %v5200, 43
    %vm5421 = vcmp.eq.s32.totalorder %v5201, 43
    %vm5422 = vcmp.eq.s32.totalorder %v5202, 43
    %vm5423 = vcmp.eq.s32.totalorder %v5203, 43
    %vm5424 = vcmp.eq.s32.totalorder %v5204, 43
    %vm5425 = vcmp.eq.s32.totalorder %v5205, 43
    %vm5426 = vcmp.eq.s32.totalorder %v5206, 43
    %vm5427 = vcmp.eq.s32.totalorder %v5207, 43
    %vm5428 = vcmp.eq.s32.totalorder %v5208, 43
    %vm5429 = vcmp.eq.s32.totalorder %v5209, 43
    %vm5430 = vcmp.eq.s32.totalorder %v5210, 43
    %vm5431 = vcmp.eq.s32.totalorder %v5211, 43
    %vm5432 = vcmp.eq.s32.totalorder %v5212, 43
    %vm5433 = vcmp.eq.s32.totalorder %v5213, 43
    %vm5434 = vcmp.eq.s32.totalorder %v5214, 43
    %vm5435 = vcmp.eq.s32.totalorder %v5215, 43
    %vm5436 = vcmp.eq.s32.totalorder %v5216, 43
    %vm5437 = vcmp.eq.s32.totalorder %v5217, 43
    %vm5438 = vcmp.eq.s32.totalorder %v5218, 43
    %vm5439 = vcmp.eq.s32.totalorder %v5219, 43
    %vm5440 = vcmp.eq.s32.totalorder %v5220, 43
    %vm5441 = vcmp.eq.s32.totalorder %v5221, 43
    %vm5442 = vcmp.eq.s32.totalorder %v5222, 43
    %vm5443 = vcmp.eq.s32.totalorder %v5223, 43
    %vm5444 = vcmp.eq.s32.totalorder %v5224, 43
    %vm5445 = vcmp.eq.s32.totalorder %v5225, 43
    %vm5446 = vcmp.eq.s32.totalorder %v5226, 43
    %vm5447 = vcmp.eq.s32.totalorder %v5227, 43
    %vm5448 = vcmp.eq.s32.totalorder %v5228, 43
    %vm5449 = vcmp.eq.s32.totalorder %v5229, 43
    %vm5450 = vcmp.eq.s32.totalorder %v5230, 43
    %vm5451 = vcmp.eq.s32.totalorder %v5231, 43
    %vm5452 = vcmp.eq.s32.totalorder %v5232, 43
    %vm5453 = vcmp.eq.s32.totalorder %v5233, 43
    %vm5454 = vcmp.eq.s32.totalorder %v5234, 43
    %v5455 = vrot.slane %v4444, 1
    %v5456 = vrot.slane %v4446, 1
    %v5457 = vrot.slane %v4448, 1
    %v5458 = vrot.slane %v4450, 1
    %v5459 = vrot.slane %v4452, 1
    %v5460 = vrot.slane %v4454, 1
    %v5461 = vrot.slane %v4456, 1
    %v5462 = vrot.slane %v4458, 1
    %v5463 = vrot.slane %v4460, 1
    %v5464 = vrot.slane %v4462, 1
    %v5465 = vrot.slane %v4464, 1
    %v5466 = vrot.slane %v4466, 1
    %v5467 = vrot.slane %v4468, 1
    %v5468 = vrot.slane %v4470, 1
    %v5469 = vrot.slane %v4472, 1
    %v5470 = vrot.slane %v4474, 1
    %v5471 = vrot.slane %v4476, 1
    %v5472 = vrot.slane %v4478, 1
    %v5473 = vrot.slane %v4480, 1
    %v5474 = vrot.slane %v4482, 1
    %v5475 = vrot.slane %v4484, 1
    %v5476 = vrot.slane %v4486, 1
    %v5477 = vrot.slane %v4488, 1
    %v5478 = vrot.slane %v4490, 1
    %v5479 = vrot.slane %v4492, 1
    %v5480 = vrot.slane %v4494, 1
    %v5481 = vrot.slane %v4496, 1
    %v5482 = vrot.slane %v4498, 1
    %v5483 = vrot.slane %v4500, 1
    %v5484 = vrot.slane %v4502, 1
    %v5485 = vrot.slane %v4504, 1
    %v5486 = vrot.slane %v4506, 1
    %v5487 = vrot.slane %v4508, 1
    %v5488 = vrot.slane %v4510, 1
    %v5489 = vrot.slane %v4512, 1
    %v5490 = vrot.slane %v4514, 1
    %v5491 = vrot.slane %v4516, 1
    %v5492 = vrot.slane %v4518, 1
    %v5493 = vrot.slane %v4520, 1
    %v5494 = vrot.slane %v4522, 1
    %v5495 = vrot.slane %v4524, 1
    %v5496 = vrot.slane %v4526, 1
    %v5497 = vrot.slane %v4528, 1
    %v5498 = vrot.slane %v4530, 1
    %v5499 = vsel %vm2161, %v5497, %v5498
    %v5500 = vsel %vm2161, %v5496, %v5497
    %v5501 = vsel %vm2161, %v5495, %v5496
    %v5502 = vsel %vm2161, %v5494, %v5495
    %v5503 = vsel %vm2161, %v5493, %v5494
    %v5504 = vsel %vm2161, %v5492, %v5493
    %v5505 = vsel %vm2161, %v5491, %v5492
    %v5506 = vsel %vm2161, %v5490, %v5491
    %v5507 = vsel %vm2161, %v5489, %v5490
    %v5508 = vsel %vm2161, %v5488, %v5489
    %v5509 = vsel %vm2161, %v5487, %v5488
    %v5510 = vsel %vm2161, %v5486, %v5487
    %v5511 = vsel %vm2161, %v5485, %v5486
    %v5512 = vsel %vm2161, %v5484, %v5485
    %v5513 = vsel %vm2161, %v5483, %v5484
    %v5514 = vsel %vm2161, %v5482, %v5483
    %v5515 = vsel %vm2161, %v5481, %v5482
    %v5516 = vsel %vm2161, %v5480, %v5481
    %v5517 = vsel %vm2161, %v5479, %v5480
    %v5518 = vsel %vm2161, %v5478, %v5479
    %v5519 = vsel %vm2161, %v5477, %v5478
    %v5520 = vsel %vm2161, %v5476, %v5477
    %v5521 = vsel %vm2161, %v5475, %v5476
    %v5522 = vsel %vm2161, %v5474, %v5475
    %v5523 = vsel %vm2161, %v5473, %v5474
    %v5524 = vsel %vm2161, %v5472, %v5473
    %v5525 = vsel %vm2161, %v5471, %v5472
    %v5526 = vsel %vm2161, %v5470, %v5471
    %v5527 = vsel %vm2161, %v5469, %v5470
    %v5528 = vsel %vm2161, %v5468, %v5469
    %v5529 = vsel %vm2161, %v5467, %v5468
    %v5530 = vsel %vm2161, %v5466, %v5467
    %v5531 = vsel %vm2161, %v5465, %v5466
    %v5532 = vsel %vm2161, %v5464, %v5465
    %v5533 = vsel %vm2161, %v5463, %v5464
    %v5534 = vsel %vm2161, %v5462, %v5463
    %v5535 = vsel %vm2161, %v5461, %v5462
    %v5536 = vsel %vm2161, %v5460, %v5461
    %v5537 = vsel %vm2161, %v5459, %v5460
    %v5538 = vsel %vm2161, %v5458, %v5459
    %v5539 = vsel %vm2161, %v5457, %v5458
    %v5540 = vsel %vm2161, %v5456, %v5457
    %v5541 = vsel %vm2161, %v5455, %v5456
    %v5542 = vsel %vm2161, %v5498, %v5455
    %v5543 = vsel %vm5411, 0.0, %v5541
    %v5544 = vsel %vm5412, 0.0, %v5540
    %v5545 = vsel %vm5413, 0.0, %v5539
    %v5546 = vsel %vm5414, 0.0, %v5538
    %v5547 = vsel %vm5415, 0.0, %v5537
    %v5548 = vsel %vm5416, 0.0, %v5536
    %v5549 = vsel %vm5417, 0.0, %v5535
    %v5550 = vsel %vm5418, 0.0, %v5534
    %v5551 = vsel %vm5419, 0.0, %v5533
    %v5552 = vsel %vm5420, 0.0, %v5532
    %v5553 = vsel %vm5421, 0.0, %v5531
    %v5554 = vsel %vm5422, 0.0, %v5530
    %v5555 = vsel %vm5423, 0.0, %v5529
    %v5556 = vsel %vm5424, 0.0, %v5528
    %v5557 = vsel %vm5425, 0.0, %v5527
    %v5558 = vsel %vm5426, 0.0, %v5526
    %v5559 = vsel %vm5427, 0.0, %v5525
    %v5560 = vsel %vm5428, 0.0, %v5524
    %v5561 = vsel %vm5429, 0.0, %v5523
    %v5562 = vsel %vm5430, 0.0, %v5522
    %v5563 = vsel %vm5431, 0.0, %v5521
    %v5564 = vsel %vm5432, 0.0, %v5520
    %v5565 = vsel %vm5433, 0.0, %v5519
    %v5566 = vsel %vm5434, 0.0, %v5518
    %v5567 = vsel %vm5435, 0.0, %v5517
    %v5568 = vsel %vm5436, 0.0, %v5516
    %v5569 = vsel %vm5437, 0.0, %v5515
    %v5570 = vsel %vm5438, 0.0, %v5514
    %v5571 = vsel %vm5439, 0.0, %v5513
    %v5572 = vsel %vm5440, 0.0, %v5512
    %v5573 = vsel %vm5441, 0.0, %v5511
    %v5574 = vsel %vm5442, 0.0, %v5510
    %v5575 = vsel %vm5443, 0.0, %v5509
    %v5576 = vsel %vm5444, 0.0, %v5508
    %v5577 = vsel %vm5445, 0.0, %v5507
    %v5578 = vsel %vm5446, 0.0, %v5506
    %v5579 = vsel %vm5447, 0.0, %v5505
    %v5580 = vsel %vm5448, 0.0, %v5504
    %v5581 = vsel %vm5449, 0.0, %v5503
    %v5582 = vsel %vm5450, 0.0, %v5502
    %v5583 = vsel %vm5451, 0.0, %v5501
    %v5584 = vsel %vm5452, 0.0, %v5500
    %v5585 = vsel %vm5453, 0.0, %v5499
    %v5586 = vsel %vm5454, 0.0, %v5542
    %5631 = vrot.lane.b32.xlu0 %v4444, 16
    %v5632 = vpop.permute.xlu0 %5631
    %5633 = vrot.lane.b32.xlu0 %v4446, 16
    %v5634 = vpop.permute.xlu0 %5633
    %5635 = vrot.lane.b32.xlu0 %v4448, 16
    %v5636 = vpop.permute.xlu0 %5635
    %5637 = vrot.lane.b32.xlu0 %v4450, 16
    %v5638 = vpop.permute.xlu0 %5637
    %5639 = vrot.lane.b32.xlu0 %v4452, 16
    %v5640 = vpop.permute.xlu0 %5639
    %5641 = vrot.lane.b32.xlu0 %v4454, 16
    %v5642 = vpop.permute.xlu0 %5641
    %5643 = vrot.lane.b32.xlu0 %v4456, 16
    %v5644 = vpop.permute.xlu0 %5643
    %5645 = vrot.lane.b32.xlu0 %v4458, 16
    %v5646 = vpop.permute.xlu0 %5645
    %5647 = vrot.lane.b32.xlu0 %v4460, 16
    %v5648 = vpop.permute.xlu0 %5647
    %5649 = vrot.lane.b32.xlu0 %v4462, 16
    %v5650 = vpop.permute.xlu0 %5649
    %5651 = vrot.lane.b32.xlu0 %v4464, 16
    %v5652 = vpop.permute.xlu0 %5651
    %5653 = vrot.lane.b32.xlu0 %v4466, 16
    %v5654 = vpop.permute.xlu0 %5653
    %5655 = vrot.lane.b32.xlu0 %v4468, 16
    %v5656 = vpop.permute.xlu0 %5655
    %5657 = vrot.lane.b32.xlu0 %v4470, 16
    %v5658 = vpop.permute.xlu0 %5657
    %5659 = vrot.lane.b32.xlu0 %v4472, 16
    %v5660 = vpop.permute.xlu0 %5659
    %5661 = vrot.lane.b32.xlu0 %v4474, 16
    %v5662 = vpop.permute.xlu0 %5661
    %5663 = vrot.lane.b32.xlu0 %v4476, 16
    %v5664 = vpop.permute.xlu0 %5663
    %5665 = vrot.lane.b32.xlu0 %v4478, 16
    %v5666 = vpop.permute.xlu0 %5665
    %5667 = vrot.lane.b32.xlu0 %v4480, 16
    %v5668 = vpop.permute.xlu0 %5667
    %5669 = vrot.lane.b32.xlu0 %v4482, 16
    %v5670 = vpop.permute.xlu0 %5669
    %5671 = vrot.lane.b32.xlu0 %v4484, 16
    %v5672 = vpop.permute.xlu0 %5671
    %5673 = vrot.lane.b32.xlu0 %v4486, 16
    %v5674 = vpop.permute.xlu0 %5673
    %5675 = vrot.lane.b32.xlu0 %v4488, 16
    %v5676 = vpop.permute.xlu0 %5675
    %5677 = vrot.lane.b32.xlu0 %v4490, 16
    %v5678 = vpop.permute.xlu0 %5677
    %5679 = vrot.lane.b32.xlu0 %v4492, 16
    %v5680 = vpop.permute.xlu0 %5679
    %5681 = vrot.lane.b32.xlu0 %v4494, 16
    %v5682 = vpop.permute.xlu0 %5681
    %5683 = vrot.lane.b32.xlu0 %v4496, 16
    %v5684 = vpop.permute.xlu0 %5683
    %5685 = vrot.lane.b32.xlu0 %v4498, 16
    %v5686 = vpop.permute.xlu0 %5685
    %5687 = vrot.lane.b32.xlu0 %v4500, 16
    %v5688 = vpop.permute.xlu0 %5687
    %5689 = vrot.lane.b32.xlu0 %v4502, 16
    %v5690 = vpop.permute.xlu0 %5689
    %5691 = vrot.lane.b32.xlu0 %v4504, 16
    %v5692 = vpop.permute.xlu0 %5691
    %5693 = vrot.lane.b32.xlu0 %v4506, 16
    %v5694 = vpop.permute.xlu0 %5693
    %5695 = vrot.lane.b32.xlu0 %v4508, 16
    %v5696 = vpop.permute.xlu0 %5695
    %5697 = vrot.lane.b32.xlu0 %v4510, 16
    %v5698 = vpop.permute.xlu0 %5697
    %5699 = vrot.lane.b32.xlu0 %v4512, 16
    %v5700 = vpop.permute.xlu0 %5699
    %5701 = vrot.lane.b32.xlu0 %v4514, 16
    %v5702 = vpop.permute.xlu0 %5701
    %5703 = vrot.lane.b32.xlu0 %v4516, 16
    %v5704 = vpop.permute.xlu0 %5703
    %5705 = vrot.lane.b32.xlu0 %v4518, 16
    %v5706 = vpop.permute.xlu0 %5705
    %5707 = vrot.lane.b32.xlu0 %v4520, 16
    %v5708 = vpop.permute.xlu0 %5707
    %5709 = vrot.lane.b32.xlu0 %v4522, 16
    %v5710 = vpop.permute.xlu0 %5709
    %5711 = vrot.lane.b32.xlu0 %v4524, 16
    %v5712 = vpop.permute.xlu0 %5711
    %5713 = vrot.lane.b32.xlu0 %v4526, 16
    %v5714 = vpop.permute.xlu0 %5713
    %5715 = vrot.lane.b32.xlu0 %v4528, 16
    %v5716 = vpop.permute.xlu0 %5715
    %5717 = vrot.lane.b32.xlu0 %v4530, 16
    %v5718 = vpop.permute.xlu0 %5717
    %5807 = vrot.lane.b32.xlu0 %v5543, 32
    %v5808 = vpop.permute.xlu0 %5807
    %5809 = vrot.lane.b32.xlu0 %v5544, 32
    %v5810 = vpop.permute.xlu0 %5809
    %5811 = vrot.lane.b32.xlu0 %v5545, 32
    %v5812 = vpop.permute.xlu0 %5811
    %5813 = vrot.lane.b32.xlu0 %v5546, 32
    %v5814 = vpop.permute.xlu0 %5813
    %5815 = vrot.lane.b32.xlu0 %v5547, 32
    %v5816 = vpop.permute.xlu0 %5815
    %5817 = vrot.lane.b32.xlu0 %v5548, 32
    %v5818 = vpop.permute.xlu0 %5817
    %5819 = vrot.lane.b32.xlu0 %v5549, 32
    %v5820 = vpop.permute.xlu0 %5819
    %5821 = vrot.lane.b32.xlu0 %v5550, 32
    %v5822 = vpop.permute.xlu0 %5821
    %5823 = vrot.lane.b32.xlu0 %v5551, 32
    %v5824 = vpop.permute.xlu0 %5823
    %5825 = vrot.lane.b32.xlu0 %v5552, 32
    %v5826 = vpop.permute.xlu0 %5825
    %5827 = vrot.lane.b32.xlu0 %v5553, 32
    %v5828 = vpop.permute.xlu0 %5827
    %5829 = vrot.lane.b32.xlu0 %v5554, 32
    %v5830 = vpop.permute.xlu0 %5829
    %5831 = vrot.lane.b32.xlu0 %v5555, 32
    %v5832 = vpop.permute.xlu0 %5831
    %5833 = vrot.lane.b32.xlu0 %v5556, 32
    %v5834 = vpop.permute.xlu0 %5833
    %5835 = vrot.lane.b32.xlu0 %v5557, 32
    %v5836 = vpop.permute.xlu0 %5835
    %5837 = vrot.lane.b32.xlu0 %v5558, 32
    %v5838 = vpop.permute.xlu0 %5837
    %5839 = vrot.lane.b32.xlu0 %v5559, 32
    %v5840 = vpop.permute.xlu0 %5839
    %5841 = vrot.lane.b32.xlu0 %v5560, 32
    %v5842 = vpop.permute.xlu0 %5841
    %5843 = vrot.lane.b32.xlu0 %v5561, 32
    %v5844 = vpop.permute.xlu0 %5843
    %5845 = vrot.lane.b32.xlu0 %v5562, 32
    %v5846 = vpop.permute.xlu0 %5845
    %5847 = vrot.lane.b32.xlu0 %v5563, 32
    %v5848 = vpop.permute.xlu0 %5847
    %5849 = vrot.lane.b32.xlu0 %v5564, 32
    %v5850 = vpop.permute.xlu0 %5849
    %5851 = vrot.lane.b32.xlu0 %v5565, 32
    %v5852 = vpop.permute.xlu0 %5851
    %5853 = vrot.lane.b32.xlu0 %v5566, 32
    %v5854 = vpop.permute.xlu0 %5853
    %5855 = vrot.lane.b32.xlu0 %v5567, 32
    %v5856 = vpop.permute.xlu0 %5855
    %5857 = vrot.lane.b32.xlu0 %v5568, 32
    %v5858 = vpop.permute.xlu0 %5857
    %5859 = vrot.lane.b32.xlu0 %v5569, 32
    %v5860 = vpop.permute.xlu0 %5859
    %5861 = vrot.lane.b32.xlu0 %v5570, 32
    %v5862 = vpop.permute.xlu0 %5861
    %5863 = vrot.lane.b32.xlu0 %v5571, 32
    %v5864 = vpop.permute.xlu0 %5863
    %5865 = vrot.lane.b32.xlu0 %v5572, 32
    %v5866 = vpop.permute.xlu0 %5865
    %5867 = vrot.lane.b32.xlu0 %v5573, 32
    %v5868 = vpop.permute.xlu0 %5867
    %5869 = vrot.lane.b32.xlu0 %v5574, 32
    %v5870 = vpop.permute.xlu0 %5869
    %5871 = vrot.lane.b32.xlu0 %v5575, 32
    %v5872 = vpop.permute.xlu0 %5871
    %5873 = vrot.lane.b32.xlu0 %v5576, 32
    %v5874 = vpop.permute.xlu0 %5873
    %5875 = vrot.lane.b32.xlu0 %v5577, 32
    %v5876 = vpop.permute.xlu0 %5875
    %5877 = vrot.lane.b32.xlu0 %v5578, 32
    %v5878 = vpop.permute.xlu0 %5877
    %5879 = vrot.lane.b32.xlu0 %v5579, 32
    %v5880 = vpop.permute.xlu0 %5879
    %5881 = vrot.lane.b32.xlu0 %v5580, 32
    %v5882 = vpop.permute.xlu0 %5881
    %5883 = vrot.lane.b32.xlu0 %v5581, 32
    %v5884 = vpop.permute.xlu0 %5883
    %5885 = vrot.lane.b32.xlu0 %v5582, 32
    %v5886 = vpop.permute.xlu0 %5885
    %5887 = vrot.lane.b32.xlu0 %v5583, 32
    %v5888 = vpop.permute.xlu0 %5887
    %5889 = vrot.lane.b32.xlu0 %v5584, 32
    %v5890 = vpop.permute.xlu0 %5889
    %5891 = vrot.lane.b32.xlu0 %v5585, 32
    %v5892 = vpop.permute.xlu0 %5891
    %5893 = vrot.lane.b32.xlu0 %v5586, 32
    %v5894 = vpop.permute.xlu0 %5893
    %v5939 = vsel %vm4355, %v5367, %v5632
    %v5940 = vsel %vm4355, %v5368, %v5634
    %v5941 = vsel %vm4355, %v5369, %v5636
    %v5942 = vsel %vm4355, %v5370, %v5638
    %v5943 = vsel %vm4355, %v5371, %v5640
    %v5944 = vsel %vm4355, %v5372, %v5642
    %v5945 = vsel %vm4355, %v5373, %v5644
    %v5946 = vsel %vm4355, %v5374, %v5646
    %v5947 = vsel %vm4355, %v5375, %v5648
    %v5948 = vsel %vm4355, %v5376, %v5650
    %v5949 = vsel %vm4355, %v5377, %v5652
    %v5950 = vsel %vm4355, %v5378, %v5654
    %v5951 = vsel %vm4355, %v5379, %v5656
    %v5952 = vsel %vm4355, %v5380, %v5658
    %v5953 = vsel %vm4355, %v5381, %v5660
    %v5954 = vsel %vm4355, %v5382, %v5662
    %v5955 = vsel %vm4355, %v5383, %v5664
    %v5956 = vsel %vm4355, %v5384, %v5666
    %v5957 = vsel %vm4355, %v5385, %v5668
    %v5958 = vsel %vm4355, %v5386, %v5670
    %v5959 = vsel %vm4355, %v5387, %v5672
    %v5960 = vsel %vm4355, %v5388, %v5674
    %v5961 = vsel %vm4355, %v5389, %v5676
    %v5962 = vsel %vm4355, %v5390, %v5678
    %v5963 = vsel %vm4355, %v5391, %v5680
    %v5964 = vsel %vm4355, %v5392, %v5682
    %v5965 = vsel %vm4355, %v5393, %v5684
    %v5966 = vsel %vm4355, %v5394, %v5686
    %v5967 = vsel %vm4355, %v5395, %v5688
    %v5968 = vsel %vm4355, %v5396, %v5690
    %v5969 = vsel %vm4355, %v5397, %v5692
    %v5970 = vsel %vm4355, %v5398, %v5694
    %v5971 = vsel %vm4355, %v5399, %v5696
    %v5972 = vsel %vm4355, %v5400, %v5698
    %v5973 = vsel %vm4355, %v5401, %v5700
    %v5974 = vsel %vm4355, %v5402, %v5702
    %v5975 = vsel %vm4355, %v5403, %v5704
    %v5976 = vsel %vm4355, %v5404, %v5706
    %v5977 = vsel %vm4355, %v5405, %v5708
    %v5978 = vsel %vm4355, %v5406, %v5710
    %v5979 = vsel %vm4355, %v5407, %v5712
    %v5980 = vsel %vm4355, %v5408, %v5714
    %v5981 = vsel %vm4355, %v5409, %v5716
    %v5982 = vsel %vm4355, %v5410, %v5718
    %vm5983 = vcmask 261120
    %v5984 = vsel %vm5983, %v5939, %v5808
    %v5985 = vsel %vm5983, %v5940, %v5810
    %v5986 = vsel %vm5983, %v5941, %v5812
    %v5987 = vsel %vm5983, %v5942, %v5814
    %v5988 = vsel %vm5983, %v5943, %v5816
    %v5989 = vsel %vm5983, %v5944, %v5818
    %v5990 = vsel %vm5983, %v5945, %v5820
    %v5991 = vsel %vm5983, %v5946, %v5822
    %v5992 = vsel %vm5983, %v5947, %v5824
    %v5993 = vsel %vm5983, %v5948, %v5826
    %v5994 = vsel %vm5983, %v5949, %v5828
    %v5995 = vsel %vm5983, %v5950, %v5830
    %v5996 = vsel %vm5983, %v5951, %v5832
    %v5997 = vsel %vm5983, %v5952, %v5834
    %v5998 = vsel %vm5983, %v5953, %v5836
    %v5999 = vsel %vm5983, %v5954, %v5838
    %v6000 = vsel %vm5983, %v5955, %v5840
    %v6001 = vsel %vm5983, %v5956, %v5842
    %v6002 = vsel %vm5983, %v5957, %v5844
    %v6003 = vsel %vm5983, %v5958, %v5846
    %v6004 = vsel %vm5983, %v5959, %v5848
    %v6005 = vsel %vm5983, %v5960, %v5850
    %v6006 = vsel %vm5983, %v5961, %v5852
    %v6007 = vsel %vm5983, %v5962, %v5854
    %v6008 = vsel %vm5983, %v5963, %v5856
    %v6009 = vsel %vm5983, %v5964, %v5858
    %v6010 = vsel %vm5983, %v5965, %v5860
    %v6011 = vsel %vm5983, %v5966, %v5862
    %v6012 = vsel %vm5983, %v5967, %v5864
    %v6013 = vsel %vm5983, %v5968, %v5866
    %v6014 = vsel %vm5983, %v5969, %v5868
    %v6015 = vsel %vm5983, %v5970, %v5870
    %v6016 = vsel %vm5983, %v5971, %v5872
    %v6017 = vsel %vm5983, %v5972, %v5874
    %v6018 = vsel %vm5983, %v5973, %v5876
    %v6019 = vsel %vm5983, %v5974, %v5878
    %v6020 = vsel %vm5983, %v5975, %v5880
    %v6021 = vsel %vm5983, %v5976, %v5882
    %v6022 = vsel %vm5983, %v5977, %v5884
    %v6023 = vsel %vm5983, %v5978, %v5886
    %v6024 = vsel %vm5983, %v5979, %v5888
    %v6025 = vsel %vm5983, %v5980, %v5890
    %v6026 = vsel %vm5983, %v5981, %v5892
    %v6027 = vsel %vm5983, %v5982, %v5894
    %v6028 = vld [vmem:[%s3] sm:$0xff]
    %v6029 = vld [vmem:[%s3 + $0x8] sm:$0xff]
    %v6030 = vld [vmem:[%s3 + $0x10] sm:$0xff]
    %v6031 = vld [vmem:[%s3 + $0x18] sm:$0xff]
    %v6032 = vld [vmem:[%s3 + $0x20] sm:$0xff]
    %v6033 = vld [vmem:[%s3 + $0x28] sm:$0xff]
    %v6034 = vld [vmem:[%s4] sm:$0x1]
    %v6036 = vlaneseq
    %v6037 = vshrl.u32 %v6036, 7
    %v6038 = vsub.s32 0, %v6037
    %v6039 = vrot.slane %v6034, %v6038
    %vm6041 = vcmask 392192
    %v6043 = vsel %vm6041, %v5984, 0
    %v6046 = vsel %vm6041, %v5985, 0
    %v6049 = vsel %vm6041, %v5986, 0
    %v6052 = vsel %vm6041, %v5987, 0
    %v6055 = vsel %vm6041, %v5988, 0
    %v6058 = vsel %vm6041, %v5989, 0
    %v6061 = vsel %vm6041, %v5990, 0
    %v6064 = vsel %vm6041, %v5991, 0
    %v6067 = vsel %vm6041, %v5992, 0
    %v6070 = vsel %vm6041, %v5993, 0
    %v6073 = vsel %vm6041, %v5994, 0
    %v6076 = vsel %vm6041, %v5995, 0
    %v6079 = vsel %vm6041, %v5996, 0
    %v6082 = vsel %vm6041, %v5997, 0
    %v6085 = vsel %vm6041, %v5998, 0
    %v6088 = vsel %vm6041, %v5999, 0
    %v6091 = vsel %vm6041, %v6000, 0
    %v6094 = vsel %vm6041, %v6001, 0
    %v6097 = vsel %vm6041, %v6002, 0
    %v6100 = vsel %vm6041, %v6003, 0
    %v6103 = vsel %vm6041, %v6004, 0
    %v6106 = vsel %vm6041, %v6005, 0
    %v6109 = vsel %vm6041, %v6006, 0
    %v6112 = vsel %vm6041, %v6007, 0
    %v6115 = vsel %vm6041, %v6008, 0
    %v6118 = vsel %vm6041, %v6009, 0
    %v6121 = vsel %vm6041, %v6010, 0
    %v6124 = vsel %vm6041, %v6011, 0
    %v6127 = vsel %vm6041, %v6012, 0
    %v6130 = vsel %vm6041, %v6013, 0
    %v6133 = vsel %vm6041, %v6014, 0
    %v6136 = vsel %vm6041, %v6015, 0
    %v6139 = vsel %vm6041, %v6016, 0
    %v6142 = vsel %vm6041, %v6017, 0
    %v6145 = vsel %vm6041, %v6018, 0
    %v6148 = vsel %vm6041, %v6019, 0
    %v6151 = vsel %vm6041, %v6020, 0
    %v6154 = vsel %vm6041, %v6021, 0
    %v6157 = vsel %vm6041, %v6022, 0
    %v6160 = vsel %vm6041, %v6023, 0
    %v6163 = vsel %vm6041, %v6024, 0
    %v6166 = vsel %vm6041, %v6025, 0
    %v6169 = vsel %vm6041, %v6026, 0
    %v6172 = vsel %vm6041, %v6027, 0
    %6174 = vmatprep.subr.mxu0 0.0
    %6175 = vmatpush1.msra.mxu0 %v6028
    %6176 = vmatprep.subr.mxu0 0.0
    %6177 = vmatpush1.msra.mxu0 %v6029
    %6178 = vmatprep.subr.mxu0 0.0
    %6179 = vmatpush1.msra.mxu0 %v6030
    %6180 = vmatprep.subr.mxu0 0.0
    %6181 = vmatpush1.msra.mxu0 %v6031
    %6182 = vmatprep.subr.mxu0 0.0
    %6183 = vmatpush1.msra.mxu0 %v6032
    %6184 = vmatprep.subr.mxu0 0.0
    %6185 = vmatpush1.msra.mxu0 %v6033
    %6186 = vmatprep.subr.mxu0 0.0
    %6187 = vmatpush1.msra.mxu0 0.0
    %6188 = vmatprep.subr.mxu0 0.0
    %6189 = vmatpush1.msra.mxu0 0.0
    %6190 = vmatprep.subr.mxu0 0.0
    %6191 = vmatpush1.msra.mxu0 0.0
    %6192 = vmatprep.subr.mxu0 0.0
    %6193 = vmatpush1.msra.mxu0 0.0
    %6194 = vmatprep.subr.mxu0 0.0
    %6195 = vmatpush1.msra.mxu0 0.0
    %6196 = vmatprep.subr.mxu0 0.0
    %6197 = vmatpush1.msra.mxu0 0.0
    %6198 = vmatprep.subr.mxu0 0.0
    %6199 = vmatpush1.msra.mxu0 0.0
    %6200 = vmatprep.subr.mxu0 0.0
    %6201 = vmatpush1.msra.mxu0 0.0
    %6202 = vmatprep.subr.mxu0 0.0
    %6203 = vmatpush1.msra.mxu0 0.0
    %6204 = vmatprep.subr.mxu0 0.0
    %6205 = vmatpush1.msra.mxu0 0.0
    %6206 = vmatprep.subr.mxu0 0.0
    %6207 = vmatpush1.msra.mxu0 0.0
    %6208 = vmatprep.subr.mxu0 0.0
    %6209 = vmatpush1.msra.mxu0 0.0
    %6210 = vmatprep.subr.mxu0 0.0
    %6211 = vmatpush1.msra.mxu0 0.0
    %6212 = vmatprep.subr.mxu0 0.0
    %6213 = vmatpush1.msra.mxu0 0.0
    %6214 = vmatprep.subr.mxu0 0.0
    %6215 = vmatpush1.msra.mxu0 0.0
    %6216 = vmatprep.subr.mxu0 0.0
    %6217 = vmatpush1.msra.mxu0 0.0
    %6218 = vmatprep.subr.mxu0 0.0
    %6219 = vmatpush1.msra.mxu0 0.0
    %6220 = vmatprep.subr.mxu0 0.0
    %6221 = vmatpush1.msra.mxu0 0.0
    %6222 = vmatprep.subr.mxu0 0.0
    %6223 = vmatpush1.msra.mxu0 0.0
    %6224 = vmatprep.subr.mxu0 0.0
    %6225 = vmatpush1.msra.mxu0 0.0
    %6226 = vmatprep.subr.mxu0 0.0
    %6227 = vmatpush1.msra.mxu0 0.0
    %6228 = vmatprep.subr.mxu0 0.0
    %6229 = vmatpush1.msra.mxu0 0.0
    %6230 = vmatprep.subr.mxu0 0.0
    %6231 = vmatpush1.msra.mxu0 0.0
    %6232 = vmatprep.subr.mxu0 0.0
    %6233 = vmatpush1.msra.mxu0 0.0
    %6234 = vmatprep.subr.mxu0 0.0
    %6235 = vmatpush1.msra.mxu0 0.0
    %6236 = vmatprep.subr.mxu0 0.0
    %6237 = vmatpush1.msra.mxu0 0.0
    %6238 = vmatprep.mubr.f32.mxu0 0.0
    %6239 = vmatmul.mubr.f32.gmra.mrb[0].mxu0 %v6043
    %v6240 = vpop.f32.mrb[0].mxu0
    %v6241 = vadd.f32 %v6039, %v6240
    %v6242 = vpop.f32.mrb[0].mxu0
    %6243 = vmatprep.mubr.f32.mxu0 0.0
    %6244 = vmatmul.mubr.f32.gmra.mrb[0].mxu0 %v6046
    %v6245 = vpop.f32.mrb[0].mxu0
    %v6246 = vadd.f32 %v6039, %v6245
    %v6247 = vpop.f32.mrb[0].mxu0
    %6248 = vmatprep.mubr.f32.mxu0 0.0
    %6249 = vmatmul.mubr.f32.gmra.mrb[0].mxu0 %v6049
    %v6250 = vpop.f32.mrb[0].mxu0
    %v6251 = vadd.f32 %v6039, %v6250
    %v6252 = vpop.f32.mrb[0].mxu0
    %6253 = vmatprep.mubr.f32.mxu0 0.0
    %6254 = vmatmul.mubr.f32.gmra.mrb[0].mxu0 %v6052
    %v6255 = vpop.f32.mrb[0].mxu0
    %v6256 = vadd.f32 %v6039, %v6255
    %v6257 = vpop.f32.mrb[0].mxu0
    %6258 = vmatprep.mubr.f32.mxu0 0.0
    %6259 = vmatmul.mubr.f32.gmra.mrb[0].mxu0 %v6055
    %v6260 = vpop.f32.mrb[0].mxu0
    %v6261 = vadd.f32 %v6039, %v6260
    %v6262 = vpop.f32.mrb[0].mxu0
    %6263 = vmatprep.mubr.f32.mxu0 0.0
    %6264 = vmatmul.mubr.f32.gmra.mrb[0].mxu0 %v6058
    %v6265 = vpop.f32.mrb[0].mxu0
    %v6266 = vadd.f32 %v6039, %v6265
    %v6267 = vpop.f32.mrb[0].mxu0
    %6268 = vmatprep.mubr.f32.mxu0 0.0
    %6269 = vmatmul.mubr.f32.gmra.mrb[0].mxu0 %v6061
    %v6270 = vpop.f32.mrb[0].mxu0
    %v6271 = vadd.f32 %v6039, %v6270
    %v6272 = vpop.f32.mrb[0].mxu0
    %6273 = vmatprep.mubr.f32.mxu0 0.0
    %6274 = vmatmul.mubr.f32.gmra.mrb[0].mxu0 %v6064
    %v6275 = vpop.f32.mrb[0].mxu0
    %v6276 = vadd.f32 %v6039, %v6275
    %v6277 = vpop.f32.mrb[0].mxu0
    %6278 = vmatprep.mubr.f32.mxu0 0.0
    %6279 = vmatmul.mubr.f32.gmra.mrb[0].mxu0 %v6067
    %v6280 = vpop.f32.mrb[0].mxu0
    %v6281 = vadd.f32 %v6039, %v6280
    %v6282 = vpop.f32.mrb[0].mxu0
    %6283 = vmatprep.mubr.f32.mxu0 0.0
    %6284 = vmatmul.mubr.f32.gmra.mrb[0].mxu0 %v6070
    %v6285 = vpop.f32.mrb[0].mxu0
    %v6286 = vadd.f32 %v6039, %v6285
    %v6287 = vpop.f32.mrb[0].mxu0
    %6288 = vmatprep.mubr.f32.mxu0 0.0
    %6289 = vmatmul.mubr.f32.gmra.mrb[0].mxu0 %v6073
    %v6290 = vpop.f32.mrb[0].mxu0
    %v6291 = vadd.f32 %v6039, %v6290
    %v6292 = vpop.f32.mrb[0].mxu0
    %6293 = vmatprep.mubr.f32.mxu0 0.0
    %6294 = vmatmul.mubr.f32.gmra.mrb[0].mxu0 %v6076
    %v6295 = vpop.f32.mrb[0].mxu0
    %v6296 = vadd.f32 %v6039, %v6295
    %v6297 = vpop.f32.mrb[0].mxu0
    %6298 = vmatprep.mubr.f32.mxu0 0.0
    %6299 = vmatmul.mubr.f32.gmra.mrb[0].mxu0 %v6079
    %v6300 = vpop.f32.mrb[0].mxu0
    %v6301 = vadd.f32 %v6039, %v6300
    %v6302 = vpop.f32.mrb[0].mxu0
    %6303 = vmatprep.mubr.f32.mxu0 0.0
    %6304 = vmatmul.mubr.f32.gmra.mrb[0].mxu0 %v6082
    %v6305 = vpop.f32.mrb[0].mxu0
    %v6306 = vadd.f32 %v6039, %v6305
    %v6307 = vpop.f32.mrb[0].mxu0
    %6308 = vmatprep.mubr.f32.mxu0 0.0
    %6309 = vmatmul.mubr.f32.gmra.mrb[0].mxu0 %v6085
    %v6310 = vpop.f32.mrb[0].mxu0
    %v6311 = vadd.f32 %v6039, %v6310
    %v6312 = vpop.f32.mrb[0].mxu0
    %6313 = vmatprep.mubr.f32.mxu0 0.0
    %6314 = vmatmul.mubr.f32.gmra.mrb[0].mxu0 %v6088
    %v6315 = vpop.f32.mrb[0].mxu0
    %v6316 = vadd.f32 %v6039, %v6315
    %v6317 = vpop.f32.mrb[0].mxu0
    %6318 = vmatprep.mubr.f32.mxu0 0.0
    %6319 = vmatmul.mubr.f32.gmra.mrb[0].mxu0 %v6091
    %v6320 = vpop.f32.mrb[0].mxu0
    %v6321 = vadd.f32 %v6039, %v6320
    %v6322 = vpop.f32.mrb[0].mxu0
    %6323 = vmatprep.mubr.f32.mxu0 0.0
    %6324 = vmatmul.mubr.f32.gmra.mrb[0].mxu0 %v6094
    %v6325 = vpop.f32.mrb[0].mxu0
    %v6326 = vadd.f32 %v6039, %v6325
    %v6327 = vpop.f32.mrb[0].mxu0
    %6328 = vmatprep.mubr.f32.mxu0 0.0
    %6329 = vmatmul.mubr.f32.gmra.mrb[0].mxu0 %v6097
    %v6330 = vpop.f32.mrb[0].mxu0
    %v6331 = vadd.f32 %v6039, %v6330
    %v6332 = vpop.f32.mrb[0].mxu0
    %6333 = vmatprep.mubr.f32.mxu0 0.0
    %6334 = vmatmul.mubr.f32.gmra.mrb[0].mxu0 %v6100
    %v6335 = vpop.f32.mrb[0].mxu0
    %v6336 = vadd.f32 %v6039, %v6335
    %v6337 = vpop.f32.mrb[0].mxu0
    %6338 = vmatprep.mubr.f32.mxu0 0.0
    %6339 = vmatmul.mubr.f32.gmra.mrb[0].mxu0 %v6103
    %v6340 = vpop.f32.mrb[0].mxu0
    %v6341 = vadd.f32 %v6039, %v6340
    %v6342 = vpop.f32.mrb[0].mxu0
    %6343 = vmatprep.mubr.f32.mxu0 0.0
    %6344 = vmatmul.mubr.f32.gmra.mrb[0].mxu0 %v6106
    %v6345 = vpop.f32.mrb[0].mxu0
    %v6346 = vadd.f32 %v6039, %v6345
    %v6347 = vpop.f32.mrb[0].mxu0
    %6348 = vmatprep.mubr.f32.mxu0 0.0
    %6349 = vmatmul.mubr.f32.gmra.mrb[0].mxu0 %v6109
    %v6350 = vpop.f32.mrb[0].mxu0
    %v6351 = vadd.f32 %v6039, %v6350
    %v6352 = vpop.f32.mrb[0].mxu0
    %6353 = vmatprep.mubr.f32.mxu0 0.0
    %6354 = vmatmul.mubr.f32.gmra.mrb[0].mxu0 %v6112
    %v6355 = vpop.f32.mrb[0].mxu0
    %v6356 = vadd.f32 %v6039, %v6355
    %v6357 = vpop.f32.mrb[0].mxu0
    %6358 = vmatprep.mubr.f32.mxu0 0.0
    %6359 = vmatmul.mubr.f32.gmra.mrb[0].mxu0 %v6115
    %v6360 = vpop.f32.mrb[0].mxu0
    %v6361 = vadd.f32 %v6039, %v6360
    %v6362 = vpop.f32.mrb[0].mxu0
    %6363 = vmatprep.mubr.f32.mxu0 0.0
    %6364 = vmatmul.mubr.f32.gmra.mrb[0].mxu0 %v6118
    %v6365 = vpop.f32.mrb[0].mxu0
    %v6366 = vadd.f32 %v6039, %v6365
    %v6367 = vpop.f32.mrb[0].mxu0
    %6368 = vmatprep.mubr.f32.mxu0 0.0
    %6369 = vmatmul.mubr.f32.gmra.mrb[0].mxu0 %v6121
    %v6370 = vpop.f32.mrb[0].mxu0
    %v6371 = vadd.f32 %v6039, %v6370
    %v6372 = vpop.f32.mrb[0].mxu0
    %6373 = vmatprep.mubr.f32.mxu0 0.0
    %6374 = vmatmul.mubr.f32.gmra.mrb[0].mxu0 %v6124
    %v6375 = vpop.f32.mrb[0].mxu0
    %v6376 = vadd.f32 %v6039, %v6375
    %v6377 = vpop.f32.mrb[0].mxu0
    %6378 = vmatprep.mubr.f32.mxu0 0.0
    %6379 = vmatmul.mubr.f32.gmra.mrb[0].mxu0 %v6127
    %v6380 = vpop.f32.mrb[0].mxu0
    %v6381 = vadd.f32 %v6039, %v6380
    %v6382 = vpop.f32.mrb[0].mxu0
    %6383 = vmatprep.mubr.f32.mxu0 0.0
    %6384 = vmatmul.mubr.f32.gmra.mrb[0].mxu0 %v6130
    %v6385 = vpop.f32.mrb[0].mxu0
    %v6386 = vadd.f32 %v6039, %v6385
    %v6387 = vpop.f32.mrb[0].mxu0
    %6388 = vmatprep.mubr.f32.mxu0 0.0
    %6389 = vmatmul.mubr.f32.gmra.mrb[0].mxu0 %v6133
    %v6390 = vpop.f32.mrb[0].mxu0
    %v6391 = vadd.f32 %v6039, %v6390
    %v6392 = vpop.f32.mrb[0].mxu0
    %6393 = vmatprep.mubr.f32.mxu0 0.0
    %6394 = vmatmul.mubr.f32.gmra.mrb[0].mxu0 %v6136
    %v6395 = vpop.f32.mrb[0].mxu0
    %v6396 = vadd.f32 %v6039, %v6395
    %v6397 = vpop.f32.mrb[0].mxu0
    %6398 = vmatprep.mubr.f32.mxu0 0.0
    %6399 = vmatmul.mubr.f32.gmra.mrb[0].mxu0 %v6139
    %v6400 = vpop.f32.mrb[0].mxu0
    %v6401 = vadd.f32 %v6039, %v6400
    %v6402 = vpop.f32.mrb[0].mxu0
    %6403 = vmatprep.mubr.f32.mxu0 0.0
    %6404 = vmatmul.mubr.f32.gmra.mrb[0].mxu0 %v6142
    %v6405 = vpop.f32.mrb[0].mxu0
    %v6406 = vadd.f32 %v6039, %v6405
    %v6407 = vpop.f32.mrb[0].mxu0
    %6408 = vmatprep.mubr.f32.mxu0 0.0
    %6409 = vmatmul.mubr.f32.gmra.mrb[0].mxu0 %v6145
    %v6410 = vpop.f32.mrb[0].mxu0
    %v6411 = vadd.f32 %v6039, %v6410
    %v6412 = vpop.f32.mrb[0].mxu0
    %6413 = vmatprep.mubr.f32.mxu0 0.0
    %6414 = vmatmul.mubr.f32.gmra.mrb[0].mxu0 %v6148
    %v6415 = vpop.f32.mrb[0].mxu0
    %v6416 = vadd.f32 %v6039, %v6415
    %v6417 = vpop.f32.mrb[0].mxu0
    %6418 = vmatprep.mubr.f32.mxu0 0.0
    %6419 = vmatmul.mubr.f32.gmra.mrb[0].mxu0 %v6151
    %v6420 = vpop.f32.mrb[0].mxu0
    %v6421 = vadd.f32 %v6039, %v6420
    %v6422 = vpop.f32.mrb[0].mxu0
    %6423 = vmatprep.mubr.f32.mxu0 0.0
    %6424 = vmatmul.mubr.f32.gmra.mrb[0].mxu0 %v6154
    %v6425 = vpop.f32.mrb[0].mxu0
    %v6426 = vadd.f32 %v6039, %v6425
    %v6427 = vpop.f32.mrb[0].mxu0
    %6428 = vmatprep.mubr.f32.mxu0 0.0
    %6429 = vmatmul.mubr.f32.gmra.mrb[0].mxu0 %v6157
    %v6430 = vpop.f32.mrb[0].mxu0
    %v6431 = vadd.f32 %v6039, %v6430
    %v6432 = vpop.f32.mrb[0].mxu0
    %6433 = vmatprep.mubr.f32.mxu0 0.0
    %6434 = vmatmul.mubr.f32.gmra.mrb[0].mxu0 %v6160
    %v6435 = vpop.f32.mrb[0].mxu0
    %v6436 = vadd.f32 %v6039, %v6435
    %v6437 = vpop.f32.mrb[0].mxu0
    %6438 = vmatprep.mubr.f32.mxu0 0.0
    %6439 = vmatmul.mubr.f32.gmra.mrb[0].mxu0 %v6163
    %v6440 = vpop.f32.mrb[0].mxu0
    %v6441 = vadd.f32 %v6039, %v6440
    %v6442 = vpop.f32.mrb[0].mxu0
    %6443 = vmatprep.mubr.f32.mxu0 0.0
    %6444 = vmatmul.mubr.f32.gmra.mrb[0].mxu0 %v6166
    %v6445 = vpop.f32.mrb[0].mxu0
    %v6446 = vadd.f32 %v6039, %v6445
    %v6447 = vpop.f32.mrb[0].mxu0
    %6448 = vmatprep.mubr.f32.mxu0 0.0
    %6449 = vmatmul.mubr.f32.gmra.mrb[0].mxu0 %v6169
    %v6450 = vpop.f32.mrb[0].mxu0
    %v6451 = vadd.f32 %v6039, %v6450
    %v6452 = vpop.f32.mrb[0].mxu0
    %6453 = vmatprep.mubr.f32.mxu0 0.0
    %6454 = vmatmul.mubr.f32.gmra.mrb[0].mxu0 %v6172
    %v6455 = vpop.f32.mrb[0].mxu0
    %v6456 = vadd.f32 %v6039, %v6455
    %v6457 = vpop.f32.mrb[0].mxu0
    %6458 = vdwg.mxu0
    %v6459 = vmax.f32 %v6241, 0.0
    %v6460 = vmax.f32 %v6246, 0.0
    %v6461 = vmax.f32 %v6251, 0.0
    %v6462 = vmax.f32 %v6256, 0.0
    %v6463 = vmax.f32 %v6261, 0.0
    %v6464 = vmax.f32 %v6266, 0.0
    %v6465 = vmax.f32 %v6271, 0.0
    %v6466 = vmax.f32 %v6276, 0.0
    %v6467 = vmax.f32 %v6281, 0.0
    %v6468 = vmax.f32 %v6286, 0.0
    %v6469 = vmax.f32 %v6291, 0.0
    %v6470 = vmax.f32 %v6296, 0.0
    %v6471 = vmax.f32 %v6301, 0.0
    %v6472 = vmax.f32 %v6306, 0.0
    %v6473 = vmax.f32 %v6311, 0.0
    %v6474 = vmax.f32 %v6316, 0.0
    %v6475 = vmax.f32 %v6321, 0.0
    %v6476 = vmax.f32 %v6326, 0.0
    %v6477 = vmax.f32 %v6331, 0.0
    %v6478 = vmax.f32 %v6336, 0.0
    %v6479 = vmax.f32 %v6341, 0.0
    %v6480 = vmax.f32 %v6346, 0.0
    %v6481 = vmax.f32 %v6351, 0.0
    %v6482 = vmax.f32 %v6356, 0.0
    %v6483 = vmax.f32 %v6361, 0.0
    %v6484 = vmax.f32 %v6366, 0.0
    %v6485 = vmax.f32 %v6371, 0.0
    %v6486 = vmax.f32 %v6376, 0.0
    %v6487 = vmax.f32 %v6381, 0.0
    %v6488 = vmax.f32 %v6386, 0.0
    %v6489 = vmax.f32 %v6391, 0.0
    %v6490 = vmax.f32 %v6396, 0.0
    %v6491 = vmax.f32 %v6401, 0.0
    %v6492 = vmax.f32 %v6406, 0.0
    %v6493 = vmax.f32 %v6411, 0.0
    %v6494 = vmax.f32 %v6416, 0.0
    %v6495 = vmax.f32 %v6421, 0.0
    %v6496 = vmax.f32 %v6426, 0.0
    %v6497 = vmax.f32 %v6431, 0.0
    %v6498 = vmax.f32 %v6436, 0.0
    %v6499 = vmax.f32 %v6441, 0.0
    %v6500 = vmax.f32 %v6446, 0.0
    %v6501 = vmax.f32 %v6451, 0.0
    %v6502 = vmax.f32 %v6456, 0.0
    %v6503 = vrot.slane %v6459, 1
    %v6504 = vrot.slane %v6460, 1
    %v6505 = vrot.slane %v6461, 1
    %v6506 = vrot.slane %v6462, 1
    %v6507 = vrot.slane %v6463, 1
    %v6508 = vrot.slane %v6464, 1
    %v6509 = vrot.slane %v6465, 1
    %v6510 = vrot.slane %v6466, 1
    %v6511 = vrot.slane %v6467, 1
    %v6512 = vrot.slane %v6468, 1
    %v6513 = vrot.slane %v6469, 1
    %v6514 = vrot.slane %v6470, 1
    %v6515 = vrot.slane %v6471, 1
    %v6516 = vrot.slane %v6472, 1
    %v6517 = vrot.slane %v6473, 1
    %v6518 = vrot.slane %v6474, 1
    %v6519 = vrot.slane %v6475, 1
    %v6520 = vrot.slane %v6476, 1
    %v6521 = vrot.slane %v6477, 1
    %v6522 = vrot.slane %v6478, 1
    %v6523 = vrot.slane %v6479, 1
    %v6524 = vrot.slane %v6480, 1
    %v6525 = vrot.slane %v6481, 1
    %v6526 = vrot.slane %v6482, 1
    %v6527 = vrot.slane %v6483, 1
    %v6528 = vrot.slane %v6484, 1
    %v6529 = vrot.slane %v6485, 1
    %v6530 = vrot.slane %v6486, 1
    %v6531 = vrot.slane %v6487, 1
    %v6532 = vrot.slane %v6488, 1
    %v6533 = vrot.slane %v6489, 1
    %v6534 = vrot.slane %v6490, 1
    %v6535 = vrot.slane %v6491, 1
    %v6536 = vrot.slane %v6492, 1
    %v6537 = vrot.slane %v6493, 1
    %v6538 = vrot.slane %v6494, 1
    %v6539 = vrot.slane %v6495, 1
    %v6540 = vrot.slane %v6496, 1
    %v6541 = vrot.slane %v6497, 1
    %v6542 = vrot.slane %v6498, 1
    %v6543 = vrot.slane %v6499, 1
    %v6544 = vrot.slane %v6500, 1
    %v6545 = vrot.slane %v6501, 1
    %v6546 = vrot.slane %v6502, 1
    %v6547 = vsel %vm2161, %v6545, %v6546
    %v6548 = vsel %vm2161, %v6544, %v6545
    %v6549 = vsel %vm2161, %v6543, %v6544
    %v6550 = vsel %vm2161, %v6542, %v6543
    %v6551 = vsel %vm2161, %v6541, %v6542
    %v6552 = vsel %vm2161, %v6540, %v6541
    %v6553 = vsel %vm2161, %v6539, %v6540
    %v6554 = vsel %vm2161, %v6538, %v6539
    %v6555 = vsel %vm2161, %v6537, %v6538
    %v6556 = vsel %vm2161, %v6536, %v6537
    %v6557 = vsel %vm2161, %v6535, %v6536
    %v6558 = vsel %vm2161, %v6534, %v6535
    %v6559 = vsel %vm2161, %v6533, %v6534
    %v6560 = vsel %vm2161, %v6532, %v6533
    %v6561 = vsel %vm2161, %v6531, %v6532
    %v6562 = vsel %vm2161, %v6530, %v6531
    %v6563 = vsel %vm2161, %v6529, %v6530
    %v6564 = vsel %vm2161, %v6528, %v6529
    %v6565 = vsel %vm2161, %v6527, %v6528
    %v6566 = vsel %vm2161, %v6526, %v6527
    %v6567 = vsel %vm2161, %v6525, %v6526
    %v6568 = vsel %vm2161, %v6524, %v6525
    %v6569 = vsel %vm2161, %v6523, %v6524
    %v6570 = vsel %vm2161, %v6522, %v6523
    %v6571 = vsel %vm2161, %v6521, %v6522
    %v6572 = vsel %vm2161, %v6520, %v6521
    %v6573 = vsel %vm2161, %v6519, %v6520
    %v6574 = vsel %vm2161, %v6518, %v6519
    %v6575 = vsel %vm2161, %v6517, %v6518
    %v6576 = vsel %vm2161, %v6516, %v6517
    %v6577 = vsel %vm2161, %v6515, %v6516
    %v6578 = vsel %vm2161, %v6514, %v6515
    %v6579 = vsel %vm2161, %v6513, %v6514
    %v6580 = vsel %vm2161, %v6512, %v6513
    %v6581 = vsel %vm2161, %v6511, %v6512
    %v6582 = vsel %vm2161, %v6510, %v6511
    %v6583 = vsel %vm2161, %v6509, %v6510
    %v6584 = vsel %vm2161, %v6508, %v6509
    %v6585 = vsel %vm2161, %v6507, %v6508
    %v6586 = vsel %vm2161, %v6506, %v6507
    %v6587 = vsel %vm2161, %v6505, %v6506
    %v6588 = vsel %vm2161, %v6504, %v6505
    %v6589 = vsel %vm2161, %v6503, %v6504
    %v6590 = vsel %vm2161, %v6546, %v6503
    %v6591 = vmax.f32 %v6459, %v6589
    %v6592 = vmax.f32 %v6460, %v6588
    %v6593 = vmax.f32 %v6461, %v6587
    %v6594 = vmax.f32 %v6462, %v6586
    %v6595 = vmax.f32 %v6463, %v6585
    %v6596 = vmax.f32 %v6464, %v6584
    %v6597 = vmax.f32 %v6465, %v6583
    %v6598 = vmax.f32 %v6466, %v6582
    %v6599 = vmax.f32 %v6467, %v6581
    %v6600 = vmax.f32 %v6468, %v6580
    %v6601 = vmax.f32 %v6469, %v6579
    %v6602 = vmax.f32 %v6470, %v6578
    %v6603 = vmax.f32 %v6471, %v6577
    %v6604 = vmax.f32 %v6472, %v6576
    %v6605 = vmax.f32 %v6473, %v6575
    %v6606 = vmax.f32 %v6474, %v6574
    %v6607 = vmax.f32 %v6475, %v6573
    %v6608 = vmax.f32 %v6476, %v6572
    %v6609 = vmax.f32 %v6477, %v6571
    %v6610 = vmax.f32 %v6478, %v6570
    %v6611 = vmax.f32 %v6479, %v6569
    %v6612 = vmax.f32 %v6480, %v6568
    %v6613 = vmax.f32 %v6481, %v6567
    %v6614 = vmax.f32 %v6482, %v6566
    %v6615 = vmax.f32 %v6483, %v6565
    %v6616 = vmax.f32 %v6484, %v6564
    %v6617 = vmax.f32 %v6485, %v6563
    %v6618 = vmax.f32 %v6486, %v6562
    %v6619 = vmax.f32 %v6487, %v6561
    %v6620 = vmax.f32 %v6488, %v6560
    %v6621 = vmax.f32 %v6489, %v6559
    %v6622 = vmax.f32 %v6490, %v6558
    %v6623 = vmax.f32 %v6491, %v6557
    %v6624 = vmax.f32 %v6492, %v6556
    %v6625 = vmax.f32 %v6493, %v6555
    %v6626 = vmax.f32 %v6494, %v6554
    %v6627 = vmax.f32 %v6495, %v6553
    %v6628 = vmax.f32 %v6496, %v6552
    %v6629 = vmax.f32 %v6497, %v6551
    %v6630 = vmax.f32 %v6498, %v6550
    %v6631 = vmax.f32 %v6499, %v6549
    %v6632 = vmax.f32 %v6500, %v6548
    %v6633 = vmax.f32 %v6501, %v6547
    %v6634 = vmax.f32 %v6502, %v6590
    %6635 = vst.msk [vmem:[#allocation3] sm:$0xff] %vm5983, %v6591
    %6636 = vst.msk [vmem:[#allocation3 + $0x8] sm:$0xff] %vm5983, %v6592
    %6637 = vst.msk [vmem:[#allocation3 + $0x10] sm:$0xff] %vm5983, %v6593
    %6638 = vst.msk [vmem:[#allocation3 + $0x18] sm:$0xff] %vm5983, %v6594
    %6639 = vst.msk [vmem:[#allocation3 + $0x20] sm:$0xff] %vm5983, %v6595
    %6640 = vst.msk [vmem:[#allocation3 + $0x28] sm:$0xff] %vm5983, %v6596
    %6641 = vst.msk [vmem:[#allocation3 + $0x30] sm:$0xff] %vm5983, %v6597
    %6642 = vst.msk [vmem:[#allocation3 + $0x38] sm:$0xff] %vm5983, %v6598
    %6643 = vst.msk [vmem:[#allocation3 + $0x40] sm:$0xff] %vm5983, %v6599
    %6644 = vst.msk [vmem:[#allocation3 + $0x48] sm:$0xff] %vm5983, %v6600
    %6645 = vst.msk [vmem:[#allocation3 + $0x50] sm:$0xff] %vm5983, %v6601
    %6646 = vst.msk [vmem:[#allocation3 + $0x58] sm:$0xff] %vm5983, %v6602
    %6647 = vst.msk [vmem:[#allocation3 + $0x60] sm:$0xff] %vm5983, %v6603
    %6648 = vst.msk [vmem:[#allocation3 + $0x68] sm:$0xff] %vm5983, %v6604
    %6649 = vst.msk [vmem:[#allocation3 + $0x70] sm:$0xff] %vm5983, %v6605
    %6650 = vst.msk [vmem:[#allocation3 + $0x78] sm:$0xff] %vm5983, %v6606
    %6651 = vst.msk [vmem:[#allocation3 + $0x80] sm:$0xff] %vm5983, %v6607
    %6652 = vst.msk [vmem:[#allocation3 + $0x88] sm:$0xff] %vm5983, %v6608
    %6653 = vst.msk [vmem:[#allocation3 + $0x90] sm:$0xff] %vm5983, %v6609
    %6654 = vst.msk [vmem:[#allocation3 + $0x98] sm:$0xff] %vm5983, %v6610
    %6655 = vst.msk [vmem:[#allocation3 + $0xa0] sm:$0xff] %vm5983, %v6611
    %6656 = vst.msk [vmem:[#allocation3 + $0xa8] sm:$0xff] %vm5983, %v6612
    %6657 = vst.msk [vmem:[#allocation3 + $0xb0] sm:$0xff] %vm5983, %v6613
    %6658 = vst.msk [vmem:[#allocation3 + $0xb8] sm:$0xff] %vm5983, %v6614
    %6659 = vst.msk [vmem:[#allocation3 + $0xc0] sm:$0xff] %vm5983, %v6615
    %6660 = vst.msk [vmem:[#allocation3 + $0xc8] sm:$0xff] %vm5983, %v6616
    %6661 = vst.msk [vmem:[#allocation3 + $0xd0] sm:$0xff] %vm5983, %v6617
    %6662 = vst.msk [vmem:[#allocation3 + $0xd8] sm:$0xff] %vm5983, %v6618
    %6663 = vst.msk [vmem:[#allocation3 + $0xe0] sm:$0xff] %vm5983, %v6619
    %6664 = vst.msk [vmem:[#allocation3 + $0xe8] sm:$0xff] %vm5983, %v6620
    %6665 = vst.msk [vmem:[#allocation3 + $0xf0] sm:$0xff] %vm5983, %v6621
    %6666 = vst.msk [vmem:[#allocation3 + $0xf8] sm:$0xff] %vm5983, %v6622
    %6667 = vst.msk [vmem:[#allocation3 + $0x100] sm:$0xff] %vm5983, %v6623
    %6668 = vst.msk [vmem:[#allocation3 + $0x108] sm:$0xff] %vm5983, %v6624
    %6669 = vst.msk [vmem:[#allocation3 + $0x110] sm:$0xff] %vm5983, %v6625
    %6670 = vst.msk [vmem:[#allocation3 + $0x118] sm:$0xff] %vm5983, %v6626
    %6671 = vst.msk [vmem:[#allocation3 + $0x120] sm:$0xff] %vm5983, %v6627
    %6672 = vst.msk [vmem:[#allocation3 + $0x128] sm:$0xff] %vm5983, %v6628
    %6673 = vst.msk [vmem:[#allocation3 + $0x130] sm:$0xff] %vm5983, %v6629
    %6674 = vst.msk [vmem:[#allocation3 + $0x138] sm:$0xff] %vm5983, %v6630
    %6675 = vst.msk [vmem:[#allocation3 + $0x140] sm:$0xff] %vm5983, %v6631
    %6676 = vst.msk [vmem:[#allocation3 + $0x148] sm:$0xff] %vm5983, %v6632
    %6677 = vst.msk [vmem:[#allocation3 + $0x150] sm:$0xff] %vm5983, %v6633
    %6678 = vst.msk [vmem:[#allocation3 + $0x158] sm:$0xff] %vm5983, %v6634
    %v6679 = vld [vmem:[#allocation3] ss:$44 sm:$0xff]
    %6680 = vst.msk [vmem:[#allocation4] sm:$0xff] %vm5983, %v6679
    %s6681 = scalar_lea.vmem [#allocation3], 2
    %v6682 = vld [vmem:[%s6681] ss:$44 sm:$0xff]
    %6684 = vrot.lane.b32.xlu0 %v6682, 32
    %v6685 = vpop.permute.xlu0 %6684
    %vm6687 = vcmask 523520
    %6688 = vst.msk [vmem:[#allocation4] sm:$0xff] %vm6687, %v6685
    %s6689 = scalar_lea.vmem [#allocation3], 4
    %v6690 = vld [vmem:[%s6689] ss:$44 sm:$0xff]
    %6692 = vrot.lane.b32.xlu0 %v6690, 64
    %v6693 = vpop.permute.xlu0 %6692
    %vm6695 = vcmask 785920
    %6696 = vst.msk [vmem:[#allocation4] sm:$0xff] %vm6695, %v6693
    %s6697 = scalar_lea.vmem [#allocation3], 6
    %v6698 = vld [vmem:[%s6697] ss:$44 sm:$0xff]
    %6700 = vrot.lane.b32.xlu0 %v6698, 96
    %v6701 = vpop.permute.xlu0 %6700
    %vm6703 = vcmask 1048320
    %6704 = vst.msk [vmem:[#allocation4] sm:$0xff] %vm6703, %v6701
    %s6705 = scalar_lea.vmem [#allocation3], 8
    %v6706 = vld [vmem:[%s6705] ss:$44 sm:$0xff]
    %6707 = vst.msk [vmem:[#allocation4 + $0x8] sm:$0xff] %vm5983, %v6706
    %s6708 = scalar_lea.vmem [#allocation3], 10
    %v6709 = vld [vmem:[%s6708] ss:$44 sm:$0xff]
    %6711 = vrot.lane.b32.xlu0 %v6709, 32
    %v6712 = vpop.permute.xlu0 %6711
    %6714 = vst.msk [vmem:[#allocation4 + $0x8] sm:$0xff] %vm6687, %v6712
    %s6715 = scalar_lea.vmem [#allocation3], 12
    %v6716 = vld [vmem:[%s6715] ss:$44 sm:$0xff]
    %6718 = vrot.lane.b32.xlu0 %v6716, 64
    %v6719 = vpop.permute.xlu0 %6718
    %6721 = vst.msk [vmem:[#allocation4 + $0x8] sm:$0xff] %vm6695, %v6719
    %s6722 = scalar_lea.vmem [#allocation3], 14
    %v6723 = vld [vmem:[%s6722] ss:$44 sm:$0xff]
    %6725 = vrot.lane.b32.xlu0 %v6723, 96
    %v6726 = vpop.permute.xlu0 %6725
    %6728 = vst.msk [vmem:[#allocation4 + $0x8] sm:$0xff] %vm6703, %v6726
    %s6729 = scalar_lea.vmem [#allocation3], 16
    %v6730 = vld [vmem:[%s6729] ss:$44 sm:$0xff]
    %6731 = vst.msk [vmem:[#allocation4 + $0x10] sm:$0xff] %vm5983, %v6730
    %s6732 = scalar_lea.vmem [#allocation3], 18
    %v6733 = vld [vmem:[%s6732] ss:$44 sm:$0xff]
    %6735 = vrot.lane.b32.xlu0 %v6733, 32
    %v6736 = vpop.permute.xlu0 %6735
    %6738 = vst.msk [vmem:[#allocation4 + $0x10] sm:$0xff] %vm6687, %v6736
    %s6739 = scalar_lea.vmem [#allocation3], 20
    %v6740 = vld [vmem:[%s6739] ss:$44 sm:$0xff]
    %6742 = vrot.lane.b32.xlu0 %v6740, 64
    %v6743 = vpop.permute.xlu0 %6742
    %6745 = vst.msk [vmem:[#allocation4 + $0x10] sm:$0xff] %vm6695, %v6743
    %s6746 = scalar_lea.vmem [#allocation3], 22
    %v6747 = vld [vmem:[%s6746] ss:$44 sm:$0xff]
    %6749 = vrot.lane.b32.xlu0 %v6747, 96
    %v6750 = vpop.permute.xlu0 %6749
    %6752 = vst.msk [vmem:[#allocation4 + $0x10] sm:$0xff] %vm6703, %v6750
    %s6753 = scalar_lea.vmem [#allocation3], 24
    %v6754 = vld [vmem:[%s6753] ss:$44 sm:$0xff]
    %6755 = vst.msk [vmem:[#allocation4 + $0x18] sm:$0xff] %vm5983, %v6754
    %s6756 = scalar_lea.vmem [#allocation3], 26
    %v6757 = vld [vmem:[%s6756] ss:$44 sm:$0xff]
    %6759 = vrot.lane.b32.xlu0 %v6757, 32
    %v6760 = vpop.permute.xlu0 %6759
    %6762 = vst.msk [vmem:[#allocation4 + $0x18] sm:$0xff] %vm6687, %v6760
    %s6763 = scalar_lea.vmem [#allocation3], 28
    %v6764 = vld [vmem:[%s6763] ss:$44 sm:$0xff]
    %6766 = vrot.lane.b32.xlu0 %v6764, 64
    %v6767 = vpop.permute.xlu0 %6766
    %6769 = vst.msk [vmem:[#allocation4 + $0x18] sm:$0xff] %vm6695, %v6767
    %s6770 = scalar_lea.vmem [#allocation3], 30
    %v6771 = vld [vmem:[%s6770] ss:$44 sm:$0xff]
    %6773 = vrot.lane.b32.xlu0 %v6771, 96
    %v6774 = vpop.permute.xlu0 %6773
    %6776 = vst.msk [vmem:[#allocation4 + $0x18] sm:$0xff] %vm6703, %v6774
    %s6777 = scalar_lea.vmem [#allocation3], 32
    %v6778 = vld [vmem:[%s6777] ss:$44 sm:$0xff]
    %6779 = vst.msk [vmem:[#allocation4 + $0x20] sm:$0xff] %vm5983, %v6778
    %s6780 = scalar_lea.vmem [#allocation3], 34
    %v6781 = vld [vmem:[%s6780] ss:$44 sm:$0xff]
    %6783 = vrot.lane.b32.xlu0 %v6781, 32
    %v6784 = vpop.permute.xlu0 %6783
    %6786 = vst.msk [vmem:[#allocation4 + $0x20] sm:$0xff] %vm6687, %v6784
    %s6787 = scalar_lea.vmem [#allocation3], 36
    %v6788 = vld [vmem:[%s6787] ss:$44 sm:$0xff]
    %6790 = vrot.lane.b32.xlu0 %v6788, 64
    %v6791 = vpop.permute.xlu0 %6790
    %6793 = vst.msk [vmem:[#allocation4 + $0x20] sm:$0xff] %vm6695, %v6791
    %s6794 = scalar_lea.vmem [#allocation3], 38
    %v6795 = vld [vmem:[%s6794] ss:$44 sm:$0xff]
    %6797 = vrot.lane.b32.xlu0 %v6795, 96
    %v6798 = vpop.permute.xlu0 %6797
    %6800 = vst.msk [vmem:[#allocation4 + $0x20] sm:$0xff] %vm6703, %v6798
    %s6801 = scalar_lea.vmem [#allocation3], 40
    %v6802 = vld [vmem:[%s6801] ss:$44 sm:$0xff]
    %6803 = vst.msk [vmem:[#allocation4 + $0x28] sm:$0xff] %vm5983, %v6802
    %s6804 = scalar_lea.vmem [#allocation3], 42
    %v6805 = vld [vmem:[%s6804] ss:$44 sm:$0xff]
    %6807 = vrot.lane.b32.xlu0 %v6805, 32
    %v6808 = vpop.permute.xlu0 %6807
    %6810 = vst.msk [vmem:[#allocation4 + $0x28] sm:$0xff] %vm6687, %v6808
    %v6811 = vld [vmem:[#allocation4] sm:$0xff]
    %v6812 = vld [vmem:[#allocation4 + $0x8] sm:$0xff]
    %v6813 = vld [vmem:[#allocation4 + $0x10] sm:$0xff]
    %v6814 = vld [vmem:[#allocation4 + $0x18] sm:$0xff]
    %v6815 = vld [vmem:[#allocation4 + $0x20] sm:$0xff]
    %v6816 = vld [vmem:[#allocation4 + $0x28] sm:$0xff]
    %v6817 = vld [vmem:[%s5] sm:$0xff]
    %v6818 = vld [vmem:[%s5 + $0x8] sm:$0xff]
    %v6819 = vld [vmem:[%s5 + $0x10] sm:$0xff]
    %v6820 = vld [vmem:[%s5 + $0x18] sm:$0xff]
    %v6821 = vld [vmem:[%s5 + $0x20] sm:$0xff]
    %v6822 = vld [vmem:[%s5 + $0x28] sm:$0xff]
    %v6823 = vld [vmem:[%s5 + $0x30] sm:$0xff]
    %v6824 = vld [vmem:[%s5 + $0x38] sm:$0xff]
    %v6825 = vld [vmem:[%s5 + $0x40] sm:$0xff]
    %v6826 = vld [vmem:[%s5 + $0x48] sm:$0xff]
    %v6827 = vld [vmem:[%s5 + $0x50] sm:$0xff]
    %v6828 = vld [vmem:[%s5 + $0x58] sm:$0xff]
    %v6829 = vld [vmem:[%s5 + $0x60] sm:$0xff]
    %v6830 = vld [vmem:[%s5 + $0x68] sm:$0xff]
    %v6831 = vld [vmem:[%s5 + $0x70] sm:$0xff]
    %v6832 = vld [vmem:[%s5 + $0x78] sm:$0xff]
    %v6833 = vld [vmem:[%s5 + $0x80] sm:$0xff]
    %v6834 = vld [vmem:[%s5 + $0x88] sm:$0xff]
    %v6835 = vld [vmem:[%s5 + $0x90] sm:$0xff]
    %v6836 = vld [vmem:[%s5 + $0x98] sm:$0xff]
    %v6837 = vld [vmem:[%s5 + $0xa0] sm:$0xff]
    %v6838 = vld [vmem:[%s5 + $0xa8] sm:$0xff]
    %v6839 = vld [vmem:[%s5 + $0xb0] sm:$0xff]
    %v6840 = vld [vmem:[%s5 + $0xb8] sm:$0xff]
    %v6841 = vld [vmem:[%s5 + $0xc0] sm:$0xff]
    %v6842 = vld [vmem:[%s5 + $0xc8] sm:$0xff]
    %v6843 = vld [vmem:[%s5 + $0xd0] sm:$0xff]
    %v6844 = vld [vmem:[%s5 + $0xd8] sm:$0xff]
    %v6845 = vld [vmem:[%s5 + $0xe0] sm:$0xff]
    %v6846 = vld [vmem:[%s5 + $0xe8] sm:$0xff]
    %v6847 = vld [vmem:[%s5 + $0xf0] sm:$0xff]
    %v6848 = vld [vmem:[%s5 + $0xf8] sm:$0xff]
    %v6849 = vld [vmem:[%s5 + $0x100] sm:$0xff]
    %v6850 = vld [vmem:[%s5 + $0x108] sm:$0xff]
    %v6851 = vld [vmem:[%s5 + $0x110] sm:$0xff]
    %v6852 = vld [vmem:[%s5 + $0x118] sm:$0xff]
    %v6853 = vld [vmem:[%s5 + $0x120] sm:$0xff]
    %v6854 = vld [vmem:[%s5 + $0x128] sm:$0xff]
    %v6855 = vld [vmem:[%s5 + $0x130] sm:$0xff]
    %v6856 = vld [vmem:[%s5 + $0x138] sm:$0xff]
    %v6857 = vld [vmem:[%s5 + $0x140] sm:$0xff]
    %v6858 = vld [vmem:[%s5 + $0x148] sm:$0xff]
    %v6859 = vld [vmem:[%s5 + $0x150] sm:$0xff]
    %v6860 = vld [vmem:[%s5 + $0x158] sm:$0xff]
    %v6861 = vld [vmem:[%s5 + $0x160] sm:$0xff]
    %v6862 = vld [vmem:[%s5 + $0x168] sm:$0xff]
    %v6863 = vld [vmem:[%s5 + $0x170] sm:$0xff]
    %v6864 = vld [vmem:[%s5 + $0x178] sm:$0xff]
    %v6865 = vld [vmem:[%s5 + $0x180] sm:$0xff]
    %v6866 = vld [vmem:[%s5 + $0x188] sm:$0xff]
    %v6867 = vld [vmem:[%s5 + $0x190] sm:$0xff]
    %v6868 = vld [vmem:[%s5 + $0x198] sm:$0xff]
    %v6869 = vld [vmem:[%s5 + $0x1a0] sm:$0xff]
    %v6870 = vld [vmem:[%s5 + $0x1a8] sm:$0xff]
    %v6871 = vld [vmem:[%s5 + $0x1b0] sm:$0xff]
    %v6872 = vld [vmem:[%s5 + $0x1b8] sm:$0xff]
    %v6873 = vld [vmem:[%s5 + $0x1c0] sm:$0xff]
    %v6874 = vld [vmem:[%s5 + $0x1c8] sm:$0xff]
    %v6875 = vld [vmem:[%s5 + $0x1d0] sm:$0xff]
    %v6876 = vld [vmem:[%s5 + $0x1d8] sm:$0xff]
    %v6877 = vld [vmem:[%s5 + $0x1e0] sm:$0xff]
    %v6878 = vld [vmem:[%s5 + $0x1e8] sm:$0xff]
    %v6879 = vld [vmem:[%s5 + $0x1f0] sm:$0xff]
    %v6880 = vld [vmem:[%s5 + $0x1f8] sm:$0xff]
    %v6881 = vld [vmem:[%s5 + $0x200] sm:$0xff]
    %v6882 = vld [vmem:[%s5 + $0x208] sm:$0xff]
    %v6883 = vld [vmem:[%s5 + $0x210] sm:$0xff]
    %v6884 = vld [vmem:[%s5 + $0x218] sm:$0xff]
    %v6885 = vld [vmem:[%s5 + $0x220] sm:$0xff]
    %v6886 = vld [vmem:[%s5 + $0x228] sm:$0xff]
    %v6887 = vld [vmem:[%s5 + $0x230] sm:$0xff]
    %v6888 = vld [vmem:[%s5 + $0x238] sm:$0xff]
    %v6889 = vld [vmem:[%s5 + $0x240] sm:$0xff]
    %v6890 = vld [vmem:[%s5 + $0x248] sm:$0xff]
    %v6891 = vld [vmem:[%s5 + $0x250] sm:$0xff]
    %v6892 = vld [vmem:[%s5 + $0x258] sm:$0xff]
    %v6893 = vld [vmem:[%s5 + $0x260] sm:$0xff]
    %v6894 = vld [vmem:[%s5 + $0x268] sm:$0xff]
    %v6895 = vld [vmem:[%s5 + $0x270] sm:$0xff]
    %v6896 = vld [vmem:[%s5 + $0x278] sm:$0xff]
    %v6897 = vld [vmem:[%s5 + $0x280] sm:$0xff]
    %v6898 = vld [vmem:[%s5 + $0x288] sm:$0xff]
    %v6899 = vld [vmem:[%s5 + $0x290] sm:$0xff]
    %v6900 = vld [vmem:[%s5 + $0x298] sm:$0xff]
    %v6901 = vld [vmem:[%s5 + $0x2a0] sm:$0xff]
    %v6902 = vld [vmem:[%s5 + $0x2a8] sm:$0xff]
    %v6903 = vld [vmem:[%s5 + $0x2b0] sm:$0xff]
    %v6904 = vld [vmem:[%s5 + $0x2b8] sm:$0xff]
    %v6905 = vld [vmem:[%s6] sm:$0x1]
    %v6907 = vlaneseq
    %v6908 = vshrl.u32 %v6907, 7
    %v6909 = vsub.s32 0, %v6908
    %v6910 = vrot.slane %v6905, %v6909
    %vm6912 = vcmask 523264
    %v6914 = vsel %vm6912, %v6816, 0
    %6916 = vmatprep.subr.mxu0 0.0
    %6917 = vmatpush1.msra.mxu0 %v6817
    %6918 = vmatprep.subr.mxu0 0.0
    %6919 = vmatpush1.msra.mxu0 %v6818
    %6920 = vmatprep.subr.mxu0 0.0
    %6921 = vmatpush1.msra.mxu0 %v6819
    %6922 = vmatprep.subr.mxu0 0.0
    %6923 = vmatpush1.msra.mxu0 %v6820
    %6924 = vmatprep.subr.mxu0 0.0
    %6925 = vmatpush1.msra.mxu0 %v6821
    %6926 = vmatprep.subr.mxu0 0.0
    %6927 = vmatpush1.msra.mxu0 %v6822
    %6928 = vmatprep.subr.mxu0 0.0
    %6929 = vmatpush1.msra.mxu0 %v6823
    %6930 = vmatprep.subr.mxu0 0.0
    %6931 = vmatpush1.msra.mxu0 %v6824
    %6932 = vmatprep.subr.mxu0 0.0
    %6933 = vmatpush1.msra.mxu0 %v6825
    %6934 = vmatprep.subr.mxu0 0.0
    %6935 = vmatpush1.msra.mxu0 %v6826
    %6936 = vmatprep.subr.mxu0 0.0
    %6937 = vmatpush1.msra.mxu0 %v6827
    %6938 = vmatprep.subr.mxu0 0.0
    %6939 = vmatpush1.msra.mxu0 %v6828
    %6940 = vmatprep.subr.mxu0 0.0
    %6941 = vmatpush1.msra.mxu0 %v6829
    %6942 = vmatprep.subr.mxu0 0.0
    %6943 = vmatpush1.msra.mxu0 %v6830
    %6944 = vmatprep.subr.mxu0 0.0
    %6945 = vmatpush1.msra.mxu0 %v6831
    %6946 = vmatprep.subr.mxu0 0.0
    %6947 = vmatpush1.msra.mxu0 %v6832
    %6948 = vmatprep.subr.mxu0 0.0
    %6949 = vmatpush1.msra.mxu0 %v6833
    %6950 = vmatprep.subr.mxu0 0.0
    %6951 = vmatpush1.msra.mxu0 %v6834
    %6952 = vmatprep.subr.mxu0 0.0
    %6953 = vmatpush1.msra.mxu0 %v6835
    %6954 = vmatprep.subr.mxu0 0.0
    %6955 = vmatpush1.msra.mxu0 %v6836
    %6956 = vmatprep.subr.mxu0 0.0
    %6957 = vmatpush1.msra.mxu0 %v6837
    %6958 = vmatprep.subr.mxu0 0.0
    %6959 = vmatpush1.msra.mxu0 %v6838
    %6960 = vmatprep.subr.mxu0 0.0
    %6961 = vmatpush1.msra.mxu0 %v6839
    %6962 = vmatprep.subr.mxu0 0.0
    %6963 = vmatpush1.msra.mxu0 %v6840
    %6964 = vmatprep.subr.mxu0 0.0
    %6965 = vmatpush1.msra.mxu0 %v6841
    %6966 = vmatprep.subr.mxu0 0.0
    %6967 = vmatpush1.msra.mxu0 %v6842
    %6968 = vmatprep.subr.mxu0 0.0
    %6969 = vmatpush1.msra.mxu0 %v6843
    %6970 = vmatprep.subr.mxu0 0.0
    %6971 = vmatpush1.msra.mxu0 %v6844
    %6972 = vmatprep.subr.mxu0 0.0
    %6973 = vmatpush1.msra.mxu0 %v6845
    %6974 = vmatprep.subr.mxu0 0.0
    %6975 = vmatpush1.msra.mxu0 %v6846
    %6976 = vmatprep.subr.mxu0 0.0
    %6977 = vmatpush1.msra.mxu0 %v6847
    %6978 = vmatprep.subr.mxu0 0.0
    %6979 = vmatpush1.msra.mxu0 %v6848
    %6980 = vmatprep.mubr.f32.mxu0 %v6812
    %6981 = vmatmul.mubr.f32.gmra.mrb[0].mxu0 %v6811
    %v6982 = vpop.f32.mrb[0].mxu0
    %v6983 = vadd.f32 %v6910, %v6982
    %v6984 = vpop.f32.mrb[0].mxu0
    %6985 = vdwg.mxu0
    %6986 = vmatprep.subr.mxu0 0.0
    %6987 = vmatpush1.msra.mxu0 %v6849
    %6988 = vmatprep.subr.mxu0 0.0
    %6989 = vmatpush1.msra.mxu0 %v6850
    %6990 = vmatprep.subr.mxu0 0.0
    %6991 = vmatpush1.msra.mxu0 %v6851
    %6992 = vmatprep.subr.mxu0 0.0
    %6993 = vmatpush1.msra.mxu0 %v6852
    %6994 = vmatprep.subr.mxu0 0.0
    %6995 = vmatpush1.msra.mxu0 %v6853
    %6996 = vmatprep.subr.mxu0 0.0
    %6997 = vmatpush1.msra.mxu0 %v6854
    %6998 = vmatprep.subr.mxu0 0.0
    %6999 = vmatpush1.msra.mxu0 %v6855
    %7000 = vmatprep.subr.mxu0 0.0
    %7001 = vmatpush1.msra.mxu0 %v6856
    %7002 = vmatprep.subr.mxu0 0.0
    %7003 = vmatpush1.msra.mxu0 %v6857
    %7004 = vmatprep.subr.mxu0 0.0
    %7005 = vmatpush1.msra.mxu0 %v6858
    %7006 = vmatprep.subr.mxu0 0.0
    %7007 = vmatpush1.msra.mxu0 %v6859
    %7008 = vmatprep.subr.mxu0 0.0
    %7009 = vmatpush1.msra.mxu0 %v6860
    %7010 = vmatprep.subr.mxu0 0.0
    %7011 = vmatpush1.msra.mxu0 %v6861
    %7012 = vmatprep.subr.mxu0 0.0
    %7013 = vmatpush1.msra.mxu0 %v6862
    %7014 = vmatprep.subr.mxu0 0.0
    %7015 = vmatpush1.msra.mxu0 %v6863
    %7016 = vmatprep.subr.mxu0 0.0
    %7017 = vmatpush1.msra.mxu0 %v6864
    %7018 = vmatprep.subr.mxu0 0.0
    %7019 = vmatpush1.msra.mxu0 %v6865
    %7020 = vmatprep.subr.mxu0 0.0
    %7021 = vmatpush1.msra.mxu0 %v6866
    %7022 = vmatprep.subr.mxu0 0.0
    %7023 = vmatpush1.msra.mxu0 %v6867
    %7024 = vmatprep.subr.mxu0 0.0
    %7025 = vmatpush1.msra.mxu0 %v6868
    %7026 = vmatprep.subr.mxu0 0.0
    %7027 = vmatpush1.msra.mxu0 %v6869
    %7028 = vmatprep.subr.mxu0 0.0
    %7029 = vmatpush1.msra.mxu0 %v6870
    %7030 = vmatprep.subr.mxu0 0.0
    %7031 = vmatpush1.msra.mxu0 %v6871
    %7032 = vmatprep.subr.mxu0 0.0
    %7033 = vmatpush1.msra.mxu0 %v6872
    %7034 = vmatprep.subr.mxu0 0.0
    %7035 = vmatpush1.msra.mxu0 %v6873
    %7036 = vmatprep.subr.mxu0 0.0
    %7037 = vmatpush1.msra.mxu0 %v6874
    %7038 = vmatprep.subr.mxu0 0.0
    %7039 = vmatpush1.msra.mxu0 %v6875
    %7040 = vmatprep.subr.mxu0 0.0
    %7041 = vmatpush1.msra.mxu0 %v6876
    %7042 = vmatprep.subr.mxu0 0.0
    %7043 = vmatpush1.msra.mxu0 %v6877
    %7044 = vmatprep.subr.mxu0 0.0
    %7045 = vmatpush1.msra.mxu0 %v6878
    %7046 = vmatprep.subr.mxu0 0.0
    %7047 = vmatpush1.msra.mxu0 %v6879
    %7048 = vmatprep.subr.mxu0 0.0
    %7049 = vmatpush1.msra.mxu0 %v6880
    %7050 = vmatprep.mubr.f32.mxu0 %v6814
    %7051 = vmatmul.mubr.f32.gmra.mrb[0].mxu0 %v6813
    %v7052 = vpop.f32.mrb[0].mxu0
    %v7053 = vadd.f32 %v6983, %v7052
    %v7054 = vpop.f32.mrb[0].mxu0
    %7055 = vdwg.mxu0
    %7056 = vmatprep.subr.mxu0 0.0
    %7057 = vmatpush1.msra.mxu0 %v6881
    %7058 = vmatprep.subr.mxu0 0.0
    %7059 = vmatpush1.msra.mxu0 %v6882
    %7060 = vmatprep.subr.mxu0 0.0
    %7061 = vmatpush1.msra.mxu0 %v6883
    %7062 = vmatprep.subr.mxu0 0.0
    %7063 = vmatpush1.msra.mxu0 %v6884
    %7064 = vmatprep.subr.mxu0 0.0
    %7065 = vmatpush1.msra.mxu0 %v6885
    %7066 = vmatprep.subr.mxu0 0.0
    %7067 = vmatpush1.msra.mxu0 %v6886
    %7068 = vmatprep.subr.mxu0 0.0
    %7069 = vmatpush1.msra.mxu0 %v6887
    %7070 = vmatprep.subr.mxu0 0.0
    %7071 = vmatpush1.msra.mxu0 %v6888
    %7072 = vmatprep.subr.mxu0 0.0
    %7073 = vmatpush1.msra.mxu0 %v6889
    %7074 = vmatprep.subr.mxu0 0.0
    %7075 = vmatpush1.msra.mxu0 %v6890
    %7076 = vmatprep.subr.mxu0 0.0
    %7077 = vmatpush1.msra.mxu0 %v6891
    %7078 = vmatprep.subr.mxu0 0.0
    %7079 = vmatpush1.msra.mxu0 %v6892
    %7080 = vmatprep.subr.mxu0 0.0
    %7081 = vmatpush1.msra.mxu0 %v6893
    %7082 = vmatprep.subr.mxu0 0.0
    %7083 = vmatpush1.msra.mxu0 %v6894
    %7084 = vmatprep.subr.mxu0 0.0
    %7085 = vmatpush1.msra.mxu0 %v6895
    %7086 = vmatprep.subr.mxu0 0.0
    %7087 = vmatpush1.msra.mxu0 %v6896
    %7088 = vmatprep.subr.mxu0 0.0
    %7089 = vmatpush1.msra.mxu0 %v6897
    %7090 = vmatprep.subr.mxu0 0.0
    %7091 = vmatpush1.msra.mxu0 %v6898
    %7092 = vmatprep.subr.mxu0 0.0
    %7093 = vmatpush1.msra.mxu0 %v6899
    %7094 = vmatprep.subr.mxu0 0.0
    %7095 = vmatpush1.msra.mxu0 %v6900
    %7096 = vmatprep.subr.mxu0 0.0
    %7097 = vmatpush1.msra.mxu0 %v6901
    %7098 = vmatprep.subr.mxu0 0.0
    %7099 = vmatpush1.msra.mxu0 %v6902
    %7100 = vmatprep.subr.mxu0 0.0
    %7101 = vmatpush1.msra.mxu0 %v6903
    %7102 = vmatprep.subr.mxu0 0.0
    %7103 = vmatpush1.msra.mxu0 %v6904
    %7104 = vmatprep.subr.mxu0 0.0
    %7105 = vmatpush1.msra.mxu0 0.0
    %7106 = vmatprep.subr.mxu0 0.0
    %7107 = vmatpush1.msra.mxu0 0.0
    %7108 = vmatprep.subr.mxu0 0.0
    %7109 = vmatpush1.msra.mxu0 0.0
    %7110 = vmatprep.subr.mxu0 0.0
    %7111 = vmatpush1.msra.mxu0 0.0
    %7112 = vmatprep.subr.mxu0 0.0
    %7113 = vmatpush1.msra.mxu0 0.0
    %7114 = vmatprep.subr.mxu0 0.0
    %7115 = vmatpush1.msra.mxu0 0.0
    %7116 = vmatprep.subr.mxu0 0.0
    %7117 = vmatpush1.msra.mxu0 0.0
    %7118 = vmatprep.subr.mxu0 0.0
    %7119 = vmatpush1.msra.mxu0 0.0
    %7120 = vmatprep.mubr.f32.mxu0 %v6914
    %7121 = vmatmul.mubr.f32.gmra.mrb[0].mxu0 %v6815
    %v7122 = vpop.f32.mrb[0].mxu0
    %v7123 = vadd.f32 %v7053, %v7122
    %v7124 = vpop.f32.mrb[0].mxu0
    %7125 = vdwg.mxu0
    %v7126 = vmax.f32 %v7123, 0.0
    %v7127 = vld [vmem:[#allocation5] sm:$0xff]
    %v7128 = vld [vmem:[#allocation5 + $0x8] sm:$0xff]
    %v7129 = vld [vmem:[#allocation5 + $0x10] sm:$0xff]
    %v7130 = vld [vmem:[#allocation5 + $0x18] sm:$0xff]
    %v7131 = vld [vmem:[#allocation5 + $0x20] sm:$0xff]
    %v7132 = vld [vmem:[#allocation5 + $0x28] sm:$0xff]
    %v7133 = vld [vmem:[#allocation5 + $0x30] sm:$0xff]
    %v7134 = vld [vmem:[#allocation5 + $0x38] sm:$0xff]
    %v7135 = vld [vmem:[#allocation5 + $0x40] sm:$0xff]
    %v7136 = vld [vmem:[#allocation5 + $0x48] sm:$0xff]
    %v7137 = vld [vmem:[#allocation5 + $0x50] sm:$0xff]
    %v7138 = vld [vmem:[#allocation5 + $0x58] sm:$0xff]
    %v7139 = vld [vmem:[#allocation5 + $0x60] sm:$0xff]
    %v7140 = vld [vmem:[#allocation5 + $0x68] sm:$0xff]
    %v7141 = vld [vmem:[#allocation5 + $0x70] sm:$0xff]
    %v7142 = vld [vmem:[#allocation5 + $0x78] sm:$0xff]
    %v7143 = vld [vmem:[%s8] sm:$0x1]
    %v7145 = vlaneseq
    %v7146 = vshrl.u32 %v7145, 7
    %v7147 = vsub.s32 0, %v7146
    %v7148 = vrot.slane %v7143, %v7147
    %7150 = vmatprep.subr.mxu0 0.0
    %7151 = vmatpush1.msra.mxu0 %v7127
    %7152 = vmatprep.subr.mxu0 0.0
    %7153 = vmatpush1.msra.mxu0 %v7128
    %7154 = vmatprep.subr.mxu0 0.0
    %7155 = vmatpush1.msra.mxu0 %v7129
    %7156 = vmatprep.subr.mxu0 0.0
    %7157 = vmatpush1.msra.mxu0 %v7130
    %7158 = vmatprep.subr.mxu0 0.0
    %7159 = vmatpush1.msra.mxu0 %v7131
    %7160 = vmatprep.subr.mxu0 0.0
    %7161 = vmatpush1.msra.mxu0 %v7132
    %7162 = vmatprep.subr.mxu0 0.0
    %7163 = vmatpush1.msra.mxu0 %v7133
    %7164 = vmatprep.subr.mxu0 0.0
    %7165 = vmatpush1.msra.mxu0 %v7134
    %7166 = vmatprep.subr.mxu0 0.0
    %7167 = vmatpush1.msra.mxu0 %v7135
    %7168 = vmatprep.subr.mxu0 0.0
    %7169 = vmatpush1.msra.mxu0 %v7136
    %7170 = vmatprep.subr.mxu0 0.0
    %7171 = vmatpush1.msra.mxu0 %v7137
    %7172 = vmatprep.subr.mxu0 0.0
    %7173 = vmatpush1.msra.mxu0 %v7138
    %7174 = vmatprep.subr.mxu0 0.0
    %7175 = vmatpush1.msra.mxu0 %v7139
    %7176 = vmatprep.subr.mxu0 0.0
    %7177 = vmatpush1.msra.mxu0 %v7140
    %7178 = vmatprep.subr.mxu0 0.0
    %7179 = vmatpush1.msra.mxu0 %v7141
    %7180 = vmatprep.subr.mxu0 0.0
    %7181 = vmatpush1.msra.mxu0 %v7142
    %7182 = vmatprep.subr.mxu0 0.0
    %7183 = vmatpush1.msra.mxu0 0.0
    %7184 = vmatprep.subr.mxu0 0.0
    %7185 = vmatpush1.msra.mxu0 0.0
    %7186 = vmatprep.subr.mxu0 0.0
    %7187 = vmatpush1.msra.mxu0 0.0
    %7188 = vmatprep.subr.mxu0 0.0
    %7189 = vmatpush1.msra.mxu0 0.0
    %7190 = vmatprep.subr.mxu0 0.0
    %7191 = vmatpush1.msra.mxu0 0.0
    %7192 = vmatprep.subr.mxu0 0.0
    %7193 = vmatpush1.msra.mxu0 0.0
    %7194 = vmatprep.subr.mxu0 0.0
    %7195 = vmatpush1.msra.mxu0 0.0
    %7196 = vmatprep.subr.mxu0 0.0
    %7197 = vmatpush1.msra.mxu0 0.0
    %7198 = vmatprep.subr.mxu0 0.0
    %7199 = vmatpush1.msra.mxu0 0.0
    %7200 = vmatprep.subr.mxu0 0.0
    %7201 = vmatpush1.msra.mxu0 0.0
    %7202 = vmatprep.subr.mxu0 0.0
    %7203 = vmatpush1.msra.mxu0 0.0
    %7204 = vmatprep.subr.mxu0 0.0
    %7205 = vmatpush1.msra.mxu0 0.0
    %7206 = vmatprep.subr.mxu0 0.0
    %7207 = vmatpush1.msra.mxu0 0.0
    %7208 = vmatprep.subr.mxu0 0.0
    %7209 = vmatpush1.msra.mxu0 0.0
    %7210 = vmatprep.subr.mxu0 0.0
    %7211 = vmatpush1.msra.mxu0 0.0
    %7212 = vmatprep.subr.mxu0 0.0
    %7213 = vmatpush1.msra.mxu0 0.0
    %7214 = vmatprep.mubr.f32.mxu0 0.0
    %7215 = vmatmul.mubr.f32.gmra.mrb[0].mxu0 %v7126
    %v7216 = vpop.f32.mrb[0].mxu0
    %v7217 = vadd.f32 %v7148, %v7216
    %v7218 = vpop.f32.mrb[0].mxu0
    %7219 = vdwg.mxu0
    %7220 = vst [vmem:[#allocation8] sm:$0xff] %v7217
    // Predicated region
    $region42: #{tpu_custom_call.1} parent=1 // pred_check
      _
    $region43: #{tpu_custom_call.1} parent=1 // pred_check_branch
      %7222 = sbr.rel (0) target = $region45
    $region44: #{tpu_custom_call.1} parent=1 // pred_region
      %s7224 = ssub.s32 128, 128
      %7225 = vsyncadd [#allocation7], %s7224
      %s7227 = sshll.u32 [#allocation8], 4
      %s7228 = int_to_ptr.vmem [resolvable:$true] %s7227
      %7230 = dma.vmem_to_hbm [thread:$0]  %s7228, 128, %s9, [#allocation7]
    $region45: #{tpu_custom_call.1} parent=1 // pred_fallthru
      _
    // Predicated region
    $region46: #{tpu_custom_call.1} parent=1 // pred_check
      _
    $region47: #{tpu_custom_call.1} parent=1 // pred_check_branch
      %7232 = sbr.rel (0) target = $region49
    $region48: #{tpu_custom_call.1} parent=1 // pred_region
      %7233 = dma.done [#allocation7], 128
    $region49: #{tpu_custom_call.1} parent=1 // pred_fallthru
      _
    %7234 = vsyncpa [#allocation6], 1
    %7235 = vsyncpa [#allocation7], 1

</llo_original>
